<compile_context>
chip_gen: v6e
topology: v6e:2x2x1
jax: 0.10.0
libtpu: 0.0.40
codegen_flags: <defaults>
</compile_context>

<pallas_src>
import functools

import jax
import jax.numpy as jnp
from jax import lax
from jax.experimental import pallas as pl
from jax.experimental.pallas import tpu as pltpu

BN_EPS = 1e-5  # PyTorch nn.BatchNorm2d default


def _mbasic_block_kernel(x_ref, w1_ref, g1_ref, b1_ref, w2_ref, g2_ref,
                         b2_ref, o_ref, xpad_ref, y1pad_ref, *, stride):
    """relu -> conv1(3x3, pad=1, stride) -> bn1 -> relu -> conv2(3x3) -> bn2.

    x_ref:     (N, H, W, Cin)        bf16  input (NHWC)
    w1_ref:    (9*Cin, C1)           bf16  im2col conv1 weight (tap-major rows)
    g1/b1:     (1, C1)               f32   bn1 scale / shift
    w2_ref:    (9*C1, C2)            bf16  im2col conv2 weight (tap-major rows)
    g2/b2:     (1, C2)               f32   bn2 scale / shift
    o_ref:     (N*Ho*Wo, C2)         f32   output, channels-last
    scratch:   xpad  (N, H+2,  W+2,  Cin)  bf16   padded relu(x)
               y1pad (N, Ho+2, Wo+2, C1)   bf16   padded relu(bn1(conv1))
    """
    n, h_in, w_in, cin = x_ref.shape
    c1 = w1_ref.shape[1]
    c2 = w2_ref.shape[1]
    ho = (h_in + 2 - 3) // stride + 1
    wo = (w_in + 2 - 3) // stride + 1
    m = n * ho * wo                  # conv2 is stride 1, pad 1 -> same spatial

    # ---- stage 1: relu(x) into a padded bf16 scratch; zero only the halo ---
    xpad_ref[:, 1:h_in + 1, 1:w_in + 1, :] = jnp.maximum(x_ref[...], 0.0)
    zrow = jnp.zeros((n, 1, w_in + 2, cin), jnp.bfloat16)
    zcol = jnp.zeros((n, h_in, 1, cin), jnp.bfloat16)
    xpad_ref[:, 0:1, :, :] = zrow
    xpad_ref[:, h_in + 1:h_in + 2, :, :] = zrow
    xpad_ref[:, 1:h_in + 1, 0:1, :] = zcol
    xpad_ref[:, 1:h_in + 1, w_in + 1:w_in + 2, :] = zcol

    # ---- conv1: 9 tap-wise MXU matmuls, f32 accumulator (M, C1) -------------
    xpad = xpad_ref[...]
    acc1 = None
    for dh in range(3):
        for dw in range(3):
            tap = dh * 3 + dw
            piece = lax.slice(
                xpad,
                (0, dh, dw, 0),
                (n, dh + (ho - 1) * stride + 1,
                 dw + (wo - 1) * stride + 1, cin),
                (1, stride, stride, 1))                      # (N, Ho, Wo, Cin)
            part = jnp.dot(piece.reshape(m, cin),
                           w1_ref[tap * cin:(tap + 1) * cin, :],
                           preferred_element_type=jnp.float32)
            acc1 = part if acc1 is None else acc1 + part     # (M, C1) f32

    # ---- bn1 folded into per-channel affine (two-pass stats) + relu ---------
    mean1 = jnp.sum(acc1, axis=0, keepdims=True) / m
    var1 = jnp.sum(jnp.square(acc1 - mean1), axis=0, keepdims=True) / m
    a1 = g1_ref[...] * lax.rsqrt(var1 + BN_EPS)
    c1_aff = b1_ref[...] - mean1 * a1
    y1 = jnp.maximum(acc1 * a1 + c1_aff, 0.0).astype(jnp.bfloat16)

    # ---- stage 2 input: padded bf16 scratch; zero only the halo -------------
    y1pad_ref[:, 1:ho + 1, 1:wo + 1, :] = y1.reshape(n, ho, wo, c1)
    zrow2 = jnp.zeros((n, 1, wo + 2, c1), jnp.bfloat16)
    zcol2 = jnp.zeros((n, ho, 1, c1), jnp.bfloat16)
    y1pad_ref[:, 0:1, :, :] = zrow2
    y1pad_ref[:, ho + 1:ho + 2, :, :] = zrow2
    y1pad_ref[:, 1:ho + 1, 0:1, :] = zcol2
    y1pad_ref[:, 1:ho + 1, wo + 1:wo + 2, :] = zcol2

    # ---- conv2 (stride 1): 9 tap-wise MXU matmuls, f32 accumulator (M, C2) --
    y1pad = y1pad_ref[...]
    acc2 = None
    for dh in range(3):
        for dw in range(3):
            tap = dh * 3 + dw
            piece = lax.slice(y1pad, (0, dh, dw, 0),
                              (n, dh + ho, dw + wo, c1))     # (N, Ho, Wo, C1)
            part = jnp.dot(piece.reshape(m, c1),
                           w2_ref[tap * c1:(tap + 1) * c1, :],
                           preferred_element_type=jnp.float32)
            acc2 = part if acc2 is None else acc2 + part     # (M, C2) f32

    # ---- bn2 folded into per-channel affine (two-pass stats) ----------------
    mean2 = jnp.sum(acc2, axis=0, keepdims=True) / m
    var2 = jnp.sum(jnp.square(acc2 - mean2), axis=0, keepdims=True) / m
    a2 = g2_ref[...] * lax.rsqrt(var2 + BN_EPS)
    c2_aff = b2_ref[...] - mean2 * a2
    o_ref[...] = acc2 * a2 + c2_aff                          # (M, C2) f32


def _vmem_limit_bytes(n, h, w, cin, c1, c2, ho, wo):
    """Scoped-VMEM budget from the actual footprint (bf16 scratch, f32 acc)."""
    bf16, f32 = 2, 4
    xpad = n * (h + 2) * (w + 2) * cin * bf16
    y1pad = n * (ho + 2) * (wo + 2) * c1 * bf16
    x_in = 2 * n * h * w * cin * bf16                 # double-buffered input
    out = 2 * n * ho * wo * c2 * f32                  # double-buffered output
    live = n * ho * wo * (c1 + c2) * f32              # f32 conv accumulators
    wts = 2 * 9 * (cin * c1 + c1 * c2) * bf16 + 4 * (c1 + c2) * f32
    est = xpad + y1pad + x_in + out + live + wts
    # 2x headroom for compiler temporaries / relayouts; floor 8 MiB, cap 64 MiB.
    return int(min(max(2 * est, 8 << 20), 64 << 20))


def mbasic_block_forward(x_nchw, params, *, stride=1):
    """Pallas implementation of MBasicBlock.forward (downsample=None)."""
    n, cin, h, w = x_nchw.shape
    c1 = params["w1"].shape[-1]
    c2 = params["w2"].shape[-1]
    ho = (h + 2 - 3) // stride + 1
    wo = (w + 2 - 3) // stride + 1

    # NCHW -> NHWC once, cast to bf16 (halves input DMA; relu commutes with
    # the bf16 cast, and conv operands are bf16 on the MXU anyway).
    x_nhwc = jnp.transpose(x_nchw, (0, 2, 3, 1)).astype(jnp.bfloat16)

    # Conv weights as im2col matrices (tap-major rows), bf16 for the MXU.
    w1_mat = params["w1"].reshape(9 * cin, c1).astype(jnp.bfloat16)   # (9Cin,C1)
    w2_mat = params["w2"].reshape(9 * c1, c2).astype(jnp.bfloat16)    # (9C1,C2)
    g1 = params["g1"].reshape(1, c1).astype(jnp.float32)
    b1 = params["b1"].reshape(1, c1).astype(jnp.float32)
    g2 = params["g2"].reshape(1, c2).astype(jnp.float32)
    b2 = params["b2"].reshape(1, c2).astype(jnp.float32)

    vmem = pl.BlockSpec(memory_space=pltpu.MemorySpace.VMEM)
    out = pl.pallas_call(
        functools.partial(_mbasic_block_kernel, stride=stride),
        out_shape=jax.ShapeDtypeStruct((n * ho * wo, c2), jnp.float32),
        in_specs=[vmem] * 7,
        out_specs=vmem,
        scratch_shapes=[
            pltpu.VMEM((n, h + 2, w + 2, cin), jnp.bfloat16),    # padded relu(x)
            pltpu.VMEM((n, ho + 2, wo + 2, c1), jnp.bfloat16),   # padded relu(bn1)
        ],
        compiler_params=pltpu.CompilerParams(
            vmem_limit_bytes=_vmem_limit_bytes(n, h, w, cin, c1, c2, ho, wo)),
    )(x_nhwc, w1_mat, g1, b1, w2_mat, g2, b2)

    # Channels-last (N*Ho*Wo, C2) -> NCHW for the caller (outside the kernel).
    return jnp.transpose(out.reshape(n, ho, wo, c2), (0, 3, 1, 2))


def _ref_forward(x_nchw, params, *, stride=1, matmul_dtype=jnp.float32):
    """Pure-JAX reference for the PyTorch forward (training-mode BN).

    matmul_dtype=bf16 builds a reference whose conv operands are rounded to
    bf16 exactly like the kernel's MXU operands (accumulation/BN stay f32).
    """
    def conv(x, w_hwio, s):
        return lax.conv_general_dilated(
            x.astype(matmul_dtype), w_hwio.astype(matmul_dtype),
            window_strides=(s, s), padding=((1, 1), (1, 1)),
            dimension_numbers=("NCHW", "HWIO", "NCHW"),
            preferred_element_type=jnp.float32)

    def bn(x, g, b):
        mean = jnp.mean(x, axis=(0, 2, 3), keepdims=True)
        var = jnp.mean((x - mean) ** 2, axis=(0, 2, 3), keepdims=True)
        xn = (x - mean) / jnp.sqrt(var + BN_EPS)
        return xn * g.reshape(1, -1, 1, 1) + b.reshape(1, -1, 1, 1)

    out = jnp.maximum(x_nchw, 0.0)
    out = bn(conv(out, params["w1"], stride), params["g1"], params["b1"])
    out = jnp.maximum(out, 0.0)
    out = bn(conv(out, params["w2"], 1), params["g2"], params["b2"])
    return out


if __name__ == "__main__":
    # Small shapes consistent with the module: N=2, inplanes=4, planes=8, 16x16.
    n, inplanes, planes, hw = 2, 4, 8, 16
    stride = 1

    key = jax.random.PRNGKey(0)
    ks = jax.random.split(key, 8)
    x = jax.random.normal(ks[0], (n, inplanes, hw, hw), jnp.float32)
    params = {
        # conv weights stored HWIO: (3, 3, Cin, Cout)
        "w1": 0.1 * jax.random.normal(ks[1], (3, 3, inplanes, planes), jnp.float32),
        "g1": 1.0 + 0.1 * jax.random.normal(ks[2], (planes,), jnp.float32),
        "b1": 0.1 * jax.random.normal(ks[3], (planes,), jnp.float32),
        "w2": 0.1 * jax.random.normal(ks[4], (3, 3, planes, planes), jnp.float32),
        "g2": 1.0 + 0.1 * jax.random.normal(ks[5], (planes,), jnp.float32),
        "b2": 0.1 * jax.random.normal(ks[6], (planes,), jnp.float32),
    }

    out = jax.block_until_ready(mbasic_block_forward(x, params, stride=stride))
    assert out.shape == (n, planes, hw // stride, hw // stride), out.shape

    # Tight check vs. a reference whose conv operands are bf16-rounded exactly
    # like the kernel's MXU operands (f32 accumulation + f32 BN in both).
    ref_bf16 = _ref_forward(x, params, stride=stride, matmul_dtype=jnp.bfloat16)
    if not jnp.allclose(out, ref_bf16, atol=1e-2, rtol=1e-2):
        raise AssertionError("Pallas output mismatches bf16-matmul JAX reference")

    # Semantic sanity check vs. the full-f32 reference (bf16 MXU inputs ->
    # slightly looser tolerance).
    ref_f32 = _ref_forward(x, params, stride=stride, matmul_dtype=jnp.float32)
    if not jnp.allclose(out, ref_f32, atol=5e-2, rtol=5e-2):
        raise AssertionError("Pallas output mismatches f32 JAX reference")

    print("KERNEL_OK")
</pallas_src>

<mosaic_0001>
module attributes {stable_mosaic.version = 11 : i64} {
  func.func @_mbasic_block_kernel(%arg0: memref<2x16x16x4xbf16, #tpu.memory_space<vmem>>, %arg1: memref<36x8xbf16, #tpu.memory_space<vmem>>, %arg2: memref<1x8xf32, #tpu.memory_space<vmem>>, %arg3: memref<1x8xf32, #tpu.memory_space<vmem>>, %arg4: memref<72x8xbf16, #tpu.memory_space<vmem>>, %arg5: memref<1x8xf32, #tpu.memory_space<vmem>>, %arg6: memref<1x8xf32, #tpu.memory_space<vmem>>, %arg7: memref<512x8xf32, #tpu.memory_space<vmem>>, %arg8: memref<2x18x18x4xbf16, #tpu.memory_space<vmem>>, %arg9: memref<2x18x18x8xbf16, #tpu.memory_space<vmem>>) attributes {dimension_semantics = [], scalar_prefetch = 0 : i64, scratch_operands = 2 : i64, tpu.core_type = #tpu.core_type<tc>} {
    %c0 = arith.constant 0 : index
    %c0_0 = arith.constant 0 : index
    %c0_1 = arith.constant 0 : index
    %c0_2 = arith.constant 0 : index
    %0 = vector.load %arg0[%c0, %c0_0, %c0_1, %c0_2] : memref<2x16x16x4xbf16, #tpu.memory_space<vmem>>, vector<2x16x16x4xbf16>
    %cst = arith.constant 0.000000e+00 : bf16
    %1 = vector.broadcast %cst : bf16 to vector<2x16x16x4xbf16>
    %2 = arith.maximumf %0, %1 : vector<2x16x16x4xbf16>
    %c0_3 = arith.constant 0 : index
    %c1 = arith.constant 1 : index
    %c1_4 = arith.constant 1 : index
    %c0_5 = arith.constant 0 : index
    %3 = vector.load %arg8[%c0_3, %c1, %c1_4, %c0_5] : memref<2x18x18x4xbf16, #tpu.memory_space<vmem>>, vector<2x16x16x4xbf16>
    tpu.vector_store %arg8[%c0_3, %c1, %c1_4, %c0_5], %2 {strides = array<i32>} : memref<2x18x18x4xbf16, #tpu.memory_space<vmem>>, vector<2x16x16x4xbf16>,
    %cst_6 = arith.constant 0.000000e+00 : bf16
    %4 = vector.broadcast %cst_6 : bf16 to vector<2x1x18x4xbf16>
    %cst_7 = arith.constant 0.000000e+00 : bf16
    %5 = vector.broadcast %cst_7 : bf16 to vector<2x16x1x4xbf16>
    %c0_8 = arith.constant 0 : index
    %c0_9 = arith.constant 0 : index
    %c0_10 = arith.constant 0 : index
    %c0_11 = arith.constant 0 : index
    %6 = vector.load %arg8[%c0_8, %c0_9, %c0_10, %c0_11] : memref<2x18x18x4xbf16, #tpu.memory_space<vmem>>, vector<2x1x18x4xbf16>
    tpu.vector_store %arg8[%c0_8, %c0_9, %c0_10, %c0_11], %4 {strides = array<i32>} : memref<2x18x18x4xbf16, #tpu.memory_space<vmem>>, vector<2x1x18x4xbf16>,
    %c0_12 = arith.constant 0 : index
    %c17 = arith.constant 17 : index
    %c0_13 = arith.constant 0 : index
    %c0_14 = arith.constant 0 : index
    %7 = vector.load %arg8[%c0_12, %c17, %c0_13, %c0_14] : memref<2x18x18x4xbf16, #tpu.memory_space<vmem>>, vector<2x1x18x4xbf16>
    tpu.vector_store %arg8[%c0_12, %c17, %c0_13, %c0_14], %4 {strides = array<i32>} : memref<2x18x18x4xbf16, #tpu.memory_space<vmem>>, vector<2x1x18x4xbf16>,
    %c0_15 = arith.constant 0 : index
    %c1_16 = arith.constant 1 : index
    %c0_17 = arith.constant 0 : index
    %c0_18 = arith.constant 0 : index
    %8 = vector.load %arg8[%c0_15, %c1_16, %c0_17, %c0_18] : memref<2x18x18x4xbf16, #tpu.memory_space<vmem>>, vector<2x16x1x4xbf16>
    tpu.vector_store %arg8[%c0_15, %c1_16, %c0_17, %c0_18], %5 {strides = array<i32>} : memref<2x18x18x4xbf16, #tpu.memory_space<vmem>>, vector<2x16x1x4xbf16>,
    %c0_19 = arith.constant 0 : index
    %c1_20 = arith.constant 1 : index
    %c17_21 = arith.constant 17 : index
    %c0_22 = arith.constant 0 : index
    %9 = vector.load %arg8[%c0_19, %c1_20, %c17_21, %c0_22] : memref<2x18x18x4xbf16, #tpu.memory_space<vmem>>, vector<2x16x1x4xbf16>
    tpu.vector_store %arg8[%c0_19, %c1_20, %c17_21, %c0_22], %5 {strides = array<i32>} : memref<2x18x18x4xbf16, #tpu.memory_space<vmem>>, vector<2x16x1x4xbf16>,
    %c0_23 = arith.constant 0 : index
    %c0_24 = arith.constant 0 : index
    %c0_25 = arith.constant 0 : index
    %c0_26 = arith.constant 0 : index
    %10 = vector.load %arg8[%c0_23, %c0_24, %c0_25, %c0_26] : memref<2x18x18x4xbf16, #tpu.memory_space<vmem>>, vector<2x18x18x4xbf16>
    %11 = vector.extract_strided_slice %10 {offsets = [0, 0, 0, 0], sizes = [2, 16, 16, 4], strides = [1, 1, 1, 1]} : vector<2x18x18x4xbf16> to vector<2x16x16x4xbf16>
    %12 = vector.shape_cast %11 : vector<2x16x16x4xbf16> to vector<512x4xbf16>
    %c0_27 = arith.constant 0 : index
    %c0_28 = arith.constant 0 : index
    %13 = vector.load %arg1[%c0_27, %c0_28] : memref<36x8xbf16, #tpu.memory_space<vmem>>, vector<4x8xbf16>
    %cst_29 = arith.constant dense<0.000000e+00> : vector<512x8xf32>
    %14 = tpu.matmul %12, %13, %cst_29 {dimension_numbers = #tpu.dot_dimension_numbers<[1], [0], [0], [1], [0, 0, 1, 1], [], []>} : vector<512x4xbf16>, vector<4x8xbf16>, vector<512x8xf32> -> vector<512x8xf32>
    %15 = vector.extract_strided_slice %10 {offsets = [0, 0, 1, 0], sizes = [2, 16, 16, 4], strides = [1, 1, 1, 1]} : vector<2x18x18x4xbf16> to vector<2x16x16x4xbf16>
    %16 = vector.shape_cast %15 : vector<2x16x16x4xbf16> to vector<512x4xbf16>
    %c4 = arith.constant 4 : index
    %c0_30 = arith.constant 0 : index
    %17 = vector.load %arg1[%c4, %c0_30] : memref<36x8xbf16, #tpu.memory_space<vmem>>, vector<4x8xbf16>
    %cst_31 = arith.constant dense<0.000000e+00> : vector<512x8xf32>
    %18 = tpu.matmul %16, %17, %cst_31 {dimension_numbers = #tpu.dot_dimension_numbers<[1], [0], [0], [1], [0, 0, 1, 1], [], []>} : vector<512x4xbf16>, vector<4x8xbf16>, vector<512x8xf32> -> vector<512x8xf32>
    %19 = arith.addf %14, %18 : vector<512x8xf32>
    %20 = vector.extract_strided_slice %10 {offsets = [0, 0, 2, 0], sizes = [2, 16, 16, 4], strides = [1, 1, 1, 1]} : vector<2x18x18x4xbf16> to vector<2x16x16x4xbf16>
    %21 = vector.shape_cast %20 : vector<2x16x16x4xbf16> to vector<512x4xbf16>
    %c8 = arith.constant 8 : index
    %c0_32 = arith.constant 0 : index
    %22 = vector.load %arg1[%c8, %c0_32] : memref<36x8xbf16, #tpu.memory_space<vmem>>, vector<4x8xbf16>
    %cst_33 = arith.constant dense<0.000000e+00> : vector<512x8xf32>
    %23 = tpu.matmul %21, %22, %cst_33 {dimension_numbers = #tpu.dot_dimension_numbers<[1], [0], [0], [1], [0, 0, 1, 1], [], []>} : vector<512x4xbf16>, vector<4x8xbf16>, vector<512x8xf32> -> vector<512x8xf32>
    %24 = arith.addf %19, %23 : vector<512x8xf32>
    %25 = vector.extract_strided_slice %10 {offsets = [0, 1, 0, 0], sizes = [2, 16, 16, 4], strides = [1, 1, 1, 1]} : vector<2x18x18x4xbf16> to vector<2x16x16x4xbf16>
    %26 = vector.shape_cast %25 : vector<2x16x16x4xbf16> to vector<512x4xbf16>
    %c12 = arith.constant 12 : index
    %c0_34 = arith.constant 0 : index
    %27 = vector.load %arg1[%c12, %c0_34] : memref<36x8xbf16, #tpu.memory_space<vmem>>, vector<4x8xbf16>
    %cst_35 = arith.constant dense<0.000000e+00> : vector<512x8xf32>
    %28 = tpu.matmul %26, %27, %cst_35 {dimension_numbers = #tpu.dot_dimension_numbers<[1], [0], [0], [1], [0, 0, 1, 1], [], []>} : vector<512x4xbf16>, vector<4x8xbf16>, vector<512x8xf32> -> vector<512x8xf32>
    %29 = arith.addf %24, %28 : vector<512x8xf32>
    %30 = vector.extract_strided_slice %10 {offsets = [0, 1, 1, 0], sizes = [2, 16, 16, 4], strides = [1, 1, 1, 1]} : vector<2x18x18x4xbf16> to vector<2x16x16x4xbf16>
    %31 = vector.shape_cast %30 : vector<2x16x16x4xbf16> to vector<512x4xbf16>
    %c16 = arith.constant 16 : index
    %c0_36 = arith.constant 0 : index
    %32 = vector.load %arg1[%c16, %c0_36] : memref<36x8xbf16, #tpu.memory_space<vmem>>, vector<4x8xbf16>
    %cst_37 = arith.constant dense<0.000000e+00> : vector<512x8xf32>
    %33 = tpu.matmul %31, %32, %cst_37 {dimension_numbers = #tpu.dot_dimension_numbers<[1], [0], [0], [1], [0, 0, 1, 1], [], []>} : vector<512x4xbf16>, vector<4x8xbf16>, vector<512x8xf32> -> vector<512x8xf32>
    %34 = arith.addf %29, %33 : vector<512x8xf32>
    %35 = vector.extract_strided_slice %10 {offsets = [0, 1, 2, 0], sizes = [2, 16, 16, 4], strides = [1, 1, 1, 1]} : vector<2x18x18x4xbf16> to vector<2x16x16x4xbf16>
    %36 = vector.shape_cast %35 : vector<2x16x16x4xbf16> to vector<512x4xbf16>
    %c20 = arith.constant 20 : index
    %c0_38 = arith.constant 0 : index
    %37 = vector.load %arg1[%c20, %c0_38] : memref<36x8xbf16, #tpu.memory_space<vmem>>, vector<4x8xbf16>
    %cst_39 = arith.constant dense<0.000000e+00> : vector<512x8xf32>
    %38 = tpu.matmul %36, %37, %cst_39 {dimension_numbers = #tpu.dot_dimension_numbers<[1], [0], [0], [1], [0, 0, 1, 1], [], []>} : vector<512x4xbf16>, vector<4x8xbf16>, vector<512x8xf32> -> vector<512x8xf32>
    %39 = arith.addf %34, %38 : vector<512x8xf32>
    %40 = vector.extract_strided_slice %10 {offsets = [0, 2, 0, 0], sizes = [2, 16, 16, 4], strides = [1, 1, 1, 1]} : vector<2x18x18x4xbf16> to vector<2x16x16x4xbf16>
    %41 = vector.shape_cast %40 : vector<2x16x16x4xbf16> to vector<512x4xbf16>
    %c24 = arith.constant 24 : index
    %c0_40 = arith.constant 0 : index
    %42 = vector.load %arg1[%c24, %c0_40] : memref<36x8xbf16, #tpu.memory_space<vmem>>, vector<4x8xbf16>
    %cst_41 = arith.constant dense<0.000000e+00> : vector<512x8xf32>
    %43 = tpu.matmul %41, %42, %cst_41 {dimension_numbers = #tpu.dot_dimension_numbers<[1], [0], [0], [1], [0, 0, 1, 1], [], []>} : vector<512x4xbf16>, vector<4x8xbf16>, vector<512x8xf32> -> vector<512x8xf32>
    %44 = arith.addf %39, %43 : vector<512x8xf32>
    %45 = vector.extract_strided_slice %10 {offsets = [0, 2, 1, 0], sizes = [2, 16, 16, 4], strides = [1, 1, 1, 1]} : vector<2x18x18x4xbf16> to vector<2x16x16x4xbf16>
    %46 = vector.shape_cast %45 : vector<2x16x16x4xbf16> to vector<512x4xbf16>
    %c28 = arith.constant 28 : index
    %c0_42 = arith.constant 0 : index
    %47 = vector.load %arg1[%c28, %c0_42] : memref<36x8xbf16, #tpu.memory_space<vmem>>, vector<4x8xbf16>
    %cst_43 = arith.constant dense<0.000000e+00> : vector<512x8xf32>
    %48 = tpu.matmul %46, %47, %cst_43 {dimension_numbers = #tpu.dot_dimension_numbers<[1], [0], [0], [1], [0, 0, 1, 1], [], []>} : vector<512x4xbf16>, vector<4x8xbf16>, vector<512x8xf32> -> vector<512x8xf32>
    %49 = arith.addf %44, %48 : vector<512x8xf32>
    %50 = vector.extract_strided_slice %10 {offsets = [0, 2, 2, 0], sizes = [2, 16, 16, 4], strides = [1, 1, 1, 1]} : vector<2x18x18x4xbf16> to vector<2x16x16x4xbf16>
    %51 = vector.shape_cast %50 : vector<2x16x16x4xbf16> to vector<512x4xbf16>
    %c32 = arith.constant 32 : index
    %c0_44 = arith.constant 0 : index
    %52 = vector.load %arg1[%c32, %c0_44] : memref<36x8xbf16, #tpu.memory_space<vmem>>, vector<4x8xbf16>
    %cst_45 = arith.constant dense<0.000000e+00> : vector<512x8xf32>
    %53 = tpu.matmul %51, %52, %cst_45 {dimension_numbers = #tpu.dot_dimension_numbers<[1], [0], [0], [1], [0, 0, 1, 1], [], []>} : vector<512x4xbf16>, vector<4x8xbf16>, vector<512x8xf32> -> vector<512x8xf32>
    %54 = arith.addf %49, %53 : vector<512x8xf32>
    %cst_46 = arith.constant dense<0.000000e+00> : vector<8xf32>
    %55 = vector.multi_reduction <add>, %54, %cst_46 [0] : vector<512x8xf32> to vector<8xf32>
    %56 = vector.shape_cast %55 : vector<8xf32> to vector<1x8xf32>
    %cst_47 = arith.constant 5.120000e+02 : f32
    %57 = vector.broadcast %cst_47 : f32 to vector<1x8xf32>
    %58 = arith.divf %56, %57 : vector<1x8xf32>
    %59 = vector.broadcast %58 : vector<1x8xf32> to vector<512x8xf32>
    %60 = arith.subf %54, %59 : vector<512x8xf32>
    %61 = arith.mulf %60, %60 : vector<512x8xf32>
    %cst_48 = arith.constant dense<0.000000e+00> : vector<8xf32>
    %62 = vector.multi_reduction <add>, %61, %cst_48 [0] : vector<512x8xf32> to vector<8xf32>
    %63 = vector.shape_cast %62 : vector<8xf32> to vector<1x8xf32>
    %cst_49 = arith.constant 5.120000e+02 : f32
    %64 = vector.broadcast %cst_49 : f32 to vector<1x8xf32>
    %65 = arith.divf %63, %64 : vector<1x8xf32>
    %c0_50 = arith.constant 0 : index
    %c0_51 = arith.constant 0 : index
    %66 = vector.load %arg2[%c0_50, %c0_51] : memref<1x8xf32, #tpu.memory_space<vmem>>, vector<1x8xf32>
    %cst_52 = arith.constant 9.99999974E-6 : f32
    %67 = vector.broadcast %cst_52 : f32 to vector<1x8xf32>
    %68 = arith.addf %65, %67 : vector<1x8xf32>
    %69 = math.rsqrt %68 : vector<1x8xf32>
    %70 = arith.mulf %66, %69 : vector<1x8xf32>
    %c0_53 = arith.constant 0 : index
    %c0_54 = arith.constant 0 : index
    %71 = vector.load %arg3[%c0_53, %c0_54] : memref<1x8xf32, #tpu.memory_space<vmem>>, vector<1x8xf32>
    %72 = arith.mulf %58, %70 : vector<1x8xf32>
    %73 = arith.subf %71, %72 : vector<1x8xf32>
    %74 = vector.broadcast %70 : vector<1x8xf32> to vector<512x8xf32>
    %75 = arith.mulf %54, %74 : vector<512x8xf32>
    %76 = vector.broadcast %73 : vector<1x8xf32> to vector<512x8xf32>
    %77 = arith.addf %75, %76 : vector<512x8xf32>
    %cst_55 = arith.constant 0.000000e+00 : f32
    %78 = vector.broadcast %cst_55 : f32 to vector<512x8xf32>
    %79 = arith.maximumf %77, %78 : vector<512x8xf32>
    %80 = arith.truncf %79 : vector<512x8xf32> to vector<512x8xbf16>
    %81 = vector.shape_cast %80 : vector<512x8xbf16> to vector<2x16x16x8xbf16>
    %c0_56 = arith.constant 0 : index
    %c1_57 = arith.constant 1 : index
    %c1_58 = arith.constant 1 : index
    %c0_59 = arith.constant 0 : index
    %82 = vector.load %arg9[%c0_56, %c1_57, %c1_58, %c0_59] : memref<2x18x18x8xbf16, #tpu.memory_space<vmem>>, vector<2x16x16x8xbf16>
    tpu.vector_store %arg9[%c0_56, %c1_57, %c1_58, %c0_59], %81 {strides = array<i32>} : memref<2x18x18x8xbf16, #tpu.memory_space<vmem>>, vector<2x16x16x8xbf16>,
    %cst_60 = arith.constant 0.000000e+00 : bf16
    %83 = vector.broadcast %cst_60 : bf16 to vector<2x1x18x8xbf16>
    %cst_61 = arith.constant 0.000000e+00 : bf16
    %84 = vector.broadcast %cst_61 : bf16 to vector<2x16x1x8xbf16>
    %c0_62 = arith.constant 0 : index
    %c0_63 = arith.constant 0 : index
    %c0_64 = arith.constant 0 : index
    %c0_65 = arith.constant 0 : index
    %85 = vector.load %arg9[%c0_62, %c0_63, %c0_64, %c0_65] : memref<2x18x18x8xbf16, #tpu.memory_space<vmem>>, vector<2x1x18x8xbf16>
    tpu.vector_store %arg9[%c0_62, %c0_63, %c0_64, %c0_65], %83 {strides = array<i32>} : memref<2x18x18x8xbf16, #tpu.memory_space<vmem>>, vector<2x1x18x8xbf16>,
    %c0_66 = arith.constant 0 : index
    %c17_67 = arith.constant 17 : index
    %c0_68 = arith.constant 0 : index
    %c0_69 = arith.constant 0 : index
    %86 = vector.load %arg9[%c0_66, %c17_67, %c0_68, %c0_69] : memref<2x18x18x8xbf16, #tpu.memory_space<vmem>>, vector<2x1x18x8xbf16>
    tpu.vector_store %arg9[%c0_66, %c17_67, %c0_68, %c0_69], %83 {strides = array<i32>} : memref<2x18x18x8xbf16, #tpu.memory_space<vmem>>, vector<2x1x18x8xbf16>,
    %c0_70 = arith.constant 0 : index
    %c1_71 = arith.constant 1 : index
    %c0_72 = arith.constant 0 : index
    %c0_73 = arith.constant 0 : index
    %87 = vector.load %arg9[%c0_70, %c1_71, %c0_72, %c0_73] : memref<2x18x18x8xbf16, #tpu.memory_space<vmem>>, vector<2x16x1x8xbf16>
    tpu.vector_store %arg9[%c0_70, %c1_71, %c0_72, %c0_73], %84 {strides = array<i32>} : memref<2x18x18x8xbf16, #tpu.memory_space<vmem>>, vector<2x16x1x8xbf16>,
    %c0_74 = arith.constant 0 : index
    %c1_75 = arith.constant 1 : index
    %c17_76 = arith.constant 17 : index
    %c0_77 = arith.constant 0 : index
    %88 = vector.load %arg9[%c0_74, %c1_75, %c17_76, %c0_77] : memref<2x18x18x8xbf16, #tpu.memory_space<vmem>>, vector<2x16x1x8xbf16>
    tpu.vector_store %arg9[%c0_74, %c1_75, %c17_76, %c0_77], %84 {strides = array<i32>} : memref<2x18x18x8xbf16, #tpu.memory_space<vmem>>, vector<2x16x1x8xbf16>,
    %c0_78 = arith.constant 0 : index
    %c0_79 = arith.constant 0 : index
    %c0_80 = arith.constant 0 : index
    %c0_81 = arith.constant 0 : index
    %89 = vector.load %arg9[%c0_78, %c0_79, %c0_80, %c0_81] : memref<2x18x18x8xbf16, #tpu.memory_space<vmem>>, vector<2x18x18x8xbf16>
    %90 = vector.extract_strided_slice %89 {offsets = [0, 0, 0, 0], sizes = [2, 16, 16, 8], strides = [1, 1, 1, 1]} : vector<2x18x18x8xbf16> to vector<2x16x16x8xbf16>
    %91 = vector.shape_cast %90 : vector<2x16x16x8xbf16> to vector<512x8xbf16>
    %c0_82 = arith.constant 0 : index
    %c0_83 = arith.constant 0 : index
    %92 = vector.load %arg4[%c0_82, %c0_83] : memref<72x8xbf16, #tpu.memory_space<vmem>>, vector<8x8xbf16>
    %cst_84 = arith.constant dense<0.000000e+00> : vector<512x8xf32>
    %93 = tpu.matmul %91, %92, %cst_84 {dimension_numbers = #tpu.dot_dimension_numbers<[1], [0], [0], [1], [0, 0, 1, 1], [], []>} : vector<512x8xbf16>, vector<8x8xbf16>, vector<512x8xf32> -> vector<512x8xf32>
    %94 = vector.extract_strided_slice %89 {offsets = [0, 0, 1, 0], sizes = [2, 16, 16, 8], strides = [1, 1, 1, 1]} : vector<2x18x18x8xbf16> to vector<2x16x16x8xbf16>
    %95 = vector.shape_cast %94 : vector<2x16x16x8xbf16> to vector<512x8xbf16>
    %c8_85 = arith.constant 8 : index
    %c0_86 = arith.constant 0 : index
    %96 = vector.load %arg4[%c8_85, %c0_86] : memref<72x8xbf16, #tpu.memory_space<vmem>>, vector<8x8xbf16>
    %cst_87 = arith.constant dense<0.000000e+00> : vector<512x8xf32>
    %97 = tpu.matmul %95, %96, %cst_87 {dimension_numbers = #tpu.dot_dimension_numbers<[1], [0], [0], [1], [0, 0, 1, 1], [], []>} : vector<512x8xbf16>, vector<8x8xbf16>, vector<512x8xf32> -> vector<512x8xf32>
    %98 = arith.addf %93, %97 : vector<512x8xf32>
    %99 = vector.extract_strided_slice %89 {offsets = [0, 0, 2, 0], sizes = [2, 16, 16, 8], strides = [1, 1, 1, 1]} : vector<2x18x18x8xbf16> to vector<2x16x16x8xbf16>
    %100 = vector.shape_cast %99 : vector<2x16x16x8xbf16> to vector<512x8xbf16>
    %c16_88 = arith.constant 16 : index
    %c0_89 = arith.constant 0 : index
    %101 = vector.load %arg4[%c16_88, %c0_89] : memref<72x8xbf16, #tpu.memory_space<vmem>>, vector<8x8xbf16>
    %cst_90 = arith.constant dense<0.000000e+00> : vector<512x8xf32>
    %102 = tpu.matmul %100, %101, %cst_90 {dimension_numbers = #tpu.dot_dimension_numbers<[1], [0], [0], [1], [0, 0, 1, 1], [], []>} : vector<512x8xbf16>, vector<8x8xbf16>, vector<512x8xf32> -> vector<512x8xf32>
    %103 = arith.addf %98, %102 : vector<512x8xf32>
    %104 = vector.extract_strided_slice %89 {offsets = [0, 1, 0, 0], sizes = [2, 16, 16, 8], strides = [1, 1, 1, 1]} : vector<2x18x18x8xbf16> to vector<2x16x16x8xbf16>
    %105 = vector.shape_cast %104 : vector<2x16x16x8xbf16> to vector<512x8xbf16>
    %c24_91 = arith.constant 24 : index
    %c0_92 = arith.constant 0 : index
    %106 = vector.load %arg4[%c24_91, %c0_92] : memref<72x8xbf16, #tpu.memory_space<vmem>>, vector<8x8xbf16>
    %cst_93 = arith.constant dense<0.000000e+00> : vector<512x8xf32>
    %107 = tpu.matmul %105, %106, %cst_93 {dimension_numbers = #tpu.dot_dimension_numbers<[1], [0], [0], [1], [0, 0, 1, 1], [], []>} : vector<512x8xbf16>, vector<8x8xbf16>, vector<512x8xf32> -> vector<512x8xf32>
    %108 = arith.addf %103, %107 : vector<512x8xf32>
    %109 = vector.extract_strided_slice %89 {offsets = [0, 1, 1, 0], sizes = [2, 16, 16, 8], strides = [1, 1, 1, 1]} : vector<2x18x18x8xbf16> to vector<2x16x16x8xbf16>
    %110 = vector.shape_cast %109 : vector<2x16x16x8xbf16> to vector<512x8xbf16>
    %c32_94 = arith.constant 32 : index
    %c0_95 = arith.constant 0 : index
    %111 = vector.load %arg4[%c32_94, %c0_95] : memref<72x8xbf16, #tpu.memory_space<vmem>>, vector<8x8xbf16>
    %cst_96 = arith.constant dense<0.000000e+00> : vector<512x8xf32>
    %112 = tpu.matmul %110, %111, %cst_96 {dimension_numbers = #tpu.dot_dimension_numbers<[1], [0], [0], [1], [0, 0, 1, 1], [], []>} : vector<512x8xbf16>, vector<8x8xbf16>, vector<512x8xf32> -> vector<512x8xf32>
    %113 = arith.addf %108, %112 : vector<512x8xf32>
    %114 = vector.extract_strided_slice %89 {offsets = [0, 1, 2, 0], sizes = [2, 16, 16, 8], strides = [1, 1, 1, 1]} : vector<2x18x18x8xbf16> to vector<2x16x16x8xbf16>
    %115 = vector.shape_cast %114 : vector<2x16x16x8xbf16> to vector<512x8xbf16>
    %c40 = arith.constant 40 : index
    %c0_97 = arith.constant 0 : index
    %116 = vector.load %arg4[%c40, %c0_97] : memref<72x8xbf16, #tpu.memory_space<vmem>>, vector<8x8xbf16>
    %cst_98 = arith.constant dense<0.000000e+00> : vector<512x8xf32>
    %117 = tpu.matmul %115, %116, %cst_98 {dimension_numbers = #tpu.dot_dimension_numbers<[1], [0], [0], [1], [0, 0, 1, 1], [], []>} : vector<512x8xbf16>, vector<8x8xbf16>, vector<512x8xf32> -> vector<512x8xf32>
    %118 = arith.addf %113, %117 : vector<512x8xf32>
    %119 = vector.extract_strided_slice %89 {offsets = [0, 2, 0, 0], sizes = [2, 16, 16, 8], strides = [1, 1, 1, 1]} : vector<2x18x18x8xbf16> to vector<2x16x16x8xbf16>
    %120 = vector.shape_cast %119 : vector<2x16x16x8xbf16> to vector<512x8xbf16>
    %c48 = arith.constant 48 : index
    %c0_99 = arith.constant 0 : index
    %121 = vector.load %arg4[%c48, %c0_99] : memref<72x8xbf16, #tpu.memory_space<vmem>>, vector<8x8xbf16>
    %cst_100 = arith.constant dense<0.000000e+00> : vector<512x8xf32>
    %122 = tpu.matmul %120, %121, %cst_100 {dimension_numbers = #tpu.dot_dimension_numbers<[1], [0], [0], [1], [0, 0, 1, 1], [], []>} : vector<512x8xbf16>, vector<8x8xbf16>, vector<512x8xf32> -> vector<512x8xf32>
    %123 = arith.addf %118, %122 : vector<512x8xf32>
    %124 = vector.extract_strided_slice %89 {offsets = [0, 2, 1, 0], sizes = [2, 16, 16, 8], strides = [1, 1, 1, 1]} : vector<2x18x18x8xbf16> to vector<2x16x16x8xbf16>
    %125 = vector.shape_cast %124 : vector<2x16x16x8xbf16> to vector<512x8xbf16>
    %c56 = arith.constant 56 : index
    %c0_101 = arith.constant 0 : index
    %126 = vector.load %arg4[%c56, %c0_101] : memref<72x8xbf16, #tpu.memory_space<vmem>>, vector<8x8xbf16>
    %cst_102 = arith.constant dense<0.000000e+00> : vector<512x8xf32>
    %127 = tpu.matmul %125, %126, %cst_102 {dimension_numbers = #tpu.dot_dimension_numbers<[1], [0], [0], [1], [0, 0, 1, 1], [], []>} : vector<512x8xbf16>, vector<8x8xbf16>, vector<512x8xf32> -> vector<512x8xf32>
    %128 = arith.addf %123, %127 : vector<512x8xf32>
    %129 = vector.extract_strided_slice %89 {offsets = [0, 2, 2, 0], sizes = [2, 16, 16, 8], strides = [1, 1, 1, 1]} : vector<2x18x18x8xbf16> to vector<2x16x16x8xbf16>
    %130 = vector.shape_cast %129 : vector<2x16x16x8xbf16> to vector<512x8xbf16>
    %c64 = arith.constant 64 : index
    %c0_103 = arith.constant 0 : index
    %131 = vector.load %arg4[%c64, %c0_103] : memref<72x8xbf16, #tpu.memory_space<vmem>>, vector<8x8xbf16>
    %cst_104 = arith.constant dense<0.000000e+00> : vector<512x8xf32>
    %132 = tpu.matmul %130, %131, %cst_104 {dimension_numbers = #tpu.dot_dimension_numbers<[1], [0], [0], [1], [0, 0, 1, 1], [], []>} : vector<512x8xbf16>, vector<8x8xbf16>, vector<512x8xf32> -> vector<512x8xf32>
    %133 = arith.addf %128, %132 : vector<512x8xf32>
    %cst_105 = arith.constant dense<0.000000e+00> : vector<8xf32>
    %134 = vector.multi_reduction <add>, %133, %cst_105 [0] : vector<512x8xf32> to vector<8xf32>
    %135 = vector.shape_cast %134 : vector<8xf32> to vector<1x8xf32>
    %cst_106 = arith.constant 5.120000e+02 : f32
    %136 = vector.broadcast %cst_106 : f32 to vector<1x8xf32>
    %137 = arith.divf %135, %136 : vector<1x8xf32>
    %138 = vector.broadcast %137 : vector<1x8xf32> to vector<512x8xf32>
    %139 = arith.subf %133, %138 : vector<512x8xf32>
    %140 = arith.mulf %139, %139 : vector<512x8xf32>
    %cst_107 = arith.constant dense<0.000000e+00> : vector<8xf32>
    %141 = vector.multi_reduction <add>, %140, %cst_107 [0] : vector<512x8xf32> to vector<8xf32>
    %142 = vector.shape_cast %141 : vector<8xf32> to vector<1x8xf32>
    %cst_108 = arith.constant 5.120000e+02 : f32
    %143 = vector.broadcast %cst_108 : f32 to vector<1x8xf32>
    %144 = arith.divf %142, %143 : vector<1x8xf32>
    %c0_109 = arith.constant 0 : index
    %c0_110 = arith.constant 0 : index
    %145 = vector.load %arg5[%c0_109, %c0_110] : memref<1x8xf32, #tpu.memory_space<vmem>>, vector<1x8xf32>
    %cst_111 = arith.constant 9.99999974E-6 : f32
    %146 = vector.broadcast %cst_111 : f32 to vector<1x8xf32>
    %147 = arith.addf %144, %146 : vector<1x8xf32>
    %148 = math.rsqrt %147 : vector<1x8xf32>
    %149 = arith.mulf %145, %148 : vector<1x8xf32>
    %c0_112 = arith.constant 0 : index
    %c0_113 = arith.constant 0 : index
    %150 = vector.load %arg6[%c0_112, %c0_113] : memref<1x8xf32, #tpu.memory_space<vmem>>, vector<1x8xf32>
    %151 = arith.mulf %137, %149 : vector<1x8xf32>
    %152 = arith.subf %150, %151 : vector<1x8xf32>
    %153 = vector.broadcast %149 : vector<1x8xf32> to vector<512x8xf32>
    %154 = arith.mulf %133, %153 : vector<512x8xf32>
    %155 = vector.broadcast %152 : vector<1x8xf32> to vector<512x8xf32>
    %156 = arith.addf %154, %155 : vector<512x8xf32>
    %c0_114 = arith.constant 0 : index
    %c0_115 = arith.constant 0 : index
    %157 = vector.load %arg7[%c0_114, %c0_115] : memref<512x8xf32, #tpu.memory_space<vmem>>, vector<512x8xf32>
    tpu.vector_store %arg7[%c0_114, %c0_115], %156 {strides = array<i32>} : memref<512x8xf32, #tpu.memory_space<vmem>>, vector<512x8xf32>,
    return
  }
}

</mosaic_0001>

<llo_original>
// kernel: tpu_custom_call.1
$region0: #{tpu_custom_call.1}
  #allocation0 [shape = 'u32[]', space=smem, size = 0x4, offset = 0x4, fixed_abs, tag = 'smem constant byte address 0x4 - core index']
  #allocation1 [shape = 'u32[144,128]{1,0:T(1,128)}', space=vmem, size = 0x12000, scoped, tag = 'internal scratch']
  #allocation2 [shape = 'bf16[2,18,18,4]{3,2,1,0:T(8,128)(2,1)}', space=vmem, size = 0x36000, scoped, tag = 'scratch operand']
  #allocation3 [shape = 'bf16[2,18,18,8]{3,2,1,0:T(8,128)(2,1)}', space=vmem, size = 0x36000, scoped, tag = 'scratch operand']
  %s0 = inlined_call_operand.vmem [shape: bf16[2,16,16,4], index: 0, kind: input, shape index: {}]
  %s1 = inlined_call_operand.vmem [shape: bf16[36,8], index: 1, kind: input, shape index: {}]
  %s2 = inlined_call_operand.vmem [shape: f32[1,8], index: 2, kind: input, shape index: {}]
  %s3 = inlined_call_operand.vmem [shape: f32[1,8], index: 3, kind: input, shape index: {}]
  %s4 = inlined_call_operand.vmem [shape: bf16[72,8], index: 4, kind: input, shape index: {}]
  %s5 = inlined_call_operand.vmem [shape: f32[1,8], index: 5, kind: input, shape index: {}]
  %s6 = inlined_call_operand.vmem [shape: f32[1,8], index: 6, kind: input, shape index: {}]
  %s7 = inlined_call_operand.vmem [shape: f32[512,8], index: 7, kind: output, shape index: {}]
  %s8 = sld [smem:[#allocation0]]
  $region38: #{tpu_custom_call.1} parent=0
    _
  %s10 = ssub.s32 1, %s8
  %s11 = scalar_select 0, %s10, %s8
  // Predicated region
  $region2: #{tpu_custom_call.1} parent=0 // pred_check
    _
  $region3: #{tpu_custom_call.1} parent=0 // pred_check_branch
    %13 = sbr.rel (0) target = $region5
  $region4: #{tpu_custom_call.1} parent=0 // pred_region
    _
  $region5: #{tpu_custom_call.1} parent=0 // pred_fallthru
    _
  // Predicated region
  $region6: #{tpu_custom_call.1} parent=0 // pred_check
    _
  $region7: #{tpu_custom_call.1} parent=0 // pred_check_branch
    %15 = sbr.rel (0) target = $region9
  $region8: #{tpu_custom_call.1} parent=0 // pred_region
    _
  $region9: #{tpu_custom_call.1} parent=0 // pred_fallthru
    _
  // Predicated region
  $region10: #{tpu_custom_call.1} parent=0 // pred_check
    _
  $region11: #{tpu_custom_call.1} parent=0 // pred_check_branch
    %17 = sbr.rel (0) target = $region13
  $region12: #{tpu_custom_call.1} parent=0 // pred_region
    _
  $region13: #{tpu_custom_call.1} parent=0 // pred_fallthru
    _
  // Predicated region
  $region14: #{tpu_custom_call.1} parent=0 // pred_check
    _
  $region15: #{tpu_custom_call.1} parent=0 // pred_check_branch
    %19 = sbr.rel (0) target = $region17
  $region16: #{tpu_custom_call.1} parent=0 // pred_region
    _
  $region17: #{tpu_custom_call.1} parent=0 // pred_fallthru
    _
  // Predicated region
  $region18: #{tpu_custom_call.1} parent=0 // pred_check
    _
  $region19: #{tpu_custom_call.1} parent=0 // pred_check_branch
    %21 = sbr.rel (0) target = $region21
  $region20: #{tpu_custom_call.1} parent=0 // pred_region
    _
  $region21: #{tpu_custom_call.1} parent=0 // pred_fallthru
    _
  // Predicated region
  $region22: #{tpu_custom_call.1} parent=0 // pred_check
    _
  $region23: #{tpu_custom_call.1} parent=0 // pred_check_branch
    %23 = sbr.rel (0) target = $region25
  $region24: #{tpu_custom_call.1} parent=0 // pred_region
    _
  $region25: #{tpu_custom_call.1} parent=0 // pred_fallthru
    _
  // Predicated region
  $region26: #{tpu_custom_call.1} parent=0 // pred_check
    _
  $region27: #{tpu_custom_call.1} parent=0 // pred_check_branch
    %25 = sbr.rel (0) target = $region29
  $region28: #{tpu_custom_call.1} parent=0 // pred_region
    _
  $region29: #{tpu_custom_call.1} parent=0 // pred_fallthru
    _
  %v27 = vld [vmem:[%s0] sm:$0xf]
  %v28 = vld [vmem:[%s0 + $0x4] sm:$0xf]
  %v29 = vld [vmem:[%s0 + $0x8] sm:$0xf]
  %v30 = vld [vmem:[%s0 + $0xc] sm:$0xf]
  %v31 = vld [vmem:[%s0 + $0x10] sm:$0xf]
  %v32 = vld [vmem:[%s0 + $0x14] sm:$0xf]
  %v33 = vld [vmem:[%s0 + $0x18] sm:$0xf]
  %v34 = vld [vmem:[%s0 + $0x1c] sm:$0xf]
  %v35 = vld [vmem:[%s0 + $0x20] sm:$0xf]
  %v36 = vld [vmem:[%s0 + $0x24] sm:$0xf]
  %v37 = vld [vmem:[%s0 + $0x28] sm:$0xf]
  %v38 = vld [vmem:[%s0 + $0x2c] sm:$0xf]
  %v39 = vld [vmem:[%s0 + $0x30] sm:$0xf]
  %v40 = vld [vmem:[%s0 + $0x34] sm:$0xf]
  %v41 = vld [vmem:[%s0 + $0x38] sm:$0xf]
  %v42 = vld [vmem:[%s0 + $0x3c] sm:$0xf]
  %v43 = vld [vmem:[%s0 + $0x40] sm:$0xf]
  %v44 = vld [vmem:[%s0 + $0x44] sm:$0xf]
  %v45 = vld [vmem:[%s0 + $0x48] sm:$0xf]
  %v46 = vld [vmem:[%s0 + $0x4c] sm:$0xf]
  %v47 = vld [vmem:[%s0 + $0x50] sm:$0xf]
  %v48 = vld [vmem:[%s0 + $0x54] sm:$0xf]
  %v49 = vld [vmem:[%s0 + $0x58] sm:$0xf]
  %v50 = vld [vmem:[%s0 + $0x5c] sm:$0xf]
  %v51 = vld [vmem:[%s0 + $0x60] sm:$0xf]
  %v52 = vld [vmem:[%s0 + $0x64] sm:$0xf]
  %v53 = vld [vmem:[%s0 + $0x68] sm:$0xf]
  %v54 = vld [vmem:[%s0 + $0x6c] sm:$0xf]
  %v55 = vld [vmem:[%s0 + $0x70] sm:$0xf]
  %v56 = vld [vmem:[%s0 + $0x74] sm:$0xf]
  %v57 = vld [vmem:[%s0 + $0x78] sm:$0xf]
  %v58 = vld [vmem:[%s0 + $0x7c] sm:$0xf]
  %v59 = vld [vmem:[%s0 + $0x80] sm:$0xf]
  %v60 = vld [vmem:[%s0 + $0x84] sm:$0xf]
  %v61 = vld [vmem:[%s0 + $0x88] sm:$0xf]
  %v62 = vld [vmem:[%s0 + $0x8c] sm:$0xf]
  %v63 = vld [vmem:[%s0 + $0x90] sm:$0xf]
  %v64 = vld [vmem:[%s0 + $0x94] sm:$0xf]
  %v65 = vld [vmem:[%s0 + $0x98] sm:$0xf]
  %v66 = vld [vmem:[%s0 + $0x9c] sm:$0xf]
  %v67 = vld [vmem:[%s0 + $0xa0] sm:$0xf]
  %v68 = vld [vmem:[%s0 + $0xa4] sm:$0xf]
  %v69 = vld [vmem:[%s0 + $0xa8] sm:$0xf]
  %v70 = vld [vmem:[%s0 + $0xac] sm:$0xf]
  %v71 = vld [vmem:[%s0 + $0xb0] sm:$0xf]
  %v72 = vld [vmem:[%s0 + $0xb4] sm:$0xf]
  %v73 = vld [vmem:[%s0 + $0xb8] sm:$0xf]
  %v74 = vld [vmem:[%s0 + $0xbc] sm:$0xf]
  %v75 = vld [vmem:[%s0 + $0xc0] sm:$0xf]
  %v76 = vld [vmem:[%s0 + $0xc4] sm:$0xf]
  %v77 = vld [vmem:[%s0 + $0xc8] sm:$0xf]
  %v78 = vld [vmem:[%s0 + $0xcc] sm:$0xf]
  %v79 = vld [vmem:[%s0 + $0xd0] sm:$0xf]
  %v80 = vld [vmem:[%s0 + $0xd4] sm:$0xf]
  %v81 = vld [vmem:[%s0 + $0xd8] sm:$0xf]
  %v82 = vld [vmem:[%s0 + $0xdc] sm:$0xf]
  %v83 = vld [vmem:[%s0 + $0xe0] sm:$0xf]
  %v84 = vld [vmem:[%s0 + $0xe4] sm:$0xf]
  %v85 = vld [vmem:[%s0 + $0xe8] sm:$0xf]
  %v86 = vld [vmem:[%s0 + $0xec] sm:$0xf]
  %v87 = vld [vmem:[%s0 + $0xf0] sm:$0xf]
  %v88 = vld [vmem:[%s0 + $0xf4] sm:$0xf]
  %v89 = vld [vmem:[%s0 + $0xf8] sm:$0xf]
  %v90 = vld [vmem:[%s0 + $0xfc] sm:$0xf]
  %v91 = vmax.bf16 %v27, 0
  %v92 = vmax.bf16 %v28, 0
  %v93 = vmax.bf16 %v29, 0
  %v94 = vmax.bf16 %v30, 0
  %v95 = vmax.bf16 %v31, 0
  %v96 = vmax.bf16 %v32, 0
  %v97 = vmax.bf16 %v33, 0
  %v98 = vmax.bf16 %v34, 0
  %v99 = vmax.bf16 %v35, 0
  %v100 = vmax.bf16 %v36, 0
  %v101 = vmax.bf16 %v37, 0
  %v102 = vmax.bf16 %v38, 0
  %v103 = vmax.bf16 %v39, 0
  %v104 = vmax.bf16 %v40, 0
  %v105 = vmax.bf16 %v41, 0
  %v106 = vmax.bf16 %v42, 0
  %v107 = vmax.bf16 %v43, 0
  %v108 = vmax.bf16 %v44, 0
  %v109 = vmax.bf16 %v45, 0
  %v110 = vmax.bf16 %v46, 0
  %v111 = vmax.bf16 %v47, 0
  %v112 = vmax.bf16 %v48, 0
  %v113 = vmax.bf16 %v49, 0
  %v114 = vmax.bf16 %v50, 0
  %v115 = vmax.bf16 %v51, 0
  %v116 = vmax.bf16 %v52, 0
  %v117 = vmax.bf16 %v53, 0
  %v118 = vmax.bf16 %v54, 0
  %v119 = vmax.bf16 %v55, 0
  %v120 = vmax.bf16 %v56, 0
  %v121 = vmax.bf16 %v57, 0
  %v122 = vmax.bf16 %v58, 0
  %v123 = vmax.bf16 %v59, 0
  %v124 = vmax.bf16 %v60, 0
  %v125 = vmax.bf16 %v61, 0
  %v126 = vmax.bf16 %v62, 0
  %v127 = vmax.bf16 %v63, 0
  %v128 = vmax.bf16 %v64, 0
  %v129 = vmax.bf16 %v65, 0
  %v130 = vmax.bf16 %v66, 0
  %v131 = vmax.bf16 %v67, 0
  %v132 = vmax.bf16 %v68, 0
  %v133 = vmax.bf16 %v69, 0
  %v134 = vmax.bf16 %v70, 0
  %v135 = vmax.bf16 %v71, 0
  %v136 = vmax.bf16 %v72, 0
  %v137 = vmax.bf16 %v73, 0
  %v138 = vmax.bf16 %v74, 0
  %v139 = vmax.bf16 %v75, 0
  %v140 = vmax.bf16 %v76, 0
  %v141 = vmax.bf16 %v77, 0
  %v142 = vmax.bf16 %v78, 0
  %v143 = vmax.bf16 %v79, 0
  %v144 = vmax.bf16 %v80, 0
  %v145 = vmax.bf16 %v81, 0
  %v146 = vmax.bf16 %v82, 0
  %v147 = vmax.bf16 %v83, 0
  %v148 = vmax.bf16 %v84, 0
  %v149 = vmax.bf16 %v85, 0
  %v150 = vmax.bf16 %v86, 0
  %v151 = vmax.bf16 %v87, 0
  %v152 = vmax.bf16 %v88, 0
  %v153 = vmax.bf16 %v89, 0
  %v154 = vmax.bf16 %v90, 0
  %vm155 = vsmask.f32 256
  %vm156 = vsmask.f32 4368
  %vm157 = vmor %vm155, %vm156
  %v159 = vshrl.u32 %v91, 16
  %v161 = vrot.slane %v159, 7
  %v162 = vshll.u32 %v91, 16
  %v164 = vor.u32 %v161, %v162
  %v165 = vrot.slane %v161, 4
  %v167 = vshrl.u32 %v92, 16
  %v169 = vrot.slane %v167, 7
  %v170 = vshll.u32 %v92, 16
  %v172 = vor.u32 %v169, %v170
  %v173 = vsel %vm157, %v165, %v172
  %v174 = vrot.slane %v169, 4
  %v176 = vshrl.u32 %v93, 16
  %v178 = vrot.slane %v176, 7
  %v179 = vshll.u32 %v93, 16
  %v181 = vor.u32 %v178, %v179
  %v182 = vrot.slane %v178, 4
  %v184 = vshrl.u32 %v94, 16
  %v186 = vrot.slane %v184, 7
  %v187 = vshll.u32 %v94, 16
  %v189 = vor.u32 %v186, %v187
  %v190 = vsel %vm157, %v182, %v189
  %v191 = vrot.slane %v186, 4
  %v193 = vshrl.u32 %v95, 16
  %v195 = vrot.slane %v193, 7
  %v196 = vshll.u32 %v95, 16
  %v198 = vor.u32 %v195, %v196
  %v199 = vrot.slane %v195, 4
  %v201 = vshrl.u32 %v96, 16
  %v203 = vrot.slane %v201, 7
  %v204 = vshll.u32 %v96, 16
  %v206 = vor.u32 %v203, %v204
  %v207 = vsel %vm157, %v199, %v206
  %v208 = vrot.slane %v203, 4
  %v210 = vshrl.u32 %v97, 16
  %v212 = vrot.slane %v210, 7
  %v213 = vshll.u32 %v97, 16
  %v215 = vor.u32 %v212, %v213
  %v216 = vrot.slane %v212, 4
  %v218 = vshrl.u32 %v98, 16
  %v220 = vrot.slane %v218, 7
  %v221 = vshll.u32 %v98, 16
  %v223 = vor.u32 %v220, %v221
  %v224 = vsel %vm157, %v216, %v223
  %v225 = vrot.slane %v220, 4
  %v227 = vshrl.u32 %v99, 16
  %v229 = vrot.slane %v227, 7
  %v230 = vshll.u32 %v99, 16
  %v232 = vor.u32 %v229, %v230
  %v233 = vrot.slane %v229, 4
  %v235 = vshrl.u32 %v100, 16
  %v237 = vrot.slane %v235, 7
  %v238 = vshll.u32 %v100, 16
  %v240 = vor.u32 %v237, %v238
  %v241 = vsel %vm157, %v233, %v240
  %v242 = vrot.slane %v237, 4
  %v244 = vshrl.u32 %v101, 16
  %v246 = vrot.slane %v244, 7
  %v247 = vshll.u32 %v101, 16
  %v249 = vor.u32 %v246, %v247
  %v250 = vrot.slane %v246, 4
  %v252 = vshrl.u32 %v102, 16
  %v254 = vrot.slane %v252, 7
  %v255 = vshll.u32 %v102, 16
  %v257 = vor.u32 %v254, %v255
  %v258 = vsel %vm157, %v250, %v257
  %v259 = vrot.slane %v254, 4
  %v261 = vshrl.u32 %v103, 16
  %v263 = vrot.slane %v261, 7
  %v264 = vshll.u32 %v103, 16
  %v266 = vor.u32 %v263, %v264
  %v267 = vrot.slane %v263, 4
  %v269 = vshrl.u32 %v104, 16
  %v271 = vrot.slane %v269, 7
  %v272 = vshll.u32 %v104, 16
  %v274 = vor.u32 %v271, %v272
  %v275 = vsel %vm157, %v267, %v274
  %v276 = vrot.slane %v271, 4
  %v278 = vshrl.u32 %v105, 16
  %v280 = vrot.slane %v278, 7
  %v281 = vshll.u32 %v105, 16
  %v283 = vor.u32 %v280, %v281
  %v284 = vrot.slane %v280, 4
  %v286 = vshrl.u32 %v106, 16
  %v288 = vrot.slane %v286, 7
  %v289 = vshll.u32 %v106, 16
  %v291 = vor.u32 %v288, %v289
  %v292 = vsel %vm157, %v284, %v291
  %v293 = vrot.slane %v288, 4
  %v295 = vshrl.u32 %v107, 16
  %v297 = vrot.slane %v295, 7
  %v298 = vshll.u32 %v107, 16
  %v300 = vor.u32 %v297, %v298
  %v301 = vrot.slane %v297, 4
  %v303 = vshrl.u32 %v108, 16
  %v305 = vrot.slane %v303, 7
  %v306 = vshll.u32 %v108, 16
  %v308 = vor.u32 %v305, %v306
  %v309 = vsel %vm157, %v301, %v308
  %v310 = vrot.slane %v305, 4
  %v312 = vshrl.u32 %v109, 16
  %v314 = vrot.slane %v312, 7
  %v315 = vshll.u32 %v109, 16
  %v317 = vor.u32 %v314, %v315
  %v318 = vrot.slane %v314, 4
  %v320 = vshrl.u32 %v110, 16
  %v322 = vrot.slane %v320, 7
  %v323 = vshll.u32 %v110, 16
  %v325 = vor.u32 %v322, %v323
  %v326 = vsel %vm157, %v318, %v325
  %v327 = vrot.slane %v322, 4
  %v329 = vshrl.u32 %v111, 16
  %v331 = vrot.slane %v329, 7
  %v332 = vshll.u32 %v111, 16
  %v334 = vor.u32 %v331, %v332
  %v335 = vrot.slane %v331, 4
  %v337 = vshrl.u32 %v112, 16
  %v339 = vrot.slane %v337, 7
  %v340 = vshll.u32 %v112, 16
  %v342 = vor.u32 %v339, %v340
  %v343 = vsel %vm157, %v335, %v342
  %v344 = vrot.slane %v339, 4
  %v346 = vshrl.u32 %v113, 16
  %v348 = vrot.slane %v346, 7
  %v349 = vshll.u32 %v113, 16
  %v351 = vor.u32 %v348, %v349
  %v352 = vrot.slane %v348, 4
  %v354 = vshrl.u32 %v114, 16
  %v356 = vrot.slane %v354, 7
  %v357 = vshll.u32 %v114, 16
  %v359 = vor.u32 %v356, %v357
  %v360 = vsel %vm157, %v352, %v359
  %v361 = vrot.slane %v356, 4
  %v363 = vshrl.u32 %v115, 16
  %v365 = vrot.slane %v363, 7
  %v366 = vshll.u32 %v115, 16
  %v368 = vor.u32 %v365, %v366
  %v369 = vrot.slane %v365, 4
  %v371 = vshrl.u32 %v116, 16
  %v373 = vrot.slane %v371, 7
  %v374 = vshll.u32 %v116, 16
  %v376 = vor.u32 %v373, %v374
  %v377 = vsel %vm157, %v369, %v376
  %v378 = vrot.slane %v373, 4
  %v380 = vshrl.u32 %v117, 16
  %v382 = vrot.slane %v380, 7
  %v383 = vshll.u32 %v117, 16
  %v385 = vor.u32 %v382, %v383
  %v386 = vrot.slane %v382, 4
  %v388 = vshrl.u32 %v118, 16
  %v390 = vrot.slane %v388, 7
  %v391 = vshll.u32 %v118, 16
  %v393 = vor.u32 %v390, %v391
  %v394 = vsel %vm157, %v386, %v393
  %v395 = vrot.slane %v390, 4
  %v397 = vshrl.u32 %v119, 16
  %v399 = vrot.slane %v397, 7
  %v400 = vshll.u32 %v119, 16
  %v402 = vor.u32 %v399, %v400
  %v403 = vrot.slane %v399, 4
  %v405 = vshrl.u32 %v120, 16
  %v407 = vrot.slane %v405, 7
  %v408 = vshll.u32 %v120, 16
  %v410 = vor.u32 %v407, %v408
  %v411 = vsel %vm157, %v403, %v410
  %v412 = vrot.slane %v407, 4
  %v414 = vshrl.u32 %v121, 16
  %v416 = vrot.slane %v414, 7
  %v417 = vshll.u32 %v121, 16
  %v419 = vor.u32 %v416, %v417
  %v420 = vrot.slane %v416, 4
  %v422 = vshrl.u32 %v122, 16
  %v424 = vrot.slane %v422, 7
  %v425 = vshll.u32 %v122, 16
  %v427 = vor.u32 %v424, %v425
  %v428 = vsel %vm157, %v420, %v427
  %v429 = vrot.slane %v424, 4
  %v431 = vshrl.u32 %v123, 16
  %v433 = vrot.slane %v431, 7
  %v434 = vshll.u32 %v123, 16
  %v436 = vor.u32 %v433, %v434
  %v437 = vrot.slane %v433, 4
  %v439 = vshrl.u32 %v124, 16
  %v441 = vrot.slane %v439, 7
  %v442 = vshll.u32 %v124, 16
  %v444 = vor.u32 %v441, %v442
  %v445 = vsel %vm157, %v437, %v444
  %v446 = vrot.slane %v441, 4
  %v448 = vshrl.u32 %v125, 16
  %v450 = vrot.slane %v448, 7
  %v451 = vshll.u32 %v125, 16
  %v453 = vor.u32 %v450, %v451
  %v454 = vrot.slane %v450, 4
  %v456 = vshrl.u32 %v126, 16
  %v458 = vrot.slane %v456, 7
  %v459 = vshll.u32 %v126, 16
  %v461 = vor.u32 %v458, %v459
  %v462 = vsel %vm157, %v454, %v461
  %v463 = vrot.slane %v458, 4
  %v465 = vshrl.u32 %v127, 16
  %v467 = vrot.slane %v465, 7
  %v468 = vshll.u32 %v127, 16
  %v470 = vor.u32 %v467, %v468
  %v471 = vrot.slane %v467, 4
  %v473 = vshrl.u32 %v128, 16
  %v475 = vrot.slane %v473, 7
  %v476 = vshll.u32 %v128, 16
  %v478 = vor.u32 %v475, %v476
  %v479 = vsel %vm157, %v471, %v478
  %v480 = vrot.slane %v475, 4
  %v482 = vshrl.u32 %v129, 16
  %v484 = vrot.slane %v482, 7
  %v485 = vshll.u32 %v129, 16
  %v487 = vor.u32 %v484, %v485
  %v488 = vrot.slane %v484, 4
  %v490 = vshrl.u32 %v130, 16
  %v492 = vrot.slane %v490, 7
  %v493 = vshll.u32 %v130, 16
  %v495 = vor.u32 %v492, %v493
  %v496 = vsel %vm157, %v488, %v495
  %v497 = vrot.slane %v492, 4
  %v499 = vshrl.u32 %v131, 16
  %v501 = vrot.slane %v499, 7
  %v502 = vshll.u32 %v131, 16
  %v504 = vor.u32 %v501, %v502
  %v505 = vrot.slane %v501, 4
  %v507 = vshrl.u32 %v132, 16
  %v509 = vrot.slane %v507, 7
  %v510 = vshll.u32 %v132, 16
  %v512 = vor.u32 %v509, %v510
  %v513 = vsel %vm157, %v505, %v512
  %v514 = vrot.slane %v509, 4
  %v516 = vshrl.u32 %v133, 16
  %v518 = vrot.slane %v516, 7
  %v519 = vshll.u32 %v133, 16
  %v521 = vor.u32 %v518, %v519
  %v522 = vrot.slane %v518, 4
  %v524 = vshrl.u32 %v134, 16
  %v526 = vrot.slane %v524, 7
  %v527 = vshll.u32 %v134, 16
  %v529 = vor.u32 %v526, %v527
  %v530 = vsel %vm157, %v522, %v529
  %v531 = vrot.slane %v526, 4
  %v533 = vshrl.u32 %v135, 16
  %v535 = vrot.slane %v533, 7
  %v536 = vshll.u32 %v135, 16
  %v538 = vor.u32 %v535, %v536
  %v539 = vrot.slane %v535, 4
  %v541 = vshrl.u32 %v136, 16
  %v543 = vrot.slane %v541, 7
  %v544 = vshll.u32 %v136, 16
  %v546 = vor.u32 %v543, %v544
  %v547 = vsel %vm157, %v539, %v546
  %v548 = vrot.slane %v543, 4
  %v550 = vshrl.u32 %v137, 16
  %v552 = vrot.slane %v550, 7
  %v553 = vshll.u32 %v137, 16
  %v555 = vor.u32 %v552, %v553
  %v556 = vrot.slane %v552, 4
  %v558 = vshrl.u32 %v138, 16
  %v560 = vrot.slane %v558, 7
  %v561 = vshll.u32 %v138, 16
  %v563 = vor.u32 %v560, %v561
  %v564 = vsel %vm157, %v556, %v563
  %v565 = vrot.slane %v560, 4
  %v567 = vshrl.u32 %v139, 16
  %v569 = vrot.slane %v567, 7
  %v570 = vshll.u32 %v139, 16
  %v572 = vor.u32 %v569, %v570
  %v573 = vrot.slane %v569, 4
  %v575 = vshrl.u32 %v140, 16
  %v577 = vrot.slane %v575, 7
  %v578 = vshll.u32 %v140, 16
  %v580 = vor.u32 %v577, %v578
  %v581 = vsel %vm157, %v573, %v580
  %v582 = vrot.slane %v577, 4
  %v584 = vshrl.u32 %v141, 16
  %v586 = vrot.slane %v584, 7
  %v587 = vshll.u32 %v141, 16
  %v589 = vor.u32 %v586, %v587
  %v590 = vrot.slane %v586, 4
  %v592 = vshrl.u32 %v142, 16
  %v594 = vrot.slane %v592, 7
  %v595 = vshll.u32 %v142, 16
  %v597 = vor.u32 %v594, %v595
  %v598 = vsel %vm157, %v590, %v597
  %v599 = vrot.slane %v594, 4
  %v601 = vshrl.u32 %v143, 16
  %v603 = vrot.slane %v601, 7
  %v604 = vshll.u32 %v143, 16
  %v606 = vor.u32 %v603, %v604
  %v607 = vrot.slane %v603, 4
  %v609 = vshrl.u32 %v144, 16
  %v611 = vrot.slane %v609, 7
  %v612 = vshll.u32 %v144, 16
  %v614 = vor.u32 %v611, %v612
  %v615 = vsel %vm157, %v607, %v614
  %v616 = vrot.slane %v611, 4
  %v618 = vshrl.u32 %v145, 16
  %v620 = vrot.slane %v618, 7
  %v621 = vshll.u32 %v145, 16
  %v623 = vor.u32 %v620, %v621
  %v624 = vrot.slane %v620, 4
  %v626 = vshrl.u32 %v146, 16
  %v628 = vrot.slane %v626, 7
  %v629 = vshll.u32 %v146, 16
  %v631 = vor.u32 %v628, %v629
  %v632 = vsel %vm157, %v624, %v631
  %v633 = vrot.slane %v628, 4
  %v635 = vshrl.u32 %v147, 16
  %v637 = vrot.slane %v635, 7
  %v638 = vshll.u32 %v147, 16
  %v640 = vor.u32 %v637, %v638
  %v641 = vrot.slane %v637, 4
  %v643 = vshrl.u32 %v148, 16
  %v645 = vrot.slane %v643, 7
  %v646 = vshll.u32 %v148, 16
  %v648 = vor.u32 %v645, %v646
  %v649 = vsel %vm157, %v641, %v648
  %v650 = vrot.slane %v645, 4
  %v652 = vshrl.u32 %v149, 16
  %v654 = vrot.slane %v652, 7
  %v655 = vshll.u32 %v149, 16
  %v657 = vor.u32 %v654, %v655
  %v658 = vrot.slane %v654, 4
  %v660 = vshrl.u32 %v150, 16
  %v662 = vrot.slane %v660, 7
  %v663 = vshll.u32 %v150, 16
  %v665 = vor.u32 %v662, %v663
  %v666 = vsel %vm157, %v658, %v665
  %v667 = vrot.slane %v662, 4
  %v669 = vshrl.u32 %v151, 16
  %v671 = vrot.slane %v669, 7
  %v672 = vshll.u32 %v151, 16
  %v674 = vor.u32 %v671, %v672
  %v675 = vrot.slane %v671, 4
  %v677 = vshrl.u32 %v152, 16
  %v679 = vrot.slane %v677, 7
  %v680 = vshll.u32 %v152, 16
  %v682 = vor.u32 %v679, %v680
  %v683 = vsel %vm157, %v675, %v682
  %v684 = vrot.slane %v679, 4
  %v686 = vshrl.u32 %v153, 16
  %v688 = vrot.slane %v686, 7
  %v689 = vshll.u32 %v153, 16
  %v691 = vor.u32 %v688, %v689
  %v692 = vrot.slane %v688, 4
  %v694 = vshrl.u32 %v154, 16
  %v696 = vrot.slane %v694, 7
  %v697 = vshll.u32 %v154, 16
  %v699 = vor.u32 %v696, %v697
  %v700 = vsel %vm157, %v692, %v699
  %v701 = vrot.slane %v696, 4
  %s798 = scalar_lea.vmem [#allocation2], 12
  %vm799 = vcmask 27648
  %vm800 = vsmask.f32 7938
  %vm801 = vmand %vm799, %vm800
  %v802 = vld [vmem:[%s798] sm:$0xf]
  %v803 = vsel %vm801, %v164, %v802
  %804 = vst [vmem:[%s798] sm:$0xf] %v803
  %vm805 = vcmask 27648
  %806 = vst.msk [vmem:[%s798 + $0x4] sm:$0xf] %vm805, %v173
  %vm807 = vcmask 24576
  %vm808 = vmand %vm807, %vm155
  %v809 = vld [vmem:[%s798 + $0x8] sm:$0x1]
  %v810 = vsel %vm808, %v174, %v809
  %811 = vst [vmem:[%s798 + $0x8] sm:$0x1] %v810
  %v812 = vld [vmem:[%s798 + $0xc] sm:$0xf]
  %v813 = vsel %vm801, %v181, %v812
  %814 = vst [vmem:[%s798 + $0xc] sm:$0xf] %v813
  %815 = vst.msk [vmem:[%s798 + $0x10] sm:$0xf] %vm805, %v190
  %v816 = vld [vmem:[%s798 + $0x14] sm:$0x1]
  %v817 = vsel %vm808, %v191, %v816
  %818 = vst [vmem:[%s798 + $0x14] sm:$0x1] %v817
  %v819 = vld [vmem:[%s798 + $0x18] sm:$0xf]
  %v820 = vsel %vm801, %v198, %v819
  %821 = vst [vmem:[%s798 + $0x18] sm:$0xf] %v820
  %822 = vst.msk [vmem:[%s798 + $0x1c] sm:$0xf] %vm805, %v207
  %v823 = vld [vmem:[%s798 + $0x20] sm:$0x1]
  %v824 = vsel %vm808, %v208, %v823
  %825 = vst [vmem:[%s798 + $0x20] sm:$0x1] %v824
  %v826 = vld [vmem:[%s798 + $0x24] sm:$0xf]
  %v827 = vsel %vm801, %v215, %v826
  %828 = vst [vmem:[%s798 + $0x24] sm:$0xf] %v827
  %829 = vst.msk [vmem:[%s798 + $0x28] sm:$0xf] %vm805, %v224
  %v830 = vld [vmem:[%s798 + $0x2c] sm:$0x1]
  %v831 = vsel %vm808, %v225, %v830
  %832 = vst [vmem:[%s798 + $0x2c] sm:$0x1] %v831
  %v833 = vld [vmem:[%s798 + $0x30] sm:$0xf]
  %v834 = vsel %vm801, %v232, %v833
  %835 = vst [vmem:[%s798 + $0x30] sm:$0xf] %v834
  %836 = vst.msk [vmem:[%s798 + $0x34] sm:$0xf] %vm805, %v241
  %v837 = vld [vmem:[%s798 + $0x38] sm:$0x1]
  %v838 = vsel %vm808, %v242, %v837
  %839 = vst [vmem:[%s798 + $0x38] sm:$0x1] %v838
  %v840 = vld [vmem:[%s798 + $0x3c] sm:$0xf]
  %v841 = vsel %vm801, %v249, %v840
  %842 = vst [vmem:[%s798 + $0x3c] sm:$0xf] %v841
  %843 = vst.msk [vmem:[%s798 + $0x40] sm:$0xf] %vm805, %v258
  %v844 = vld [vmem:[%s798 + $0x44] sm:$0x1]
  %v845 = vsel %vm808, %v259, %v844
  %846 = vst [vmem:[%s798 + $0x44] sm:$0x1] %v845
  %v847 = vld [vmem:[%s798 + $0x48] sm:$0xf]
  %v848 = vsel %vm801, %v266, %v847
  %849 = vst [vmem:[%s798 + $0x48] sm:$0xf] %v848
  %850 = vst.msk [vmem:[%s798 + $0x4c] sm:$0xf] %vm805, %v275
  %v851 = vld [vmem:[%s798 + $0x50] sm:$0x1]
  %v852 = vsel %vm808, %v276, %v851
  %853 = vst [vmem:[%s798 + $0x50] sm:$0x1] %v852
  %v854 = vld [vmem:[%s798 + $0x54] sm:$0xf]
  %v855 = vsel %vm801, %v283, %v854
  %856 = vst [vmem:[%s798 + $0x54] sm:$0xf] %v855
  %857 = vst.msk [vmem:[%s798 + $0x58] sm:$0xf] %vm805, %v292
  %v858 = vld [vmem:[%s798 + $0x5c] sm:$0x1]
  %v859 = vsel %vm808, %v293, %v858
  %860 = vst [vmem:[%s798 + $0x5c] sm:$0x1] %v859
  %v861 = vld [vmem:[%s798 + $0x60] sm:$0xf]
  %v862 = vsel %vm801, %v300, %v861
  %863 = vst [vmem:[%s798 + $0x60] sm:$0xf] %v862
  %864 = vst.msk [vmem:[%s798 + $0x64] sm:$0xf] %vm805, %v309
  %v865 = vld [vmem:[%s798 + $0x68] sm:$0x1]
  %v866 = vsel %vm808, %v310, %v865
  %867 = vst [vmem:[%s798 + $0x68] sm:$0x1] %v866
  %v868 = vld [vmem:[%s798 + $0x6c] sm:$0xf]
  %v869 = vsel %vm801, %v317, %v868
  %870 = vst [vmem:[%s798 + $0x6c] sm:$0xf] %v869
  %871 = vst.msk [vmem:[%s798 + $0x70] sm:$0xf] %vm805, %v326
  %v872 = vld [vmem:[%s798 + $0x74] sm:$0x1]
  %v873 = vsel %vm808, %v327, %v872
  %874 = vst [vmem:[%s798 + $0x74] sm:$0x1] %v873
  %v875 = vld [vmem:[%s798 + $0x78] sm:$0xf]
  %v876 = vsel %vm801, %v334, %v875
  %877 = vst [vmem:[%s798 + $0x78] sm:$0xf] %v876
  %878 = vst.msk [vmem:[%s798 + $0x7c] sm:$0xf] %vm805, %v343
  %v879 = vld [vmem:[%s798 + $0x80] sm:$0x1]
  %v880 = vsel %vm808, %v344, %v879
  %881 = vst [vmem:[%s798 + $0x80] sm:$0x1] %v880
  %v882 = vld [vmem:[%s798 + $0x84] sm:$0xf]
  %v883 = vsel %vm801, %v351, %v882
  %884 = vst [vmem:[%s798 + $0x84] sm:$0xf] %v883
  %885 = vst.msk [vmem:[%s798 + $0x88] sm:$0xf] %vm805, %v360
  %v886 = vld [vmem:[%s798 + $0x8c] sm:$0x1]
  %v887 = vsel %vm808, %v361, %v886
  %888 = vst [vmem:[%s798 + $0x8c] sm:$0x1] %v887
  %v889 = vld [vmem:[%s798 + $0x90] sm:$0xf]
  %v890 = vsel %vm801, %v368, %v889
  %891 = vst [vmem:[%s798 + $0x90] sm:$0xf] %v890
  %892 = vst.msk [vmem:[%s798 + $0x94] sm:$0xf] %vm805, %v377
  %v893 = vld [vmem:[%s798 + $0x98] sm:$0x1]
  %v894 = vsel %vm808, %v378, %v893
  %895 = vst [vmem:[%s798 + $0x98] sm:$0x1] %v894
  %v896 = vld [vmem:[%s798 + $0x9c] sm:$0xf]
  %v897 = vsel %vm801, %v385, %v896
  %898 = vst [vmem:[%s798 + $0x9c] sm:$0xf] %v897
  %899 = vst.msk [vmem:[%s798 + $0xa0] sm:$0xf] %vm805, %v394
  %v900 = vld [vmem:[%s798 + $0xa4] sm:$0x1]
  %v901 = vsel %vm808, %v395, %v900
  %902 = vst [vmem:[%s798 + $0xa4] sm:$0x1] %v901
  %v903 = vld [vmem:[%s798 + $0xa8] sm:$0xf]
  %v904 = vsel %vm801, %v402, %v903
  %905 = vst [vmem:[%s798 + $0xa8] sm:$0xf] %v904
  %906 = vst.msk [vmem:[%s798 + $0xac] sm:$0xf] %vm805, %v411
  %v907 = vld [vmem:[%s798 + $0xb0] sm:$0x1]
  %v908 = vsel %vm808, %v412, %v907
  %909 = vst [vmem:[%s798 + $0xb0] sm:$0x1] %v908
  %v910 = vld [vmem:[%s798 + $0xb4] sm:$0xf]
  %v911 = vsel %vm801, %v419, %v910
  %912 = vst [vmem:[%s798 + $0xb4] sm:$0xf] %v911
  %913 = vst.msk [vmem:[%s798 + $0xb8] sm:$0xf] %vm805, %v428
  %v914 = vld [vmem:[%s798 + $0xbc] sm:$0x1]
  %v915 = vsel %vm808, %v429, %v914
  %916 = vst [vmem:[%s798 + $0xbc] sm:$0x1] %v915
  %v917 = vld [vmem:[%s798 + $0xd8] sm:$0xf]
  %v918 = vsel %vm801, %v436, %v917
  %919 = vst [vmem:[%s798 + $0xd8] sm:$0xf] %v918
  %920 = vst.msk [vmem:[%s798 + $0xdc] sm:$0xf] %vm805, %v445
  %v921 = vld [vmem:[%s798 + $0xe0] sm:$0x1]
  %v922 = vsel %vm808, %v446, %v921
  %923 = vst [vmem:[%s798 + $0xe0] sm:$0x1] %v922
  %v924 = vld [vmem:[%s798 + $0xe4] sm:$0xf]
  %v925 = vsel %vm801, %v453, %v924
  %926 = vst [vmem:[%s798 + $0xe4] sm:$0xf] %v925
  %927 = vst.msk [vmem:[%s798 + $0xe8] sm:$0xf] %vm805, %v462
  %v928 = vld [vmem:[%s798 + $0xec] sm:$0x1]
  %v929 = vsel %vm808, %v463, %v928
  %930 = vst [vmem:[%s798 + $0xec] sm:$0x1] %v929
  %v931 = vld [vmem:[%s798 + $0xf0] sm:$0xf]
  %v932 = vsel %vm801, %v470, %v931
  %933 = vst [vmem:[%s798 + $0xf0] sm:$0xf] %v932
  %934 = vst.msk [vmem:[%s798 + $0xf4] sm:$0xf] %vm805, %v479
  %v935 = vld [vmem:[%s798 + $0xf8] sm:$0x1]
  %v936 = vsel %vm808, %v480, %v935
  %937 = vst [vmem:[%s798 + $0xf8] sm:$0x1] %v936
  %v938 = vld [vmem:[%s798 + $0xfc] sm:$0xf]
  %v939 = vsel %vm801, %v487, %v938
  %940 = vst [vmem:[%s798 + $0xfc] sm:$0xf] %v939
  %941 = vst.msk [vmem:[%s798 + $0x100] sm:$0xf] %vm805, %v496
  %v942 = vld [vmem:[%s798 + $0x104] sm:$0x1]
  %v943 = vsel %vm808, %v497, %v942
  %944 = vst [vmem:[%s798 + $0x104] sm:$0x1] %v943
  %v945 = vld [vmem:[%s798 + $0x108] sm:$0xf]
  %v946 = vsel %vm801, %v504, %v945
  %947 = vst [vmem:[%s798 + $0x108] sm:$0xf] %v946
  %948 = vst.msk [vmem:[%s798 + $0x10c] sm:$0xf] %vm805, %v513
  %v949 = vld [vmem:[%s798 + $0x110] sm:$0x1]
  %v950 = vsel %vm808, %v514, %v949
  %951 = vst [vmem:[%s798 + $0x110] sm:$0x1] %v950
  %v952 = vld [vmem:[%s798 + $0x114] sm:$0xf]
  %v953 = vsel %vm801, %v521, %v952
  %954 = vst [vmem:[%s798 + $0x114] sm:$0xf] %v953
  %955 = vst.msk [vmem:[%s798 + $0x118] sm:$0xf] %vm805, %v530
  %v956 = vld [vmem:[%s798 + $0x11c] sm:$0x1]
  %v957 = vsel %vm808, %v531, %v956
  %958 = vst [vmem:[%s798 + $0x11c] sm:$0x1] %v957
  %v959 = vld [vmem:[%s798 + $0x120] sm:$0xf]
  %v960 = vsel %vm801, %v538, %v959
  %961 = vst [vmem:[%s798 + $0x120] sm:$0xf] %v960
  %962 = vst.msk [vmem:[%s798 + $0x124] sm:$0xf] %vm805, %v547
  %v963 = vld [vmem:[%s798 + $0x128] sm:$0x1]
  %v964 = vsel %vm808, %v548, %v963
  %965 = vst [vmem:[%s798 + $0x128] sm:$0x1] %v964
  %v966 = vld [vmem:[%s798 + $0x12c] sm:$0xf]
  %v967 = vsel %vm801, %v555, %v966
  %968 = vst [vmem:[%s798 + $0x12c] sm:$0xf] %v967
  %969 = vst.msk [vmem:[%s798 + $0x130] sm:$0xf] %vm805, %v564
  %v970 = vld [vmem:[%s798 + $0x134] sm:$0x1]
  %v971 = vsel %vm808, %v565, %v970
  %972 = vst [vmem:[%s798 + $0x134] sm:$0x1] %v971
  %v973 = vld [vmem:[%s798 + $0x138] sm:$0xf]
  %v974 = vsel %vm801, %v572, %v973
  %975 = vst [vmem:[%s798 + $0x138] sm:$0xf] %v974
  %976 = vst.msk [vmem:[%s798 + $0x13c] sm:$0xf] %vm805, %v581
  %v977 = vld [vmem:[%s798 + $0x140] sm:$0x1]
  %v978 = vsel %vm808, %v582, %v977
  %979 = vst [vmem:[%s798 + $0x140] sm:$0x1] %v978
  %v980 = vld [vmem:[%s798 + $0x144] sm:$0xf]
  %v981 = vsel %vm801, %v589, %v980
  %982 = vst [vmem:[%s798 + $0x144] sm:$0xf] %v981
  %983 = vst.msk [vmem:[%s798 + $0x148] sm:$0xf] %vm805, %v598
  %v984 = vld [vmem:[%s798 + $0x14c] sm:$0x1]
  %v985 = vsel %vm808, %v599, %v984
  %986 = vst [vmem:[%s798 + $0x14c] sm:$0x1] %v985
  %v987 = vld [vmem:[%s798 + $0x150] sm:$0xf]
  %v988 = vsel %vm801, %v606, %v987
  %989 = vst [vmem:[%s798 + $0x150] sm:$0xf] %v988
  %990 = vst.msk [vmem:[%s798 + $0x154] sm:$0xf] %vm805, %v615
  %v991 = vld [vmem:[%s798 + $0x158] sm:$0x1]
  %v992 = vsel %vm808, %v616, %v991
  %993 = vst [vmem:[%s798 + $0x158] sm:$0x1] %v992
  %v994 = vld [vmem:[%s798 + $0x15c] sm:$0xf]
  %v995 = vsel %vm801, %v623, %v994
  %996 = vst [vmem:[%s798 + $0x15c] sm:$0xf] %v995
  %997 = vst.msk [vmem:[%s798 + $0x160] sm:$0xf] %vm805, %v632
  %v998 = vld [vmem:[%s798 + $0x164] sm:$0x1]
  %v999 = vsel %vm808, %v633, %v998
  %1000 = vst [vmem:[%s798 + $0x164] sm:$0x1] %v999
  %v1001 = vld [vmem:[%s798 + $0x168] sm:$0xf]
  %v1002 = vsel %vm801, %v640, %v1001
  %1003 = vst [vmem:[%s798 + $0x168] sm:$0xf] %v1002
  %1004 = vst.msk [vmem:[%s798 + $0x16c] sm:$0xf] %vm805, %v649
  %v1005 = vld [vmem:[%s798 + $0x170] sm:$0x1]
  %v1006 = vsel %vm808, %v650, %v1005
  %1007 = vst [vmem:[%s798 + $0x170] sm:$0x1] %v1006
  %v1008 = vld [vmem:[%s798 + $0x174] sm:$0xf]
  %v1009 = vsel %vm801, %v657, %v1008
  %1010 = vst [vmem:[%s798 + $0x174] sm:$0xf] %v1009
  %1011 = vst.msk [vmem:[%s798 + $0x178] sm:$0xf] %vm805, %v666
  %v1012 = vld [vmem:[%s798 + $0x17c] sm:$0x1]
  %v1013 = vsel %vm808, %v667, %v1012
  %1014 = vst [vmem:[%s798 + $0x17c] sm:$0x1] %v1013
  %v1015 = vld [vmem:[%s798 + $0x180] sm:$0xf]
  %v1016 = vsel %vm801, %v674, %v1015
  %1017 = vst [vmem:[%s798 + $0x180] sm:$0xf] %v1016
  %1018 = vst.msk [vmem:[%s798 + $0x184] sm:$0xf] %vm805, %v683
  %v1019 = vld [vmem:[%s798 + $0x188] sm:$0x1]
  %v1020 = vsel %vm808, %v684, %v1019
  %1021 = vst [vmem:[%s798 + $0x188] sm:$0x1] %v1020
  %v1022 = vld [vmem:[%s798 + $0x18c] sm:$0xf]
  %v1023 = vsel %vm801, %v691, %v1022
  %1024 = vst [vmem:[%s798 + $0x18c] sm:$0xf] %v1023
  %1025 = vst.msk [vmem:[%s798 + $0x190] sm:$0xf] %vm805, %v700
  %v1026 = vld [vmem:[%s798 + $0x194] sm:$0x1]
  %v1027 = vsel %vm808, %v701, %v1026
  %1028 = vst [vmem:[%s798 + $0x194] sm:$0x1] %v1027
  %1029 = vst.msk [vmem:[#allocation2] sm:$0xf] %vm805, 0
  %1030 = vst.msk [vmem:[#allocation2 + $0x4] sm:$0xf] %vm805, 0
  %vm1031 = vcmask 24576
  %1032 = vst.msk [vmem:[#allocation2 + $0x8] sm:$0x1] %vm1031, 0
  %1033 = vst.msk [vmem:[#allocation2 + $0xd8] sm:$0xf] %vm805, 0
  %1034 = vst.msk [vmem:[#allocation2 + $0xdc] sm:$0xf] %vm805, 0
  %1035 = vst.msk [vmem:[#allocation2 + $0xe0] sm:$0x1] %vm1031, 0
  %s1036 = scalar_lea.vmem [#allocation2], 204
  %1037 = vst.msk [vmem:[%s1036] sm:$0xf] %vm805, 0
  %1038 = vst.msk [vmem:[%s1036 + $0x4] sm:$0xf] %vm805, 0
  %1039 = vst.msk [vmem:[%s1036 + $0x8] sm:$0x1] %vm1031, 0
  %1040 = vst.msk [vmem:[%s1036 + $0xd8] sm:$0xf] %vm805, 0
  %1041 = vst.msk [vmem:[%s1036 + $0xdc] sm:$0xf] %vm805, 0
  %1042 = vst.msk [vmem:[%s1036 + $0xe0] sm:$0x1] %vm1031, 0
  %v1043 = vld [vmem:[%s798] sm:$0x1]
  %v1044 = vsel %vm808, 0, %v1043
  %1045 = vst [vmem:[%s798] sm:$0x1] %v1044
  %v1046 = vld [vmem:[%s798 + $0xc] sm:$0x1]
  %v1047 = vsel %vm808, 0, %v1046
  %1048 = vst [vmem:[%s798 + $0xc] sm:$0x1] %v1047
  %v1049 = vld [vmem:[%s798 + $0x18] sm:$0x1]
  %v1050 = vsel %vm808, 0, %v1049
  %1051 = vst [vmem:[%s798 + $0x18] sm:$0x1] %v1050
  %v1052 = vld [vmem:[%s798 + $0x24] sm:$0x1]
  %v1053 = vsel %vm808, 0, %v1052
  %1054 = vst [vmem:[%s798 + $0x24] sm:$0x1] %v1053
  %v1055 = vld [vmem:[%s798 + $0x30] sm:$0x1]
  %v1056 = vsel %vm808, 0, %v1055
  %1057 = vst [vmem:[%s798 + $0x30] sm:$0x1] %v1056
  %v1058 = vld [vmem:[%s798 + $0x3c] sm:$0x1]
  %v1059 = vsel %vm808, 0, %v1058
  %1060 = vst [vmem:[%s798 + $0x3c] sm:$0x1] %v1059
  %v1061 = vld [vmem:[%s798 + $0x48] sm:$0x1]
  %v1062 = vsel %vm808, 0, %v1061
  %1063 = vst [vmem:[%s798 + $0x48] sm:$0x1] %v1062
  %v1064 = vld [vmem:[%s798 + $0x54] sm:$0x1]
  %v1065 = vsel %vm808, 0, %v1064
  %1066 = vst [vmem:[%s798 + $0x54] sm:$0x1] %v1065
  %v1067 = vld [vmem:[%s798 + $0x60] sm:$0x1]
  %v1068 = vsel %vm808, 0, %v1067
  %1069 = vst [vmem:[%s798 + $0x60] sm:$0x1] %v1068
  %v1070 = vld [vmem:[%s798 + $0x6c] sm:$0x1]
  %v1071 = vsel %vm808, 0, %v1070
  %1072 = vst [vmem:[%s798 + $0x6c] sm:$0x1] %v1071
  %v1073 = vld [vmem:[%s798 + $0x78] sm:$0x1]
  %v1074 = vsel %vm808, 0, %v1073
  %1075 = vst [vmem:[%s798 + $0x78] sm:$0x1] %v1074
  %v1076 = vld [vmem:[%s798 + $0x84] sm:$0x1]
  %v1077 = vsel %vm808, 0, %v1076
  %1078 = vst [vmem:[%s798 + $0x84] sm:$0x1] %v1077
  %v1079 = vld [vmem:[%s798 + $0x90] sm:$0x1]
  %v1080 = vsel %vm808, 0, %v1079
  %1081 = vst [vmem:[%s798 + $0x90] sm:$0x1] %v1080
  %v1082 = vld [vmem:[%s798 + $0x9c] sm:$0x1]
  %v1083 = vsel %vm808, 0, %v1082
  %1084 = vst [vmem:[%s798 + $0x9c] sm:$0x1] %v1083
  %v1085 = vld [vmem:[%s798 + $0xa8] sm:$0x1]
  %v1086 = vsel %vm808, 0, %v1085
  %1087 = vst [vmem:[%s798 + $0xa8] sm:$0x1] %v1086
  %v1088 = vld [vmem:[%s798 + $0xb4] sm:$0x1]
  %v1089 = vsel %vm808, 0, %v1088
  %1090 = vst [vmem:[%s798 + $0xb4] sm:$0x1] %v1089
  %v1091 = vld [vmem:[%s798 + $0xd8] sm:$0x1]
  %v1092 = vsel %vm808, 0, %v1091
  %1093 = vst [vmem:[%s798 + $0xd8] sm:$0x1] %v1092
  %v1094 = vld [vmem:[%s798 + $0xe4] sm:$0x1]
  %v1095 = vsel %vm808, 0, %v1094
  %1096 = vst [vmem:[%s798 + $0xe4] sm:$0x1] %v1095
  %v1097 = vld [vmem:[%s798 + $0xf0] sm:$0x1]
  %v1098 = vsel %vm808, 0, %v1097
  %1099 = vst [vmem:[%s798 + $0xf0] sm:$0x1] %v1098
  %v1100 = vld [vmem:[%s798 + $0xfc] sm:$0x1]
  %v1101 = vsel %vm808, 0, %v1100
  %1102 = vst [vmem:[%s798 + $0xfc] sm:$0x1] %v1101
  %v1103 = vld [vmem:[%s798 + $0x108] sm:$0x1]
  %v1104 = vsel %vm808, 0, %v1103
  %1105 = vst [vmem:[%s798 + $0x108] sm:$0x1] %v1104
  %v1106 = vld [vmem:[%s798 + $0x114] sm:$0x1]
  %v1107 = vsel %vm808, 0, %v1106
  %1108 = vst [vmem:[%s798 + $0x114] sm:$0x1] %v1107
  %v1109 = vld [vmem:[%s798 + $0x120] sm:$0x1]
  %v1110 = vsel %vm808, 0, %v1109
  %1111 = vst [vmem:[%s798 + $0x120] sm:$0x1] %v1110
  %v1112 = vld [vmem:[%s798 + $0x12c] sm:$0x1]
  %v1113 = vsel %vm808, 0, %v1112
  %1114 = vst [vmem:[%s798 + $0x12c] sm:$0x1] %v1113
  %v1115 = vld [vmem:[%s798 + $0x138] sm:$0x1]
  %v1116 = vsel %vm808, 0, %v1115
  %1117 = vst [vmem:[%s798 + $0x138] sm:$0x1] %v1116
  %v1118 = vld [vmem:[%s798 + $0x144] sm:$0x1]
  %v1119 = vsel %vm808, 0, %v1118
  %1120 = vst [vmem:[%s798 + $0x144] sm:$0x1] %v1119
  %v1121 = vld [vmem:[%s798 + $0x150] sm:$0x1]
  %v1122 = vsel %vm808, 0, %v1121
  %1123 = vst [vmem:[%s798 + $0x150] sm:$0x1] %v1122
  %v1124 = vld [vmem:[%s798 + $0x15c] sm:$0x1]
  %v1125 = vsel %vm808, 0, %v1124
  %1126 = vst [vmem:[%s798 + $0x15c] sm:$0x1] %v1125
  %v1127 = vld [vmem:[%s798 + $0x168] sm:$0x1]
  %v1128 = vsel %vm808, 0, %v1127
  %1129 = vst [vmem:[%s798 + $0x168] sm:$0x1] %v1128
  %v1130 = vld [vmem:[%s798 + $0x174] sm:$0x1]
  %v1131 = vsel %vm808, 0, %v1130
  %1132 = vst [vmem:[%s798 + $0x174] sm:$0x1] %v1131
  %v1133 = vld [vmem:[%s798 + $0x180] sm:$0x1]
  %v1134 = vsel %vm808, 0, %v1133
  %1135 = vst [vmem:[%s798 + $0x180] sm:$0x1] %v1134
  %v1136 = vld [vmem:[%s798 + $0x18c] sm:$0x1]
  %v1137 = vsel %vm808, 0, %v1136
  %1138 = vst [vmem:[%s798 + $0x18c] sm:$0x1] %v1137
  %vm1139 = vmand %vm807, %vm800
  %v1140 = vld [vmem:[%s798 + $0x8] sm:$0x1]
  %v1141 = vsel %vm1139, 0, %v1140
  %1142 = vst [vmem:[%s798 + $0x8] sm:$0x1] %v1141
  %v1143 = vld [vmem:[%s798 + $0x14] sm:$0x1]
  %v1144 = vsel %vm1139, 0, %v1143
  %1145 = vst [vmem:[%s798 + $0x14] sm:$0x1] %v1144
  %v1146 = vld [vmem:[%s798 + $0x20] sm:$0x1]
  %v1147 = vsel %vm1139, 0, %v1146
  %1148 = vst [vmem:[%s798 + $0x20] sm:$0x1] %v1147
  %v1149 = vld [vmem:[%s798 + $0x2c] sm:$0x1]
  %v1150 = vsel %vm1139, 0, %v1149
  %1151 = vst [vmem:[%s798 + $0x2c] sm:$0x1] %v1150
  %v1152 = vld [vmem:[%s798 + $0x38] sm:$0x1]
  %v1153 = vsel %vm1139, 0, %v1152
  %1154 = vst [vmem:[%s798 + $0x38] sm:$0x1] %v1153
  %v1155 = vld [vmem:[%s798 + $0x44] sm:$0x1]
  %v1156 = vsel %vm1139, 0, %v1155
  %1157 = vst [vmem:[%s798 + $0x44] sm:$0x1] %v1156
  %v1158 = vld [vmem:[%s798 + $0x50] sm:$0x1]
  %v1159 = vsel %vm1139, 0, %v1158
  %1160 = vst [vmem:[%s798 + $0x50] sm:$0x1] %v1159
  %v1161 = vld [vmem:[%s798 + $0x5c] sm:$0x1]
  %v1162 = vsel %vm1139, 0, %v1161
  %1163 = vst [vmem:[%s798 + $0x5c] sm:$0x1] %v1162
  %v1164 = vld [vmem:[%s798 + $0x68] sm:$0x1]
  %v1165 = vsel %vm1139, 0, %v1164
  %1166 = vst [vmem:[%s798 + $0x68] sm:$0x1] %v1165
  %v1167 = vld [vmem:[%s798 + $0x74] sm:$0x1]
  %v1168 = vsel %vm1139, 0, %v1167
  %1169 = vst [vmem:[%s798 + $0x74] sm:$0x1] %v1168
  %v1170 = vld [vmem:[%s798 + $0x80] sm:$0x1]
  %v1171 = vsel %vm1139, 0, %v1170
  %1172 = vst [vmem:[%s798 + $0x80] sm:$0x1] %v1171
  %v1173 = vld [vmem:[%s798 + $0x8c] sm:$0x1]
  %v1174 = vsel %vm1139, 0, %v1173
  %1175 = vst [vmem:[%s798 + $0x8c] sm:$0x1] %v1174
  %v1176 = vld [vmem:[%s798 + $0x98] sm:$0x1]
  %v1177 = vsel %vm1139, 0, %v1176
  %1178 = vst [vmem:[%s798 + $0x98] sm:$0x1] %v1177
  %v1179 = vld [vmem:[%s798 + $0xa4] sm:$0x1]
  %v1180 = vsel %vm1139, 0, %v1179
  %1181 = vst [vmem:[%s798 + $0xa4] sm:$0x1] %v1180
  %v1182 = vld [vmem:[%s798 + $0xb0] sm:$0x1]
  %v1183 = vsel %vm1139, 0, %v1182
  %1184 = vst [vmem:[%s798 + $0xb0] sm:$0x1] %v1183
  %v1185 = vld [vmem:[%s798 + $0xbc] sm:$0x1]
  %v1186 = vsel %vm1139, 0, %v1185
  %1187 = vst [vmem:[%s798 + $0xbc] sm:$0x1] %v1186
  %v1188 = vld [vmem:[%s798 + $0xe0] sm:$0x1]
  %v1189 = vsel %vm1139, 0, %v1188
  %1190 = vst [vmem:[%s798 + $0xe0] sm:$0x1] %v1189
  %v1191 = vld [vmem:[%s798 + $0xec] sm:$0x1]
  %v1192 = vsel %vm1139, 0, %v1191
  %1193 = vst [vmem:[%s798 + $0xec] sm:$0x1] %v1192
  %v1194 = vld [vmem:[%s798 + $0xf8] sm:$0x1]
  %v1195 = vsel %vm1139, 0, %v1194
  %1196 = vst [vmem:[%s798 + $0xf8] sm:$0x1] %v1195
  %v1197 = vld [vmem:[%s798 + $0x104] sm:$0x1]
  %v1198 = vsel %vm1139, 0, %v1197
  %1199 = vst [vmem:[%s798 + $0x104] sm:$0x1] %v1198
  %v1200 = vld [vmem:[%s798 + $0x110] sm:$0x1]
  %v1201 = vsel %vm1139, 0, %v1200
  %1202 = vst [vmem:[%s798 + $0x110] sm:$0x1] %v1201
  %v1203 = vld [vmem:[%s798 + $0x11c] sm:$0x1]
  %v1204 = vsel %vm1139, 0, %v1203
  %1205 = vst [vmem:[%s798 + $0x11c] sm:$0x1] %v1204
  %v1206 = vld [vmem:[%s798 + $0x128] sm:$0x1]
  %v1207 = vsel %vm1139, 0, %v1206
  %1208 = vst [vmem:[%s798 + $0x128] sm:$0x1] %v1207
  %v1209 = vld [vmem:[%s798 + $0x134] sm:$0x1]
  %v1210 = vsel %vm1139, 0, %v1209
  %1211 = vst [vmem:[%s798 + $0x134] sm:$0x1] %v1210
  %v1212 = vld [vmem:[%s798 + $0x140] sm:$0x1]
  %v1213 = vsel %vm1139, 0, %v1212
  %1214 = vst [vmem:[%s798 + $0x140] sm:$0x1] %v1213
  %v1215 = vld [vmem:[%s798 + $0x14c] sm:$0x1]
  %v1216 = vsel %vm1139, 0, %v1215
  %1217 = vst [vmem:[%s798 + $0x14c] sm:$0x1] %v1216
  %v1218 = vld [vmem:[%s798 + $0x158] sm:$0x1]
  %v1219 = vsel %vm1139, 0, %v1218
  %1220 = vst [vmem:[%s798 + $0x158] sm:$0x1] %v1219
  %v1221 = vld [vmem:[%s798 + $0x164] sm:$0x1]
  %v1222 = vsel %vm1139, 0, %v1221
  %1223 = vst [vmem:[%s798 + $0x164] sm:$0x1] %v1222
  %v1224 = vld [vmem:[%s798 + $0x170] sm:$0x1]
  %v1225 = vsel %vm1139, 0, %v1224
  %1226 = vst [vmem:[%s798 + $0x170] sm:$0x1] %v1225
  %v1227 = vld [vmem:[%s798 + $0x17c] sm:$0x1]
  %v1228 = vsel %vm1139, 0, %v1227
  %1229 = vst [vmem:[%s798 + $0x17c] sm:$0x1] %v1228
  %v1230 = vld [vmem:[%s798 + $0x188] sm:$0x1]
  %v1231 = vsel %vm1139, 0, %v1230
  %1232 = vst [vmem:[%s798 + $0x188] sm:$0x1] %v1231
  %v1233 = vld [vmem:[%s798 + $0x194] sm:$0x1]
  %v1234 = vsel %vm1139, 0, %v1233
  %1235 = vst [vmem:[%s798 + $0x194] sm:$0x1] %v1234
  %v1236 = vld [vmem:[#allocation2] sm:$0xf]
  %v1237 = vld [vmem:[#allocation2 + $0x4] sm:$0xf]
  %v1238 = vld [vmem:[#allocation2 + $0x8] sm:$0x1]
  %v1239 = vld [vmem:[#allocation2 + $0xc] sm:$0xf]
  %v1240 = vld [vmem:[#allocation2 + $0x10] sm:$0xf]
  %v1241 = vld [vmem:[#allocation2 + $0x14] sm:$0x1]
  %v1242 = vld [vmem:[#allocation2 + $0x18] sm:$0xf]
  %v1243 = vld [vmem:[#allocation2 + $0x1c] sm:$0xf]
  %v1244 = vld [vmem:[#allocation2 + $0x20] sm:$0x1]
  %v1245 = vld [vmem:[#allocation2 + $0x24] sm:$0xf]
  %v1246 = vld [vmem:[#allocation2 + $0x28] sm:$0xf]
  %v1247 = vld [vmem:[#allocation2 + $0x2c] sm:$0x1]
  %v1248 = vld [vmem:[#allocation2 + $0x30] sm:$0xf]
  %v1249 = vld [vmem:[#allocation2 + $0x34] sm:$0xf]
  %v1250 = vld [vmem:[#allocation2 + $0x38] sm:$0x1]
  %v1251 = vld [vmem:[#allocation2 + $0x3c] sm:$0xf]
  %v1252 = vld [vmem:[#allocation2 + $0x40] sm:$0xf]
  %v1253 = vld [vmem:[#allocation2 + $0x44] sm:$0x1]
  %v1254 = vld [vmem:[#allocation2 + $0x48] sm:$0xf]
  %v1255 = vld [vmem:[#allocation2 + $0x4c] sm:$0xf]
  %v1256 = vld [vmem:[#allocation2 + $0x50] sm:$0x1]
  %v1257 = vld [vmem:[#allocation2 + $0x54] sm:$0xf]
  %v1258 = vld [vmem:[#allocation2 + $0x58] sm:$0xf]
  %v1259 = vld [vmem:[#allocation2 + $0x5c] sm:$0x1]
  %v1260 = vld [vmem:[#allocation2 + $0x60] sm:$0xf]
  %v1261 = vld [vmem:[#allocation2 + $0x64] sm:$0xf]
  %v1262 = vld [vmem:[#allocation2 + $0x68] sm:$0x1]
  %v1263 = vld [vmem:[#allocation2 + $0x6c] sm:$0xf]
  %v1264 = vld [vmem:[#allocation2 + $0x70] sm:$0xf]
  %v1265 = vld [vmem:[#allocation2 + $0x74] sm:$0x1]
  %v1266 = vld [vmem:[#allocation2 + $0x78] sm:$0xf]
  %v1267 = vld [vmem:[#allocation2 + $0x7c] sm:$0xf]
  %v1268 = vld [vmem:[#allocation2 + $0x80] sm:$0x1]
  %v1269 = vld [vmem:[#allocation2 + $0x84] sm:$0xf]
  %v1270 = vld [vmem:[#allocation2 + $0x88] sm:$0xf]
  %v1271 = vld [vmem:[#allocation2 + $0x8c] sm:$0x1]
  %v1272 = vld [vmem:[#allocation2 + $0x90] sm:$0xf]
  %v1273 = vld [vmem:[#allocation2 + $0x94] sm:$0xf]
  %v1274 = vld [vmem:[#allocation2 + $0x98] sm:$0x1]
  %v1275 = vld [vmem:[#allocation2 + $0x9c] sm:$0xf]
  %v1276 = vld [vmem:[#allocation2 + $0xa0] sm:$0xf]
  %v1277 = vld [vmem:[#allocation2 + $0xa4] sm:$0x1]
  %v1278 = vld [vmem:[#allocation2 + $0xa8] sm:$0xf]
  %v1279 = vld [vmem:[#allocation2 + $0xac] sm:$0xf]
  %v1280 = vld [vmem:[#allocation2 + $0xb0] sm:$0x1]
  %v1281 = vld [vmem:[#allocation2 + $0xb4] sm:$0xf]
  %v1282 = vld [vmem:[#allocation2 + $0xb8] sm:$0xf]
  %v1283 = vld [vmem:[#allocation2 + $0xbc] sm:$0x1]
  %v1284 = vld [vmem:[#allocation2 + $0xc0] sm:$0xf]
  %v1285 = vld [vmem:[#allocation2 + $0xc4] sm:$0xf]
  %v1286 = vld [vmem:[#allocation2 + $0xc8] sm:$0x1]
  %v1287 = vld [vmem:[#allocation2 + $0xcc] sm:$0xf]
  %v1288 = vld [vmem:[#allocation2 + $0xd0] sm:$0xf]
  %v1289 = vld [vmem:[#allocation2 + $0xd4] sm:$0x1]
  %v1290 = vld [vmem:[#allocation2 + $0xd8] sm:$0xf]
  %v1291 = vld [vmem:[#allocation2 + $0xdc] sm:$0xf]
  %v1292 = vld [vmem:[#allocation2 + $0xe0] sm:$0x1]
  %v1293 = vld [vmem:[#allocation2 + $0xe4] sm:$0xf]
  %v1294 = vld [vmem:[#allocation2 + $0xe8] sm:$0xf]
  %v1295 = vld [vmem:[#allocation2 + $0xec] sm:$0x1]
  %v1296 = vld [vmem:[#allocation2 + $0xf0] sm:$0xf]
  %v1297 = vld [vmem:[#allocation2 + $0xf4] sm:$0xf]
  %v1298 = vld [vmem:[#allocation2 + $0xf8] sm:$0x1]
  %v1299 = vld [vmem:[#allocation2 + $0xfc] sm:$0xf]
  %v1300 = vld [vmem:[#allocation2 + $0x100] sm:$0xf]
  %v1301 = vld [vmem:[#allocation2 + $0x104] sm:$0x1]
  %v1302 = vld [vmem:[#allocation2 + $0x108] sm:$0xf]
  %v1303 = vld [vmem:[#allocation2 + $0x10c] sm:$0xf]
  %v1304 = vld [vmem:[#allocation2 + $0x110] sm:$0x1]
  %v1305 = vld [vmem:[#allocation2 + $0x114] sm:$0xf]
  %v1306 = vld [vmem:[#allocation2 + $0x118] sm:$0xf]
  %v1307 = vld [vmem:[#allocation2 + $0x11c] sm:$0x1]
  %v1308 = vld [vmem:[#allocation2 + $0x120] sm:$0xf]
  %v1309 = vld [vmem:[#allocation2 + $0x124] sm:$0xf]
  %v1310 = vld [vmem:[#allocation2 + $0x128] sm:$0x1]
  %v1311 = vld [vmem:[#allocation2 + $0x12c] sm:$0xf]
  %v1312 = vld [vmem:[#allocation2 + $0x130] sm:$0xf]
  %v1313 = vld [vmem:[#allocation2 + $0x134] sm:$0x1]
  %v1314 = vld [vmem:[#allocation2 + $0x138] sm:$0xf]
  %v1315 = vld [vmem:[#allocation2 + $0x13c] sm:$0xf]
  %v1316 = vld [vmem:[#allocation2 + $0x140] sm:$0x1]
  %v1317 = vld [vmem:[#allocation2 + $0x144] sm:$0xf]
  %v1318 = vld [vmem:[#allocation2 + $0x148] sm:$0xf]
  %v1319 = vld [vmem:[#allocation2 + $0x14c] sm:$0x1]
  %v1320 = vld [vmem:[#allocation2 + $0x150] sm:$0xf]
  %v1321 = vld [vmem:[#allocation2 + $0x154] sm:$0xf]
  %v1322 = vld [vmem:[#allocation2 + $0x158] sm:$0x1]
  %v1323 = vld [vmem:[#allocation2 + $0x15c] sm:$0xf]
  %v1324 = vld [vmem:[#allocation2 + $0x160] sm:$0xf]
  %v1325 = vld [vmem:[#allocation2 + $0x164] sm:$0x1]
  %v1326 = vld [vmem:[#allocation2 + $0x168] sm:$0xf]
  %v1327 = vld [vmem:[#allocation2 + $0x16c] sm:$0xf]
  %v1328 = vld [vmem:[#allocation2 + $0x170] sm:$0x1]
  %v1329 = vld [vmem:[#allocation2 + $0x174] sm:$0xf]
  %v1330 = vld [vmem:[#allocation2 + $0x178] sm:$0xf]
  %v1331 = vld [vmem:[#allocation2 + $0x17c] sm:$0x1]
  %v1332 = vld [vmem:[#allocation2 + $0x180] sm:$0xf]
  %v1333 = vld [vmem:[#allocation2 + $0x184] sm:$0xf]
  %v1334 = vld [vmem:[#allocation2 + $0x188] sm:$0x1]
  %v1335 = vld [vmem:[#allocation2 + $0x18c] sm:$0xf]
  %v1336 = vld [vmem:[#allocation2 + $0x190] sm:$0xf]
  %v1337 = vld [vmem:[#allocation2 + $0x194] sm:$0x1]
  %v1338 = vld [vmem:[#allocation2 + $0x198] sm:$0xf]
  %v1339 = vld [vmem:[#allocation2 + $0x19c] sm:$0xf]
  %v1340 = vld [vmem:[#allocation2 + $0x1a0] sm:$0x1]
  %v1341 = vld [vmem:[#allocation2 + $0x1a4] sm:$0xf]
  %v1342 = vld [vmem:[#allocation2 + $0x1a8] sm:$0xf]
  %v1343 = vld [vmem:[#allocation2 + $0x1ac] sm:$0x1]
  %v1344 = vld [vmem:[%s1] sm:$0x3]
  %vm1345 = vsmask.f32 3328
  %vm1346 = vsmask.f32 7440
  %vm1347 = vmor %vm1345, %vm1346
  %v1349 = vshrl.u32 %v1236, 16
  %v1351 = vrot.slane %v1349, 4
  %v1352 = vshll.u32 %v1236, 16
  %v1354 = vrot.slane %v1352, 5
  %v1355 = vor.u32 %v1351, %v1354
  %v1356 = vrot.slane %v1355, 4
  %v1358 = vshll.u32 %v1237, 16
  %v1360 = vrot.slane %v1358, 5
  %v1361 = vsel %vm1347, %v1356, %v1360
  %v1362 = vshrl.u32 %v1237, 16
  %v1364 = vrot.slane %v1362, 4
  %v1365 = vor.u32 %v1364, %v1360
  %v1366 = vrot.slane %v1365, 4
  %v1368 = vshll.u32 %v1238, 16
  %v1370 = vrot.slane %v1368, 5
  %v1371 = vsel %vm1347, %v1366, %v1370
  %v1373 = vshrl.u32 %v1239, 16
  %v1375 = vrot.slane %v1373, 4
  %v1376 = vshll.u32 %v1239, 16
  %v1378 = vrot.slane %v1376, 5
  %v1379 = vor.u32 %v1375, %v1378
  %v1380 = vrot.slane %v1379, 4
  %v1382 = vshll.u32 %v1240, 16
  %v1384 = vrot.slane %v1382, 5
  %v1385 = vsel %vm1347, %v1380, %v1384
  %v1386 = vshrl.u32 %v1240, 16
  %v1388 = vrot.slane %v1386, 4
  %v1389 = vor.u32 %v1388, %v1384
  %v1390 = vrot.slane %v1389, 4
  %v1392 = vshll.u32 %v1241, 16
  %v1394 = vrot.slane %v1392, 5
  %v1395 = vsel %vm1347, %v1390, %v1394
  %v1397 = vshrl.u32 %v1242, 16
  %v1399 = vrot.slane %v1397, 4
  %v1400 = vshll.u32 %v1242, 16
  %v1402 = vrot.slane %v1400, 5
  %v1403 = vor.u32 %v1399, %v1402
  %v1404 = vrot.slane %v1403, 4
  %v1406 = vshll.u32 %v1243, 16
  %v1408 = vrot.slane %v1406, 5
  %v1409 = vsel %vm1347, %v1404, %v1408
  %v1410 = vshrl.u32 %v1243, 16
  %v1412 = vrot.slane %v1410, 4
  %v1413 = vor.u32 %v1412, %v1408
  %v1414 = vrot.slane %v1413, 4
  %v1416 = vshll.u32 %v1244, 16
  %v1418 = vrot.slane %v1416, 5
  %v1419 = vsel %vm1347, %v1414, %v1418
  %v1421 = vshrl.u32 %v1245, 16
  %v1423 = vrot.slane %v1421, 4
  %v1424 = vshll.u32 %v1245, 16
  %v1426 = vrot.slane %v1424, 5
  %v1427 = vor.u32 %v1423, %v1426
  %v1428 = vrot.slane %v1427, 4
  %v1430 = vshll.u32 %v1246, 16
  %v1432 = vrot.slane %v1430, 5
  %v1433 = vsel %vm1347, %v1428, %v1432
  %v1434 = vshrl.u32 %v1246, 16
  %v1436 = vrot.slane %v1434, 4
  %v1437 = vor.u32 %v1436, %v1432
  %v1438 = vrot.slane %v1437, 4
  %v1440 = vshll.u32 %v1247, 16
  %v1442 = vrot.slane %v1440, 5
  %v1443 = vsel %vm1347, %v1438, %v1442
  %v1445 = vshrl.u32 %v1248, 16
  %v1447 = vrot.slane %v1445, 4
  %v1448 = vshll.u32 %v1248, 16
  %v1450 = vrot.slane %v1448, 5
  %v1451 = vor.u32 %v1447, %v1450
  %v1452 = vrot.slane %v1451, 4
  %v1454 = vshll.u32 %v1249, 16
  %v1456 = vrot.slane %v1454, 5
  %v1457 = vsel %vm1347, %v1452, %v1456
  %v1458 = vshrl.u32 %v1249, 16
  %v1460 = vrot.slane %v1458, 4
  %v1461 = vor.u32 %v1460, %v1456
  %v1462 = vrot.slane %v1461, 4
  %v1464 = vshll.u32 %v1250, 16
  %v1466 = vrot.slane %v1464, 5
  %v1467 = vsel %vm1347, %v1462, %v1466
  %v1469 = vshrl.u32 %v1251, 16
  %v1471 = vrot.slane %v1469, 4
  %v1472 = vshll.u32 %v1251, 16
  %v1474 = vrot.slane %v1472, 5
  %v1475 = vor.u32 %v1471, %v1474
  %v1476 = vrot.slane %v1475, 4
  %v1478 = vshll.u32 %v1252, 16
  %v1480 = vrot.slane %v1478, 5
  %v1481 = vsel %vm1347, %v1476, %v1480
  %v1482 = vshrl.u32 %v1252, 16
  %v1484 = vrot.slane %v1482, 4
  %v1485 = vor.u32 %v1484, %v1480
  %v1486 = vrot.slane %v1485, 4
  %v1488 = vshll.u32 %v1253, 16
  %v1490 = vrot.slane %v1488, 5
  %v1491 = vsel %vm1347, %v1486, %v1490
  %v1493 = vshrl.u32 %v1254, 16
  %v1495 = vrot.slane %v1493, 4
  %v1496 = vshll.u32 %v1254, 16
  %v1498 = vrot.slane %v1496, 5
  %v1499 = vor.u32 %v1495, %v1498
  %v1500 = vrot.slane %v1499, 4
  %v1502 = vshll.u32 %v1255, 16
  %v1504 = vrot.slane %v1502, 5
  %v1505 = vsel %vm1347, %v1500, %v1504
  %v1506 = vshrl.u32 %v1255, 16
  %v1508 = vrot.slane %v1506, 4
  %v1509 = vor.u32 %v1508, %v1504
  %v1510 = vrot.slane %v1509, 4
  %v1512 = vshll.u32 %v1256, 16
  %v1514 = vrot.slane %v1512, 5
  %v1515 = vsel %vm1347, %v1510, %v1514
  %v1517 = vshrl.u32 %v1257, 16
  %v1519 = vrot.slane %v1517, 4
  %v1520 = vshll.u32 %v1257, 16
  %v1522 = vrot.slane %v1520, 5
  %v1523 = vor.u32 %v1519, %v1522
  %v1524 = vrot.slane %v1523, 4
  %v1526 = vshll.u32 %v1258, 16
  %v1528 = vrot.slane %v1526, 5
  %v1529 = vsel %vm1347, %v1524, %v1528
  %v1530 = vshrl.u32 %v1258, 16
  %v1532 = vrot.slane %v1530, 4
  %v1533 = vor.u32 %v1532, %v1528
  %v1534 = vrot.slane %v1533, 4
  %v1536 = vshll.u32 %v1259, 16
  %v1538 = vrot.slane %v1536, 5
  %v1539 = vsel %vm1347, %v1534, %v1538
  %v1541 = vshrl.u32 %v1260, 16
  %v1543 = vrot.slane %v1541, 4
  %v1544 = vshll.u32 %v1260, 16
  %v1546 = vrot.slane %v1544, 5
  %v1547 = vor.u32 %v1543, %v1546
  %v1548 = vrot.slane %v1547, 4
  %v1550 = vshll.u32 %v1261, 16
  %v1552 = vrot.slane %v1550, 5
  %v1553 = vsel %vm1347, %v1548, %v1552
  %v1554 = vshrl.u32 %v1261, 16
  %v1556 = vrot.slane %v1554, 4
  %v1557 = vor.u32 %v1556, %v1552
  %v1558 = vrot.slane %v1557, 4
  %v1560 = vshll.u32 %v1262, 16
  %v1562 = vrot.slane %v1560, 5
  %v1563 = vsel %vm1347, %v1558, %v1562
  %v1565 = vshrl.u32 %v1263, 16
  %v1567 = vrot.slane %v1565, 4
  %v1568 = vshll.u32 %v1263, 16
  %v1570 = vrot.slane %v1568, 5
  %v1571 = vor.u32 %v1567, %v1570
  %v1572 = vrot.slane %v1571, 4
  %v1574 = vshll.u32 %v1264, 16
  %v1576 = vrot.slane %v1574, 5
  %v1577 = vsel %vm1347, %v1572, %v1576
  %v1578 = vshrl.u32 %v1264, 16
  %v1580 = vrot.slane %v1578, 4
  %v1581 = vor.u32 %v1580, %v1576
  %v1582 = vrot.slane %v1581, 4
  %v1584 = vshll.u32 %v1265, 16
  %v1586 = vrot.slane %v1584, 5
  %v1587 = vsel %vm1347, %v1582, %v1586
  %v1589 = vshrl.u32 %v1266, 16
  %v1591 = vrot.slane %v1589, 4
  %v1592 = vshll.u32 %v1266, 16
  %v1594 = vrot.slane %v1592, 5
  %v1595 = vor.u32 %v1591, %v1594
  %v1596 = vrot.slane %v1595, 4
  %v1598 = vshll.u32 %v1267, 16
  %v1600 = vrot.slane %v1598, 5
  %v1601 = vsel %vm1347, %v1596, %v1600
  %v1602 = vshrl.u32 %v1267, 16
  %v1604 = vrot.slane %v1602, 4
  %v1605 = vor.u32 %v1604, %v1600
  %v1606 = vrot.slane %v1605, 4
  %v1608 = vshll.u32 %v1268, 16
  %v1610 = vrot.slane %v1608, 5
  %v1611 = vsel %vm1347, %v1606, %v1610
  %v1613 = vshrl.u32 %v1269, 16
  %v1615 = vrot.slane %v1613, 4
  %v1616 = vshll.u32 %v1269, 16
  %v1618 = vrot.slane %v1616, 5
  %v1619 = vor.u32 %v1615, %v1618
  %v1620 = vrot.slane %v1619, 4
  %v1622 = vshll.u32 %v1270, 16
  %v1624 = vrot.slane %v1622, 5
  %v1625 = vsel %vm1347, %v1620, %v1624
  %v1626 = vshrl.u32 %v1270, 16
  %v1628 = vrot.slane %v1626, 4
  %v1629 = vor.u32 %v1628, %v1624
  %v1630 = vrot.slane %v1629, 4
  %v1632 = vshll.u32 %v1271, 16
  %v1634 = vrot.slane %v1632, 5
  %v1635 = vsel %vm1347, %v1630, %v1634
  %v1637 = vshrl.u32 %v1272, 16
  %v1639 = vrot.slane %v1637, 4
  %v1640 = vshll.u32 %v1272, 16
  %v1642 = vrot.slane %v1640, 5
  %v1643 = vor.u32 %v1639, %v1642
  %v1644 = vrot.slane %v1643, 4
  %v1646 = vshll.u32 %v1273, 16
  %v1648 = vrot.slane %v1646, 5
  %v1649 = vsel %vm1347, %v1644, %v1648
  %v1650 = vshrl.u32 %v1273, 16
  %v1652 = vrot.slane %v1650, 4
  %v1653 = vor.u32 %v1652, %v1648
  %v1654 = vrot.slane %v1653, 4
  %v1656 = vshll.u32 %v1274, 16
  %v1658 = vrot.slane %v1656, 5
  %v1659 = vsel %vm1347, %v1654, %v1658
  %v1661 = vshrl.u32 %v1275, 16
  %v1663 = vrot.slane %v1661, 4
  %v1664 = vshll.u32 %v1275, 16
  %v1666 = vrot.slane %v1664, 5
  %v1667 = vor.u32 %v1663, %v1666
  %v1668 = vrot.slane %v1667, 4
  %v1670 = vshll.u32 %v1276, 16
  %v1672 = vrot.slane %v1670, 5
  %v1673 = vsel %vm1347, %v1668, %v1672
  %v1674 = vshrl.u32 %v1276, 16
  %v1676 = vrot.slane %v1674, 4
  %v1677 = vor.u32 %v1676, %v1672
  %v1678 = vrot.slane %v1677, 4
  %v1680 = vshll.u32 %v1277, 16
  %v1682 = vrot.slane %v1680, 5
  %v1683 = vsel %vm1347, %v1678, %v1682
  %v1685 = vshrl.u32 %v1278, 16
  %v1687 = vrot.slane %v1685, 4
  %v1688 = vshll.u32 %v1278, 16
  %v1690 = vrot.slane %v1688, 5
  %v1691 = vor.u32 %v1687, %v1690
  %v1692 = vrot.slane %v1691, 4
  %v1694 = vshll.u32 %v1279, 16
  %v1696 = vrot.slane %v1694, 5
  %v1697 = vsel %vm1347, %v1692, %v1696
  %v1698 = vshrl.u32 %v1279, 16
  %v1700 = vrot.slane %v1698, 4
  %v1701 = vor.u32 %v1700, %v1696
  %v1702 = vrot.slane %v1701, 4
  %v1704 = vshll.u32 %v1280, 16
  %v1706 = vrot.slane %v1704, 5
  %v1707 = vsel %vm1347, %v1702, %v1706
  %v1709 = vshrl.u32 %v1281, 16
  %v1711 = vrot.slane %v1709, 4
  %v1712 = vshll.u32 %v1281, 16
  %v1714 = vrot.slane %v1712, 5
  %v1715 = vor.u32 %v1711, %v1714
  %v1716 = vrot.slane %v1715, 4
  %v1718 = vshll.u32 %v1282, 16
  %v1720 = vrot.slane %v1718, 5
  %v1721 = vsel %vm1347, %v1716, %v1720
  %v1722 = vshrl.u32 %v1282, 16
  %v1724 = vrot.slane %v1722, 4
  %v1725 = vor.u32 %v1724, %v1720
  %v1726 = vrot.slane %v1725, 4
  %v1728 = vshll.u32 %v1283, 16
  %v1730 = vrot.slane %v1728, 5
  %v1731 = vsel %vm1347, %v1726, %v1730
  %v1733 = vshrl.u32 %v1290, 16
  %v1735 = vrot.slane %v1733, 4
  %v1736 = vshll.u32 %v1290, 16
  %v1738 = vrot.slane %v1736, 5
  %v1739 = vor.u32 %v1735, %v1738
  %v1740 = vrot.slane %v1739, 4
  %v1742 = vshll.u32 %v1291, 16
  %v1744 = vrot.slane %v1742, 5
  %v1745 = vsel %vm1347, %v1740, %v1744
  %v1746 = vshrl.u32 %v1291, 16
  %v1748 = vrot.slane %v1746, 4
  %v1749 = vor.u32 %v1748, %v1744
  %v1750 = vrot.slane %v1749, 4
  %v1752 = vshll.u32 %v1292, 16
  %v1754 = vrot.slane %v1752, 5
  %v1755 = vsel %vm1347, %v1750, %v1754
  %v1757 = vshrl.u32 %v1293, 16
  %v1759 = vrot.slane %v1757, 4
  %v1760 = vshll.u32 %v1293, 16
  %v1762 = vrot.slane %v1760, 5
  %v1763 = vor.u32 %v1759, %v1762
  %v1764 = vrot.slane %v1763, 4
  %v1766 = vshll.u32 %v1294, 16
  %v1768 = vrot.slane %v1766, 5
  %v1769 = vsel %vm1347, %v1764, %v1768
  %v1770 = vshrl.u32 %v1294, 16
  %v1772 = vrot.slane %v1770, 4
  %v1773 = vor.u32 %v1772, %v1768
  %v1774 = vrot.slane %v1773, 4
  %v1776 = vshll.u32 %v1295, 16
  %v1778 = vrot.slane %v1776, 5
  %v1779 = vsel %vm1347, %v1774, %v1778
  %v1781 = vshrl.u32 %v1296, 16
  %v1783 = vrot.slane %v1781, 4
  %v1784 = vshll.u32 %v1296, 16
  %v1786 = vrot.slane %v1784, 5
  %v1787 = vor.u32 %v1783, %v1786
  %v1788 = vrot.slane %v1787, 4
  %v1790 = vshll.u32 %v1297, 16
  %v1792 = vrot.slane %v1790, 5
  %v1793 = vsel %vm1347, %v1788, %v1792
  %v1794 = vshrl.u32 %v1297, 16
  %v1796 = vrot.slane %v1794, 4
  %v1797 = vor.u32 %v1796, %v1792
  %v1798 = vrot.slane %v1797, 4
  %v1800 = vshll.u32 %v1298, 16
  %v1802 = vrot.slane %v1800, 5
  %v1803 = vsel %vm1347, %v1798, %v1802
  %v1805 = vshrl.u32 %v1299, 16
  %v1807 = vrot.slane %v1805, 4
  %v1808 = vshll.u32 %v1299, 16
  %v1810 = vrot.slane %v1808, 5
  %v1811 = vor.u32 %v1807, %v1810
  %v1812 = vrot.slane %v1811, 4
  %v1814 = vshll.u32 %v1300, 16
  %v1816 = vrot.slane %v1814, 5
  %v1817 = vsel %vm1347, %v1812, %v1816
  %v1818 = vshrl.u32 %v1300, 16
  %v1820 = vrot.slane %v1818, 4
  %v1821 = vor.u32 %v1820, %v1816
  %v1822 = vrot.slane %v1821, 4
  %v1824 = vshll.u32 %v1301, 16
  %v1826 = vrot.slane %v1824, 5
  %v1827 = vsel %vm1347, %v1822, %v1826
  %v1829 = vshrl.u32 %v1302, 16
  %v1831 = vrot.slane %v1829, 4
  %v1832 = vshll.u32 %v1302, 16
  %v1834 = vrot.slane %v1832, 5
  %v1835 = vor.u32 %v1831, %v1834
  %v1836 = vrot.slane %v1835, 4
  %v1838 = vshll.u32 %v1303, 16
  %v1840 = vrot.slane %v1838, 5
  %v1841 = vsel %vm1347, %v1836, %v1840
  %v1842 = vshrl.u32 %v1303, 16
  %v1844 = vrot.slane %v1842, 4
  %v1845 = vor.u32 %v1844, %v1840
  %v1846 = vrot.slane %v1845, 4
  %v1848 = vshll.u32 %v1304, 16
  %v1850 = vrot.slane %v1848, 5
  %v1851 = vsel %vm1347, %v1846, %v1850
  %v1853 = vshrl.u32 %v1305, 16
  %v1855 = vrot.slane %v1853, 4
  %v1856 = vshll.u32 %v1305, 16
  %v1858 = vrot.slane %v1856, 5
  %v1859 = vor.u32 %v1855, %v1858
  %v1860 = vrot.slane %v1859, 4
  %v1862 = vshll.u32 %v1306, 16
  %v1864 = vrot.slane %v1862, 5
  %v1865 = vsel %vm1347, %v1860, %v1864
  %v1866 = vshrl.u32 %v1306, 16
  %v1868 = vrot.slane %v1866, 4
  %v1869 = vor.u32 %v1868, %v1864
  %v1870 = vrot.slane %v1869, 4
  %v1872 = vshll.u32 %v1307, 16
  %v1874 = vrot.slane %v1872, 5
  %v1875 = vsel %vm1347, %v1870, %v1874
  %v1877 = vshrl.u32 %v1308, 16
  %v1879 = vrot.slane %v1877, 4
  %v1880 = vshll.u32 %v1308, 16
  %v1882 = vrot.slane %v1880, 5
  %v1883 = vor.u32 %v1879, %v1882
  %v1884 = vrot.slane %v1883, 4
  %v1886 = vshll.u32 %v1309, 16
  %v1888 = vrot.slane %v1886, 5
  %v1889 = vsel %vm1347, %v1884, %v1888
  %v1890 = vshrl.u32 %v1309, 16
  %v1892 = vrot.slane %v1890, 4
  %v1893 = vor.u32 %v1892, %v1888
  %v1894 = vrot.slane %v1893, 4
  %v1896 = vshll.u32 %v1310, 16
  %v1898 = vrot.slane %v1896, 5
  %v1899 = vsel %vm1347, %v1894, %v1898
  %v1901 = vshrl.u32 %v1311, 16
  %v1903 = vrot.slane %v1901, 4
  %v1904 = vshll.u32 %v1311, 16
  %v1906 = vrot.slane %v1904, 5
  %v1907 = vor.u32 %v1903, %v1906
  %v1908 = vrot.slane %v1907, 4
  %v1910 = vshll.u32 %v1312, 16
  %v1912 = vrot.slane %v1910, 5
  %v1913 = vsel %vm1347, %v1908, %v1912
  %v1914 = vshrl.u32 %v1312, 16
  %v1916 = vrot.slane %v1914, 4
  %v1917 = vor.u32 %v1916, %v1912
  %v1918 = vrot.slane %v1917, 4
  %v1920 = vshll.u32 %v1313, 16
  %v1922 = vrot.slane %v1920, 5
  %v1923 = vsel %vm1347, %v1918, %v1922
  %v1925 = vshrl.u32 %v1314, 16
  %v1927 = vrot.slane %v1925, 4
  %v1928 = vshll.u32 %v1314, 16
  %v1930 = vrot.slane %v1928, 5
  %v1931 = vor.u32 %v1927, %v1930
  %v1932 = vrot.slane %v1931, 4
  %v1934 = vshll.u32 %v1315, 16
  %v1936 = vrot.slane %v1934, 5
  %v1937 = vsel %vm1347, %v1932, %v1936
  %v1938 = vshrl.u32 %v1315, 16
  %v1940 = vrot.slane %v1938, 4
  %v1941 = vor.u32 %v1940, %v1936
  %v1942 = vrot.slane %v1941, 4
  %v1944 = vshll.u32 %v1316, 16
  %v1946 = vrot.slane %v1944, 5
  %v1947 = vsel %vm1347, %v1942, %v1946
  %v1949 = vshrl.u32 %v1317, 16
  %v1951 = vrot.slane %v1949, 4
  %v1952 = vshll.u32 %v1317, 16
  %v1954 = vrot.slane %v1952, 5
  %v1955 = vor.u32 %v1951, %v1954
  %v1956 = vrot.slane %v1955, 4
  %v1958 = vshll.u32 %v1318, 16
  %v1960 = vrot.slane %v1958, 5
  %v1961 = vsel %vm1347, %v1956, %v1960
  %v1962 = vshrl.u32 %v1318, 16
  %v1964 = vrot.slane %v1962, 4
  %v1965 = vor.u32 %v1964, %v1960
  %v1966 = vrot.slane %v1965, 4
  %v1968 = vshll.u32 %v1319, 16
  %v1970 = vrot.slane %v1968, 5
  %v1971 = vsel %vm1347, %v1966, %v1970
  %v1973 = vshrl.u32 %v1320, 16
  %v1975 = vrot.slane %v1973, 4
  %v1976 = vshll.u32 %v1320, 16
  %v1978 = vrot.slane %v1976, 5
  %v1979 = vor.u32 %v1975, %v1978
  %v1980 = vrot.slane %v1979, 4
  %v1982 = vshll.u32 %v1321, 16
  %v1984 = vrot.slane %v1982, 5
  %v1985 = vsel %vm1347, %v1980, %v1984
  %v1986 = vshrl.u32 %v1321, 16
  %v1988 = vrot.slane %v1986, 4
  %v1989 = vor.u32 %v1988, %v1984
  %v1990 = vrot.slane %v1989, 4
  %v1992 = vshll.u32 %v1322, 16
  %v1994 = vrot.slane %v1992, 5
  %v1995 = vsel %vm1347, %v1990, %v1994
  %v1997 = vshrl.u32 %v1323, 16
  %v1999 = vrot.slane %v1997, 4
  %v2000 = vshll.u32 %v1323, 16
  %v2002 = vrot.slane %v2000, 5
  %v2003 = vor.u32 %v1999, %v2002
  %v2004 = vrot.slane %v2003, 4
  %v2006 = vshll.u32 %v1324, 16
  %v2008 = vrot.slane %v2006, 5
  %v2009 = vsel %vm1347, %v2004, %v2008
  %v2010 = vshrl.u32 %v1324, 16
  %v2012 = vrot.slane %v2010, 4
  %v2013 = vor.u32 %v2012, %v2008
  %v2014 = vrot.slane %v2013, 4
  %v2016 = vshll.u32 %v1325, 16
  %v2018 = vrot.slane %v2016, 5
  %v2019 = vsel %vm1347, %v2014, %v2018
  %v2021 = vshrl.u32 %v1326, 16
  %v2023 = vrot.slane %v2021, 4
  %v2024 = vshll.u32 %v1326, 16
  %v2026 = vrot.slane %v2024, 5
  %v2027 = vor.u32 %v2023, %v2026
  %v2028 = vrot.slane %v2027, 4
  %v2030 = vshll.u32 %v1327, 16
  %v2032 = vrot.slane %v2030, 5
  %v2033 = vsel %vm1347, %v2028, %v2032
  %v2034 = vshrl.u32 %v1327, 16
  %v2036 = vrot.slane %v2034, 4
  %v2037 = vor.u32 %v2036, %v2032
  %v2038 = vrot.slane %v2037, 4
  %v2040 = vshll.u32 %v1328, 16
  %v2042 = vrot.slane %v2040, 5
  %v2043 = vsel %vm1347, %v2038, %v2042
  %v2045 = vshrl.u32 %v1329, 16
  %v2047 = vrot.slane %v2045, 4
  %v2048 = vshll.u32 %v1329, 16
  %v2050 = vrot.slane %v2048, 5
  %v2051 = vor.u32 %v2047, %v2050
  %v2052 = vrot.slane %v2051, 4
  %v2054 = vshll.u32 %v1330, 16
  %v2056 = vrot.slane %v2054, 5
  %v2057 = vsel %vm1347, %v2052, %v2056
  %v2058 = vshrl.u32 %v1330, 16
  %v2060 = vrot.slane %v2058, 4
  %v2061 = vor.u32 %v2060, %v2056
  %v2062 = vrot.slane %v2061, 4
  %v2064 = vshll.u32 %v1331, 16
  %v2066 = vrot.slane %v2064, 5
  %v2067 = vsel %vm1347, %v2062, %v2066
  %v2069 = vshrl.u32 %v1332, 16
  %v2071 = vrot.slane %v2069, 4
  %v2072 = vshll.u32 %v1332, 16
  %v2074 = vrot.slane %v2072, 5
  %v2075 = vor.u32 %v2071, %v2074
  %v2076 = vrot.slane %v2075, 4
  %v2078 = vshll.u32 %v1333, 16
  %v2080 = vrot.slane %v2078, 5
  %v2081 = vsel %vm1347, %v2076, %v2080
  %v2082 = vshrl.u32 %v1333, 16
  %v2084 = vrot.slane %v2082, 4
  %v2085 = vor.u32 %v2084, %v2080
  %v2086 = vrot.slane %v2085, 4
  %v2088 = vshll.u32 %v1334, 16
  %v2090 = vrot.slane %v2088, 5
  %v2091 = vsel %vm1347, %v2086, %v2090
  %v2093 = vshrl.u32 %v1335, 16
  %v2095 = vrot.slane %v2093, 4
  %v2096 = vshll.u32 %v1335, 16
  %v2098 = vrot.slane %v2096, 5
  %v2099 = vor.u32 %v2095, %v2098
  %v2100 = vrot.slane %v2099, 4
  %v2102 = vshll.u32 %v1336, 16
  %v2104 = vrot.slane %v2102, 5
  %v2105 = vsel %vm1347, %v2100, %v2104
  %v2106 = vshrl.u32 %v1336, 16
  %v2108 = vrot.slane %v2106, 4
  %v2109 = vor.u32 %v2108, %v2104
  %v2110 = vrot.slane %v2109, 4
  %v2112 = vshll.u32 %v1337, 16
  %v2114 = vrot.slane %v2112, 5
  %v2115 = vsel %vm1347, %v2110, %v2114
  %v2116 = vld [vmem:[%s1] sm:$0xc]
  %v2117 = vunpack.c.l.b16 %v1361
  %v2118 = vunpack.c.l.b16 %v1371
  %v2119 = vunpack.c.l.b16 %v1385
  %v2120 = vunpack.c.l.b16 %v1395
  %v2121 = vunpack.c.l.b16 %v1409
  %v2122 = vunpack.c.l.b16 %v1419
  %v2123 = vunpack.c.l.b16 %v1433
  %v2124 = vunpack.c.l.b16 %v1443
  %v2125 = vunpack.c.l.b16 %v1457
  %v2126 = vunpack.c.l.b16 %v1467
  %v2127 = vunpack.c.l.b16 %v1481
  %v2128 = vunpack.c.l.b16 %v1491
  %v2129 = vunpack.c.l.b16 %v1505
  %v2130 = vunpack.c.l.b16 %v1515
  %v2131 = vunpack.c.l.b16 %v1529
  %v2132 = vunpack.c.l.b16 %v1539
  %v2133 = vunpack.c.l.b16 %v1553
  %v2134 = vunpack.c.l.b16 %v1563
  %v2135 = vunpack.c.l.b16 %v1577
  %v2136 = vunpack.c.l.b16 %v1587
  %v2137 = vunpack.c.l.b16 %v1601
  %v2138 = vunpack.c.l.b16 %v1611
  %v2139 = vunpack.c.l.b16 %v1625
  %v2140 = vunpack.c.l.b16 %v1635
  %v2141 = vunpack.c.l.b16 %v1649
  %v2142 = vunpack.c.l.b16 %v1659
  %v2143 = vunpack.c.l.b16 %v1673
  %v2144 = vunpack.c.l.b16 %v1683
  %v2145 = vunpack.c.l.b16 %v1697
  %v2146 = vunpack.c.l.b16 %v1707
  %v2147 = vunpack.c.l.b16 %v1721
  %v2148 = vunpack.c.l.b16 %v1731
  %v2149 = vunpack.c.l.b16 %v1745
  %v2150 = vunpack.c.l.b16 %v1755
  %v2151 = vunpack.c.l.b16 %v1769
  %v2152 = vunpack.c.l.b16 %v1779
  %v2153 = vunpack.c.l.b16 %v1793
  %v2154 = vunpack.c.l.b16 %v1803
  %v2155 = vunpack.c.l.b16 %v1817
  %v2156 = vunpack.c.l.b16 %v1827
  %v2157 = vunpack.c.l.b16 %v1841
  %v2158 = vunpack.c.l.b16 %v1851
  %v2159 = vunpack.c.l.b16 %v1865
  %v2160 = vunpack.c.l.b16 %v1875
  %v2161 = vunpack.c.l.b16 %v1889
  %v2162 = vunpack.c.l.b16 %v1899
  %v2163 = vunpack.c.l.b16 %v1913
  %v2164 = vunpack.c.l.b16 %v1923
  %v2165 = vunpack.c.l.b16 %v1937
  %v2166 = vunpack.c.l.b16 %v1947
  %v2167 = vunpack.c.l.b16 %v1961
  %v2168 = vunpack.c.l.b16 %v1971
  %v2169 = vunpack.c.l.b16 %v1985
  %v2170 = vunpack.c.l.b16 %v1995
  %v2171 = vunpack.c.l.b16 %v2009
  %v2172 = vunpack.c.l.b16 %v2019
  %v2173 = vunpack.c.l.b16 %v2033
  %v2174 = vunpack.c.l.b16 %v2043
  %v2175 = vunpack.c.l.b16 %v2057
  %v2176 = vunpack.c.l.b16 %v2067
  %v2177 = vunpack.c.l.b16 %v2081
  %v2178 = vunpack.c.l.b16 %v2091
  %v2179 = vunpack.c.l.b16 %v2105
  %v2180 = vunpack.c.l.b16 %v2115
  %v2181 = vpack.c.b16 %v2118, %v2117
  %v2182 = vpack.c.b16 %v2120, %v2119
  %v2183 = vpack.c.b16 %v2122, %v2121
  %v2184 = vpack.c.b16 %v2124, %v2123
  %v2185 = vpack.c.b16 %v2126, %v2125
  %v2186 = vpack.c.b16 %v2128, %v2127
  %v2187 = vpack.c.b16 %v2130, %v2129
  %v2188 = vpack.c.b16 %v2132, %v2131
  %v2189 = vpack.c.b16 %v2134, %v2133
  %v2190 = vpack.c.b16 %v2136, %v2135
  %v2191 = vpack.c.b16 %v2138, %v2137
  %v2192 = vpack.c.b16 %v2140, %v2139
  %v2193 = vpack.c.b16 %v2142, %v2141
  %v2194 = vpack.c.b16 %v2144, %v2143
  %v2195 = vpack.c.b16 %v2146, %v2145
  %v2196 = vpack.c.b16 %v2148, %v2147
  %v2197 = vpack.c.b16 %v2150, %v2149
  %v2198 = vpack.c.b16 %v2152, %v2151
  %v2199 = vpack.c.b16 %v2154, %v2153
  %v2200 = vpack.c.b16 %v2156, %v2155
  %v2201 = vpack.c.b16 %v2158, %v2157
  %v2202 = vpack.c.b16 %v2160, %v2159
  %v2203 = vpack.c.b16 %v2162, %v2161
  %v2204 = vpack.c.b16 %v2164, %v2163
  %v2205 = vpack.c.b16 %v2166, %v2165
  %v2206 = vpack.c.b16 %v2168, %v2167
  %v2207 = vpack.c.b16 %v2170, %v2169
  %v2208 = vpack.c.b16 %v2172, %v2171
  %v2209 = vpack.c.b16 %v2174, %v2173
  %v2210 = vpack.c.b16 %v2176, %v2175
  %v2211 = vpack.c.b16 %v2178, %v2177
  %v2212 = vpack.c.b16 %v2180, %v2179
  %v2214 = vunpack.c.l.b16 %v2116
  %v2215 = vpack.c.b16 %v2214, %v2214
  %v2216 = vrot.slane %v2215, 2
  %vm2217 = vcmask 31744
  %v2219 = vsel %vm2217, %v2181, 0
  %v2222 = vsel %vm2217, %v2182, 0
  %v2225 = vsel %vm2217, %v2183, 0
  %v2228 = vsel %vm2217, %v2184, 0
  %v2231 = vsel %vm2217, %v2185, 0
  %v2234 = vsel %vm2217, %v2186, 0
  %v2237 = vsel %vm2217, %v2187, 0
  %v2240 = vsel %vm2217, %v2188, 0
  %v2243 = vsel %vm2217, %v2189, 0
  %v2246 = vsel %vm2217, %v2190, 0
  %v2249 = vsel %vm2217, %v2191, 0
  %v2252 = vsel %vm2217, %v2192, 0
  %v2255 = vsel %vm2217, %v2193, 0
  %v2258 = vsel %vm2217, %v2194, 0
  %v2261 = vsel %vm2217, %v2195, 0
  %v2264 = vsel %vm2217, %v2196, 0
  %v2267 = vsel %vm2217, %v2197, 0
  %v2270 = vsel %vm2217, %v2198, 0
  %v2273 = vsel %vm2217, %v2199, 0
  %v2276 = vsel %vm2217, %v2200, 0
  %v2279 = vsel %vm2217, %v2201, 0
  %v2282 = vsel %vm2217, %v2202, 0
  %v2285 = vsel %vm2217, %v2203, 0
  %v2288 = vsel %vm2217, %v2204, 0
  %v2291 = vsel %vm2217, %v2205, 0
  %v2294 = vsel %vm2217, %v2206, 0
  %v2297 = vsel %vm2217, %v2207, 0
  %v2300 = vsel %vm2217, %v2208, 0
  %v2303 = vsel %vm2217, %v2209, 0
  %v2306 = vsel %vm2217, %v2210, 0
  %v2309 = vsel %vm2217, %v2211, 0
  %v2312 = vsel %vm2217, %v2212, 0
  %vm2314 = vcmask 1041408
  %v2316 = vsel %vm2314, %v2216, 0
  %2318 = vmatprep.subr.bf16.mxu0 0
  %2319 = vmatpush1.bf16.msra.mxu0 0
  %2320 = vmatprep.subr.bf16.mxu0 0
  %2321 = vmatpush1.bf16.msra.mxu0 0
  %2322 = vmatprep.subr.bf16.mxu0 0
  %2323 = vmatpush1.bf16.msra.mxu0 0
  %2324 = vmatprep.subr.bf16.mxu0 0
  %2325 = vmatpush1.bf16.msra.mxu0 0
  %2326 = vmatprep.subr.bf16.mxu0 0
  %2327 = vmatpush1.bf16.msra.mxu0 0
  %2328 = vmatprep.subr.bf16.mxu0 0
  %2329 = vmatpush1.bf16.msra.mxu0 0
  %2330 = vmatprep.subr.bf16.mxu0 0
  %2331 = vmatpush1.bf16.msra.mxu0 0
  %2332 = vmatprep.subr.bf16.mxu0 0
  %2333 = vmatpush1.bf16.msra.mxu0 %v2316
  %2334 = vmatprep.subr.bf16.mxu0 0
  %2335 = vmatpush2.bf16.msra.mxu0 0
  %2336 = vmatprep.subr.bf16.mxu0 0
  %2337 = vmatpush2.bf16.msra.mxu0 0
  %2338 = vmatprep.subr.bf16.mxu0 0
  %2339 = vmatpush2.bf16.msra.mxu0 0
  %2340 = vmatprep.subr.bf16.mxu0 0
  %2341 = vmatpush2.bf16.msra.mxu0 0
  %2342 = vmatprep.subr.bf16.mxu0 0
  %2343 = vmatpush2.bf16.msra.mxu0 0
  %2344 = vmatprep.subr.bf16.mxu0 0
  %2345 = vmatpush2.bf16.msra.mxu0 0
  %2346 = vmatprep.subr.bf16.mxu0 0
  %2347 = vmatpush2.bf16.msra.mxu0 0
  %2348 = vmatprep.subr.bf16.mxu0 0
  %2349 = vmatpush2.bf16.msra.mxu0 0
  %2350 = vmatprep.mubr.bf16.mxu0 0
  %2351 = vmatmul.mubr.bf16.gmra.mxu0 %v2219
  %v2352 = vpop.f32.mrf.mxu0
  %v2353 = vadd.f32 0.0, %v2352
  %v2354 = vpop.f32.mrf.mxu0
  %v2355 = vpop.f32.mrf.mxu0
  %v2356 = vadd.f32 0.0, %v2355
  %v2357 = vpop.f32.mrf.mxu0
  %2358 = vmatprep.mubr.bf16.mxu0 0
  %2359 = vmatmul.mubr.bf16.gmra.mxu0 %v2222
  %v2360 = vpop.f32.mrf.mxu0
  %v2361 = vadd.f32 0.0, %v2360
  %v2362 = vpop.f32.mrf.mxu0
  %v2363 = vpop.f32.mrf.mxu0
  %v2364 = vadd.f32 0.0, %v2363
  %v2365 = vpop.f32.mrf.mxu0
  %2366 = vmatprep.mubr.bf16.mxu0 0
  %2367 = vmatmul.mubr.bf16.gmra.mxu0 %v2225
  %v2368 = vpop.f32.mrf.mxu0
  %v2369 = vadd.f32 0.0, %v2368
  %v2370 = vpop.f32.mrf.mxu0
  %v2371 = vpop.f32.mrf.mxu0
  %v2372 = vadd.f32 0.0, %v2371
  %v2373 = vpop.f32.mrf.mxu0
  %2374 = vmatprep.mubr.bf16.mxu0 0
  %2375 = vmatmul.mubr.bf16.gmra.mxu0 %v2228
  %v2376 = vpop.f32.mrf.mxu0
  %v2377 = vadd.f32 0.0, %v2376
  %v2378 = vpop.f32.mrf.mxu0
  %v2379 = vpop.f32.mrf.mxu0
  %v2380 = vadd.f32 0.0, %v2379
  %v2381 = vpop.f32.mrf.mxu0
  %2382 = vmatprep.mubr.bf16.mxu0 0
  %2383 = vmatmul.mubr.bf16.gmra.mxu0 %v2231
  %v2384 = vpop.f32.mrf.mxu0
  %v2385 = vadd.f32 0.0, %v2384
  %v2386 = vpop.f32.mrf.mxu0
  %v2387 = vpop.f32.mrf.mxu0
  %v2388 = vadd.f32 0.0, %v2387
  %v2389 = vpop.f32.mrf.mxu0
  %2390 = vmatprep.mubr.bf16.mxu0 0
  %2391 = vmatmul.mubr.bf16.gmra.mxu0 %v2234
  %v2392 = vpop.f32.mrf.mxu0
  %v2393 = vadd.f32 0.0, %v2392
  %v2394 = vpop.f32.mrf.mxu0
  %v2395 = vpop.f32.mrf.mxu0
  %v2396 = vadd.f32 0.0, %v2395
  %v2397 = vpop.f32.mrf.mxu0
  %2398 = vmatprep.mubr.bf16.mxu0 0
  %2399 = vmatmul.mubr.bf16.gmra.mxu0 %v2237
  %v2400 = vpop.f32.mrf.mxu0
  %v2401 = vadd.f32 0.0, %v2400
  %v2402 = vpop.f32.mrf.mxu0
  %v2403 = vpop.f32.mrf.mxu0
  %v2404 = vadd.f32 0.0, %v2403
  %v2405 = vpop.f32.mrf.mxu0
  %2406 = vmatprep.mubr.bf16.mxu0 0
  %2407 = vmatmul.mubr.bf16.gmra.mxu0 %v2240
  %v2408 = vpop.f32.mrf.mxu0
  %v2409 = vadd.f32 0.0, %v2408
  %v2410 = vpop.f32.mrf.mxu0
  %v2411 = vpop.f32.mrf.mxu0
  %v2412 = vadd.f32 0.0, %v2411
  %v2413 = vpop.f32.mrf.mxu0
  %2414 = vmatprep.mubr.bf16.mxu0 0
  %2415 = vmatmul.mubr.bf16.gmra.mxu0 %v2243
  %v2416 = vpop.f32.mrf.mxu0
  %v2417 = vadd.f32 0.0, %v2416
  %v2418 = vpop.f32.mrf.mxu0
  %v2419 = vpop.f32.mrf.mxu0
  %v2420 = vadd.f32 0.0, %v2419
  %v2421 = vpop.f32.mrf.mxu0
  %2422 = vmatprep.mubr.bf16.mxu0 0
  %2423 = vmatmul.mubr.bf16.gmra.mxu0 %v2246
  %v2424 = vpop.f32.mrf.mxu0
  %v2425 = vadd.f32 0.0, %v2424
  %v2426 = vpop.f32.mrf.mxu0
  %v2427 = vpop.f32.mrf.mxu0
  %v2428 = vadd.f32 0.0, %v2427
  %v2429 = vpop.f32.mrf.mxu0
  %2430 = vmatprep.mubr.bf16.mxu0 0
  %2431 = vmatmul.mubr.bf16.gmra.mxu0 %v2249
  %v2432 = vpop.f32.mrf.mxu0
  %v2433 = vadd.f32 0.0, %v2432
  %v2434 = vpop.f32.mrf.mxu0
  %v2435 = vpop.f32.mrf.mxu0
  %v2436 = vadd.f32 0.0, %v2435
  %v2437 = vpop.f32.mrf.mxu0
  %2438 = vmatprep.mubr.bf16.mxu0 0
  %2439 = vmatmul.mubr.bf16.gmra.mxu0 %v2252
  %v2440 = vpop.f32.mrf.mxu0
  %v2441 = vadd.f32 0.0, %v2440
  %v2442 = vpop.f32.mrf.mxu0
  %v2443 = vpop.f32.mrf.mxu0
  %v2444 = vadd.f32 0.0, %v2443
  %v2445 = vpop.f32.mrf.mxu0
  %2446 = vmatprep.mubr.bf16.mxu0 0
  %2447 = vmatmul.mubr.bf16.gmra.mxu0 %v2255
  %v2448 = vpop.f32.mrf.mxu0
  %v2449 = vadd.f32 0.0, %v2448
  %v2450 = vpop.f32.mrf.mxu0
  %v2451 = vpop.f32.mrf.mxu0
  %v2452 = vadd.f32 0.0, %v2451
  %v2453 = vpop.f32.mrf.mxu0
  %2454 = vmatprep.mubr.bf16.mxu0 0
  %2455 = vmatmul.mubr.bf16.gmra.mxu0 %v2258
  %v2456 = vpop.f32.mrf.mxu0
  %v2457 = vadd.f32 0.0, %v2456
  %v2458 = vpop.f32.mrf.mxu0
  %v2459 = vpop.f32.mrf.mxu0
  %v2460 = vadd.f32 0.0, %v2459
  %v2461 = vpop.f32.mrf.mxu0
  %2462 = vmatprep.mubr.bf16.mxu0 0
  %2463 = vmatmul.mubr.bf16.gmra.mxu0 %v2261
  %v2464 = vpop.f32.mrf.mxu0
  %v2465 = vadd.f32 0.0, %v2464
  %v2466 = vpop.f32.mrf.mxu0
  %v2467 = vpop.f32.mrf.mxu0
  %v2468 = vadd.f32 0.0, %v2467
  %v2469 = vpop.f32.mrf.mxu0
  %2470 = vmatprep.mubr.bf16.mxu0 0
  %2471 = vmatmul.mubr.bf16.gmra.mxu0 %v2264
  %v2472 = vpop.f32.mrf.mxu0
  %v2473 = vadd.f32 0.0, %v2472
  %v2474 = vpop.f32.mrf.mxu0
  %v2475 = vpop.f32.mrf.mxu0
  %v2476 = vadd.f32 0.0, %v2475
  %v2477 = vpop.f32.mrf.mxu0
  %2478 = vmatprep.mubr.bf16.mxu0 0
  %2479 = vmatmul.mubr.bf16.gmra.mxu0 %v2267
  %v2480 = vpop.f32.mrf.mxu0
  %v2481 = vadd.f32 0.0, %v2480
  %v2482 = vpop.f32.mrf.mxu0
  %v2483 = vpop.f32.mrf.mxu0
  %v2484 = vadd.f32 0.0, %v2483
  %v2485 = vpop.f32.mrf.mxu0
  %2486 = vmatprep.mubr.bf16.mxu0 0
  %2487 = vmatmul.mubr.bf16.gmra.mxu0 %v2270
  %v2488 = vpop.f32.mrf.mxu0
  %v2489 = vadd.f32 0.0, %v2488
  %v2490 = vpop.f32.mrf.mxu0
  %v2491 = vpop.f32.mrf.mxu0
  %v2492 = vadd.f32 0.0, %v2491
  %v2493 = vpop.f32.mrf.mxu0
  %2494 = vmatprep.mubr.bf16.mxu0 0
  %2495 = vmatmul.mubr.bf16.gmra.mxu0 %v2273
  %v2496 = vpop.f32.mrf.mxu0
  %v2497 = vadd.f32 0.0, %v2496
  %v2498 = vpop.f32.mrf.mxu0
  %v2499 = vpop.f32.mrf.mxu0
  %v2500 = vadd.f32 0.0, %v2499
  %v2501 = vpop.f32.mrf.mxu0
  %2502 = vmatprep.mubr.bf16.mxu0 0
  %2503 = vmatmul.mubr.bf16.gmra.mxu0 %v2276
  %v2504 = vpop.f32.mrf.mxu0
  %v2505 = vadd.f32 0.0, %v2504
  %v2506 = vpop.f32.mrf.mxu0
  %v2507 = vpop.f32.mrf.mxu0
  %v2508 = vadd.f32 0.0, %v2507
  %v2509 = vpop.f32.mrf.mxu0
  %2510 = vmatprep.mubr.bf16.mxu0 0
  %2511 = vmatmul.mubr.bf16.gmra.mxu0 %v2279
  %v2512 = vpop.f32.mrf.mxu0
  %v2513 = vadd.f32 0.0, %v2512
  %v2514 = vpop.f32.mrf.mxu0
  %v2515 = vpop.f32.mrf.mxu0
  %v2516 = vadd.f32 0.0, %v2515
  %v2517 = vpop.f32.mrf.mxu0
  %2518 = vmatprep.mubr.bf16.mxu0 0
  %2519 = vmatmul.mubr.bf16.gmra.mxu0 %v2282
  %v2520 = vpop.f32.mrf.mxu0
  %v2521 = vadd.f32 0.0, %v2520
  %v2522 = vpop.f32.mrf.mxu0
  %v2523 = vpop.f32.mrf.mxu0
  %v2524 = vadd.f32 0.0, %v2523
  %v2525 = vpop.f32.mrf.mxu0
  %2526 = vmatprep.mubr.bf16.mxu0 0
  %2527 = vmatmul.mubr.bf16.gmra.mxu0 %v2285
  %v2528 = vpop.f32.mrf.mxu0
  %v2529 = vadd.f32 0.0, %v2528
  %v2530 = vpop.f32.mrf.mxu0
  %v2531 = vpop.f32.mrf.mxu0
  %v2532 = vadd.f32 0.0, %v2531
  %v2533 = vpop.f32.mrf.mxu0
  %2534 = vmatprep.mubr.bf16.mxu0 0
  %2535 = vmatmul.mubr.bf16.gmra.mxu0 %v2288
  %v2536 = vpop.f32.mrf.mxu0
  %v2537 = vadd.f32 0.0, %v2536
  %v2538 = vpop.f32.mrf.mxu0
  %v2539 = vpop.f32.mrf.mxu0
  %v2540 = vadd.f32 0.0, %v2539
  %v2541 = vpop.f32.mrf.mxu0
  %2542 = vmatprep.mubr.bf16.mxu0 0
  %2543 = vmatmul.mubr.bf16.gmra.mxu0 %v2291
  %v2544 = vpop.f32.mrf.mxu0
  %v2545 = vadd.f32 0.0, %v2544
  %v2546 = vpop.f32.mrf.mxu0
  %v2547 = vpop.f32.mrf.mxu0
  %v2548 = vadd.f32 0.0, %v2547
  %v2549 = vpop.f32.mrf.mxu0
  %2550 = vmatprep.mubr.bf16.mxu0 0
  %2551 = vmatmul.mubr.bf16.gmra.mxu0 %v2294
  %v2552 = vpop.f32.mrf.mxu0
  %v2553 = vadd.f32 0.0, %v2552
  %v2554 = vpop.f32.mrf.mxu0
  %v2555 = vpop.f32.mrf.mxu0
  %v2556 = vadd.f32 0.0, %v2555
  %v2557 = vpop.f32.mrf.mxu0
  %2558 = vmatprep.mubr.bf16.mxu0 0
  %2559 = vmatmul.mubr.bf16.gmra.mxu0 %v2297
  %v2560 = vpop.f32.mrf.mxu0
  %v2561 = vadd.f32 0.0, %v2560
  %v2562 = vpop.f32.mrf.mxu0
  %v2563 = vpop.f32.mrf.mxu0
  %v2564 = vadd.f32 0.0, %v2563
  %v2565 = vpop.f32.mrf.mxu0
  %2566 = vmatprep.mubr.bf16.mxu0 0
  %2567 = vmatmul.mubr.bf16.gmra.mxu0 %v2300
  %v2568 = vpop.f32.mrf.mxu0
  %v2569 = vadd.f32 0.0, %v2568
  %v2570 = vpop.f32.mrf.mxu0
  %v2571 = vpop.f32.mrf.mxu0
  %v2572 = vadd.f32 0.0, %v2571
  %v2573 = vpop.f32.mrf.mxu0
  %2574 = vmatprep.mubr.bf16.mxu0 0
  %2575 = vmatmul.mubr.bf16.gmra.mxu0 %v2303
  %v2576 = vpop.f32.mrf.mxu0
  %v2577 = vadd.f32 0.0, %v2576
  %v2578 = vpop.f32.mrf.mxu0
  %v2579 = vpop.f32.mrf.mxu0
  %v2580 = vadd.f32 0.0, %v2579
  %v2581 = vpop.f32.mrf.mxu0
  %2582 = vmatprep.mubr.bf16.mxu0 0
  %2583 = vmatmul.mubr.bf16.gmra.mxu0 %v2306
  %v2584 = vpop.f32.mrf.mxu0
  %v2585 = vadd.f32 0.0, %v2584
  %v2586 = vpop.f32.mrf.mxu0
  %v2587 = vpop.f32.mrf.mxu0
  %v2588 = vadd.f32 0.0, %v2587
  %v2589 = vpop.f32.mrf.mxu0
  %2590 = vmatprep.mubr.bf16.mxu0 0
  %2591 = vmatmul.mubr.bf16.gmra.mxu0 %v2309
  %v2592 = vpop.f32.mrf.mxu0
  %v2593 = vadd.f32 0.0, %v2592
  %v2594 = vpop.f32.mrf.mxu0
  %v2595 = vpop.f32.mrf.mxu0
  %v2596 = vadd.f32 0.0, %v2595
  %v2597 = vpop.f32.mrf.mxu0
  %2598 = vmatprep.mubr.bf16.mxu0 0
  %2599 = vmatmul.mubr.bf16.gmra.mxu0 %v2312
  %v2600 = vpop.f32.mrf.mxu0
  %v2601 = vadd.f32 0.0, %v2600
  %v2602 = vpop.f32.mrf.mxu0
  %v2603 = vpop.f32.mrf.mxu0
  %v2604 = vadd.f32 0.0, %v2603
  %v2605 = vpop.f32.mrf.mxu0
  %2606 = vdwg.mxu0
  %v2671 = vunpack.c.l.b16 %v1236
  %v2672 = vunpack.c.l.b16 %v1237
  %v2673 = vunpack.c.l.b16 %v1239
  %v2674 = vunpack.c.l.b16 %v1240
  %v2675 = vunpack.c.l.b16 %v1242
  %v2676 = vunpack.c.l.b16 %v1243
  %v2677 = vunpack.c.l.b16 %v1245
  %v2678 = vunpack.c.l.b16 %v1246
  %v2679 = vunpack.c.l.b16 %v1248
  %v2680 = vunpack.c.l.b16 %v1249
  %v2681 = vunpack.c.l.b16 %v1251
  %v2682 = vunpack.c.l.b16 %v1252
  %v2683 = vunpack.c.l.b16 %v1254
  %v2684 = vunpack.c.l.b16 %v1255
  %v2685 = vunpack.c.l.b16 %v1257
  %v2686 = vunpack.c.l.b16 %v1258
  %v2687 = vunpack.c.l.b16 %v1260
  %v2688 = vunpack.c.l.b16 %v1261
  %v2689 = vunpack.c.l.b16 %v1263
  %v2690 = vunpack.c.l.b16 %v1264
  %v2691 = vunpack.c.l.b16 %v1266
  %v2692 = vunpack.c.l.b16 %v1267
  %v2693 = vunpack.c.l.b16 %v1269
  %v2694 = vunpack.c.l.b16 %v1270
  %v2695 = vunpack.c.l.b16 %v1272
  %v2696 = vunpack.c.l.b16 %v1273
  %v2697 = vunpack.c.l.b16 %v1275
  %v2698 = vunpack.c.l.b16 %v1276
  %v2699 = vunpack.c.l.b16 %v1278
  %v2700 = vunpack.c.l.b16 %v1279
  %v2701 = vunpack.c.l.b16 %v1281
  %v2702 = vunpack.c.l.b16 %v1282
  %v2703 = vunpack.c.l.b16 %v1290
  %v2704 = vunpack.c.l.b16 %v1291
  %v2705 = vunpack.c.l.b16 %v1293
  %v2706 = vunpack.c.l.b16 %v1294
  %v2707 = vunpack.c.l.b16 %v1296
  %v2708 = vunpack.c.l.b16 %v1297
  %v2709 = vunpack.c.l.b16 %v1299
  %v2710 = vunpack.c.l.b16 %v1300
  %v2711 = vunpack.c.l.b16 %v1302
  %v2712 = vunpack.c.l.b16 %v1303
  %v2713 = vunpack.c.l.b16 %v1305
  %v2714 = vunpack.c.l.b16 %v1306
  %v2715 = vunpack.c.l.b16 %v1308
  %v2716 = vunpack.c.l.b16 %v1309
  %v2717 = vunpack.c.l.b16 %v1311
  %v2718 = vunpack.c.l.b16 %v1312
  %v2719 = vunpack.c.l.b16 %v1314
  %v2720 = vunpack.c.l.b16 %v1315
  %v2721 = vunpack.c.l.b16 %v1317
  %v2722 = vunpack.c.l.b16 %v1318
  %v2723 = vunpack.c.l.b16 %v1320
  %v2724 = vunpack.c.l.b16 %v1321
  %v2725 = vunpack.c.l.b16 %v1323
  %v2726 = vunpack.c.l.b16 %v1324
  %v2727 = vunpack.c.l.b16 %v1326
  %v2728 = vunpack.c.l.b16 %v1327
  %v2729 = vunpack.c.l.b16 %v1329
  %v2730 = vunpack.c.l.b16 %v1330
  %v2731 = vunpack.c.l.b16 %v1332
  %v2732 = vunpack.c.l.b16 %v1333
  %v2733 = vunpack.c.l.b16 %v1335
  %v2734 = vunpack.c.l.b16 %v1336
  %v2735 = vpack.c.b16 %v2672, %v2671
  %v2736 = vpack.c.b16 %v2674, %v2673
  %v2737 = vpack.c.b16 %v2676, %v2675
  %v2738 = vpack.c.b16 %v2678, %v2677
  %v2739 = vpack.c.b16 %v2680, %v2679
  %v2740 = vpack.c.b16 %v2682, %v2681
  %v2741 = vpack.c.b16 %v2684, %v2683
  %v2742 = vpack.c.b16 %v2686, %v2685
  %v2743 = vpack.c.b16 %v2688, %v2687
  %v2744 = vpack.c.b16 %v2690, %v2689
  %v2745 = vpack.c.b16 %v2692, %v2691
  %v2746 = vpack.c.b16 %v2694, %v2693
  %v2747 = vpack.c.b16 %v2696, %v2695
  %v2748 = vpack.c.b16 %v2698, %v2697
  %v2749 = vpack.c.b16 %v2700, %v2699
  %v2750 = vpack.c.b16 %v2702, %v2701
  %v2751 = vpack.c.b16 %v2704, %v2703
  %v2752 = vpack.c.b16 %v2706, %v2705
  %v2753 = vpack.c.b16 %v2708, %v2707
  %v2754 = vpack.c.b16 %v2710, %v2709
  %v2755 = vpack.c.b16 %v2712, %v2711
  %v2756 = vpack.c.b16 %v2714, %v2713
  %v2757 = vpack.c.b16 %v2716, %v2715
  %v2758 = vpack.c.b16 %v2718, %v2717
  %v2759 = vpack.c.b16 %v2720, %v2719
  %v2760 = vpack.c.b16 %v2722, %v2721
  %v2761 = vpack.c.b16 %v2724, %v2723
  %v2762 = vpack.c.b16 %v2726, %v2725
  %v2763 = vpack.c.b16 %v2728, %v2727
  %v2764 = vpack.c.b16 %v2730, %v2729
  %v2765 = vpack.c.b16 %v2732, %v2731
  %v2766 = vpack.c.b16 %v2734, %v2733
  %v2768 = vsel %vm2217, %v2735, 0
  %v2771 = vsel %vm2217, %v2736, 0
  %v2774 = vsel %vm2217, %v2737, 0
  %v2777 = vsel %vm2217, %v2738, 0
  %v2780 = vsel %vm2217, %v2739, 0
  %v2783 = vsel %vm2217, %v2740, 0
  %v2786 = vsel %vm2217, %v2741, 0
  %v2789 = vsel %vm2217, %v2742, 0
  %v2792 = vsel %vm2217, %v2743, 0
  %v2795 = vsel %vm2217, %v2744, 0
  %v2798 = vsel %vm2217, %v2745, 0
  %v2801 = vsel %vm2217, %v2746, 0
  %v2804 = vsel %vm2217, %v2747, 0
  %v2807 = vsel %vm2217, %v2748, 0
  %v2810 = vsel %vm2217, %v2749, 0
  %v2813 = vsel %vm2217, %v2750, 0
  %v2816 = vsel %vm2217, %v2751, 0
  %v2819 = vsel %vm2217, %v2752, 0
  %v2822 = vsel %vm2217, %v2753, 0
  %v2825 = vsel %vm2217, %v2754, 0
  %v2828 = vsel %vm2217, %v2755, 0
  %v2831 = vsel %vm2217, %v2756, 0
  %v2834 = vsel %vm2217, %v2757, 0
  %v2837 = vsel %vm2217, %v2758, 0
  %v2840 = vsel %vm2217, %v2759, 0
  %v2843 = vsel %vm2217, %v2760, 0
  %v2846 = vsel %vm2217, %v2761, 0
  %v2849 = vsel %vm2217, %v2762, 0
  %v2852 = vsel %vm2217, %v2763, 0
  %v2855 = vsel %vm2217, %v2764, 0
  %v2858 = vsel %vm2217, %v2765, 0
  %v2861 = vsel %vm2217, %v2766, 0
  %v2864 = vsel %vm2314, %v1344, 0
  %2866 = vmatprep.subr.bf16.mxu0 0
  %2867 = vmatpush1.bf16.msra.mxu0 0
  %2868 = vmatprep.subr.bf16.mxu0 0
  %2869 = vmatpush1.bf16.msra.mxu0 0
  %2870 = vmatprep.subr.bf16.mxu0 0
  %2871 = vmatpush1.bf16.msra.mxu0 0
  %2872 = vmatprep.subr.bf16.mxu0 0
  %2873 = vmatpush1.bf16.msra.mxu0 0
  %2874 = vmatprep.subr.bf16.mxu0 0
  %2875 = vmatpush1.bf16.msra.mxu0 0
  %2876 = vmatprep.subr.bf16.mxu0 0
  %2877 = vmatpush1.bf16.msra.mxu0 0
  %2878 = vmatprep.subr.bf16.mxu0 0
  %2879 = vmatpush1.bf16.msra.mxu0 0
  %2880 = vmatprep.subr.bf16.mxu0 0
  %2881 = vmatpush1.bf16.msra.mxu0 %v2864
  %2882 = vmatprep.subr.bf16.mxu0 0
  %2883 = vmatpush2.bf16.msra.mxu0 0
  %2884 = vmatprep.subr.bf16.mxu0 0
  %2885 = vmatpush2.bf16.msra.mxu0 0
  %2886 = vmatprep.subr.bf16.mxu0 0
  %2887 = vmatpush2.bf16.msra.mxu0 0
  %2888 = vmatprep.subr.bf16.mxu0 0
  %2889 = vmatpush2.bf16.msra.mxu0 0
  %2890 = vmatprep.subr.bf16.mxu0 0
  %2891 = vmatpush2.bf16.msra.mxu0 0
  %2892 = vmatprep.subr.bf16.mxu0 0
  %2893 = vmatpush2.bf16.msra.mxu0 0
  %2894 = vmatprep.subr.bf16.mxu0 0
  %2895 = vmatpush2.bf16.msra.mxu0 0
  %2896 = vmatprep.subr.bf16.mxu0 0
  %2897 = vmatpush2.bf16.msra.mxu0 0
  %2898 = vmatprep.mubr.bf16.mxu0 0
  %2899 = vmatmul.mubr.bf16.gmra.mxu0 %v2768
  %v2900 = vpop.f32.mrf.mxu0
  %v2901 = vadd.f32 %v2353, %v2900
  %v2902 = vpop.f32.mrf.mxu0
  %v2903 = vpop.f32.mrf.mxu0
  %v2904 = vadd.f32 %v2356, %v2903
  %v2905 = vpop.f32.mrf.mxu0
  %2906 = vmatprep.mubr.bf16.mxu0 0
  %2907 = vmatmul.mubr.bf16.gmra.mxu0 %v2771
  %v2908 = vpop.f32.mrf.mxu0
  %v2909 = vadd.f32 %v2361, %v2908
  %v2910 = vpop.f32.mrf.mxu0
  %v2911 = vpop.f32.mrf.mxu0
  %v2912 = vadd.f32 %v2364, %v2911
  %v2913 = vpop.f32.mrf.mxu0
  %2914 = vmatprep.mubr.bf16.mxu0 0
  %2915 = vmatmul.mubr.bf16.gmra.mxu0 %v2774
  %v2916 = vpop.f32.mrf.mxu0
  %v2917 = vadd.f32 %v2369, %v2916
  %v2918 = vpop.f32.mrf.mxu0
  %v2919 = vpop.f32.mrf.mxu0
  %v2920 = vadd.f32 %v2372, %v2919
  %v2921 = vpop.f32.mrf.mxu0
  %2922 = vmatprep.mubr.bf16.mxu0 0
  %2923 = vmatmul.mubr.bf16.gmra.mxu0 %v2777
  %v2924 = vpop.f32.mrf.mxu0
  %v2925 = vadd.f32 %v2377, %v2924
  %v2926 = vpop.f32.mrf.mxu0
  %v2927 = vpop.f32.mrf.mxu0
  %v2928 = vadd.f32 %v2380, %v2927
  %v2929 = vpop.f32.mrf.mxu0
  %2930 = vmatprep.mubr.bf16.mxu0 0
  %2931 = vmatmul.mubr.bf16.gmra.mxu0 %v2780
  %v2932 = vpop.f32.mrf.mxu0
  %v2933 = vadd.f32 %v2385, %v2932
  %v2934 = vpop.f32.mrf.mxu0
  %v2935 = vpop.f32.mrf.mxu0
  %v2936 = vadd.f32 %v2388, %v2935
  %v2937 = vpop.f32.mrf.mxu0
  %2938 = vmatprep.mubr.bf16.mxu0 0
  %2939 = vmatmul.mubr.bf16.gmra.mxu0 %v2783
  %v2940 = vpop.f32.mrf.mxu0
  %v2941 = vadd.f32 %v2393, %v2940
  %v2942 = vpop.f32.mrf.mxu0
  %v2943 = vpop.f32.mrf.mxu0
  %v2944 = vadd.f32 %v2396, %v2943
  %v2945 = vpop.f32.mrf.mxu0
  %2946 = vmatprep.mubr.bf16.mxu0 0
  %2947 = vmatmul.mubr.bf16.gmra.mxu0 %v2786
  %v2948 = vpop.f32.mrf.mxu0
  %v2949 = vadd.f32 %v2401, %v2948
  %v2950 = vpop.f32.mrf.mxu0
  %v2951 = vpop.f32.mrf.mxu0
  %v2952 = vadd.f32 %v2404, %v2951
  %v2953 = vpop.f32.mrf.mxu0
  %2954 = vmatprep.mubr.bf16.mxu0 0
  %2955 = vmatmul.mubr.bf16.gmra.mxu0 %v2789
  %v2956 = vpop.f32.mrf.mxu0
  %v2957 = vadd.f32 %v2409, %v2956
  %v2958 = vpop.f32.mrf.mxu0
  %v2959 = vpop.f32.mrf.mxu0
  %v2960 = vadd.f32 %v2412, %v2959
  %v2961 = vpop.f32.mrf.mxu0
  %2962 = vmatprep.mubr.bf16.mxu0 0
  %2963 = vmatmul.mubr.bf16.gmra.mxu0 %v2792
  %v2964 = vpop.f32.mrf.mxu0
  %v2965 = vadd.f32 %v2417, %v2964
  %v2966 = vpop.f32.mrf.mxu0
  %v2967 = vpop.f32.mrf.mxu0
  %v2968 = vadd.f32 %v2420, %v2967
  %v2969 = vpop.f32.mrf.mxu0
  %2970 = vmatprep.mubr.bf16.mxu0 0
  %2971 = vmatmul.mubr.bf16.gmra.mxu0 %v2795
  %v2972 = vpop.f32.mrf.mxu0
  %v2973 = vadd.f32 %v2425, %v2972
  %v2974 = vpop.f32.mrf.mxu0
  %v2975 = vpop.f32.mrf.mxu0
  %v2976 = vadd.f32 %v2428, %v2975
  %v2977 = vpop.f32.mrf.mxu0
  %2978 = vmatprep.mubr.bf16.mxu0 0
  %2979 = vmatmul.mubr.bf16.gmra.mxu0 %v2798
  %v2980 = vpop.f32.mrf.mxu0
  %v2981 = vadd.f32 %v2433, %v2980
  %v2982 = vpop.f32.mrf.mxu0
  %v2983 = vpop.f32.mrf.mxu0
  %v2984 = vadd.f32 %v2436, %v2983
  %v2985 = vpop.f32.mrf.mxu0
  %2986 = vmatprep.mubr.bf16.mxu0 0
  %2987 = vmatmul.mubr.bf16.gmra.mxu0 %v2801
  %v2988 = vpop.f32.mrf.mxu0
  %v2989 = vadd.f32 %v2441, %v2988
  %v2990 = vpop.f32.mrf.mxu0
  %v2991 = vpop.f32.mrf.mxu0
  %v2992 = vadd.f32 %v2444, %v2991
  %v2993 = vpop.f32.mrf.mxu0
  %2994 = vmatprep.mubr.bf16.mxu0 0
  %2995 = vmatmul.mubr.bf16.gmra.mxu0 %v2804
  %v2996 = vpop.f32.mrf.mxu0
  %v2997 = vadd.f32 %v2449, %v2996
  %v2998 = vpop.f32.mrf.mxu0
  %v2999 = vpop.f32.mrf.mxu0
  %v3000 = vadd.f32 %v2452, %v2999
  %v3001 = vpop.f32.mrf.mxu0
  %3002 = vmatprep.mubr.bf16.mxu0 0
  %3003 = vmatmul.mubr.bf16.gmra.mxu0 %v2807
  %v3004 = vpop.f32.mrf.mxu0
  %v3005 = vadd.f32 %v2457, %v3004
  %v3006 = vpop.f32.mrf.mxu0
  %v3007 = vpop.f32.mrf.mxu0
  %v3008 = vadd.f32 %v2460, %v3007
  %v3009 = vpop.f32.mrf.mxu0
  %3010 = vmatprep.mubr.bf16.mxu0 0
  %3011 = vmatmul.mubr.bf16.gmra.mxu0 %v2810
  %v3012 = vpop.f32.mrf.mxu0
  %v3013 = vadd.f32 %v2465, %v3012
  %v3014 = vpop.f32.mrf.mxu0
  %v3015 = vpop.f32.mrf.mxu0
  %v3016 = vadd.f32 %v2468, %v3015
  %v3017 = vpop.f32.mrf.mxu0
  %3018 = vmatprep.mubr.bf16.mxu0 0
  %3019 = vmatmul.mubr.bf16.gmra.mxu0 %v2813
  %v3020 = vpop.f32.mrf.mxu0
  %v3021 = vadd.f32 %v2473, %v3020
  %v3022 = vpop.f32.mrf.mxu0
  %v3023 = vpop.f32.mrf.mxu0
  %v3024 = vadd.f32 %v2476, %v3023
  %v3025 = vpop.f32.mrf.mxu0
  %3026 = vmatprep.mubr.bf16.mxu0 0
  %3027 = vmatmul.mubr.bf16.gmra.mxu0 %v2816
  %v3028 = vpop.f32.mrf.mxu0
  %v3029 = vadd.f32 %v2481, %v3028
  %v3030 = vpop.f32.mrf.mxu0
  %v3031 = vpop.f32.mrf.mxu0
  %v3032 = vadd.f32 %v2484, %v3031
  %v3033 = vpop.f32.mrf.mxu0
  %3034 = vmatprep.mubr.bf16.mxu0 0
  %3035 = vmatmul.mubr.bf16.gmra.mxu0 %v2819
  %v3036 = vpop.f32.mrf.mxu0
  %v3037 = vadd.f32 %v2489, %v3036
  %v3038 = vpop.f32.mrf.mxu0
  %v3039 = vpop.f32.mrf.mxu0
  %v3040 = vadd.f32 %v2492, %v3039
  %v3041 = vpop.f32.mrf.mxu0
  %3042 = vmatprep.mubr.bf16.mxu0 0
  %3043 = vmatmul.mubr.bf16.gmra.mxu0 %v2822
  %v3044 = vpop.f32.mrf.mxu0
  %v3045 = vadd.f32 %v2497, %v3044
  %v3046 = vpop.f32.mrf.mxu0
  %v3047 = vpop.f32.mrf.mxu0
  %v3048 = vadd.f32 %v2500, %v3047
  %v3049 = vpop.f32.mrf.mxu0
  %3050 = vmatprep.mubr.bf16.mxu0 0
  %3051 = vmatmul.mubr.bf16.gmra.mxu0 %v2825
  %v3052 = vpop.f32.mrf.mxu0
  %v3053 = vadd.f32 %v2505, %v3052
  %v3054 = vpop.f32.mrf.mxu0
  %v3055 = vpop.f32.mrf.mxu0
  %v3056 = vadd.f32 %v2508, %v3055
  %v3057 = vpop.f32.mrf.mxu0
  %3058 = vmatprep.mubr.bf16.mxu0 0
  %3059 = vmatmul.mubr.bf16.gmra.mxu0 %v2828
  %v3060 = vpop.f32.mrf.mxu0
  %v3061 = vadd.f32 %v2513, %v3060
  %v3062 = vpop.f32.mrf.mxu0
  %v3063 = vpop.f32.mrf.mxu0
  %v3064 = vadd.f32 %v2516, %v3063
  %v3065 = vpop.f32.mrf.mxu0
  %3066 = vmatprep.mubr.bf16.mxu0 0
  %3067 = vmatmul.mubr.bf16.gmra.mxu0 %v2831
  %v3068 = vpop.f32.mrf.mxu0
  %v3069 = vadd.f32 %v2521, %v3068
  %v3070 = vpop.f32.mrf.mxu0
  %v3071 = vpop.f32.mrf.mxu0
  %v3072 = vadd.f32 %v2524, %v3071
  %v3073 = vpop.f32.mrf.mxu0
  %3074 = vmatprep.mubr.bf16.mxu0 0
  %3075 = vmatmul.mubr.bf16.gmra.mxu0 %v2834
  %v3076 = vpop.f32.mrf.mxu0
  %v3077 = vadd.f32 %v2529, %v3076
  %v3078 = vpop.f32.mrf.mxu0
  %v3079 = vpop.f32.mrf.mxu0
  %v3080 = vadd.f32 %v2532, %v3079
  %v3081 = vpop.f32.mrf.mxu0
  %3082 = vmatprep.mubr.bf16.mxu0 0
  %3083 = vmatmul.mubr.bf16.gmra.mxu0 %v2837
  %v3084 = vpop.f32.mrf.mxu0
  %v3085 = vadd.f32 %v2537, %v3084
  %v3086 = vpop.f32.mrf.mxu0
  %v3087 = vpop.f32.mrf.mxu0
  %v3088 = vadd.f32 %v2540, %v3087
  %v3089 = vpop.f32.mrf.mxu0
  %3090 = vmatprep.mubr.bf16.mxu0 0
  %3091 = vmatmul.mubr.bf16.gmra.mxu0 %v2840
  %v3092 = vpop.f32.mrf.mxu0
  %v3093 = vadd.f32 %v2545, %v3092
  %v3094 = vpop.f32.mrf.mxu0
  %v3095 = vpop.f32.mrf.mxu0
  %v3096 = vadd.f32 %v2548, %v3095
  %v3097 = vpop.f32.mrf.mxu0
  %3098 = vmatprep.mubr.bf16.mxu0 0
  %3099 = vmatmul.mubr.bf16.gmra.mxu0 %v2843
  %v3100 = vpop.f32.mrf.mxu0
  %v3101 = vadd.f32 %v2553, %v3100
  %v3102 = vpop.f32.mrf.mxu0
  %v3103 = vpop.f32.mrf.mxu0
  %v3104 = vadd.f32 %v2556, %v3103
  %v3105 = vpop.f32.mrf.mxu0
  %3106 = vmatprep.mubr.bf16.mxu0 0
  %3107 = vmatmul.mubr.bf16.gmra.mxu0 %v2846
  %v3108 = vpop.f32.mrf.mxu0
  %v3109 = vadd.f32 %v2561, %v3108
  %v3110 = vpop.f32.mrf.mxu0
  %v3111 = vpop.f32.mrf.mxu0
  %v3112 = vadd.f32 %v2564, %v3111
  %v3113 = vpop.f32.mrf.mxu0
  %3114 = vmatprep.mubr.bf16.mxu0 0
  %3115 = vmatmul.mubr.bf16.gmra.mxu0 %v2849
  %v3116 = vpop.f32.mrf.mxu0
  %v3117 = vadd.f32 %v2569, %v3116
  %v3118 = vpop.f32.mrf.mxu0
  %v3119 = vpop.f32.mrf.mxu0
  %v3120 = vadd.f32 %v2572, %v3119
  %v3121 = vpop.f32.mrf.mxu0
  %3122 = vmatprep.mubr.bf16.mxu0 0
  %3123 = vmatmul.mubr.bf16.gmra.mxu0 %v2852
  %v3124 = vpop.f32.mrf.mxu0
  %v3125 = vadd.f32 %v2577, %v3124
  %v3126 = vpop.f32.mrf.mxu0
  %v3127 = vpop.f32.mrf.mxu0
  %v3128 = vadd.f32 %v2580, %v3127
  %v3129 = vpop.f32.mrf.mxu0
  %3130 = vmatprep.mubr.bf16.mxu0 0
  %3131 = vmatmul.mubr.bf16.gmra.mxu0 %v2855
  %v3132 = vpop.f32.mrf.mxu0
  %v3133 = vadd.f32 %v2585, %v3132
  %v3134 = vpop.f32.mrf.mxu0
  %v3135 = vpop.f32.mrf.mxu0
  %v3136 = vadd.f32 %v2588, %v3135
  %v3137 = vpop.f32.mrf.mxu0
  %3138 = vmatprep.mubr.bf16.mxu0 0
  %3139 = vmatmul.mubr.bf16.gmra.mxu0 %v2858
  %v3140 = vpop.f32.mrf.mxu0
  %v3141 = vadd.f32 %v2593, %v3140
  %v3142 = vpop.f32.mrf.mxu0
  %v3143 = vpop.f32.mrf.mxu0
  %v3144 = vadd.f32 %v2596, %v3143
  %v3145 = vpop.f32.mrf.mxu0
  %3146 = vmatprep.mubr.bf16.mxu0 0
  %3147 = vmatmul.mubr.bf16.gmra.mxu0 %v2861
  %v3148 = vpop.f32.mrf.mxu0
  %v3149 = vadd.f32 %v2601, %v3148
  %v3150 = vpop.f32.mrf.mxu0
  %v3151 = vpop.f32.mrf.mxu0
  %v3152 = vadd.f32 %v2604, %v3151
  %v3153 = vpop.f32.mrf.mxu0
  %3154 = vdwg.mxu0
  %vm3187 = vcmask 1042432
  %vm3188 = vcmask 1046532
  %vm3189 = vmor %vm3187, %vm3188
  %v3190 = vrot.slane %v1236, 5
  %v3191 = vrot.slane %v3190, 4
  %v3192 = vrot.slane %v1237, 5
  %v3193 = vsel %vm3189, %v3191, %v3192
  %v3194 = vrot.slane %v3192, 4
  %v3195 = vrot.slane %v1238, 5
  %v3196 = vsel %vm3189, %v3194, %v3195
  %v3197 = vrot.slane %v1239, 5
  %v3198 = vrot.slane %v3197, 4
  %v3199 = vrot.slane %v1240, 5
  %v3200 = vsel %vm3189, %v3198, %v3199
  %v3201 = vrot.slane %v3199, 4
  %v3202 = vrot.slane %v1241, 5
  %v3203 = vsel %vm3189, %v3201, %v3202
  %v3204 = vrot.slane %v1242, 5
  %v3205 = vrot.slane %v3204, 4
  %v3206 = vrot.slane %v1243, 5
  %v3207 = vsel %vm3189, %v3205, %v3206
  %v3208 = vrot.slane %v3206, 4
  %v3209 = vrot.slane %v1244, 5
  %v3210 = vsel %vm3189, %v3208, %v3209
  %v3211 = vrot.slane %v1245, 5
  %v3212 = vrot.slane %v3211, 4
  %v3213 = vrot.slane %v1246, 5
  %v3214 = vsel %vm3189, %v3212, %v3213
  %v3215 = vrot.slane %v3213, 4
  %v3216 = vrot.slane %v1247, 5
  %v3217 = vsel %vm3189, %v3215, %v3216
  %v3218 = vrot.slane %v1248, 5
  %v3219 = vrot.slane %v3218, 4
  %v3220 = vrot.slane %v1249, 5
  %v3221 = vsel %vm3189, %v3219, %v3220
  %v3222 = vrot.slane %v3220, 4
  %v3223 = vrot.slane %v1250, 5
  %v3224 = vsel %vm3189, %v3222, %v3223
  %v3225 = vrot.slane %v1251, 5
  %v3226 = vrot.slane %v3225, 4
  %v3227 = vrot.slane %v1252, 5
  %v3228 = vsel %vm3189, %v3226, %v3227
  %v3229 = vrot.slane %v3227, 4
  %v3230 = vrot.slane %v1253, 5
  %v3231 = vsel %vm3189, %v3229, %v3230
  %v3232 = vrot.slane %v1254, 5
  %v3233 = vrot.slane %v3232, 4
  %v3234 = vrot.slane %v1255, 5
  %v3235 = vsel %vm3189, %v3233, %v3234
  %v3236 = vrot.slane %v3234, 4
  %v3237 = vrot.slane %v1256, 5
  %v3238 = vsel %vm3189, %v3236, %v3237
  %v3239 = vrot.slane %v1257, 5
  %v3240 = vrot.slane %v3239, 4
  %v3241 = vrot.slane %v1258, 5
  %v3242 = vsel %vm3189, %v3240, %v3241
  %v3243 = vrot.slane %v3241, 4
  %v3244 = vrot.slane %v1259, 5
  %v3245 = vsel %vm3189, %v3243, %v3244
  %v3246 = vrot.slane %v1260, 5
  %v3247 = vrot.slane %v3246, 4
  %v3248 = vrot.slane %v1261, 5
  %v3249 = vsel %vm3189, %v3247, %v3248
  %v3250 = vrot.slane %v3248, 4
  %v3251 = vrot.slane %v1262, 5
  %v3252 = vsel %vm3189, %v3250, %v3251
  %v3253 = vrot.slane %v1263, 5
  %v3254 = vrot.slane %v3253, 4
  %v3255 = vrot.slane %v1264, 5
  %v3256 = vsel %vm3189, %v3254, %v3255
  %v3257 = vrot.slane %v3255, 4
  %v3258 = vrot.slane %v1265, 5
  %v3259 = vsel %vm3189, %v3257, %v3258
  %v3260 = vrot.slane %v1266, 5
  %v3261 = vrot.slane %v3260, 4
  %v3262 = vrot.slane %v1267, 5
  %v3263 = vsel %vm3189, %v3261, %v3262
  %v3264 = vrot.slane %v3262, 4
  %v3265 = vrot.slane %v1268, 5
  %v3266 = vsel %vm3189, %v3264, %v3265
  %v3267 = vrot.slane %v1269, 5
  %v3268 = vrot.slane %v3267, 4
  %v3269 = vrot.slane %v1270, 5
  %v3270 = vsel %vm3189, %v3268, %v3269
  %v3271 = vrot.slane %v3269, 4
  %v3272 = vrot.slane %v1271, 5
  %v3273 = vsel %vm3189, %v3271, %v3272
  %v3274 = vrot.slane %v1272, 5
  %v3275 = vrot.slane %v3274, 4
  %v3276 = vrot.slane %v1273, 5
  %v3277 = vsel %vm3189, %v3275, %v3276
  %v3278 = vrot.slane %v3276, 4
  %v3279 = vrot.slane %v1274, 5
  %v3280 = vsel %vm3189, %v3278, %v3279
  %v3281 = vrot.slane %v1275, 5
  %v3282 = vrot.slane %v3281, 4
  %v3283 = vrot.slane %v1276, 5
  %v3284 = vsel %vm3189, %v3282, %v3283
  %v3285 = vrot.slane %v3283, 4
  %v3286 = vrot.slane %v1277, 5
  %v3287 = vsel %vm3189, %v3285, %v3286
  %v3288 = vrot.slane %v1278, 5
  %v3289 = vrot.slane %v3288, 4
  %v3290 = vrot.slane %v1279, 5
  %v3291 = vsel %vm3189, %v3289, %v3290
  %v3292 = vrot.slane %v3290, 4
  %v3293 = vrot.slane %v1280, 5
  %v3294 = vsel %vm3189, %v3292, %v3293
  %v3295 = vrot.slane %v1281, 5
  %v3296 = vrot.slane %v3295, 4
  %v3297 = vrot.slane %v1282, 5
  %v3298 = vsel %vm3189, %v3296, %v3297
  %v3299 = vrot.slane %v3297, 4
  %v3300 = vrot.slane %v1283, 5
  %v3301 = vsel %vm3189, %v3299, %v3300
  %v3302 = vrot.slane %v1290, 5
  %v3303 = vrot.slane %v3302, 4
  %v3304 = vrot.slane %v1291, 5
  %v3305 = vsel %vm3189, %v3303, %v3304
  %v3306 = vrot.slane %v3304, 4
  %v3307 = vrot.slane %v1292, 5
  %v3308 = vsel %vm3189, %v3306, %v3307
  %v3309 = vrot.slane %v1293, 5
  %v3310 = vrot.slane %v3309, 4
  %v3311 = vrot.slane %v1294, 5
  %v3312 = vsel %vm3189, %v3310, %v3311
  %v3313 = vrot.slane %v3311, 4
  %v3314 = vrot.slane %v1295, 5
  %v3315 = vsel %vm3189, %v3313, %v3314
  %v3316 = vrot.slane %v1296, 5
  %v3317 = vrot.slane %v3316, 4
  %v3318 = vrot.slane %v1297, 5
  %v3319 = vsel %vm3189, %v3317, %v3318
  %v3320 = vrot.slane %v3318, 4
  %v3321 = vrot.slane %v1298, 5
  %v3322 = vsel %vm3189, %v3320, %v3321
  %v3323 = vrot.slane %v1299, 5
  %v3324 = vrot.slane %v3323, 4
  %v3325 = vrot.slane %v1300, 5
  %v3326 = vsel %vm3189, %v3324, %v3325
  %v3327 = vrot.slane %v3325, 4
  %v3328 = vrot.slane %v1301, 5
  %v3329 = vsel %vm3189, %v3327, %v3328
  %v3330 = vrot.slane %v1302, 5
  %v3331 = vrot.slane %v3330, 4
  %v3332 = vrot.slane %v1303, 5
  %v3333 = vsel %vm3189, %v3331, %v3332
  %v3334 = vrot.slane %v3332, 4
  %v3335 = vrot.slane %v1304, 5
  %v3336 = vsel %vm3189, %v3334, %v3335
  %v3337 = vrot.slane %v1305, 5
  %v3338 = vrot.slane %v3337, 4
  %v3339 = vrot.slane %v1306, 5
  %v3340 = vsel %vm3189, %v3338, %v3339
  %v3341 = vrot.slane %v3339, 4
  %v3342 = vrot.slane %v1307, 5
  %v3343 = vsel %vm3189, %v3341, %v3342
  %v3344 = vrot.slane %v1308, 5
  %v3345 = vrot.slane %v3344, 4
  %v3346 = vrot.slane %v1309, 5
  %v3347 = vsel %vm3189, %v3345, %v3346
  %v3348 = vrot.slane %v3346, 4
  %v3349 = vrot.slane %v1310, 5
  %v3350 = vsel %vm3189, %v3348, %v3349
  %v3351 = vrot.slane %v1311, 5
  %v3352 = vrot.slane %v3351, 4
  %v3353 = vrot.slane %v1312, 5
  %v3354 = vsel %vm3189, %v3352, %v3353
  %v3355 = vrot.slane %v3353, 4
  %v3356 = vrot.slane %v1313, 5
  %v3357 = vsel %vm3189, %v3355, %v3356
  %v3358 = vrot.slane %v1314, 5
  %v3359 = vrot.slane %v3358, 4
  %v3360 = vrot.slane %v1315, 5
  %v3361 = vsel %vm3189, %v3359, %v3360
  %v3362 = vrot.slane %v3360, 4
  %v3363 = vrot.slane %v1316, 5
  %v3364 = vsel %vm3189, %v3362, %v3363
  %v3365 = vrot.slane %v1317, 5
  %v3366 = vrot.slane %v3365, 4
  %v3367 = vrot.slane %v1318, 5
  %v3368 = vsel %vm3189, %v3366, %v3367
  %v3369 = vrot.slane %v3367, 4
  %v3370 = vrot.slane %v1319, 5
  %v3371 = vsel %vm3189, %v3369, %v3370
  %v3372 = vrot.slane %v1320, 5
  %v3373 = vrot.slane %v3372, 4
  %v3374 = vrot.slane %v1321, 5
  %v3375 = vsel %vm3189, %v3373, %v3374
  %v3376 = vrot.slane %v3374, 4
  %v3377 = vrot.slane %v1322, 5
  %v3378 = vsel %vm3189, %v3376, %v3377
  %v3379 = vrot.slane %v1323, 5
  %v3380 = vrot.slane %v3379, 4
  %v3381 = vrot.slane %v1324, 5
  %v3382 = vsel %vm3189, %v3380, %v3381
  %v3383 = vrot.slane %v3381, 4
  %v3384 = vrot.slane %v1325, 5
  %v3385 = vsel %vm3189, %v3383, %v3384
  %v3386 = vrot.slane %v1326, 5
  %v3387 = vrot.slane %v3386, 4
  %v3388 = vrot.slane %v1327, 5
  %v3389 = vsel %vm3189, %v3387, %v3388
  %v3390 = vrot.slane %v3388, 4
  %v3391 = vrot.slane %v1328, 5
  %v3392 = vsel %vm3189, %v3390, %v3391
  %v3393 = vrot.slane %v1329, 5
  %v3394 = vrot.slane %v3393, 4
  %v3395 = vrot.slane %v1330, 5
  %v3396 = vsel %vm3189, %v3394, %v3395
  %v3397 = vrot.slane %v3395, 4
  %v3398 = vrot.slane %v1331, 5
  %v3399 = vsel %vm3189, %v3397, %v3398
  %v3400 = vrot.slane %v1332, 5
  %v3401 = vrot.slane %v3400, 4
  %v3402 = vrot.slane %v1333, 5
  %v3403 = vsel %vm3189, %v3401, %v3402
  %v3404 = vrot.slane %v3402, 4
  %v3405 = vrot.slane %v1334, 5
  %v3406 = vsel %vm3189, %v3404, %v3405
  %v3407 = vrot.slane %v1335, 5
  %v3408 = vrot.slane %v3407, 4
  %v3409 = vrot.slane %v1336, 5
  %v3410 = vsel %vm3189, %v3408, %v3409
  %v3411 = vrot.slane %v3409, 4
  %v3412 = vrot.slane %v1337, 5
  %v3413 = vsel %vm3189, %v3411, %v3412
  %v3414 = vld [vmem:[%s1 + $0x4] sm:$0x3]
  %v3415 = vunpack.c.l.b16 %v3193
  %v3416 = vunpack.c.l.b16 %v3196
  %v3417 = vunpack.c.l.b16 %v3200
  %v3418 = vunpack.c.l.b16 %v3203
  %v3419 = vunpack.c.l.b16 %v3207
  %v3420 = vunpack.c.l.b16 %v3210
  %v3421 = vunpack.c.l.b16 %v3214
  %v3422 = vunpack.c.l.b16 %v3217
  %v3423 = vunpack.c.l.b16 %v3221
  %v3424 = vunpack.c.l.b16 %v3224
  %v3425 = vunpack.c.l.b16 %v3228
  %v3426 = vunpack.c.l.b16 %v3231
  %v3427 = vunpack.c.l.b16 %v3235
  %v3428 = vunpack.c.l.b16 %v3238
  %v3429 = vunpack.c.l.b16 %v3242
  %v3430 = vunpack.c.l.b16 %v3245
  %v3431 = vunpack.c.l.b16 %v3249
  %v3432 = vunpack.c.l.b16 %v3252
  %v3433 = vunpack.c.l.b16 %v3256
  %v3434 = vunpack.c.l.b16 %v3259
  %v3435 = vunpack.c.l.b16 %v3263
  %v3436 = vunpack.c.l.b16 %v3266
  %v3437 = vunpack.c.l.b16 %v3270
  %v3438 = vunpack.c.l.b16 %v3273
  %v3439 = vunpack.c.l.b16 %v3277
  %v3440 = vunpack.c.l.b16 %v3280
  %v3441 = vunpack.c.l.b16 %v3284
  %v3442 = vunpack.c.l.b16 %v3287
  %v3443 = vunpack.c.l.b16 %v3291
  %v3444 = vunpack.c.l.b16 %v3294
  %v3445 = vunpack.c.l.b16 %v3298
  %v3446 = vunpack.c.l.b16 %v3301
  %v3447 = vunpack.c.l.b16 %v3305
  %v3448 = vunpack.c.l.b16 %v3308
  %v3449 = vunpack.c.l.b16 %v3312
  %v3450 = vunpack.c.l.b16 %v3315
  %v3451 = vunpack.c.l.b16 %v3319
  %v3452 = vunpack.c.l.b16 %v3322
  %v3453 = vunpack.c.l.b16 %v3326
  %v3454 = vunpack.c.l.b16 %v3329
  %v3455 = vunpack.c.l.b16 %v3333
  %v3456 = vunpack.c.l.b16 %v3336
  %v3457 = vunpack.c.l.b16 %v3340
  %v3458 = vunpack.c.l.b16 %v3343
  %v3459 = vunpack.c.l.b16 %v3347
  %v3460 = vunpack.c.l.b16 %v3350
  %v3461 = vunpack.c.l.b16 %v3354
  %v3462 = vunpack.c.l.b16 %v3357
  %v3463 = vunpack.c.l.b16 %v3361
  %v3464 = vunpack.c.l.b16 %v3364
  %v3465 = vunpack.c.l.b16 %v3368
  %v3466 = vunpack.c.l.b16 %v3371
  %v3467 = vunpack.c.l.b16 %v3375
  %v3468 = vunpack.c.l.b16 %v3378
  %v3469 = vunpack.c.l.b16 %v3382
  %v3470 = vunpack.c.l.b16 %v3385
  %v3471 = vunpack.c.l.b16 %v3389
  %v3472 = vunpack.c.l.b16 %v3392
  %v3473 = vunpack.c.l.b16 %v3396
  %v3474 = vunpack.c.l.b16 %v3399
  %v3475 = vunpack.c.l.b16 %v3403
  %v3476 = vunpack.c.l.b16 %v3406
  %v3477 = vunpack.c.l.b16 %v3410
  %v3478 = vunpack.c.l.b16 %v3413
  %v3479 = vpack.c.b16 %v3416, %v3415
  %v3480 = vpack.c.b16 %v3418, %v3417
  %v3481 = vpack.c.b16 %v3420, %v3419
  %v3482 = vpack.c.b16 %v3422, %v3421
  %v3483 = vpack.c.b16 %v3424, %v3423
  %v3484 = vpack.c.b16 %v3426, %v3425
  %v3485 = vpack.c.b16 %v3428, %v3427
  %v3486 = vpack.c.b16 %v3430, %v3429
  %v3487 = vpack.c.b16 %v3432, %v3431
  %v3488 = vpack.c.b16 %v3434, %v3433
  %v3489 = vpack.c.b16 %v3436, %v3435
  %v3490 = vpack.c.b16 %v3438, %v3437
  %v3491 = vpack.c.b16 %v3440, %v3439
  %v3492 = vpack.c.b16 %v3442, %v3441
  %v3493 = vpack.c.b16 %v3444, %v3443
  %v3494 = vpack.c.b16 %v3446, %v3445
  %v3495 = vpack.c.b16 %v3448, %v3447
  %v3496 = vpack.c.b16 %v3450, %v3449
  %v3497 = vpack.c.b16 %v3452, %v3451
  %v3498 = vpack.c.b16 %v3454, %v3453
  %v3499 = vpack.c.b16 %v3456, %v3455
  %v3500 = vpack.c.b16 %v3458, %v3457
  %v3501 = vpack.c.b16 %v3460, %v3459
  %v3502 = vpack.c.b16 %v3462, %v3461
  %v3503 = vpack.c.b16 %v3464, %v3463
  %v3504 = vpack.c.b16 %v3466, %v3465
  %v3505 = vpack.c.b16 %v3468, %v3467
  %v3506 = vpack.c.b16 %v3470, %v3469
  %v3507 = vpack.c.b16 %v3472, %v3471
  %v3508 = vpack.c.b16 %v3474, %v3473
  %v3509 = vpack.c.b16 %v3476, %v3475
  %v3510 = vpack.c.b16 %v3478, %v3477
  %v3512 = vsel %vm2217, %v3479, 0
  %v3515 = vsel %vm2217, %v3480, 0
  %v3518 = vsel %vm2217, %v3481, 0
  %v3521 = vsel %vm2217, %v3482, 0
  %v3524 = vsel %vm2217, %v3483, 0
  %v3527 = vsel %vm2217, %v3484, 0
  %v3530 = vsel %vm2217, %v3485, 0
  %v3533 = vsel %vm2217, %v3486, 0
  %v3536 = vsel %vm2217, %v3487, 0
  %v3539 = vsel %vm2217, %v3488, 0
  %v3542 = vsel %vm2217, %v3489, 0
  %v3545 = vsel %vm2217, %v3490, 0
  %v3548 = vsel %vm2217, %v3491, 0
  %v3551 = vsel %vm2217, %v3492, 0
  %v3554 = vsel %vm2217, %v3493, 0
  %v3557 = vsel %vm2217, %v3494, 0
  %v3560 = vsel %vm2217, %v3495, 0
  %v3563 = vsel %vm2217, %v3496, 0
  %v3566 = vsel %vm2217, %v3497, 0
  %v3569 = vsel %vm2217, %v3498, 0
  %v3572 = vsel %vm2217, %v3499, 0
  %v3575 = vsel %vm2217, %v3500, 0
  %v3578 = vsel %vm2217, %v3501, 0
  %v3581 = vsel %vm2217, %v3502, 0
  %v3584 = vsel %vm2217, %v3503, 0
  %v3587 = vsel %vm2217, %v3504, 0
  %v3590 = vsel %vm2217, %v3505, 0
  %v3593 = vsel %vm2217, %v3506, 0
  %v3596 = vsel %vm2217, %v3507, 0
  %v3599 = vsel %vm2217, %v3508, 0
  %v3602 = vsel %vm2217, %v3509, 0
  %v3605 = vsel %vm2217, %v3510, 0
  %v3608 = vsel %vm2314, %v3414, 0
  %3610 = vmatprep.subr.bf16.mxu0 0
  %3611 = vmatpush1.bf16.msra.mxu0 0
  %3612 = vmatprep.subr.bf16.mxu0 0
  %3613 = vmatpush1.bf16.msra.mxu0 0
  %3614 = vmatprep.subr.bf16.mxu0 0
  %3615 = vmatpush1.bf16.msra.mxu0 0
  %3616 = vmatprep.subr.bf16.mxu0 0
  %3617 = vmatpush1.bf16.msra.mxu0 0
  %3618 = vmatprep.subr.bf16.mxu0 0
  %3619 = vmatpush1.bf16.msra.mxu0 0
  %3620 = vmatprep.subr.bf16.mxu0 0
  %3621 = vmatpush1.bf16.msra.mxu0 0
  %3622 = vmatprep.subr.bf16.mxu0 0
  %3623 = vmatpush1.bf16.msra.mxu0 0
  %3624 = vmatprep.subr.bf16.mxu0 0
  %3625 = vmatpush1.bf16.msra.mxu0 %v3608
  %3626 = vmatprep.subr.bf16.mxu0 0
  %3627 = vmatpush2.bf16.msra.mxu0 0
  %3628 = vmatprep.subr.bf16.mxu0 0
  %3629 = vmatpush2.bf16.msra.mxu0 0
  %3630 = vmatprep.subr.bf16.mxu0 0
  %3631 = vmatpush2.bf16.msra.mxu0 0
  %3632 = vmatprep.subr.bf16.mxu0 0
  %3633 = vmatpush2.bf16.msra.mxu0 0
  %3634 = vmatprep.subr.bf16.mxu0 0
  %3635 = vmatpush2.bf16.msra.mxu0 0
  %3636 = vmatprep.subr.bf16.mxu0 0
  %3637 = vmatpush2.bf16.msra.mxu0 0
  %3638 = vmatprep.subr.bf16.mxu0 0
  %3639 = vmatpush2.bf16.msra.mxu0 0
  %3640 = vmatprep.subr.bf16.mxu0 0
  %3641 = vmatpush2.bf16.msra.mxu0 0
  %3642 = vmatprep.mubr.bf16.mxu0 0
  %3643 = vmatmul.mubr.bf16.gmra.mxu0 %v3512
  %v3644 = vpop.f32.mrf.mxu0
  %v3645 = vadd.f32 0.0, %v3644
  %v3646 = vpop.f32.mrf.mxu0
  %v3647 = vpop.f32.mrf.mxu0
  %v3648 = vadd.f32 0.0, %v3647
  %v3649 = vpop.f32.mrf.mxu0
  %3650 = vmatprep.mubr.bf16.mxu0 0
  %3651 = vmatmul.mubr.bf16.gmra.mxu0 %v3515
  %v3652 = vpop.f32.mrf.mxu0
  %v3653 = vadd.f32 0.0, %v3652
  %v3654 = vpop.f32.mrf.mxu0
  %v3655 = vpop.f32.mrf.mxu0
  %v3656 = vadd.f32 0.0, %v3655
  %v3657 = vpop.f32.mrf.mxu0
  %3658 = vmatprep.mubr.bf16.mxu0 0
  %3659 = vmatmul.mubr.bf16.gmra.mxu0 %v3518
  %v3660 = vpop.f32.mrf.mxu0
  %v3661 = vadd.f32 0.0, %v3660
  %v3662 = vpop.f32.mrf.mxu0
  %v3663 = vpop.f32.mrf.mxu0
  %v3664 = vadd.f32 0.0, %v3663
  %v3665 = vpop.f32.mrf.mxu0
  %3666 = vmatprep.mubr.bf16.mxu0 0
  %3667 = vmatmul.mubr.bf16.gmra.mxu0 %v3521
  %v3668 = vpop.f32.mrf.mxu0
  %v3669 = vadd.f32 0.0, %v3668
  %v3670 = vpop.f32.mrf.mxu0
  %v3671 = vpop.f32.mrf.mxu0
  %v3672 = vadd.f32 0.0, %v3671
  %v3673 = vpop.f32.mrf.mxu0
  %3674 = vmatprep.mubr.bf16.mxu0 0
  %3675 = vmatmul.mubr.bf16.gmra.mxu0 %v3524
  %v3676 = vpop.f32.mrf.mxu0
  %v3677 = vadd.f32 0.0, %v3676
  %v3678 = vpop.f32.mrf.mxu0
  %v3679 = vpop.f32.mrf.mxu0
  %v3680 = vadd.f32 0.0, %v3679
  %v3681 = vpop.f32.mrf.mxu0
  %3682 = vmatprep.mubr.bf16.mxu0 0
  %3683 = vmatmul.mubr.bf16.gmra.mxu0 %v3527
  %v3684 = vpop.f32.mrf.mxu0
  %v3685 = vadd.f32 0.0, %v3684
  %v3686 = vpop.f32.mrf.mxu0
  %v3687 = vpop.f32.mrf.mxu0
  %v3688 = vadd.f32 0.0, %v3687
  %v3689 = vpop.f32.mrf.mxu0
  %3690 = vmatprep.mubr.bf16.mxu0 0
  %3691 = vmatmul.mubr.bf16.gmra.mxu0 %v3530
  %v3692 = vpop.f32.mrf.mxu0
  %v3693 = vadd.f32 0.0, %v3692
  %v3694 = vpop.f32.mrf.mxu0
  %v3695 = vpop.f32.mrf.mxu0
  %v3696 = vadd.f32 0.0, %v3695
  %v3697 = vpop.f32.mrf.mxu0
  %3698 = vmatprep.mubr.bf16.mxu0 0
  %3699 = vmatmul.mubr.bf16.gmra.mxu0 %v3533
  %v3700 = vpop.f32.mrf.mxu0
  %v3701 = vadd.f32 0.0, %v3700
  %v3702 = vpop.f32.mrf.mxu0
  %v3703 = vpop.f32.mrf.mxu0
  %v3704 = vadd.f32 0.0, %v3703
  %v3705 = vpop.f32.mrf.mxu0
  %3706 = vmatprep.mubr.bf16.mxu0 0
  %3707 = vmatmul.mubr.bf16.gmra.mxu0 %v3536
  %v3708 = vpop.f32.mrf.mxu0
  %v3709 = vadd.f32 0.0, %v3708
  %v3710 = vpop.f32.mrf.mxu0
  %v3711 = vpop.f32.mrf.mxu0
  %v3712 = vadd.f32 0.0, %v3711
  %v3713 = vpop.f32.mrf.mxu0
  %3714 = vmatprep.mubr.bf16.mxu0 0
  %3715 = vmatmul.mubr.bf16.gmra.mxu0 %v3539
  %v3716 = vpop.f32.mrf.mxu0
  %v3717 = vadd.f32 0.0, %v3716
  %v3718 = vpop.f32.mrf.mxu0
  %v3719 = vpop.f32.mrf.mxu0
  %v3720 = vadd.f32 0.0, %v3719
  %v3721 = vpop.f32.mrf.mxu0
  %3722 = vmatprep.mubr.bf16.mxu0 0
  %3723 = vmatmul.mubr.bf16.gmra.mxu0 %v3542
  %v3724 = vpop.f32.mrf.mxu0
  %v3725 = vadd.f32 0.0, %v3724
  %v3726 = vpop.f32.mrf.mxu0
  %v3727 = vpop.f32.mrf.mxu0
  %v3728 = vadd.f32 0.0, %v3727
  %v3729 = vpop.f32.mrf.mxu0
  %3730 = vmatprep.mubr.bf16.mxu0 0
  %3731 = vmatmul.mubr.bf16.gmra.mxu0 %v3545
  %v3732 = vpop.f32.mrf.mxu0
  %v3733 = vadd.f32 0.0, %v3732
  %v3734 = vpop.f32.mrf.mxu0
  %v3735 = vpop.f32.mrf.mxu0
  %v3736 = vadd.f32 0.0, %v3735
  %v3737 = vpop.f32.mrf.mxu0
  %3738 = vmatprep.mubr.bf16.mxu0 0
  %3739 = vmatmul.mubr.bf16.gmra.mxu0 %v3548
  %v3740 = vpop.f32.mrf.mxu0
  %v3741 = vadd.f32 0.0, %v3740
  %v3742 = vpop.f32.mrf.mxu0
  %v3743 = vpop.f32.mrf.mxu0
  %v3744 = vadd.f32 0.0, %v3743
  %v3745 = vpop.f32.mrf.mxu0
  %3746 = vmatprep.mubr.bf16.mxu0 0
  %3747 = vmatmul.mubr.bf16.gmra.mxu0 %v3551
  %v3748 = vpop.f32.mrf.mxu0
  %v3749 = vadd.f32 0.0, %v3748
  %v3750 = vpop.f32.mrf.mxu0
  %v3751 = vpop.f32.mrf.mxu0
  %v3752 = vadd.f32 0.0, %v3751
  %v3753 = vpop.f32.mrf.mxu0
  %3754 = vmatprep.mubr.bf16.mxu0 0
  %3755 = vmatmul.mubr.bf16.gmra.mxu0 %v3554
  %v3756 = vpop.f32.mrf.mxu0
  %v3757 = vadd.f32 0.0, %v3756
  %v3758 = vpop.f32.mrf.mxu0
  %v3759 = vpop.f32.mrf.mxu0
  %v3760 = vadd.f32 0.0, %v3759
  %v3761 = vpop.f32.mrf.mxu0
  %3762 = vmatprep.mubr.bf16.mxu0 0
  %3763 = vmatmul.mubr.bf16.gmra.mxu0 %v3557
  %v3764 = vpop.f32.mrf.mxu0
  %v3765 = vadd.f32 0.0, %v3764
  %v3766 = vpop.f32.mrf.mxu0
  %v3767 = vpop.f32.mrf.mxu0
  %v3768 = vadd.f32 0.0, %v3767
  %v3769 = vpop.f32.mrf.mxu0
  %3770 = vmatprep.mubr.bf16.mxu0 0
  %3771 = vmatmul.mubr.bf16.gmra.mxu0 %v3560
  %v3772 = vpop.f32.mrf.mxu0
  %v3773 = vadd.f32 0.0, %v3772
  %v3774 = vpop.f32.mrf.mxu0
  %v3775 = vpop.f32.mrf.mxu0
  %v3776 = vadd.f32 0.0, %v3775
  %v3777 = vpop.f32.mrf.mxu0
  %3778 = vmatprep.mubr.bf16.mxu0 0
  %3779 = vmatmul.mubr.bf16.gmra.mxu0 %v3563
  %v3780 = vpop.f32.mrf.mxu0
  %v3781 = vadd.f32 0.0, %v3780
  %v3782 = vpop.f32.mrf.mxu0
  %v3783 = vpop.f32.mrf.mxu0
  %v3784 = vadd.f32 0.0, %v3783
  %v3785 = vpop.f32.mrf.mxu0
  %3786 = vmatprep.mubr.bf16.mxu0 0
  %3787 = vmatmul.mubr.bf16.gmra.mxu0 %v3566
  %v3788 = vpop.f32.mrf.mxu0
  %v3789 = vadd.f32 0.0, %v3788
  %v3790 = vpop.f32.mrf.mxu0
  %v3791 = vpop.f32.mrf.mxu0
  %v3792 = vadd.f32 0.0, %v3791
  %v3793 = vpop.f32.mrf.mxu0
  %3794 = vmatprep.mubr.bf16.mxu0 0
  %3795 = vmatmul.mubr.bf16.gmra.mxu0 %v3569
  %v3796 = vpop.f32.mrf.mxu0
  %v3797 = vadd.f32 0.0, %v3796
  %v3798 = vpop.f32.mrf.mxu0
  %v3799 = vpop.f32.mrf.mxu0
  %v3800 = vadd.f32 0.0, %v3799
  %v3801 = vpop.f32.mrf.mxu0
  %3802 = vmatprep.mubr.bf16.mxu0 0
  %3803 = vmatmul.mubr.bf16.gmra.mxu0 %v3572
  %v3804 = vpop.f32.mrf.mxu0
  %v3805 = vadd.f32 0.0, %v3804
  %v3806 = vpop.f32.mrf.mxu0
  %v3807 = vpop.f32.mrf.mxu0
  %v3808 = vadd.f32 0.0, %v3807
  %v3809 = vpop.f32.mrf.mxu0
  %3810 = vmatprep.mubr.bf16.mxu0 0
  %3811 = vmatmul.mubr.bf16.gmra.mxu0 %v3575
  %v3812 = vpop.f32.mrf.mxu0
  %v3813 = vadd.f32 0.0, %v3812
  %v3814 = vpop.f32.mrf.mxu0
  %v3815 = vpop.f32.mrf.mxu0
  %v3816 = vadd.f32 0.0, %v3815
  %v3817 = vpop.f32.mrf.mxu0
  %3818 = vmatprep.mubr.bf16.mxu0 0
  %3819 = vmatmul.mubr.bf16.gmra.mxu0 %v3578
  %v3820 = vpop.f32.mrf.mxu0
  %v3821 = vadd.f32 0.0, %v3820
  %v3822 = vpop.f32.mrf.mxu0
  %v3823 = vpop.f32.mrf.mxu0
  %v3824 = vadd.f32 0.0, %v3823
  %v3825 = vpop.f32.mrf.mxu0
  %3826 = vmatprep.mubr.bf16.mxu0 0
  %3827 = vmatmul.mubr.bf16.gmra.mxu0 %v3581
  %v3828 = vpop.f32.mrf.mxu0
  %v3829 = vadd.f32 0.0, %v3828
  %v3830 = vpop.f32.mrf.mxu0
  %v3831 = vpop.f32.mrf.mxu0
  %v3832 = vadd.f32 0.0, %v3831
  %v3833 = vpop.f32.mrf.mxu0
  %3834 = vmatprep.mubr.bf16.mxu0 0
  %3835 = vmatmul.mubr.bf16.gmra.mxu0 %v3584
  %v3836 = vpop.f32.mrf.mxu0
  %v3837 = vadd.f32 0.0, %v3836
  %v3838 = vpop.f32.mrf.mxu0
  %v3839 = vpop.f32.mrf.mxu0
  %v3840 = vadd.f32 0.0, %v3839
  %v3841 = vpop.f32.mrf.mxu0
  %3842 = vmatprep.mubr.bf16.mxu0 0
  %3843 = vmatmul.mubr.bf16.gmra.mxu0 %v3587
  %v3844 = vpop.f32.mrf.mxu0
  %v3845 = vadd.f32 0.0, %v3844
  %v3846 = vpop.f32.mrf.mxu0
  %v3847 = vpop.f32.mrf.mxu0
  %v3848 = vadd.f32 0.0, %v3847
  %v3849 = vpop.f32.mrf.mxu0
  %3850 = vmatprep.mubr.bf16.mxu0 0
  %3851 = vmatmul.mubr.bf16.gmra.mxu0 %v3590
  %v3852 = vpop.f32.mrf.mxu0
  %v3853 = vadd.f32 0.0, %v3852
  %v3854 = vpop.f32.mrf.mxu0
  %v3855 = vpop.f32.mrf.mxu0
  %v3856 = vadd.f32 0.0, %v3855
  %v3857 = vpop.f32.mrf.mxu0
  %3858 = vmatprep.mubr.bf16.mxu0 0
  %3859 = vmatmul.mubr.bf16.gmra.mxu0 %v3593
  %v3860 = vpop.f32.mrf.mxu0
  %v3861 = vadd.f32 0.0, %v3860
  %v3862 = vpop.f32.mrf.mxu0
  %v3863 = vpop.f32.mrf.mxu0
  %v3864 = vadd.f32 0.0, %v3863
  %v3865 = vpop.f32.mrf.mxu0
  %3866 = vmatprep.mubr.bf16.mxu0 0
  %3867 = vmatmul.mubr.bf16.gmra.mxu0 %v3596
  %v3868 = vpop.f32.mrf.mxu0
  %v3869 = vadd.f32 0.0, %v3868
  %v3870 = vpop.f32.mrf.mxu0
  %v3871 = vpop.f32.mrf.mxu0
  %v3872 = vadd.f32 0.0, %v3871
  %v3873 = vpop.f32.mrf.mxu0
  %3874 = vmatprep.mubr.bf16.mxu0 0
  %3875 = vmatmul.mubr.bf16.gmra.mxu0 %v3599
  %v3876 = vpop.f32.mrf.mxu0
  %v3877 = vadd.f32 0.0, %v3876
  %v3878 = vpop.f32.mrf.mxu0
  %v3879 = vpop.f32.mrf.mxu0
  %v3880 = vadd.f32 0.0, %v3879
  %v3881 = vpop.f32.mrf.mxu0
  %3882 = vmatprep.mubr.bf16.mxu0 0
  %3883 = vmatmul.mubr.bf16.gmra.mxu0 %v3602
  %v3884 = vpop.f32.mrf.mxu0
  %v3885 = vadd.f32 0.0, %v3884
  %v3886 = vpop.f32.mrf.mxu0
  %v3887 = vpop.f32.mrf.mxu0
  %v3888 = vadd.f32 0.0, %v3887
  %v3889 = vpop.f32.mrf.mxu0
  %3890 = vmatprep.mubr.bf16.mxu0 0
  %3891 = vmatmul.mubr.bf16.gmra.mxu0 %v3605
  %v3892 = vpop.f32.mrf.mxu0
  %v3893 = vadd.f32 0.0, %v3892
  %v3894 = vpop.f32.mrf.mxu0
  %v3895 = vpop.f32.mrf.mxu0
  %v3896 = vadd.f32 0.0, %v3895
  %v3897 = vpop.f32.mrf.mxu0
  %3898 = vdwg.mxu0
  %v3899 = vadd.f32 %v2901, %v3645
  %v3900 = vadd.f32 %v2904, %v3648
  %v3901 = vadd.f32 %v2909, %v3653
  %v3902 = vadd.f32 %v2912, %v3656
  %v3903 = vadd.f32 %v2917, %v3661
  %v3904 = vadd.f32 %v2920, %v3664
  %v3905 = vadd.f32 %v2925, %v3669
  %v3906 = vadd.f32 %v2928, %v3672
  %v3907 = vadd.f32 %v2933, %v3677
  %v3908 = vadd.f32 %v2936, %v3680
  %v3909 = vadd.f32 %v2941, %v3685
  %v3910 = vadd.f32 %v2944, %v3688
  %v3911 = vadd.f32 %v2949, %v3693
  %v3912 = vadd.f32 %v2952, %v3696
  %v3913 = vadd.f32 %v2957, %v3701
  %v3914 = vadd.f32 %v2960, %v3704
  %v3915 = vadd.f32 %v2965, %v3709
  %v3916 = vadd.f32 %v2968, %v3712
  %v3917 = vadd.f32 %v2973, %v3717
  %v3918 = vadd.f32 %v2976, %v3720
  %v3919 = vadd.f32 %v2981, %v3725
  %v3920 = vadd.f32 %v2984, %v3728
  %v3921 = vadd.f32 %v2989, %v3733
  %v3922 = vadd.f32 %v2992, %v3736
  %v3923 = vadd.f32 %v2997, %v3741
  %v3924 = vadd.f32 %v3000, %v3744
  %v3925 = vadd.f32 %v3005, %v3749
  %v3926 = vadd.f32 %v3008, %v3752
  %v3927 = vadd.f32 %v3013, %v3757
  %v3928 = vadd.f32 %v3016, %v3760
  %v3929 = vadd.f32 %v3021, %v3765
  %v3930 = vadd.f32 %v3024, %v3768
  %v3931 = vadd.f32 %v3029, %v3773
  %v3932 = vadd.f32 %v3032, %v3776
  %v3933 = vadd.f32 %v3037, %v3781
  %v3934 = vadd.f32 %v3040, %v3784
  %v3935 = vadd.f32 %v3045, %v3789
  %v3936 = vadd.f32 %v3048, %v3792
  %v3937 = vadd.f32 %v3053, %v3797
  %v3938 = vadd.f32 %v3056, %v3800
  %v3939 = vadd.f32 %v3061, %v3805
  %v3940 = vadd.f32 %v3064, %v3808
  %v3941 = vadd.f32 %v3069, %v3813
  %v3942 = vadd.f32 %v3072, %v3816
  %v3943 = vadd.f32 %v3077, %v3821
  %v3944 = vadd.f32 %v3080, %v3824
  %v3945 = vadd.f32 %v3085, %v3829
  %v3946 = vadd.f32 %v3088, %v3832
  %v3947 = vadd.f32 %v3093, %v3837
  %v3948 = vadd.f32 %v3096, %v3840
  %v3949 = vadd.f32 %v3101, %v3845
  %v3950 = vadd.f32 %v3104, %v3848
  %v3951 = vadd.f32 %v3109, %v3853
  %v3952 = vadd.f32 %v3112, %v3856
  %v3953 = vadd.f32 %v3117, %v3861
  %v3954 = vadd.f32 %v3120, %v3864
  %v3955 = vadd.f32 %v3125, %v3869
  %v3956 = vadd.f32 %v3128, %v3872
  %v3957 = vadd.f32 %v3133, %v3877
  %v3958 = vadd.f32 %v3136, %v3880
  %v3959 = vadd.f32 %v3141, %v3885
  %v3960 = vadd.f32 %v3144, %v3888
  %v3961 = vadd.f32 %v3149, %v3893
  %v3962 = vadd.f32 %v3152, %v3896
  %v3963 = vld [vmem:[%s1 + $0x4] sm:$0xc]
  %v3968 = vunpack.c.l.b16 %v1284
  %v3969 = vunpack.c.l.b16 %v1285
  %v3970 = vunpack.c.l.b16 %v1338
  %v3971 = vunpack.c.l.b16 %v1339
  %v3972 = vpack.c.b16 %v3969, %v3968
  %v3973 = vpack.c.b16 %v3971, %v3970
  %v3975 = vunpack.c.l.b16 %v3963
  %v3976 = vpack.c.b16 %v3975, %v3975
  %v3977 = vrot.slane %v3976, 2
  %v3979 = vsel %vm2217, %v3972, 0
  %v3982 = vsel %vm2217, %v3973, 0
  %v3985 = vsel %vm2314, %v3977, 0
  %3987 = vmatprep.subr.bf16.mxu0 0
  %3988 = vmatpush1.bf16.msra.mxu0 0
  %3989 = vmatprep.subr.bf16.mxu0 0
  %3990 = vmatpush1.bf16.msra.mxu0 0
  %3991 = vmatprep.subr.bf16.mxu0 0
  %3992 = vmatpush1.bf16.msra.mxu0 0
  %3993 = vmatprep.subr.bf16.mxu0 0
  %3994 = vmatpush1.bf16.msra.mxu0 0
  %3995 = vmatprep.subr.bf16.mxu0 0
  %3996 = vmatpush1.bf16.msra.mxu0 0
  %3997 = vmatprep.subr.bf16.mxu0 0
  %3998 = vmatpush1.bf16.msra.mxu0 0
  %3999 = vmatprep.subr.bf16.mxu0 0
  %4000 = vmatpush1.bf16.msra.mxu0 0
  %4001 = vmatprep.subr.bf16.mxu0 0
  %4002 = vmatpush1.bf16.msra.mxu0 %v3985
  %4003 = vmatprep.subr.bf16.mxu0 0
  %4004 = vmatpush2.bf16.msra.mxu0 0
  %4005 = vmatprep.subr.bf16.mxu0 0
  %4006 = vmatpush2.bf16.msra.mxu0 0
  %4007 = vmatprep.subr.bf16.mxu0 0
  %4008 = vmatpush2.bf16.msra.mxu0 0
  %4009 = vmatprep.subr.bf16.mxu0 0
  %4010 = vmatpush2.bf16.msra.mxu0 0
  %4011 = vmatprep.subr.bf16.mxu0 0
  %4012 = vmatpush2.bf16.msra.mxu0 0
  %4013 = vmatprep.subr.bf16.mxu0 0
  %4014 = vmatpush2.bf16.msra.mxu0 0
  %4015 = vmatprep.subr.bf16.mxu0 0
  %4016 = vmatpush2.bf16.msra.mxu0 0
  %4017 = vmatprep.subr.bf16.mxu0 0
  %4018 = vmatpush2.bf16.msra.mxu0 0
  %4019 = vmatprep.mubr.bf16.mxu0 0
  %4020 = vmatmul.mubr.bf16.gmra.mxu0 %v2771
  %v4021 = vpop.f32.mrf.mxu0
  %v4022 = vadd.f32 0.0, %v4021
  %v4023 = vpop.f32.mrf.mxu0
  %v4024 = vpop.f32.mrf.mxu0
  %v4025 = vadd.f32 0.0, %v4024
  %v4026 = vpop.f32.mrf.mxu0
  %4027 = vmatprep.mubr.bf16.mxu0 0
  %4028 = vmatmul.mubr.bf16.gmra.mxu0 %v2774
  %v4029 = vpop.f32.mrf.mxu0
  %v4030 = vadd.f32 0.0, %v4029
  %v4031 = vpop.f32.mrf.mxu0
  %v4032 = vpop.f32.mrf.mxu0
  %v4033 = vadd.f32 0.0, %v4032
  %v4034 = vpop.f32.mrf.mxu0
  %4035 = vmatprep.mubr.bf16.mxu0 0
  %4036 = vmatmul.mubr.bf16.gmra.mxu0 %v2777
  %v4037 = vpop.f32.mrf.mxu0
  %v4038 = vadd.f32 0.0, %v4037
  %v4039 = vpop.f32.mrf.mxu0
  %v4040 = vpop.f32.mrf.mxu0
  %v4041 = vadd.f32 0.0, %v4040
  %v4042 = vpop.f32.mrf.mxu0
  %4043 = vmatprep.mubr.bf16.mxu0 0
  %4044 = vmatmul.mubr.bf16.gmra.mxu0 %v2780
  %v4045 = vpop.f32.mrf.mxu0
  %v4046 = vadd.f32 0.0, %v4045
  %v4047 = vpop.f32.mrf.mxu0
  %v4048 = vpop.f32.mrf.mxu0
  %v4049 = vadd.f32 0.0, %v4048
  %v4050 = vpop.f32.mrf.mxu0
  %4051 = vmatprep.mubr.bf16.mxu0 0
  %4052 = vmatmul.mubr.bf16.gmra.mxu0 %v2783
  %v4053 = vpop.f32.mrf.mxu0
  %v4054 = vadd.f32 0.0, %v4053
  %v4055 = vpop.f32.mrf.mxu0
  %v4056 = vpop.f32.mrf.mxu0
  %v4057 = vadd.f32 0.0, %v4056
  %v4058 = vpop.f32.mrf.mxu0
  %4059 = vmatprep.mubr.bf16.mxu0 0
  %4060 = vmatmul.mubr.bf16.gmra.mxu0 %v2786
  %v4061 = vpop.f32.mrf.mxu0
  %v4062 = vadd.f32 0.0, %v4061
  %v4063 = vpop.f32.mrf.mxu0
  %v4064 = vpop.f32.mrf.mxu0
  %v4065 = vadd.f32 0.0, %v4064
  %v4066 = vpop.f32.mrf.mxu0
  %4067 = vmatprep.mubr.bf16.mxu0 0
  %4068 = vmatmul.mubr.bf16.gmra.mxu0 %v2789
  %v4069 = vpop.f32.mrf.mxu0
  %v4070 = vadd.f32 0.0, %v4069
  %v4071 = vpop.f32.mrf.mxu0
  %v4072 = vpop.f32.mrf.mxu0
  %v4073 = vadd.f32 0.0, %v4072
  %v4074 = vpop.f32.mrf.mxu0
  %4075 = vmatprep.mubr.bf16.mxu0 0
  %4076 = vmatmul.mubr.bf16.gmra.mxu0 %v2792
  %v4077 = vpop.f32.mrf.mxu0
  %v4078 = vadd.f32 0.0, %v4077
  %v4079 = vpop.f32.mrf.mxu0
  %v4080 = vpop.f32.mrf.mxu0
  %v4081 = vadd.f32 0.0, %v4080
  %v4082 = vpop.f32.mrf.mxu0
  %4083 = vmatprep.mubr.bf16.mxu0 0
  %4084 = vmatmul.mubr.bf16.gmra.mxu0 %v2795
  %v4085 = vpop.f32.mrf.mxu0
  %v4086 = vadd.f32 0.0, %v4085
  %v4087 = vpop.f32.mrf.mxu0
  %v4088 = vpop.f32.mrf.mxu0
  %v4089 = vadd.f32 0.0, %v4088
  %v4090 = vpop.f32.mrf.mxu0
  %4091 = vmatprep.mubr.bf16.mxu0 0
  %4092 = vmatmul.mubr.bf16.gmra.mxu0 %v2798
  %v4093 = vpop.f32.mrf.mxu0
  %v4094 = vadd.f32 0.0, %v4093
  %v4095 = vpop.f32.mrf.mxu0
  %v4096 = vpop.f32.mrf.mxu0
  %v4097 = vadd.f32 0.0, %v4096
  %v4098 = vpop.f32.mrf.mxu0
  %4099 = vmatprep.mubr.bf16.mxu0 0
  %4100 = vmatmul.mubr.bf16.gmra.mxu0 %v2801
  %v4101 = vpop.f32.mrf.mxu0
  %v4102 = vadd.f32 0.0, %v4101
  %v4103 = vpop.f32.mrf.mxu0
  %v4104 = vpop.f32.mrf.mxu0
  %v4105 = vadd.f32 0.0, %v4104
  %v4106 = vpop.f32.mrf.mxu0
  %4107 = vmatprep.mubr.bf16.mxu0 0
  %4108 = vmatmul.mubr.bf16.gmra.mxu0 %v2804
  %v4109 = vpop.f32.mrf.mxu0
  %v4110 = vadd.f32 0.0, %v4109
  %v4111 = vpop.f32.mrf.mxu0
  %v4112 = vpop.f32.mrf.mxu0
  %v4113 = vadd.f32 0.0, %v4112
  %v4114 = vpop.f32.mrf.mxu0
  %4115 = vmatprep.mubr.bf16.mxu0 0
  %4116 = vmatmul.mubr.bf16.gmra.mxu0 %v2807
  %v4117 = vpop.f32.mrf.mxu0
  %v4118 = vadd.f32 0.0, %v4117
  %v4119 = vpop.f32.mrf.mxu0
  %v4120 = vpop.f32.mrf.mxu0
  %v4121 = vadd.f32 0.0, %v4120
  %v4122 = vpop.f32.mrf.mxu0
  %4123 = vmatprep.mubr.bf16.mxu0 0
  %4124 = vmatmul.mubr.bf16.gmra.mxu0 %v2810
  %v4125 = vpop.f32.mrf.mxu0
  %v4126 = vadd.f32 0.0, %v4125
  %v4127 = vpop.f32.mrf.mxu0
  %v4128 = vpop.f32.mrf.mxu0
  %v4129 = vadd.f32 0.0, %v4128
  %v4130 = vpop.f32.mrf.mxu0
  %4131 = vmatprep.mubr.bf16.mxu0 0
  %4132 = vmatmul.mubr.bf16.gmra.mxu0 %v2813
  %v4133 = vpop.f32.mrf.mxu0
  %v4134 = vadd.f32 0.0, %v4133
  %v4135 = vpop.f32.mrf.mxu0
  %v4136 = vpop.f32.mrf.mxu0
  %v4137 = vadd.f32 0.0, %v4136
  %v4138 = vpop.f32.mrf.mxu0
  %4139 = vmatprep.mubr.bf16.mxu0 0
  %4140 = vmatmul.mubr.bf16.gmra.mxu0 %v3979
  %v4141 = vpop.f32.mrf.mxu0
  %v4142 = vadd.f32 0.0, %v4141
  %v4143 = vpop.f32.mrf.mxu0
  %v4144 = vpop.f32.mrf.mxu0
  %v4145 = vadd.f32 0.0, %v4144
  %v4146 = vpop.f32.mrf.mxu0
  %4147 = vmatprep.mubr.bf16.mxu0 0
  %4148 = vmatmul.mubr.bf16.gmra.mxu0 %v2819
  %v4149 = vpop.f32.mrf.mxu0
  %v4150 = vadd.f32 0.0, %v4149
  %v4151 = vpop.f32.mrf.mxu0
  %v4152 = vpop.f32.mrf.mxu0
  %v4153 = vadd.f32 0.0, %v4152
  %v4154 = vpop.f32.mrf.mxu0
  %4155 = vmatprep.mubr.bf16.mxu0 0
  %4156 = vmatmul.mubr.bf16.gmra.mxu0 %v2822
  %v4157 = vpop.f32.mrf.mxu0
  %v4158 = vadd.f32 0.0, %v4157
  %v4159 = vpop.f32.mrf.mxu0
  %v4160 = vpop.f32.mrf.mxu0
  %v4161 = vadd.f32 0.0, %v4160
  %v4162 = vpop.f32.mrf.mxu0
  %4163 = vmatprep.mubr.bf16.mxu0 0
  %4164 = vmatmul.mubr.bf16.gmra.mxu0 %v2825
  %v4165 = vpop.f32.mrf.mxu0
  %v4166 = vadd.f32 0.0, %v4165
  %v4167 = vpop.f32.mrf.mxu0
  %v4168 = vpop.f32.mrf.mxu0
  %v4169 = vadd.f32 0.0, %v4168
  %v4170 = vpop.f32.mrf.mxu0
  %4171 = vmatprep.mubr.bf16.mxu0 0
  %4172 = vmatmul.mubr.bf16.gmra.mxu0 %v2828
  %v4173 = vpop.f32.mrf.mxu0
  %v4174 = vadd.f32 0.0, %v4173
  %v4175 = vpop.f32.mrf.mxu0
  %v4176 = vpop.f32.mrf.mxu0
  %v4177 = vadd.f32 0.0, %v4176
  %v4178 = vpop.f32.mrf.mxu0
  %4179 = vmatprep.mubr.bf16.mxu0 0
  %4180 = vmatmul.mubr.bf16.gmra.mxu0 %v2831
  %v4181 = vpop.f32.mrf.mxu0
  %v4182 = vadd.f32 0.0, %v4181
  %v4183 = vpop.f32.mrf.mxu0
  %v4184 = vpop.f32.mrf.mxu0
  %v4185 = vadd.f32 0.0, %v4184
  %v4186 = vpop.f32.mrf.mxu0
  %4187 = vmatprep.mubr.bf16.mxu0 0
  %4188 = vmatmul.mubr.bf16.gmra.mxu0 %v2834
  %v4189 = vpop.f32.mrf.mxu0
  %v4190 = vadd.f32 0.0, %v4189
  %v4191 = vpop.f32.mrf.mxu0
  %v4192 = vpop.f32.mrf.mxu0
  %v4193 = vadd.f32 0.0, %v4192
  %v4194 = vpop.f32.mrf.mxu0
  %4195 = vmatprep.mubr.bf16.mxu0 0
  %4196 = vmatmul.mubr.bf16.gmra.mxu0 %v2837
  %v4197 = vpop.f32.mrf.mxu0
  %v4198 = vadd.f32 0.0, %v4197
  %v4199 = vpop.f32.mrf.mxu0
  %v4200 = vpop.f32.mrf.mxu0
  %v4201 = vadd.f32 0.0, %v4200
  %v4202 = vpop.f32.mrf.mxu0
  %4203 = vmatprep.mubr.bf16.mxu0 0
  %4204 = vmatmul.mubr.bf16.gmra.mxu0 %v2840
  %v4205 = vpop.f32.mrf.mxu0
  %v4206 = vadd.f32 0.0, %v4205
  %v4207 = vpop.f32.mrf.mxu0
  %v4208 = vpop.f32.mrf.mxu0
  %v4209 = vadd.f32 0.0, %v4208
  %v4210 = vpop.f32.mrf.mxu0
  %4211 = vmatprep.mubr.bf16.mxu0 0
  %4212 = vmatmul.mubr.bf16.gmra.mxu0 %v2843
  %v4213 = vpop.f32.mrf.mxu0
  %v4214 = vadd.f32 0.0, %v4213
  %v4215 = vpop.f32.mrf.mxu0
  %v4216 = vpop.f32.mrf.mxu0
  %v4217 = vadd.f32 0.0, %v4216
  %v4218 = vpop.f32.mrf.mxu0
  %4219 = vmatprep.mubr.bf16.mxu0 0
  %4220 = vmatmul.mubr.bf16.gmra.mxu0 %v2846
  %v4221 = vpop.f32.mrf.mxu0
  %v4222 = vadd.f32 0.0, %v4221
  %v4223 = vpop.f32.mrf.mxu0
  %v4224 = vpop.f32.mrf.mxu0
  %v4225 = vadd.f32 0.0, %v4224
  %v4226 = vpop.f32.mrf.mxu0
  %4227 = vmatprep.mubr.bf16.mxu0 0
  %4228 = vmatmul.mubr.bf16.gmra.mxu0 %v2849
  %v4229 = vpop.f32.mrf.mxu0
  %v4230 = vadd.f32 0.0, %v4229
  %v4231 = vpop.f32.mrf.mxu0
  %v4232 = vpop.f32.mrf.mxu0
  %v4233 = vadd.f32 0.0, %v4232
  %v4234 = vpop.f32.mrf.mxu0
  %4235 = vmatprep.mubr.bf16.mxu0 0
  %4236 = vmatmul.mubr.bf16.gmra.mxu0 %v2852
  %v4237 = vpop.f32.mrf.mxu0
  %v4238 = vadd.f32 0.0, %v4237
  %v4239 = vpop.f32.mrf.mxu0
  %v4240 = vpop.f32.mrf.mxu0
  %v4241 = vadd.f32 0.0, %v4240
  %v4242 = vpop.f32.mrf.mxu0
  %4243 = vmatprep.mubr.bf16.mxu0 0
  %4244 = vmatmul.mubr.bf16.gmra.mxu0 %v2855
  %v4245 = vpop.f32.mrf.mxu0
  %v4246 = vadd.f32 0.0, %v4245
  %v4247 = vpop.f32.mrf.mxu0
  %v4248 = vpop.f32.mrf.mxu0
  %v4249 = vadd.f32 0.0, %v4248
  %v4250 = vpop.f32.mrf.mxu0
  %4251 = vmatprep.mubr.bf16.mxu0 0
  %4252 = vmatmul.mubr.bf16.gmra.mxu0 %v2858
  %v4253 = vpop.f32.mrf.mxu0
  %v4254 = vadd.f32 0.0, %v4253
  %v4255 = vpop.f32.mrf.mxu0
  %v4256 = vpop.f32.mrf.mxu0
  %v4257 = vadd.f32 0.0, %v4256
  %v4258 = vpop.f32.mrf.mxu0
  %4259 = vmatprep.mubr.bf16.mxu0 0
  %4260 = vmatmul.mubr.bf16.gmra.mxu0 %v2861
  %v4261 = vpop.f32.mrf.mxu0
  %v4262 = vadd.f32 0.0, %v4261
  %v4263 = vpop.f32.mrf.mxu0
  %v4264 = vpop.f32.mrf.mxu0
  %v4265 = vadd.f32 0.0, %v4264
  %v4266 = vpop.f32.mrf.mxu0
  %4267 = vmatprep.mubr.bf16.mxu0 0
  %4268 = vmatmul.mubr.bf16.gmra.mxu0 %v3982
  %v4269 = vpop.f32.mrf.mxu0
  %v4270 = vadd.f32 0.0, %v4269
  %v4271 = vpop.f32.mrf.mxu0
  %v4272 = vpop.f32.mrf.mxu0
  %v4273 = vadd.f32 0.0, %v4272
  %v4274 = vpop.f32.mrf.mxu0
  %4275 = vdwg.mxu0
  %v4276 = vadd.f32 %v3899, %v4022
  %v4277 = vadd.f32 %v3900, %v4025
  %v4278 = vadd.f32 %v3901, %v4030
  %v4279 = vadd.f32 %v3902, %v4033
  %v4280 = vadd.f32 %v3903, %v4038
  %v4281 = vadd.f32 %v3904, %v4041
  %v4282 = vadd.f32 %v3905, %v4046
  %v4283 = vadd.f32 %v3906, %v4049
  %v4284 = vadd.f32 %v3907, %v4054
  %v4285 = vadd.f32 %v3908, %v4057
  %v4286 = vadd.f32 %v3909, %v4062
  %v4287 = vadd.f32 %v3910, %v4065
  %v4288 = vadd.f32 %v3911, %v4070
  %v4289 = vadd.f32 %v3912, %v4073
  %v4290 = vadd.f32 %v3913, %v4078
  %v4291 = vadd.f32 %v3914, %v4081
  %v4292 = vadd.f32 %v3915, %v4086
  %v4293 = vadd.f32 %v3916, %v4089
  %v4294 = vadd.f32 %v3917, %v4094
  %v4295 = vadd.f32 %v3918, %v4097
  %v4296 = vadd.f32 %v3919, %v4102
  %v4297 = vadd.f32 %v3920, %v4105
  %v4298 = vadd.f32 %v3921, %v4110
  %v4299 = vadd.f32 %v3922, %v4113
  %v4300 = vadd.f32 %v3923, %v4118
  %v4301 = vadd.f32 %v3924, %v4121
  %v4302 = vadd.f32 %v3925, %v4126
  %v4303 = vadd.f32 %v3926, %v4129
  %v4304 = vadd.f32 %v3927, %v4134
  %v4305 = vadd.f32 %v3928, %v4137
  %v4306 = vadd.f32 %v3929, %v4142
  %v4307 = vadd.f32 %v3930, %v4145
  %v4308 = vadd.f32 %v3931, %v4150
  %v4309 = vadd.f32 %v3932, %v4153
  %v4310 = vadd.f32 %v3933, %v4158
  %v4311 = vadd.f32 %v3934, %v4161
  %v4312 = vadd.f32 %v3935, %v4166
  %v4313 = vadd.f32 %v3936, %v4169
  %v4314 = vadd.f32 %v3937, %v4174
  %v4315 = vadd.f32 %v3938, %v4177
  %v4316 = vadd.f32 %v3939, %v4182
  %v4317 = vadd.f32 %v3940, %v4185
  %v4318 = vadd.f32 %v3941, %v4190
  %v4319 = vadd.f32 %v3942, %v4193
  %v4320 = vadd.f32 %v3943, %v4198
  %v4321 = vadd.f32 %v3944, %v4201
  %v4322 = vadd.f32 %v3945, %v4206
  %v4323 = vadd.f32 %v3946, %v4209
  %v4324 = vadd.f32 %v3947, %v4214
  %v4325 = vadd.f32 %v3948, %v4217
  %v4326 = vadd.f32 %v3949, %v4222
  %v4327 = vadd.f32 %v3950, %v4225
  %v4328 = vadd.f32 %v3951, %v4230
  %v4329 = vadd.f32 %v3952, %v4233
  %v4330 = vadd.f32 %v3953, %v4238
  %v4331 = vadd.f32 %v3954, %v4241
  %v4332 = vadd.f32 %v3955, %v4246
  %v4333 = vadd.f32 %v3956, %v4249
  %v4334 = vadd.f32 %v3957, %v4254
  %v4335 = vadd.f32 %v3958, %v4257
  %v4336 = vadd.f32 %v3959, %v4262
  %v4337 = vadd.f32 %v3960, %v4265
  %v4338 = vadd.f32 %v3961, %v4270
  %v4339 = vadd.f32 %v3962, %v4273
  %v4341 = vshrl.u32 %v1284, 16
  %v4343 = vrot.slane %v4341, 4
  %v4344 = vshll.u32 %v1284, 16
  %v4346 = vrot.slane %v4344, 5
  %v4347 = vor.u32 %v4343, %v4346
  %v4348 = vrot.slane %v4347, 4
  %v4350 = vshll.u32 %v1285, 16
  %v4352 = vrot.slane %v4350, 5
  %v4353 = vsel %vm1347, %v4348, %v4352
  %v4354 = vshrl.u32 %v1285, 16
  %v4356 = vrot.slane %v4354, 4
  %v4357 = vor.u32 %v4356, %v4352
  %v4358 = vrot.slane %v4357, 4
  %v4360 = vshll.u32 %v1286, 16
  %v4362 = vrot.slane %v4360, 5
  %v4363 = vsel %vm1347, %v4358, %v4362
  %v4365 = vshrl.u32 %v1338, 16
  %v4367 = vrot.slane %v4365, 4
  %v4368 = vshll.u32 %v1338, 16
  %v4370 = vrot.slane %v4368, 5
  %v4371 = vor.u32 %v4367, %v4370
  %v4372 = vrot.slane %v4371, 4
  %v4374 = vshll.u32 %v1339, 16
  %v4376 = vrot.slane %v4374, 5
  %v4377 = vsel %vm1347, %v4372, %v4376
  %v4378 = vshrl.u32 %v1339, 16
  %v4380 = vrot.slane %v4378, 4
  %v4381 = vor.u32 %v4380, %v4376
  %v4382 = vrot.slane %v4381, 4
  %v4384 = vshll.u32 %v1340, 16
  %v4386 = vrot.slane %v4384, 5
  %v4387 = vsel %vm1347, %v4382, %v4386
  %v4388 = vld [vmem:[%s1 + $0x8] sm:$0x3]
  %v4389 = vunpack.c.l.b16 %v4353
  %v4390 = vunpack.c.l.b16 %v4363
  %v4391 = vunpack.c.l.b16 %v4377
  %v4392 = vunpack.c.l.b16 %v4387
  %v4393 = vpack.c.b16 %v4390, %v4389
  %v4394 = vpack.c.b16 %v4392, %v4391
  %v4396 = vsel %vm2217, %v4393, 0
  %v4399 = vsel %vm2217, %v4394, 0
  %v4402 = vsel %vm2314, %v4388, 0
  %4404 = vmatprep.subr.bf16.mxu0 0
  %4405 = vmatpush1.bf16.msra.mxu0 0
  %4406 = vmatprep.subr.bf16.mxu0 0
  %4407 = vmatpush1.bf16.msra.mxu0 0
  %4408 = vmatprep.subr.bf16.mxu0 0
  %4409 = vmatpush1.bf16.msra.mxu0 0
  %4410 = vmatprep.subr.bf16.mxu0 0
  %4411 = vmatpush1.bf16.msra.mxu0 0
  %4412 = vmatprep.subr.bf16.mxu0 0
  %4413 = vmatpush1.bf16.msra.mxu0 0
  %4414 = vmatprep.subr.bf16.mxu0 0
  %4415 = vmatpush1.bf16.msra.mxu0 0
  %4416 = vmatprep.subr.bf16.mxu0 0
  %4417 = vmatpush1.bf16.msra.mxu0 0
  %4418 = vmatprep.subr.bf16.mxu0 0
  %4419 = vmatpush1.bf16.msra.mxu0 %v4402
  %4420 = vmatprep.subr.bf16.mxu0 0
  %4421 = vmatpush2.bf16.msra.mxu0 0
  %4422 = vmatprep.subr.bf16.mxu0 0
  %4423 = vmatpush2.bf16.msra.mxu0 0
  %4424 = vmatprep.subr.bf16.mxu0 0
  %4425 = vmatpush2.bf16.msra.mxu0 0
  %4426 = vmatprep.subr.bf16.mxu0 0
  %4427 = vmatpush2.bf16.msra.mxu0 0
  %4428 = vmatprep.subr.bf16.mxu0 0
  %4429 = vmatpush2.bf16.msra.mxu0 0
  %4430 = vmatprep.subr.bf16.mxu0 0
  %4431 = vmatpush2.bf16.msra.mxu0 0
  %4432 = vmatprep.subr.bf16.mxu0 0
  %4433 = vmatpush2.bf16.msra.mxu0 0
  %4434 = vmatprep.subr.bf16.mxu0 0
  %4435 = vmatpush2.bf16.msra.mxu0 0
  %4436 = vmatprep.mubr.bf16.mxu0 0
  %4437 = vmatmul.mubr.bf16.gmra.mxu0 %v2222
  %v4438 = vpop.f32.mrf.mxu0
  %v4439 = vadd.f32 0.0, %v4438
  %v4440 = vpop.f32.mrf.mxu0
  %v4441 = vpop.f32.mrf.mxu0
  %v4442 = vadd.f32 0.0, %v4441
  %v4443 = vpop.f32.mrf.mxu0
  %4444 = vmatprep.mubr.bf16.mxu0 0
  %4445 = vmatmul.mubr.bf16.gmra.mxu0 %v2225
  %v4446 = vpop.f32.mrf.mxu0
  %v4447 = vadd.f32 0.0, %v4446
  %v4448 = vpop.f32.mrf.mxu0
  %v4449 = vpop.f32.mrf.mxu0
  %v4450 = vadd.f32 0.0, %v4449
  %v4451 = vpop.f32.mrf.mxu0
  %4452 = vmatprep.mubr.bf16.mxu0 0
  %4453 = vmatmul.mubr.bf16.gmra.mxu0 %v2228
  %v4454 = vpop.f32.mrf.mxu0
  %v4455 = vadd.f32 0.0, %v4454
  %v4456 = vpop.f32.mrf.mxu0
  %v4457 = vpop.f32.mrf.mxu0
  %v4458 = vadd.f32 0.0, %v4457
  %v4459 = vpop.f32.mrf.mxu0
  %4460 = vmatprep.mubr.bf16.mxu0 0
  %4461 = vmatmul.mubr.bf16.gmra.mxu0 %v2231
  %v4462 = vpop.f32.mrf.mxu0
  %v4463 = vadd.f32 0.0, %v4462
  %v4464 = vpop.f32.mrf.mxu0
  %v4465 = vpop.f32.mrf.mxu0
  %v4466 = vadd.f32 0.0, %v4465
  %v4467 = vpop.f32.mrf.mxu0
  %4468 = vmatprep.mubr.bf16.mxu0 0
  %4469 = vmatmul.mubr.bf16.gmra.mxu0 %v2234
  %v4470 = vpop.f32.mrf.mxu0
  %v4471 = vadd.f32 0.0, %v4470
  %v4472 = vpop.f32.mrf.mxu0
  %v4473 = vpop.f32.mrf.mxu0
  %v4474 = vadd.f32 0.0, %v4473
  %v4475 = vpop.f32.mrf.mxu0
  %4476 = vmatprep.mubr.bf16.mxu0 0
  %4477 = vmatmul.mubr.bf16.gmra.mxu0 %v2237
  %v4478 = vpop.f32.mrf.mxu0
  %v4479 = vadd.f32 0.0, %v4478
  %v4480 = vpop.f32.mrf.mxu0
  %v4481 = vpop.f32.mrf.mxu0
  %v4482 = vadd.f32 0.0, %v4481
  %v4483 = vpop.f32.mrf.mxu0
  %4484 = vmatprep.mubr.bf16.mxu0 0
  %4485 = vmatmul.mubr.bf16.gmra.mxu0 %v2240
  %v4486 = vpop.f32.mrf.mxu0
  %v4487 = vadd.f32 0.0, %v4486
  %v4488 = vpop.f32.mrf.mxu0
  %v4489 = vpop.f32.mrf.mxu0
  %v4490 = vadd.f32 0.0, %v4489
  %v4491 = vpop.f32.mrf.mxu0
  %4492 = vmatprep.mubr.bf16.mxu0 0
  %4493 = vmatmul.mubr.bf16.gmra.mxu0 %v2243
  %v4494 = vpop.f32.mrf.mxu0
  %v4495 = vadd.f32 0.0, %v4494
  %v4496 = vpop.f32.mrf.mxu0
  %v4497 = vpop.f32.mrf.mxu0
  %v4498 = vadd.f32 0.0, %v4497
  %v4499 = vpop.f32.mrf.mxu0
  %4500 = vmatprep.mubr.bf16.mxu0 0
  %4501 = vmatmul.mubr.bf16.gmra.mxu0 %v2246
  %v4502 = vpop.f32.mrf.mxu0
  %v4503 = vadd.f32 0.0, %v4502
  %v4504 = vpop.f32.mrf.mxu0
  %v4505 = vpop.f32.mrf.mxu0
  %v4506 = vadd.f32 0.0, %v4505
  %v4507 = vpop.f32.mrf.mxu0
  %4508 = vmatprep.mubr.bf16.mxu0 0
  %4509 = vmatmul.mubr.bf16.gmra.mxu0 %v2249
  %v4510 = vpop.f32.mrf.mxu0
  %v4511 = vadd.f32 0.0, %v4510
  %v4512 = vpop.f32.mrf.mxu0
  %v4513 = vpop.f32.mrf.mxu0
  %v4514 = vadd.f32 0.0, %v4513
  %v4515 = vpop.f32.mrf.mxu0
  %4516 = vmatprep.mubr.bf16.mxu0 0
  %4517 = vmatmul.mubr.bf16.gmra.mxu0 %v2252
  %v4518 = vpop.f32.mrf.mxu0
  %v4519 = vadd.f32 0.0, %v4518
  %v4520 = vpop.f32.mrf.mxu0
  %v4521 = vpop.f32.mrf.mxu0
  %v4522 = vadd.f32 0.0, %v4521
  %v4523 = vpop.f32.mrf.mxu0
  %4524 = vmatprep.mubr.bf16.mxu0 0
  %4525 = vmatmul.mubr.bf16.gmra.mxu0 %v2255
  %v4526 = vpop.f32.mrf.mxu0
  %v4527 = vadd.f32 0.0, %v4526
  %v4528 = vpop.f32.mrf.mxu0
  %v4529 = vpop.f32.mrf.mxu0
  %v4530 = vadd.f32 0.0, %v4529
  %v4531 = vpop.f32.mrf.mxu0
  %4532 = vmatprep.mubr.bf16.mxu0 0
  %4533 = vmatmul.mubr.bf16.gmra.mxu0 %v2258
  %v4534 = vpop.f32.mrf.mxu0
  %v4535 = vadd.f32 0.0, %v4534
  %v4536 = vpop.f32.mrf.mxu0
  %v4537 = vpop.f32.mrf.mxu0
  %v4538 = vadd.f32 0.0, %v4537
  %v4539 = vpop.f32.mrf.mxu0
  %4540 = vmatprep.mubr.bf16.mxu0 0
  %4541 = vmatmul.mubr.bf16.gmra.mxu0 %v2261
  %v4542 = vpop.f32.mrf.mxu0
  %v4543 = vadd.f32 0.0, %v4542
  %v4544 = vpop.f32.mrf.mxu0
  %v4545 = vpop.f32.mrf.mxu0
  %v4546 = vadd.f32 0.0, %v4545
  %v4547 = vpop.f32.mrf.mxu0
  %4548 = vmatprep.mubr.bf16.mxu0 0
  %4549 = vmatmul.mubr.bf16.gmra.mxu0 %v2264
  %v4550 = vpop.f32.mrf.mxu0
  %v4551 = vadd.f32 0.0, %v4550
  %v4552 = vpop.f32.mrf.mxu0
  %v4553 = vpop.f32.mrf.mxu0
  %v4554 = vadd.f32 0.0, %v4553
  %v4555 = vpop.f32.mrf.mxu0
  %4556 = vmatprep.mubr.bf16.mxu0 0
  %4557 = vmatmul.mubr.bf16.gmra.mxu0 %v4396
  %v4558 = vpop.f32.mrf.mxu0
  %v4559 = vadd.f32 0.0, %v4558
  %v4560 = vpop.f32.mrf.mxu0
  %v4561 = vpop.f32.mrf.mxu0
  %v4562 = vadd.f32 0.0, %v4561
  %v4563 = vpop.f32.mrf.mxu0
  %4564 = vmatprep.mubr.bf16.mxu0 0
  %4565 = vmatmul.mubr.bf16.gmra.mxu0 %v2270
  %v4566 = vpop.f32.mrf.mxu0
  %v4567 = vadd.f32 0.0, %v4566
  %v4568 = vpop.f32.mrf.mxu0
  %v4569 = vpop.f32.mrf.mxu0
  %v4570 = vadd.f32 0.0, %v4569
  %v4571 = vpop.f32.mrf.mxu0
  %4572 = vmatprep.mubr.bf16.mxu0 0
  %4573 = vmatmul.mubr.bf16.gmra.mxu0 %v2273
  %v4574 = vpop.f32.mrf.mxu0
  %v4575 = vadd.f32 0.0, %v4574
  %v4576 = vpop.f32.mrf.mxu0
  %v4577 = vpop.f32.mrf.mxu0
  %v4578 = vadd.f32 0.0, %v4577
  %v4579 = vpop.f32.mrf.mxu0
  %4580 = vmatprep.mubr.bf16.mxu0 0
  %4581 = vmatmul.mubr.bf16.gmra.mxu0 %v2276
  %v4582 = vpop.f32.mrf.mxu0
  %v4583 = vadd.f32 0.0, %v4582
  %v4584 = vpop.f32.mrf.mxu0
  %v4585 = vpop.f32.mrf.mxu0
  %v4586 = vadd.f32 0.0, %v4585
  %v4587 = vpop.f32.mrf.mxu0
  %4588 = vmatprep.mubr.bf16.mxu0 0
  %4589 = vmatmul.mubr.bf16.gmra.mxu0 %v2279
  %v4590 = vpop.f32.mrf.mxu0
  %v4591 = vadd.f32 0.0, %v4590
  %v4592 = vpop.f32.mrf.mxu0
  %v4593 = vpop.f32.mrf.mxu0
  %v4594 = vadd.f32 0.0, %v4593
  %v4595 = vpop.f32.mrf.mxu0
  %4596 = vmatprep.mubr.bf16.mxu0 0
  %4597 = vmatmul.mubr.bf16.gmra.mxu0 %v2282
  %v4598 = vpop.f32.mrf.mxu0
  %v4599 = vadd.f32 0.0, %v4598
  %v4600 = vpop.f32.mrf.mxu0
  %v4601 = vpop.f32.mrf.mxu0
  %v4602 = vadd.f32 0.0, %v4601
  %v4603 = vpop.f32.mrf.mxu0
  %4604 = vmatprep.mubr.bf16.mxu0 0
  %4605 = vmatmul.mubr.bf16.gmra.mxu0 %v2285
  %v4606 = vpop.f32.mrf.mxu0
  %v4607 = vadd.f32 0.0, %v4606
  %v4608 = vpop.f32.mrf.mxu0
  %v4609 = vpop.f32.mrf.mxu0
  %v4610 = vadd.f32 0.0, %v4609
  %v4611 = vpop.f32.mrf.mxu0
  %4612 = vmatprep.mubr.bf16.mxu0 0
  %4613 = vmatmul.mubr.bf16.gmra.mxu0 %v2288
  %v4614 = vpop.f32.mrf.mxu0
  %v4615 = vadd.f32 0.0, %v4614
  %v4616 = vpop.f32.mrf.mxu0
  %v4617 = vpop.f32.mrf.mxu0
  %v4618 = vadd.f32 0.0, %v4617
  %v4619 = vpop.f32.mrf.mxu0
  %4620 = vmatprep.mubr.bf16.mxu0 0
  %4621 = vmatmul.mubr.bf16.gmra.mxu0 %v2291
  %v4622 = vpop.f32.mrf.mxu0
  %v4623 = vadd.f32 0.0, %v4622
  %v4624 = vpop.f32.mrf.mxu0
  %v4625 = vpop.f32.mrf.mxu0
  %v4626 = vadd.f32 0.0, %v4625
  %v4627 = vpop.f32.mrf.mxu0
  %4628 = vmatprep.mubr.bf16.mxu0 0
  %4629 = vmatmul.mubr.bf16.gmra.mxu0 %v2294
  %v4630 = vpop.f32.mrf.mxu0
  %v4631 = vadd.f32 0.0, %v4630
  %v4632 = vpop.f32.mrf.mxu0
  %v4633 = vpop.f32.mrf.mxu0
  %v4634 = vadd.f32 0.0, %v4633
  %v4635 = vpop.f32.mrf.mxu0
  %4636 = vmatprep.mubr.bf16.mxu0 0
  %4637 = vmatmul.mubr.bf16.gmra.mxu0 %v2297
  %v4638 = vpop.f32.mrf.mxu0
  %v4639 = vadd.f32 0.0, %v4638
  %v4640 = vpop.f32.mrf.mxu0
  %v4641 = vpop.f32.mrf.mxu0
  %v4642 = vadd.f32 0.0, %v4641
  %v4643 = vpop.f32.mrf.mxu0
  %4644 = vmatprep.mubr.bf16.mxu0 0
  %4645 = vmatmul.mubr.bf16.gmra.mxu0 %v2300
  %v4646 = vpop.f32.mrf.mxu0
  %v4647 = vadd.f32 0.0, %v4646
  %v4648 = vpop.f32.mrf.mxu0
  %v4649 = vpop.f32.mrf.mxu0
  %v4650 = vadd.f32 0.0, %v4649
  %v4651 = vpop.f32.mrf.mxu0
  %4652 = vmatprep.mubr.bf16.mxu0 0
  %4653 = vmatmul.mubr.bf16.gmra.mxu0 %v2303
  %v4654 = vpop.f32.mrf.mxu0
  %v4655 = vadd.f32 0.0, %v4654
  %v4656 = vpop.f32.mrf.mxu0
  %v4657 = vpop.f32.mrf.mxu0
  %v4658 = vadd.f32 0.0, %v4657
  %v4659 = vpop.f32.mrf.mxu0
  %4660 = vmatprep.mubr.bf16.mxu0 0
  %4661 = vmatmul.mubr.bf16.gmra.mxu0 %v2306
  %v4662 = vpop.f32.mrf.mxu0
  %v4663 = vadd.f32 0.0, %v4662
  %v4664 = vpop.f32.mrf.mxu0
  %v4665 = vpop.f32.mrf.mxu0
  %v4666 = vadd.f32 0.0, %v4665
  %v4667 = vpop.f32.mrf.mxu0
  %4668 = vmatprep.mubr.bf16.mxu0 0
  %4669 = vmatmul.mubr.bf16.gmra.mxu0 %v2309
  %v4670 = vpop.f32.mrf.mxu0
  %v4671 = vadd.f32 0.0, %v4670
  %v4672 = vpop.f32.mrf.mxu0
  %v4673 = vpop.f32.mrf.mxu0
  %v4674 = vadd.f32 0.0, %v4673
  %v4675 = vpop.f32.mrf.mxu0
  %4676 = vmatprep.mubr.bf16.mxu0 0
  %4677 = vmatmul.mubr.bf16.gmra.mxu0 %v2312
  %v4678 = vpop.f32.mrf.mxu0
  %v4679 = vadd.f32 0.0, %v4678
  %v4680 = vpop.f32.mrf.mxu0
  %v4681 = vpop.f32.mrf.mxu0
  %v4682 = vadd.f32 0.0, %v4681
  %v4683 = vpop.f32.mrf.mxu0
  %4684 = vmatprep.mubr.bf16.mxu0 0
  %4685 = vmatmul.mubr.bf16.gmra.mxu0 %v4399
  %v4686 = vpop.f32.mrf.mxu0
  %v4687 = vadd.f32 0.0, %v4686
  %v4688 = vpop.f32.mrf.mxu0
  %v4689 = vpop.f32.mrf.mxu0
  %v4690 = vadd.f32 0.0, %v4689
  %v4691 = vpop.f32.mrf.mxu0
  %4692 = vdwg.mxu0
  %v4693 = vadd.f32 %v4276, %v4439
  %v4694 = vadd.f32 %v4277, %v4442
  %v4695 = vadd.f32 %v4278, %v4447
  %v4696 = vadd.f32 %v4279, %v4450
  %v4697 = vadd.f32 %v4280, %v4455
  %v4698 = vadd.f32 %v4281, %v4458
  %v4699 = vadd.f32 %v4282, %v4463
  %v4700 = vadd.f32 %v4283, %v4466
  %v4701 = vadd.f32 %v4284, %v4471
  %v4702 = vadd.f32 %v4285, %v4474
  %v4703 = vadd.f32 %v4286, %v4479
  %v4704 = vadd.f32 %v4287, %v4482
  %v4705 = vadd.f32 %v4288, %v4487
  %v4706 = vadd.f32 %v4289, %v4490
  %v4707 = vadd.f32 %v4290, %v4495
  %v4708 = vadd.f32 %v4291, %v4498
  %v4709 = vadd.f32 %v4292, %v4503
  %v4710 = vadd.f32 %v4293, %v4506
  %v4711 = vadd.f32 %v4294, %v4511
  %v4712 = vadd.f32 %v4295, %v4514
  %v4713 = vadd.f32 %v4296, %v4519
  %v4714 = vadd.f32 %v4297, %v4522
  %v4715 = vadd.f32 %v4298, %v4527
  %v4716 = vadd.f32 %v4299, %v4530
  %v4717 = vadd.f32 %v4300, %v4535
  %v4718 = vadd.f32 %v4301, %v4538
  %v4719 = vadd.f32 %v4302, %v4543
  %v4720 = vadd.f32 %v4303, %v4546
  %v4721 = vadd.f32 %v4304, %v4551
  %v4722 = vadd.f32 %v4305, %v4554
  %v4723 = vadd.f32 %v4306, %v4559
  %v4724 = vadd.f32 %v4307, %v4562
  %v4725 = vadd.f32 %v4308, %v4567
  %v4726 = vadd.f32 %v4309, %v4570
  %v4727 = vadd.f32 %v4310, %v4575
  %v4728 = vadd.f32 %v4311, %v4578
  %v4729 = vadd.f32 %v4312, %v4583
  %v4730 = vadd.f32 %v4313, %v4586
  %v4731 = vadd.f32 %v4314, %v4591
  %v4732 = vadd.f32 %v4315, %v4594
  %v4733 = vadd.f32 %v4316, %v4599
  %v4734 = vadd.f32 %v4317, %v4602
  %v4735 = vadd.f32 %v4318, %v4607
  %v4736 = vadd.f32 %v4319, %v4610
  %v4737 = vadd.f32 %v4320, %v4615
  %v4738 = vadd.f32 %v4321, %v4618
  %v4739 = vadd.f32 %v4322, %v4623
  %v4740 = vadd.f32 %v4323, %v4626
  %v4741 = vadd.f32 %v4324, %v4631
  %v4742 = vadd.f32 %v4325, %v4634
  %v4743 = vadd.f32 %v4326, %v4639
  %v4744 = vadd.f32 %v4327, %v4642
  %v4745 = vadd.f32 %v4328, %v4647
  %v4746 = vadd.f32 %v4329, %v4650
  %v4747 = vadd.f32 %v4330, %v4655
  %v4748 = vadd.f32 %v4331, %v4658
  %v4749 = vadd.f32 %v4332, %v4663
  %v4750 = vadd.f32 %v4333, %v4666
  %v4751 = vadd.f32 %v4334, %v4671
  %v4752 = vadd.f32 %v4335, %v4674
  %v4753 = vadd.f32 %v4336, %v4679
  %v4754 = vadd.f32 %v4337, %v4682
  %v4755 = vadd.f32 %v4338, %v4687
  %v4756 = vadd.f32 %v4339, %v4690
  %v4759 = vrot.slane %v1284, 5
  %v4760 = vrot.slane %v4759, 4
  %v4761 = vrot.slane %v1285, 5
  %v4762 = vsel %vm3189, %v4760, %v4761
  %v4763 = vrot.slane %v4761, 4
  %v4764 = vrot.slane %v1286, 5
  %v4765 = vsel %vm3189, %v4763, %v4764
  %v4766 = vrot.slane %v1338, 5
  %v4767 = vrot.slane %v4766, 4
  %v4768 = vrot.slane %v1339, 5
  %v4769 = vsel %vm3189, %v4767, %v4768
  %v4770 = vrot.slane %v4768, 4
  %v4771 = vrot.slane %v1340, 5
  %v4772 = vsel %vm3189, %v4770, %v4771
  %v4773 = vld [vmem:[%s1 + $0x8] sm:$0xc]
  %v4774 = vunpack.c.l.b16 %v4762
  %v4775 = vunpack.c.l.b16 %v4765
  %v4776 = vunpack.c.l.b16 %v4769
  %v4777 = vunpack.c.l.b16 %v4772
  %v4778 = vpack.c.b16 %v4775, %v4774
  %v4779 = vpack.c.b16 %v4777, %v4776
  %v4781 = vunpack.c.l.b16 %v4773
  %v4782 = vpack.c.b16 %v4781, %v4781
  %v4783 = vrot.slane %v4782, 2
  %v4785 = vsel %vm2217, %v4778, 0
  %v4788 = vsel %vm2217, %v4779, 0
  %v4791 = vsel %vm2314, %v4783, 0
  %4793 = vmatprep.subr.bf16.mxu0 0
  %4794 = vmatpush1.bf16.msra.mxu0 0
  %4795 = vmatprep.subr.bf16.mxu0 0
  %4796 = vmatpush1.bf16.msra.mxu0 0
  %4797 = vmatprep.subr.bf16.mxu0 0
  %4798 = vmatpush1.bf16.msra.mxu0 0
  %4799 = vmatprep.subr.bf16.mxu0 0
  %4800 = vmatpush1.bf16.msra.mxu0 0
  %4801 = vmatprep.subr.bf16.mxu0 0
  %4802 = vmatpush1.bf16.msra.mxu0 0
  %4803 = vmatprep.subr.bf16.mxu0 0
  %4804 = vmatpush1.bf16.msra.mxu0 0
  %4805 = vmatprep.subr.bf16.mxu0 0
  %4806 = vmatpush1.bf16.msra.mxu0 0
  %4807 = vmatprep.subr.bf16.mxu0 0
  %4808 = vmatpush1.bf16.msra.mxu0 %v4791
  %4809 = vmatprep.subr.bf16.mxu0 0
  %4810 = vmatpush2.bf16.msra.mxu0 0
  %4811 = vmatprep.subr.bf16.mxu0 0
  %4812 = vmatpush2.bf16.msra.mxu0 0
  %4813 = vmatprep.subr.bf16.mxu0 0
  %4814 = vmatpush2.bf16.msra.mxu0 0
  %4815 = vmatprep.subr.bf16.mxu0 0
  %4816 = vmatpush2.bf16.msra.mxu0 0
  %4817 = vmatprep.subr.bf16.mxu0 0
  %4818 = vmatpush2.bf16.msra.mxu0 0
  %4819 = vmatprep.subr.bf16.mxu0 0
  %4820 = vmatpush2.bf16.msra.mxu0 0
  %4821 = vmatprep.subr.bf16.mxu0 0
  %4822 = vmatpush2.bf16.msra.mxu0 0
  %4823 = vmatprep.subr.bf16.mxu0 0
  %4824 = vmatpush2.bf16.msra.mxu0 0
  %4825 = vmatprep.mubr.bf16.mxu0 0
  %4826 = vmatmul.mubr.bf16.gmra.mxu0 %v3515
  %v4827 = vpop.f32.mrf.mxu0
  %v4828 = vadd.f32 0.0, %v4827
  %v4829 = vpop.f32.mrf.mxu0
  %v4830 = vpop.f32.mrf.mxu0
  %v4831 = vadd.f32 0.0, %v4830
  %v4832 = vpop.f32.mrf.mxu0
  %4833 = vmatprep.mubr.bf16.mxu0 0
  %4834 = vmatmul.mubr.bf16.gmra.mxu0 %v3518
  %v4835 = vpop.f32.mrf.mxu0
  %v4836 = vadd.f32 0.0, %v4835
  %v4837 = vpop.f32.mrf.mxu0
  %v4838 = vpop.f32.mrf.mxu0
  %v4839 = vadd.f32 0.0, %v4838
  %v4840 = vpop.f32.mrf.mxu0
  %4841 = vmatprep.mubr.bf16.mxu0 0
  %4842 = vmatmul.mubr.bf16.gmra.mxu0 %v3521
  %v4843 = vpop.f32.mrf.mxu0
  %v4844 = vadd.f32 0.0, %v4843
  %v4845 = vpop.f32.mrf.mxu0
  %v4846 = vpop.f32.mrf.mxu0
  %v4847 = vadd.f32 0.0, %v4846
  %v4848 = vpop.f32.mrf.mxu0
  %4849 = vmatprep.mubr.bf16.mxu0 0
  %4850 = vmatmul.mubr.bf16.gmra.mxu0 %v3524
  %v4851 = vpop.f32.mrf.mxu0
  %v4852 = vadd.f32 0.0, %v4851
  %v4853 = vpop.f32.mrf.mxu0
  %v4854 = vpop.f32.mrf.mxu0
  %v4855 = vadd.f32 0.0, %v4854
  %v4856 = vpop.f32.mrf.mxu0
  %4857 = vmatprep.mubr.bf16.mxu0 0
  %4858 = vmatmul.mubr.bf16.gmra.mxu0 %v3527
  %v4859 = vpop.f32.mrf.mxu0
  %v4860 = vadd.f32 0.0, %v4859
  %v4861 = vpop.f32.mrf.mxu0
  %v4862 = vpop.f32.mrf.mxu0
  %v4863 = vadd.f32 0.0, %v4862
  %v4864 = vpop.f32.mrf.mxu0
  %4865 = vmatprep.mubr.bf16.mxu0 0
  %4866 = vmatmul.mubr.bf16.gmra.mxu0 %v3530
  %v4867 = vpop.f32.mrf.mxu0
  %v4868 = vadd.f32 0.0, %v4867
  %v4869 = vpop.f32.mrf.mxu0
  %v4870 = vpop.f32.mrf.mxu0
  %v4871 = vadd.f32 0.0, %v4870
  %v4872 = vpop.f32.mrf.mxu0
  %4873 = vmatprep.mubr.bf16.mxu0 0
  %4874 = vmatmul.mubr.bf16.gmra.mxu0 %v3533
  %v4875 = vpop.f32.mrf.mxu0
  %v4876 = vadd.f32 0.0, %v4875
  %v4877 = vpop.f32.mrf.mxu0
  %v4878 = vpop.f32.mrf.mxu0
  %v4879 = vadd.f32 0.0, %v4878
  %v4880 = vpop.f32.mrf.mxu0
  %4881 = vmatprep.mubr.bf16.mxu0 0
  %4882 = vmatmul.mubr.bf16.gmra.mxu0 %v3536
  %v4883 = vpop.f32.mrf.mxu0
  %v4884 = vadd.f32 0.0, %v4883
  %v4885 = vpop.f32.mrf.mxu0
  %v4886 = vpop.f32.mrf.mxu0
  %v4887 = vadd.f32 0.0, %v4886
  %v4888 = vpop.f32.mrf.mxu0
  %4889 = vmatprep.mubr.bf16.mxu0 0
  %4890 = vmatmul.mubr.bf16.gmra.mxu0 %v3539
  %v4891 = vpop.f32.mrf.mxu0
  %v4892 = vadd.f32 0.0, %v4891
  %v4893 = vpop.f32.mrf.mxu0
  %v4894 = vpop.f32.mrf.mxu0
  %v4895 = vadd.f32 0.0, %v4894
  %v4896 = vpop.f32.mrf.mxu0
  %4897 = vmatprep.mubr.bf16.mxu0 0
  %4898 = vmatmul.mubr.bf16.gmra.mxu0 %v3542
  %v4899 = vpop.f32.mrf.mxu0
  %v4900 = vadd.f32 0.0, %v4899
  %v4901 = vpop.f32.mrf.mxu0
  %v4902 = vpop.f32.mrf.mxu0
  %v4903 = vadd.f32 0.0, %v4902
  %v4904 = vpop.f32.mrf.mxu0
  %4905 = vmatprep.mubr.bf16.mxu0 0
  %4906 = vmatmul.mubr.bf16.gmra.mxu0 %v3545
  %v4907 = vpop.f32.mrf.mxu0
  %v4908 = vadd.f32 0.0, %v4907
  %v4909 = vpop.f32.mrf.mxu0
  %v4910 = vpop.f32.mrf.mxu0
  %v4911 = vadd.f32 0.0, %v4910
  %v4912 = vpop.f32.mrf.mxu0
  %4913 = vmatprep.mubr.bf16.mxu0 0
  %4914 = vmatmul.mubr.bf16.gmra.mxu0 %v3548
  %v4915 = vpop.f32.mrf.mxu0
  %v4916 = vadd.f32 0.0, %v4915
  %v4917 = vpop.f32.mrf.mxu0
  %v4918 = vpop.f32.mrf.mxu0
  %v4919 = vadd.f32 0.0, %v4918
  %v4920 = vpop.f32.mrf.mxu0
  %4921 = vmatprep.mubr.bf16.mxu0 0
  %4922 = vmatmul.mubr.bf16.gmra.mxu0 %v3551
  %v4923 = vpop.f32.mrf.mxu0
  %v4924 = vadd.f32 0.0, %v4923
  %v4925 = vpop.f32.mrf.mxu0
  %v4926 = vpop.f32.mrf.mxu0
  %v4927 = vadd.f32 0.0, %v4926
  %v4928 = vpop.f32.mrf.mxu0
  %4929 = vmatprep.mubr.bf16.mxu0 0
  %4930 = vmatmul.mubr.bf16.gmra.mxu0 %v3554
  %v4931 = vpop.f32.mrf.mxu0
  %v4932 = vadd.f32 0.0, %v4931
  %v4933 = vpop.f32.mrf.mxu0
  %v4934 = vpop.f32.mrf.mxu0
  %v4935 = vadd.f32 0.0, %v4934
  %v4936 = vpop.f32.mrf.mxu0
  %4937 = vmatprep.mubr.bf16.mxu0 0
  %4938 = vmatmul.mubr.bf16.gmra.mxu0 %v3557
  %v4939 = vpop.f32.mrf.mxu0
  %v4940 = vadd.f32 0.0, %v4939
  %v4941 = vpop.f32.mrf.mxu0
  %v4942 = vpop.f32.mrf.mxu0
  %v4943 = vadd.f32 0.0, %v4942
  %v4944 = vpop.f32.mrf.mxu0
  %4945 = vmatprep.mubr.bf16.mxu0 0
  %4946 = vmatmul.mubr.bf16.gmra.mxu0 %v4785
  %v4947 = vpop.f32.mrf.mxu0
  %v4948 = vadd.f32 0.0, %v4947
  %v4949 = vpop.f32.mrf.mxu0
  %v4950 = vpop.f32.mrf.mxu0
  %v4951 = vadd.f32 0.0, %v4950
  %v4952 = vpop.f32.mrf.mxu0
  %4953 = vmatprep.mubr.bf16.mxu0 0
  %4954 = vmatmul.mubr.bf16.gmra.mxu0 %v3563
  %v4955 = vpop.f32.mrf.mxu0
  %v4956 = vadd.f32 0.0, %v4955
  %v4957 = vpop.f32.mrf.mxu0
  %v4958 = vpop.f32.mrf.mxu0
  %v4959 = vadd.f32 0.0, %v4958
  %v4960 = vpop.f32.mrf.mxu0
  %4961 = vmatprep.mubr.bf16.mxu0 0
  %4962 = vmatmul.mubr.bf16.gmra.mxu0 %v3566
  %v4963 = vpop.f32.mrf.mxu0
  %v4964 = vadd.f32 0.0, %v4963
  %v4965 = vpop.f32.mrf.mxu0
  %v4966 = vpop.f32.mrf.mxu0
  %v4967 = vadd.f32 0.0, %v4966
  %v4968 = vpop.f32.mrf.mxu0
  %4969 = vmatprep.mubr.bf16.mxu0 0
  %4970 = vmatmul.mubr.bf16.gmra.mxu0 %v3569
  %v4971 = vpop.f32.mrf.mxu0
  %v4972 = vadd.f32 0.0, %v4971
  %v4973 = vpop.f32.mrf.mxu0
  %v4974 = vpop.f32.mrf.mxu0
  %v4975 = vadd.f32 0.0, %v4974
  %v4976 = vpop.f32.mrf.mxu0
  %4977 = vmatprep.mubr.bf16.mxu0 0
  %4978 = vmatmul.mubr.bf16.gmra.mxu0 %v3572
  %v4979 = vpop.f32.mrf.mxu0
  %v4980 = vadd.f32 0.0, %v4979
  %v4981 = vpop.f32.mrf.mxu0
  %v4982 = vpop.f32.mrf.mxu0
  %v4983 = vadd.f32 0.0, %v4982
  %v4984 = vpop.f32.mrf.mxu0
  %4985 = vmatprep.mubr.bf16.mxu0 0
  %4986 = vmatmul.mubr.bf16.gmra.mxu0 %v3575
  %v4987 = vpop.f32.mrf.mxu0
  %v4988 = vadd.f32 0.0, %v4987
  %v4989 = vpop.f32.mrf.mxu0
  %v4990 = vpop.f32.mrf.mxu0
  %v4991 = vadd.f32 0.0, %v4990
  %v4992 = vpop.f32.mrf.mxu0
  %4993 = vmatprep.mubr.bf16.mxu0 0
  %4994 = vmatmul.mubr.bf16.gmra.mxu0 %v3578
  %v4995 = vpop.f32.mrf.mxu0
  %v4996 = vadd.f32 0.0, %v4995
  %v4997 = vpop.f32.mrf.mxu0
  %v4998 = vpop.f32.mrf.mxu0
  %v4999 = vadd.f32 0.0, %v4998
  %v5000 = vpop.f32.mrf.mxu0
  %5001 = vmatprep.mubr.bf16.mxu0 0
  %5002 = vmatmul.mubr.bf16.gmra.mxu0 %v3581
  %v5003 = vpop.f32.mrf.mxu0
  %v5004 = vadd.f32 0.0, %v5003
  %v5005 = vpop.f32.mrf.mxu0
  %v5006 = vpop.f32.mrf.mxu0
  %v5007 = vadd.f32 0.0, %v5006
  %v5008 = vpop.f32.mrf.mxu0
  %5009 = vmatprep.mubr.bf16.mxu0 0
  %5010 = vmatmul.mubr.bf16.gmra.mxu0 %v3584
  %v5011 = vpop.f32.mrf.mxu0
  %v5012 = vadd.f32 0.0, %v5011
  %v5013 = vpop.f32.mrf.mxu0
  %v5014 = vpop.f32.mrf.mxu0
  %v5015 = vadd.f32 0.0, %v5014
  %v5016 = vpop.f32.mrf.mxu0
  %5017 = vmatprep.mubr.bf16.mxu0 0
  %5018 = vmatmul.mubr.bf16.gmra.mxu0 %v3587
  %v5019 = vpop.f32.mrf.mxu0
  %v5020 = vadd.f32 0.0, %v5019
  %v5021 = vpop.f32.mrf.mxu0
  %v5022 = vpop.f32.mrf.mxu0
  %v5023 = vadd.f32 0.0, %v5022
  %v5024 = vpop.f32.mrf.mxu0
  %5025 = vmatprep.mubr.bf16.mxu0 0
  %5026 = vmatmul.mubr.bf16.gmra.mxu0 %v3590
  %v5027 = vpop.f32.mrf.mxu0
  %v5028 = vadd.f32 0.0, %v5027
  %v5029 = vpop.f32.mrf.mxu0
  %v5030 = vpop.f32.mrf.mxu0
  %v5031 = vadd.f32 0.0, %v5030
  %v5032 = vpop.f32.mrf.mxu0
  %5033 = vmatprep.mubr.bf16.mxu0 0
  %5034 = vmatmul.mubr.bf16.gmra.mxu0 %v3593
  %v5035 = vpop.f32.mrf.mxu0
  %v5036 = vadd.f32 0.0, %v5035
  %v5037 = vpop.f32.mrf.mxu0
  %v5038 = vpop.f32.mrf.mxu0
  %v5039 = vadd.f32 0.0, %v5038
  %v5040 = vpop.f32.mrf.mxu0
  %5041 = vmatprep.mubr.bf16.mxu0 0
  %5042 = vmatmul.mubr.bf16.gmra.mxu0 %v3596
  %v5043 = vpop.f32.mrf.mxu0
  %v5044 = vadd.f32 0.0, %v5043
  %v5045 = vpop.f32.mrf.mxu0
  %v5046 = vpop.f32.mrf.mxu0
  %v5047 = vadd.f32 0.0, %v5046
  %v5048 = vpop.f32.mrf.mxu0
  %5049 = vmatprep.mubr.bf16.mxu0 0
  %5050 = vmatmul.mubr.bf16.gmra.mxu0 %v3599
  %v5051 = vpop.f32.mrf.mxu0
  %v5052 = vadd.f32 0.0, %v5051
  %v5053 = vpop.f32.mrf.mxu0
  %v5054 = vpop.f32.mrf.mxu0
  %v5055 = vadd.f32 0.0, %v5054
  %v5056 = vpop.f32.mrf.mxu0
  %5057 = vmatprep.mubr.bf16.mxu0 0
  %5058 = vmatmul.mubr.bf16.gmra.mxu0 %v3602
  %v5059 = vpop.f32.mrf.mxu0
  %v5060 = vadd.f32 0.0, %v5059
  %v5061 = vpop.f32.mrf.mxu0
  %v5062 = vpop.f32.mrf.mxu0
  %v5063 = vadd.f32 0.0, %v5062
  %v5064 = vpop.f32.mrf.mxu0
  %5065 = vmatprep.mubr.bf16.mxu0 0
  %5066 = vmatmul.mubr.bf16.gmra.mxu0 %v3605
  %v5067 = vpop.f32.mrf.mxu0
  %v5068 = vadd.f32 0.0, %v5067
  %v5069 = vpop.f32.mrf.mxu0
  %v5070 = vpop.f32.mrf.mxu0
  %v5071 = vadd.f32 0.0, %v5070
  %v5072 = vpop.f32.mrf.mxu0
  %5073 = vmatprep.mubr.bf16.mxu0 0
  %5074 = vmatmul.mubr.bf16.gmra.mxu0 %v4788
  %v5075 = vpop.f32.mrf.mxu0
  %v5076 = vadd.f32 0.0, %v5075
  %v5077 = vpop.f32.mrf.mxu0
  %v5078 = vpop.f32.mrf.mxu0
  %v5079 = vadd.f32 0.0, %v5078
  %v5080 = vpop.f32.mrf.mxu0
  %5081 = vdwg.mxu0
  %v5082 = vadd.f32 %v4693, %v4828
  %v5083 = vadd.f32 %v4694, %v4831
  %v5084 = vadd.f32 %v4695, %v4836
  %v5085 = vadd.f32 %v4696, %v4839
  %v5086 = vadd.f32 %v4697, %v4844
  %v5087 = vadd.f32 %v4698, %v4847
  %v5088 = vadd.f32 %v4699, %v4852
  %v5089 = vadd.f32 %v4700, %v4855
  %v5090 = vadd.f32 %v4701, %v4860
  %v5091 = vadd.f32 %v4702, %v4863
  %v5092 = vadd.f32 %v4703, %v4868
  %v5093 = vadd.f32 %v4704, %v4871
  %v5094 = vadd.f32 %v4705, %v4876
  %v5095 = vadd.f32 %v4706, %v4879
  %v5096 = vadd.f32 %v4707, %v4884
  %v5097 = vadd.f32 %v4708, %v4887
  %v5098 = vadd.f32 %v4709, %v4892
  %v5099 = vadd.f32 %v4710, %v4895
  %v5100 = vadd.f32 %v4711, %v4900
  %v5101 = vadd.f32 %v4712, %v4903
  %v5102 = vadd.f32 %v4713, %v4908
  %v5103 = vadd.f32 %v4714, %v4911
  %v5104 = vadd.f32 %v4715, %v4916
  %v5105 = vadd.f32 %v4716, %v4919
  %v5106 = vadd.f32 %v4717, %v4924
  %v5107 = vadd.f32 %v4718, %v4927
  %v5108 = vadd.f32 %v4719, %v4932
  %v5109 = vadd.f32 %v4720, %v4935
  %v5110 = vadd.f32 %v4721, %v4940
  %v5111 = vadd.f32 %v4722, %v4943
  %v5112 = vadd.f32 %v4723, %v4948
  %v5113 = vadd.f32 %v4724, %v4951
  %v5114 = vadd.f32 %v4725, %v4956
  %v5115 = vadd.f32 %v4726, %v4959
  %v5116 = vadd.f32 %v4727, %v4964
  %v5117 = vadd.f32 %v4728, %v4967
  %v5118 = vadd.f32 %v4729, %v4972
  %v5119 = vadd.f32 %v4730, %v4975
  %v5120 = vadd.f32 %v4731, %v4980
  %v5121 = vadd.f32 %v4732, %v4983
  %v5122 = vadd.f32 %v4733, %v4988
  %v5123 = vadd.f32 %v4734, %v4991
  %v5124 = vadd.f32 %v4735, %v4996
  %v5125 = vadd.f32 %v4736, %v4999
  %v5126 = vadd.f32 %v4737, %v5004
  %v5127 = vadd.f32 %v4738, %v5007
  %v5128 = vadd.f32 %v4739, %v5012
  %v5129 = vadd.f32 %v4740, %v5015
  %v5130 = vadd.f32 %v4741, %v5020
  %v5131 = vadd.f32 %v4742, %v5023
  %v5132 = vadd.f32 %v4743, %v5028
  %v5133 = vadd.f32 %v4744, %v5031
  %v5134 = vadd.f32 %v4745, %v5036
  %v5135 = vadd.f32 %v4746, %v5039
  %v5136 = vadd.f32 %v4747, %v5044
  %v5137 = vadd.f32 %v4748, %v5047
  %v5138 = vadd.f32 %v4749, %v5052
  %v5139 = vadd.f32 %v4750, %v5055
  %v5140 = vadd.f32 %v4751, %v5060
  %v5141 = vadd.f32 %v4752, %v5063
  %v5142 = vadd.f32 %v4753, %v5068
  %v5143 = vadd.f32 %v4754, %v5071
  %v5144 = vadd.f32 %v4755, %v5076
  %v5145 = vadd.f32 %v4756, %v5079
  %v5146 = vld [vmem:[%s1 + $0xc] sm:$0x3]
  %v5151 = vunpack.c.l.b16 %v1287
  %v5152 = vunpack.c.l.b16 %v1288
  %v5153 = vunpack.c.l.b16 %v1341
  %v5154 = vunpack.c.l.b16 %v1342
  %v5155 = vpack.c.b16 %v5152, %v5151
  %v5156 = vpack.c.b16 %v5154, %v5153
  %v5158 = vsel %vm2217, %v5155, 0
  %v5161 = vsel %vm2217, %v5156, 0
  %v5164 = vsel %vm2314, %v5146, 0
  %5166 = vmatprep.subr.bf16.mxu0 0
  %5167 = vmatpush1.bf16.msra.mxu0 0
  %5168 = vmatprep.subr.bf16.mxu0 0
  %5169 = vmatpush1.bf16.msra.mxu0 0
  %5170 = vmatprep.subr.bf16.mxu0 0
  %5171 = vmatpush1.bf16.msra.mxu0 0
  %5172 = vmatprep.subr.bf16.mxu0 0
  %5173 = vmatpush1.bf16.msra.mxu0 0
  %5174 = vmatprep.subr.bf16.mxu0 0
  %5175 = vmatpush1.bf16.msra.mxu0 0
  %5176 = vmatprep.subr.bf16.mxu0 0
  %5177 = vmatpush1.bf16.msra.mxu0 0
  %5178 = vmatprep.subr.bf16.mxu0 0
  %5179 = vmatpush1.bf16.msra.mxu0 0
  %5180 = vmatprep.subr.bf16.mxu0 0
  %5181 = vmatpush1.bf16.msra.mxu0 %v5164
  %5182 = vmatprep.subr.bf16.mxu0 0
  %5183 = vmatpush2.bf16.msra.mxu0 0
  %5184 = vmatprep.subr.bf16.mxu0 0
  %5185 = vmatpush2.bf16.msra.mxu0 0
  %5186 = vmatprep.subr.bf16.mxu0 0
  %5187 = vmatpush2.bf16.msra.mxu0 0
  %5188 = vmatprep.subr.bf16.mxu0 0
  %5189 = vmatpush2.bf16.msra.mxu0 0
  %5190 = vmatprep.subr.bf16.mxu0 0
  %5191 = vmatpush2.bf16.msra.mxu0 0
  %5192 = vmatprep.subr.bf16.mxu0 0
  %5193 = vmatpush2.bf16.msra.mxu0 0
  %5194 = vmatprep.subr.bf16.mxu0 0
  %5195 = vmatpush2.bf16.msra.mxu0 0
  %5196 = vmatprep.subr.bf16.mxu0 0
  %5197 = vmatpush2.bf16.msra.mxu0 0
  %5198 = vmatprep.mubr.bf16.mxu0 0
  %5199 = vmatmul.mubr.bf16.gmra.mxu0 %v2774
  %v5200 = vpop.f32.mrf.mxu0
  %v5201 = vadd.f32 0.0, %v5200
  %v5202 = vpop.f32.mrf.mxu0
  %v5203 = vpop.f32.mrf.mxu0
  %v5204 = vadd.f32 0.0, %v5203
  %v5205 = vpop.f32.mrf.mxu0
  %5206 = vmatprep.mubr.bf16.mxu0 0
  %5207 = vmatmul.mubr.bf16.gmra.mxu0 %v2777
  %v5208 = vpop.f32.mrf.mxu0
  %v5209 = vadd.f32 0.0, %v5208
  %v5210 = vpop.f32.mrf.mxu0
  %v5211 = vpop.f32.mrf.mxu0
  %v5212 = vadd.f32 0.0, %v5211
  %v5213 = vpop.f32.mrf.mxu0
  %5214 = vmatprep.mubr.bf16.mxu0 0
  %5215 = vmatmul.mubr.bf16.gmra.mxu0 %v2780
  %v5216 = vpop.f32.mrf.mxu0
  %v5217 = vadd.f32 0.0, %v5216
  %v5218 = vpop.f32.mrf.mxu0
  %v5219 = vpop.f32.mrf.mxu0
  %v5220 = vadd.f32 0.0, %v5219
  %v5221 = vpop.f32.mrf.mxu0
  %5222 = vmatprep.mubr.bf16.mxu0 0
  %5223 = vmatmul.mubr.bf16.gmra.mxu0 %v2783
  %v5224 = vpop.f32.mrf.mxu0
  %v5225 = vadd.f32 0.0, %v5224
  %v5226 = vpop.f32.mrf.mxu0
  %v5227 = vpop.f32.mrf.mxu0
  %v5228 = vadd.f32 0.0, %v5227
  %v5229 = vpop.f32.mrf.mxu0
  %5230 = vmatprep.mubr.bf16.mxu0 0
  %5231 = vmatmul.mubr.bf16.gmra.mxu0 %v2786
  %v5232 = vpop.f32.mrf.mxu0
  %v5233 = vadd.f32 0.0, %v5232
  %v5234 = vpop.f32.mrf.mxu0
  %v5235 = vpop.f32.mrf.mxu0
  %v5236 = vadd.f32 0.0, %v5235
  %v5237 = vpop.f32.mrf.mxu0
  %5238 = vmatprep.mubr.bf16.mxu0 0
  %5239 = vmatmul.mubr.bf16.gmra.mxu0 %v2789
  %v5240 = vpop.f32.mrf.mxu0
  %v5241 = vadd.f32 0.0, %v5240
  %v5242 = vpop.f32.mrf.mxu0
  %v5243 = vpop.f32.mrf.mxu0
  %v5244 = vadd.f32 0.0, %v5243
  %v5245 = vpop.f32.mrf.mxu0
  %5246 = vmatprep.mubr.bf16.mxu0 0
  %5247 = vmatmul.mubr.bf16.gmra.mxu0 %v2792
  %v5248 = vpop.f32.mrf.mxu0
  %v5249 = vadd.f32 0.0, %v5248
  %v5250 = vpop.f32.mrf.mxu0
  %v5251 = vpop.f32.mrf.mxu0
  %v5252 = vadd.f32 0.0, %v5251
  %v5253 = vpop.f32.mrf.mxu0
  %5254 = vmatprep.mubr.bf16.mxu0 0
  %5255 = vmatmul.mubr.bf16.gmra.mxu0 %v2795
  %v5256 = vpop.f32.mrf.mxu0
  %v5257 = vadd.f32 0.0, %v5256
  %v5258 = vpop.f32.mrf.mxu0
  %v5259 = vpop.f32.mrf.mxu0
  %v5260 = vadd.f32 0.0, %v5259
  %v5261 = vpop.f32.mrf.mxu0
  %5262 = vmatprep.mubr.bf16.mxu0 0
  %5263 = vmatmul.mubr.bf16.gmra.mxu0 %v2798
  %v5264 = vpop.f32.mrf.mxu0
  %v5265 = vadd.f32 0.0, %v5264
  %v5266 = vpop.f32.mrf.mxu0
  %v5267 = vpop.f32.mrf.mxu0
  %v5268 = vadd.f32 0.0, %v5267
  %v5269 = vpop.f32.mrf.mxu0
  %5270 = vmatprep.mubr.bf16.mxu0 0
  %5271 = vmatmul.mubr.bf16.gmra.mxu0 %v2801
  %v5272 = vpop.f32.mrf.mxu0
  %v5273 = vadd.f32 0.0, %v5272
  %v5274 = vpop.f32.mrf.mxu0
  %v5275 = vpop.f32.mrf.mxu0
  %v5276 = vadd.f32 0.0, %v5275
  %v5277 = vpop.f32.mrf.mxu0
  %5278 = vmatprep.mubr.bf16.mxu0 0
  %5279 = vmatmul.mubr.bf16.gmra.mxu0 %v2804
  %v5280 = vpop.f32.mrf.mxu0
  %v5281 = vadd.f32 0.0, %v5280
  %v5282 = vpop.f32.mrf.mxu0
  %v5283 = vpop.f32.mrf.mxu0
  %v5284 = vadd.f32 0.0, %v5283
  %v5285 = vpop.f32.mrf.mxu0
  %5286 = vmatprep.mubr.bf16.mxu0 0
  %5287 = vmatmul.mubr.bf16.gmra.mxu0 %v2807
  %v5288 = vpop.f32.mrf.mxu0
  %v5289 = vadd.f32 0.0, %v5288
  %v5290 = vpop.f32.mrf.mxu0
  %v5291 = vpop.f32.mrf.mxu0
  %v5292 = vadd.f32 0.0, %v5291
  %v5293 = vpop.f32.mrf.mxu0
  %5294 = vmatprep.mubr.bf16.mxu0 0
  %5295 = vmatmul.mubr.bf16.gmra.mxu0 %v2810
  %v5296 = vpop.f32.mrf.mxu0
  %v5297 = vadd.f32 0.0, %v5296
  %v5298 = vpop.f32.mrf.mxu0
  %v5299 = vpop.f32.mrf.mxu0
  %v5300 = vadd.f32 0.0, %v5299
  %v5301 = vpop.f32.mrf.mxu0
  %5302 = vmatprep.mubr.bf16.mxu0 0
  %5303 = vmatmul.mubr.bf16.gmra.mxu0 %v2813
  %v5304 = vpop.f32.mrf.mxu0
  %v5305 = vadd.f32 0.0, %v5304
  %v5306 = vpop.f32.mrf.mxu0
  %v5307 = vpop.f32.mrf.mxu0
  %v5308 = vadd.f32 0.0, %v5307
  %v5309 = vpop.f32.mrf.mxu0
  %5310 = vmatprep.mubr.bf16.mxu0 0
  %5311 = vmatmul.mubr.bf16.gmra.mxu0 %v3979
  %v5312 = vpop.f32.mrf.mxu0
  %v5313 = vadd.f32 0.0, %v5312
  %v5314 = vpop.f32.mrf.mxu0
  %v5315 = vpop.f32.mrf.mxu0
  %v5316 = vadd.f32 0.0, %v5315
  %v5317 = vpop.f32.mrf.mxu0
  %5318 = vmatprep.mubr.bf16.mxu0 0
  %5319 = vmatmul.mubr.bf16.gmra.mxu0 %v5158
  %v5320 = vpop.f32.mrf.mxu0
  %v5321 = vadd.f32 0.0, %v5320
  %v5322 = vpop.f32.mrf.mxu0
  %v5323 = vpop.f32.mrf.mxu0
  %v5324 = vadd.f32 0.0, %v5323
  %v5325 = vpop.f32.mrf.mxu0
  %5326 = vmatprep.mubr.bf16.mxu0 0
  %5327 = vmatmul.mubr.bf16.gmra.mxu0 %v2822
  %v5328 = vpop.f32.mrf.mxu0
  %v5329 = vadd.f32 0.0, %v5328
  %v5330 = vpop.f32.mrf.mxu0
  %v5331 = vpop.f32.mrf.mxu0
  %v5332 = vadd.f32 0.0, %v5331
  %v5333 = vpop.f32.mrf.mxu0
  %5334 = vmatprep.mubr.bf16.mxu0 0
  %5335 = vmatmul.mubr.bf16.gmra.mxu0 %v2825
  %v5336 = vpop.f32.mrf.mxu0
  %v5337 = vadd.f32 0.0, %v5336
  %v5338 = vpop.f32.mrf.mxu0
  %v5339 = vpop.f32.mrf.mxu0
  %v5340 = vadd.f32 0.0, %v5339
  %v5341 = vpop.f32.mrf.mxu0
  %5342 = vmatprep.mubr.bf16.mxu0 0
  %5343 = vmatmul.mubr.bf16.gmra.mxu0 %v2828
  %v5344 = vpop.f32.mrf.mxu0
  %v5345 = vadd.f32 0.0, %v5344
  %v5346 = vpop.f32.mrf.mxu0
  %v5347 = vpop.f32.mrf.mxu0
  %v5348 = vadd.f32 0.0, %v5347
  %v5349 = vpop.f32.mrf.mxu0
  %5350 = vmatprep.mubr.bf16.mxu0 0
  %5351 = vmatmul.mubr.bf16.gmra.mxu0 %v2831
  %v5352 = vpop.f32.mrf.mxu0
  %v5353 = vadd.f32 0.0, %v5352
  %v5354 = vpop.f32.mrf.mxu0
  %v5355 = vpop.f32.mrf.mxu0
  %v5356 = vadd.f32 0.0, %v5355
  %v5357 = vpop.f32.mrf.mxu0
  %5358 = vmatprep.mubr.bf16.mxu0 0
  %5359 = vmatmul.mubr.bf16.gmra.mxu0 %v2834
  %v5360 = vpop.f32.mrf.mxu0
  %v5361 = vadd.f32 0.0, %v5360
  %v5362 = vpop.f32.mrf.mxu0
  %v5363 = vpop.f32.mrf.mxu0
  %v5364 = vadd.f32 0.0, %v5363
  %v5365 = vpop.f32.mrf.mxu0
  %5366 = vmatprep.mubr.bf16.mxu0 0
  %5367 = vmatmul.mubr.bf16.gmra.mxu0 %v2837
  %v5368 = vpop.f32.mrf.mxu0
  %v5369 = vadd.f32 0.0, %v5368
  %v5370 = vpop.f32.mrf.mxu0
  %v5371 = vpop.f32.mrf.mxu0
  %v5372 = vadd.f32 0.0, %v5371
  %v5373 = vpop.f32.mrf.mxu0
  %5374 = vmatprep.mubr.bf16.mxu0 0
  %5375 = vmatmul.mubr.bf16.gmra.mxu0 %v2840
  %v5376 = vpop.f32.mrf.mxu0
  %v5377 = vadd.f32 0.0, %v5376
  %v5378 = vpop.f32.mrf.mxu0
  %v5379 = vpop.f32.mrf.mxu0
  %v5380 = vadd.f32 0.0, %v5379
  %v5381 = vpop.f32.mrf.mxu0
  %5382 = vmatprep.mubr.bf16.mxu0 0
  %5383 = vmatmul.mubr.bf16.gmra.mxu0 %v2843
  %v5384 = vpop.f32.mrf.mxu0
  %v5385 = vadd.f32 0.0, %v5384
  %v5386 = vpop.f32.mrf.mxu0
  %v5387 = vpop.f32.mrf.mxu0
  %v5388 = vadd.f32 0.0, %v5387
  %v5389 = vpop.f32.mrf.mxu0
  %5390 = vmatprep.mubr.bf16.mxu0 0
  %5391 = vmatmul.mubr.bf16.gmra.mxu0 %v2846
  %v5392 = vpop.f32.mrf.mxu0
  %v5393 = vadd.f32 0.0, %v5392
  %v5394 = vpop.f32.mrf.mxu0
  %v5395 = vpop.f32.mrf.mxu0
  %v5396 = vadd.f32 0.0, %v5395
  %v5397 = vpop.f32.mrf.mxu0
  %5398 = vmatprep.mubr.bf16.mxu0 0
  %5399 = vmatmul.mubr.bf16.gmra.mxu0 %v2849
  %v5400 = vpop.f32.mrf.mxu0
  %v5401 = vadd.f32 0.0, %v5400
  %v5402 = vpop.f32.mrf.mxu0
  %v5403 = vpop.f32.mrf.mxu0
  %v5404 = vadd.f32 0.0, %v5403
  %v5405 = vpop.f32.mrf.mxu0
  %5406 = vmatprep.mubr.bf16.mxu0 0
  %5407 = vmatmul.mubr.bf16.gmra.mxu0 %v2852
  %v5408 = vpop.f32.mrf.mxu0
  %v5409 = vadd.f32 0.0, %v5408
  %v5410 = vpop.f32.mrf.mxu0
  %v5411 = vpop.f32.mrf.mxu0
  %v5412 = vadd.f32 0.0, %v5411
  %v5413 = vpop.f32.mrf.mxu0
  %5414 = vmatprep.mubr.bf16.mxu0 0
  %5415 = vmatmul.mubr.bf16.gmra.mxu0 %v2855
  %v5416 = vpop.f32.mrf.mxu0
  %v5417 = vadd.f32 0.0, %v5416
  %v5418 = vpop.f32.mrf.mxu0
  %v5419 = vpop.f32.mrf.mxu0
  %v5420 = vadd.f32 0.0, %v5419
  %v5421 = vpop.f32.mrf.mxu0
  %5422 = vmatprep.mubr.bf16.mxu0 0
  %5423 = vmatmul.mubr.bf16.gmra.mxu0 %v2858
  %v5424 = vpop.f32.mrf.mxu0
  %v5425 = vadd.f32 0.0, %v5424
  %v5426 = vpop.f32.mrf.mxu0
  %v5427 = vpop.f32.mrf.mxu0
  %v5428 = vadd.f32 0.0, %v5427
  %v5429 = vpop.f32.mrf.mxu0
  %5430 = vmatprep.mubr.bf16.mxu0 0
  %5431 = vmatmul.mubr.bf16.gmra.mxu0 %v2861
  %v5432 = vpop.f32.mrf.mxu0
  %v5433 = vadd.f32 0.0, %v5432
  %v5434 = vpop.f32.mrf.mxu0
  %v5435 = vpop.f32.mrf.mxu0
  %v5436 = vadd.f32 0.0, %v5435
  %v5437 = vpop.f32.mrf.mxu0
  %5438 = vmatprep.mubr.bf16.mxu0 0
  %5439 = vmatmul.mubr.bf16.gmra.mxu0 %v3982
  %v5440 = vpop.f32.mrf.mxu0
  %v5441 = vadd.f32 0.0, %v5440
  %v5442 = vpop.f32.mrf.mxu0
  %v5443 = vpop.f32.mrf.mxu0
  %v5444 = vadd.f32 0.0, %v5443
  %v5445 = vpop.f32.mrf.mxu0
  %5446 = vmatprep.mubr.bf16.mxu0 0
  %5447 = vmatmul.mubr.bf16.gmra.mxu0 %v5161
  %v5448 = vpop.f32.mrf.mxu0
  %v5449 = vadd.f32 0.0, %v5448
  %v5450 = vpop.f32.mrf.mxu0
  %v5451 = vpop.f32.mrf.mxu0
  %v5452 = vadd.f32 0.0, %v5451
  %v5453 = vpop.f32.mrf.mxu0
  %5454 = vdwg.mxu0
  %v5455 = vadd.f32 %v5082, %v5201
  %v5456 = vadd.f32 %v5083, %v5204
  %v5457 = vadd.f32 %v5084, %v5209
  %v5458 = vadd.f32 %v5085, %v5212
  %v5459 = vadd.f32 %v5086, %v5217
  %v5460 = vadd.f32 %v5087, %v5220
  %v5461 = vadd.f32 %v5088, %v5225
  %v5462 = vadd.f32 %v5089, %v5228
  %v5463 = vadd.f32 %v5090, %v5233
  %v5464 = vadd.f32 %v5091, %v5236
  %v5465 = vadd.f32 %v5092, %v5241
  %v5466 = vadd.f32 %v5093, %v5244
  %v5467 = vadd.f32 %v5094, %v5249
  %v5468 = vadd.f32 %v5095, %v5252
  %v5469 = vadd.f32 %v5096, %v5257
  %v5470 = vadd.f32 %v5097, %v5260
  %v5471 = vadd.f32 %v5098, %v5265
  %v5472 = vadd.f32 %v5099, %v5268
  %v5473 = vadd.f32 %v5100, %v5273
  %v5474 = vadd.f32 %v5101, %v5276
  %v5475 = vadd.f32 %v5102, %v5281
  %v5476 = vadd.f32 %v5103, %v5284
  %v5477 = vadd.f32 %v5104, %v5289
  %v5478 = vadd.f32 %v5105, %v5292
  %v5479 = vadd.f32 %v5106, %v5297
  %v5480 = vadd.f32 %v5107, %v5300
  %v5481 = vadd.f32 %v5108, %v5305
  %v5482 = vadd.f32 %v5109, %v5308
  %v5483 = vadd.f32 %v5110, %v5313
  %v5484 = vadd.f32 %v5111, %v5316
  %v5485 = vadd.f32 %v5112, %v5321
  %v5486 = vadd.f32 %v5113, %v5324
  %v5487 = vadd.f32 %v5114, %v5329
  %v5488 = vadd.f32 %v5115, %v5332
  %v5489 = vadd.f32 %v5116, %v5337
  %v5490 = vadd.f32 %v5117, %v5340
  %v5491 = vadd.f32 %v5118, %v5345
  %v5492 = vadd.f32 %v5119, %v5348
  %v5493 = vadd.f32 %v5120, %v5353
  %v5494 = vadd.f32 %v5121, %v5356
  %v5495 = vadd.f32 %v5122, %v5361
  %v5496 = vadd.f32 %v5123, %v5364
  %v5497 = vadd.f32 %v5124, %v5369
  %v5498 = vadd.f32 %v5125, %v5372
  %v5499 = vadd.f32 %v5126, %v5377
  %v5500 = vadd.f32 %v5127, %v5380
  %v5501 = vadd.f32 %v5128, %v5385
  %v5502 = vadd.f32 %v5129, %v5388
  %v5503 = vadd.f32 %v5130, %v5393
  %v5504 = vadd.f32 %v5131, %v5396
  %v5505 = vadd.f32 %v5132, %v5401
  %v5506 = vadd.f32 %v5133, %v5404
  %v5507 = vadd.f32 %v5134, %v5409
  %v5508 = vadd.f32 %v5135, %v5412
  %v5509 = vadd.f32 %v5136, %v5417
  %v5510 = vadd.f32 %v5137, %v5420
  %v5511 = vadd.f32 %v5138, %v5425
  %v5512 = vadd.f32 %v5139, %v5428
  %v5513 = vadd.f32 %v5140, %v5433
  %v5514 = vadd.f32 %v5141, %v5436
  %v5515 = vadd.f32 %v5142, %v5441
  %v5516 = vadd.f32 %v5143, %v5444
  %v5517 = vadd.f32 %v5144, %v5449
  %v5518 = vadd.f32 %v5145, %v5452
  %v5520 = vshrl.u32 %v1287, 16
  %v5522 = vrot.slane %v5520, 4
  %v5523 = vshll.u32 %v1287, 16
  %v5525 = vrot.slane %v5523, 5
  %v5526 = vor.u32 %v5522, %v5525
  %v5527 = vrot.slane %v5526, 4
  %v5529 = vshll.u32 %v1288, 16
  %v5531 = vrot.slane %v5529, 5
  %v5532 = vsel %vm1347, %v5527, %v5531
  %v5533 = vshrl.u32 %v1288, 16
  %v5535 = vrot.slane %v5533, 4
  %v5536 = vor.u32 %v5535, %v5531
  %v5537 = vrot.slane %v5536, 4
  %v5539 = vshll.u32 %v1289, 16
  %v5541 = vrot.slane %v5539, 5
  %v5542 = vsel %vm1347, %v5537, %v5541
  %v5544 = vshrl.u32 %v1341, 16
  %v5546 = vrot.slane %v5544, 4
  %v5547 = vshll.u32 %v1341, 16
  %v5549 = vrot.slane %v5547, 5
  %v5550 = vor.u32 %v5546, %v5549
  %v5551 = vrot.slane %v5550, 4
  %v5553 = vshll.u32 %v1342, 16
  %v5555 = vrot.slane %v5553, 5
  %v5556 = vsel %vm1347, %v5551, %v5555
  %v5557 = vshrl.u32 %v1342, 16
  %v5559 = vrot.slane %v5557, 4
  %v5560 = vor.u32 %v5559, %v5555
  %v5561 = vrot.slane %v5560, 4
  %v5563 = vshll.u32 %v1343, 16
  %v5565 = vrot.slane %v5563, 5
  %v5566 = vsel %vm1347, %v5561, %v5565
  %v5567 = vld [vmem:[%s1 + $0xc] sm:$0xc]
  %v5568 = vunpack.c.l.b16 %v5532
  %v5569 = vunpack.c.l.b16 %v5542
  %v5570 = vunpack.c.l.b16 %v5556
  %v5571 = vunpack.c.l.b16 %v5566
  %v5572 = vpack.c.b16 %v5569, %v5568
  %v5573 = vpack.c.b16 %v5571, %v5570
  %v5575 = vunpack.c.l.b16 %v5567
  %v5576 = vpack.c.b16 %v5575, %v5575
  %v5577 = vrot.slane %v5576, 2
  %v5579 = vsel %vm2217, %v5572, 0
  %v5582 = vsel %vm2217, %v5573, 0
  %v5585 = vsel %vm2314, %v5577, 0
  %5587 = vmatprep.subr.bf16.mxu0 0
  %5588 = vmatpush1.bf16.msra.mxu0 0
  %5589 = vmatprep.subr.bf16.mxu0 0
  %5590 = vmatpush1.bf16.msra.mxu0 0
  %5591 = vmatprep.subr.bf16.mxu0 0
  %5592 = vmatpush1.bf16.msra.mxu0 0
  %5593 = vmatprep.subr.bf16.mxu0 0
  %5594 = vmatpush1.bf16.msra.mxu0 0
  %5595 = vmatprep.subr.bf16.mxu0 0
  %5596 = vmatpush1.bf16.msra.mxu0 0
  %5597 = vmatprep.subr.bf16.mxu0 0
  %5598 = vmatpush1.bf16.msra.mxu0 0
  %5599 = vmatprep.subr.bf16.mxu0 0
  %5600 = vmatpush1.bf16.msra.mxu0 0
  %5601 = vmatprep.subr.bf16.mxu0 0
  %5602 = vmatpush1.bf16.msra.mxu0 %v5585
  %5603 = vmatprep.subr.bf16.mxu0 0
  %5604 = vmatpush2.bf16.msra.mxu0 0
  %5605 = vmatprep.subr.bf16.mxu0 0
  %5606 = vmatpush2.bf16.msra.mxu0 0
  %5607 = vmatprep.subr.bf16.mxu0 0
  %5608 = vmatpush2.bf16.msra.mxu0 0
  %5609 = vmatprep.subr.bf16.mxu0 0
  %5610 = vmatpush2.bf16.msra.mxu0 0
  %5611 = vmatprep.subr.bf16.mxu0 0
  %5612 = vmatpush2.bf16.msra.mxu0 0
  %5613 = vmatprep.subr.bf16.mxu0 0
  %5614 = vmatpush2.bf16.msra.mxu0 0
  %5615 = vmatprep.subr.bf16.mxu0 0
  %5616 = vmatpush2.bf16.msra.mxu0 0
  %5617 = vmatprep.subr.bf16.mxu0 0
  %5618 = vmatpush2.bf16.msra.mxu0 0
  %5619 = vmatprep.mubr.bf16.mxu0 0
  %5620 = vmatmul.mubr.bf16.gmra.mxu0 %v2225
  %v5621 = vpop.f32.mrf.mxu0
  %v5622 = vadd.f32 0.0, %v5621
  %v5623 = vpop.f32.mrf.mxu0
  %v5624 = vpop.f32.mrf.mxu0
  %v5625 = vadd.f32 0.0, %v5624
  %v5626 = vpop.f32.mrf.mxu0
  %5627 = vmatprep.mubr.bf16.mxu0 0
  %5628 = vmatmul.mubr.bf16.gmra.mxu0 %v2228
  %v5629 = vpop.f32.mrf.mxu0
  %v5630 = vadd.f32 0.0, %v5629
  %v5631 = vpop.f32.mrf.mxu0
  %v5632 = vpop.f32.mrf.mxu0
  %v5633 = vadd.f32 0.0, %v5632
  %v5634 = vpop.f32.mrf.mxu0
  %5635 = vmatprep.mubr.bf16.mxu0 0
  %5636 = vmatmul.mubr.bf16.gmra.mxu0 %v2231
  %v5637 = vpop.f32.mrf.mxu0
  %v5638 = vadd.f32 0.0, %v5637
  %v5639 = vpop.f32.mrf.mxu0
  %v5640 = vpop.f32.mrf.mxu0
  %v5641 = vadd.f32 0.0, %v5640
  %v5642 = vpop.f32.mrf.mxu0
  %5643 = vmatprep.mubr.bf16.mxu0 0
  %5644 = vmatmul.mubr.bf16.gmra.mxu0 %v2234
  %v5645 = vpop.f32.mrf.mxu0
  %v5646 = vadd.f32 0.0, %v5645
  %v5647 = vpop.f32.mrf.mxu0
  %v5648 = vpop.f32.mrf.mxu0
  %v5649 = vadd.f32 0.0, %v5648
  %v5650 = vpop.f32.mrf.mxu0
  %5651 = vmatprep.mubr.bf16.mxu0 0
  %5652 = vmatmul.mubr.bf16.gmra.mxu0 %v2237
  %v5653 = vpop.f32.mrf.mxu0
  %v5654 = vadd.f32 0.0, %v5653
  %v5655 = vpop.f32.mrf.mxu0
  %v5656 = vpop.f32.mrf.mxu0
  %v5657 = vadd.f32 0.0, %v5656
  %v5658 = vpop.f32.mrf.mxu0
  %5659 = vmatprep.mubr.bf16.mxu0 0
  %5660 = vmatmul.mubr.bf16.gmra.mxu0 %v2240
  %v5661 = vpop.f32.mrf.mxu0
  %v5662 = vadd.f32 0.0, %v5661
  %v5663 = vpop.f32.mrf.mxu0
  %v5664 = vpop.f32.mrf.mxu0
  %v5665 = vadd.f32 0.0, %v5664
  %v5666 = vpop.f32.mrf.mxu0
  %5667 = vmatprep.mubr.bf16.mxu0 0
  %5668 = vmatmul.mubr.bf16.gmra.mxu0 %v2243
  %v5669 = vpop.f32.mrf.mxu0
  %v5670 = vadd.f32 0.0, %v5669
  %v5671 = vpop.f32.mrf.mxu0
  %v5672 = vpop.f32.mrf.mxu0
  %v5673 = vadd.f32 0.0, %v5672
  %v5674 = vpop.f32.mrf.mxu0
  %5675 = vmatprep.mubr.bf16.mxu0 0
  %5676 = vmatmul.mubr.bf16.gmra.mxu0 %v2246
  %v5677 = vpop.f32.mrf.mxu0
  %v5678 = vadd.f32 0.0, %v5677
  %v5679 = vpop.f32.mrf.mxu0
  %v5680 = vpop.f32.mrf.mxu0
  %v5681 = vadd.f32 0.0, %v5680
  %v5682 = vpop.f32.mrf.mxu0
  %5683 = vmatprep.mubr.bf16.mxu0 0
  %5684 = vmatmul.mubr.bf16.gmra.mxu0 %v2249
  %v5685 = vpop.f32.mrf.mxu0
  %v5686 = vadd.f32 0.0, %v5685
  %v5687 = vpop.f32.mrf.mxu0
  %v5688 = vpop.f32.mrf.mxu0
  %v5689 = vadd.f32 0.0, %v5688
  %v5690 = vpop.f32.mrf.mxu0
  %5691 = vmatprep.mubr.bf16.mxu0 0
  %5692 = vmatmul.mubr.bf16.gmra.mxu0 %v2252
  %v5693 = vpop.f32.mrf.mxu0
  %v5694 = vadd.f32 0.0, %v5693
  %v5695 = vpop.f32.mrf.mxu0
  %v5696 = vpop.f32.mrf.mxu0
  %v5697 = vadd.f32 0.0, %v5696
  %v5698 = vpop.f32.mrf.mxu0
  %5699 = vmatprep.mubr.bf16.mxu0 0
  %5700 = vmatmul.mubr.bf16.gmra.mxu0 %v2255
  %v5701 = vpop.f32.mrf.mxu0
  %v5702 = vadd.f32 0.0, %v5701
  %v5703 = vpop.f32.mrf.mxu0
  %v5704 = vpop.f32.mrf.mxu0
  %v5705 = vadd.f32 0.0, %v5704
  %v5706 = vpop.f32.mrf.mxu0
  %5707 = vmatprep.mubr.bf16.mxu0 0
  %5708 = vmatmul.mubr.bf16.gmra.mxu0 %v2258
  %v5709 = vpop.f32.mrf.mxu0
  %v5710 = vadd.f32 0.0, %v5709
  %v5711 = vpop.f32.mrf.mxu0
  %v5712 = vpop.f32.mrf.mxu0
  %v5713 = vadd.f32 0.0, %v5712
  %v5714 = vpop.f32.mrf.mxu0
  %5715 = vmatprep.mubr.bf16.mxu0 0
  %5716 = vmatmul.mubr.bf16.gmra.mxu0 %v2261
  %v5717 = vpop.f32.mrf.mxu0
  %v5718 = vadd.f32 0.0, %v5717
  %v5719 = vpop.f32.mrf.mxu0
  %v5720 = vpop.f32.mrf.mxu0
  %v5721 = vadd.f32 0.0, %v5720
  %v5722 = vpop.f32.mrf.mxu0
  %5723 = vmatprep.mubr.bf16.mxu0 0
  %5724 = vmatmul.mubr.bf16.gmra.mxu0 %v2264
  %v5725 = vpop.f32.mrf.mxu0
  %v5726 = vadd.f32 0.0, %v5725
  %v5727 = vpop.f32.mrf.mxu0
  %v5728 = vpop.f32.mrf.mxu0
  %v5729 = vadd.f32 0.0, %v5728
  %v5730 = vpop.f32.mrf.mxu0
  %5731 = vmatprep.mubr.bf16.mxu0 0
  %5732 = vmatmul.mubr.bf16.gmra.mxu0 %v4396
  %v5733 = vpop.f32.mrf.mxu0
  %v5734 = vadd.f32 0.0, %v5733
  %v5735 = vpop.f32.mrf.mxu0
  %v5736 = vpop.f32.mrf.mxu0
  %v5737 = vadd.f32 0.0, %v5736
  %v5738 = vpop.f32.mrf.mxu0
  %5739 = vmatprep.mubr.bf16.mxu0 0
  %5740 = vmatmul.mubr.bf16.gmra.mxu0 %v5579
  %v5741 = vpop.f32.mrf.mxu0
  %v5742 = vadd.f32 0.0, %v5741
  %v5743 = vpop.f32.mrf.mxu0
  %v5744 = vpop.f32.mrf.mxu0
  %v5745 = vadd.f32 0.0, %v5744
  %v5746 = vpop.f32.mrf.mxu0
  %5747 = vmatprep.mubr.bf16.mxu0 0
  %5748 = vmatmul.mubr.bf16.gmra.mxu0 %v2273
  %v5749 = vpop.f32.mrf.mxu0
  %v5750 = vadd.f32 0.0, %v5749
  %v5751 = vpop.f32.mrf.mxu0
  %v5752 = vpop.f32.mrf.mxu0
  %v5753 = vadd.f32 0.0, %v5752
  %v5754 = vpop.f32.mrf.mxu0
  %5755 = vmatprep.mubr.bf16.mxu0 0
  %5756 = vmatmul.mubr.bf16.gmra.mxu0 %v2276
  %v5757 = vpop.f32.mrf.mxu0
  %v5758 = vadd.f32 0.0, %v5757
  %v5759 = vpop.f32.mrf.mxu0
  %v5760 = vpop.f32.mrf.mxu0
  %v5761 = vadd.f32 0.0, %v5760
  %v5762 = vpop.f32.mrf.mxu0
  %5763 = vmatprep.mubr.bf16.mxu0 0
  %5764 = vmatmul.mubr.bf16.gmra.mxu0 %v2279
  %v5765 = vpop.f32.mrf.mxu0
  %v5766 = vadd.f32 0.0, %v5765
  %v5767 = vpop.f32.mrf.mxu0
  %v5768 = vpop.f32.mrf.mxu0
  %v5769 = vadd.f32 0.0, %v5768
  %v5770 = vpop.f32.mrf.mxu0
  %5771 = vmatprep.mubr.bf16.mxu0 0
  %5772 = vmatmul.mubr.bf16.gmra.mxu0 %v2282
  %v5773 = vpop.f32.mrf.mxu0
  %v5774 = vadd.f32 0.0, %v5773
  %v5775 = vpop.f32.mrf.mxu0
  %v5776 = vpop.f32.mrf.mxu0
  %v5777 = vadd.f32 0.0, %v5776
  %v5778 = vpop.f32.mrf.mxu0
  %5779 = vmatprep.mubr.bf16.mxu0 0
  %5780 = vmatmul.mubr.bf16.gmra.mxu0 %v2285
  %v5781 = vpop.f32.mrf.mxu0
  %v5782 = vadd.f32 0.0, %v5781
  %v5783 = vpop.f32.mrf.mxu0
  %v5784 = vpop.f32.mrf.mxu0
  %v5785 = vadd.f32 0.0, %v5784
  %v5786 = vpop.f32.mrf.mxu0
  %5787 = vmatprep.mubr.bf16.mxu0 0
  %5788 = vmatmul.mubr.bf16.gmra.mxu0 %v2288
  %v5789 = vpop.f32.mrf.mxu0
  %v5790 = vadd.f32 0.0, %v5789
  %v5791 = vpop.f32.mrf.mxu0
  %v5792 = vpop.f32.mrf.mxu0
  %v5793 = vadd.f32 0.0, %v5792
  %v5794 = vpop.f32.mrf.mxu0
  %5795 = vmatprep.mubr.bf16.mxu0 0
  %5796 = vmatmul.mubr.bf16.gmra.mxu0 %v2291
  %v5797 = vpop.f32.mrf.mxu0
  %v5798 = vadd.f32 0.0, %v5797
  %v5799 = vpop.f32.mrf.mxu0
  %v5800 = vpop.f32.mrf.mxu0
  %v5801 = vadd.f32 0.0, %v5800
  %v5802 = vpop.f32.mrf.mxu0
  %5803 = vmatprep.mubr.bf16.mxu0 0
  %5804 = vmatmul.mubr.bf16.gmra.mxu0 %v2294
  %v5805 = vpop.f32.mrf.mxu0
  %v5806 = vadd.f32 0.0, %v5805
  %v5807 = vpop.f32.mrf.mxu0
  %v5808 = vpop.f32.mrf.mxu0
  %v5809 = vadd.f32 0.0, %v5808
  %v5810 = vpop.f32.mrf.mxu0
  %5811 = vmatprep.mubr.bf16.mxu0 0
  %5812 = vmatmul.mubr.bf16.gmra.mxu0 %v2297
  %v5813 = vpop.f32.mrf.mxu0
  %v5814 = vadd.f32 0.0, %v5813
  %v5815 = vpop.f32.mrf.mxu0
  %v5816 = vpop.f32.mrf.mxu0
  %v5817 = vadd.f32 0.0, %v5816
  %v5818 = vpop.f32.mrf.mxu0
  %5819 = vmatprep.mubr.bf16.mxu0 0
  %5820 = vmatmul.mubr.bf16.gmra.mxu0 %v2300
  %v5821 = vpop.f32.mrf.mxu0
  %v5822 = vadd.f32 0.0, %v5821
  %v5823 = vpop.f32.mrf.mxu0
  %v5824 = vpop.f32.mrf.mxu0
  %v5825 = vadd.f32 0.0, %v5824
  %v5826 = vpop.f32.mrf.mxu0
  %5827 = vmatprep.mubr.bf16.mxu0 0
  %5828 = vmatmul.mubr.bf16.gmra.mxu0 %v2303
  %v5829 = vpop.f32.mrf.mxu0
  %v5830 = vadd.f32 0.0, %v5829
  %v5831 = vpop.f32.mrf.mxu0
  %v5832 = vpop.f32.mrf.mxu0
  %v5833 = vadd.f32 0.0, %v5832
  %v5834 = vpop.f32.mrf.mxu0
  %5835 = vmatprep.mubr.bf16.mxu0 0
  %5836 = vmatmul.mubr.bf16.gmra.mxu0 %v2306
  %v5837 = vpop.f32.mrf.mxu0
  %v5838 = vadd.f32 0.0, %v5837
  %v5839 = vpop.f32.mrf.mxu0
  %v5840 = vpop.f32.mrf.mxu0
  %v5841 = vadd.f32 0.0, %v5840
  %v5842 = vpop.f32.mrf.mxu0
  %5843 = vmatprep.mubr.bf16.mxu0 0
  %5844 = vmatmul.mubr.bf16.gmra.mxu0 %v2309
  %v5845 = vpop.f32.mrf.mxu0
  %v5846 = vadd.f32 0.0, %v5845
  %v5847 = vpop.f32.mrf.mxu0
  %v5848 = vpop.f32.mrf.mxu0
  %v5849 = vadd.f32 0.0, %v5848
  %v5850 = vpop.f32.mrf.mxu0
  %5851 = vmatprep.mubr.bf16.mxu0 0
  %5852 = vmatmul.mubr.bf16.gmra.mxu0 %v2312
  %v5853 = vpop.f32.mrf.mxu0
  %v5854 = vadd.f32 0.0, %v5853
  %v5855 = vpop.f32.mrf.mxu0
  %v5856 = vpop.f32.mrf.mxu0
  %v5857 = vadd.f32 0.0, %v5856
  %v5858 = vpop.f32.mrf.mxu0
  %5859 = vmatprep.mubr.bf16.mxu0 0
  %5860 = vmatmul.mubr.bf16.gmra.mxu0 %v4399
  %v5861 = vpop.f32.mrf.mxu0
  %v5862 = vadd.f32 0.0, %v5861
  %v5863 = vpop.f32.mrf.mxu0
  %v5864 = vpop.f32.mrf.mxu0
  %v5865 = vadd.f32 0.0, %v5864
  %v5866 = vpop.f32.mrf.mxu0
  %5867 = vmatprep.mubr.bf16.mxu0 0
  %5868 = vmatmul.mubr.bf16.gmra.mxu0 %v5582
  %v5869 = vpop.f32.mrf.mxu0
  %v5870 = vadd.f32 0.0, %v5869
  %v5871 = vpop.f32.mrf.mxu0
  %v5872 = vpop.f32.mrf.mxu0
  %v5873 = vadd.f32 0.0, %v5872
  %v5874 = vpop.f32.mrf.mxu0
  %5875 = vdwg.mxu0
  %v5876 = vadd.f32 %v5455, %v5622
  %v5877 = vadd.f32 %v5456, %v5625
  %v5878 = vadd.f32 %v5457, %v5630
  %v5879 = vadd.f32 %v5458, %v5633
  %v5880 = vadd.f32 %v5459, %v5638
  %v5881 = vadd.f32 %v5460, %v5641
  %v5882 = vadd.f32 %v5461, %v5646
  %v5883 = vadd.f32 %v5462, %v5649
  %v5884 = vadd.f32 %v5463, %v5654
  %v5885 = vadd.f32 %v5464, %v5657
  %v5886 = vadd.f32 %v5465, %v5662
  %v5887 = vadd.f32 %v5466, %v5665
  %v5888 = vadd.f32 %v5467, %v5670
  %v5889 = vadd.f32 %v5468, %v5673
  %v5890 = vadd.f32 %v5469, %v5678
  %v5891 = vadd.f32 %v5470, %v5681
  %v5892 = vadd.f32 %v5471, %v5686
  %v5893 = vadd.f32 %v5472, %v5689
  %v5894 = vadd.f32 %v5473, %v5694
  %v5895 = vadd.f32 %v5474, %v5697
  %v5896 = vadd.f32 %v5475, %v5702
  %v5897 = vadd.f32 %v5476, %v5705
  %v5898 = vadd.f32 %v5477, %v5710
  %v5899 = vadd.f32 %v5478, %v5713
  %v5900 = vadd.f32 %v5479, %v5718
  %v5901 = vadd.f32 %v5480, %v5721
  %v5902 = vadd.f32 %v5481, %v5726
  %v5903 = vadd.f32 %v5482, %v5729
  %v5904 = vadd.f32 %v5483, %v5734
  %v5905 = vadd.f32 %v5484, %v5737
  %v5906 = vadd.f32 %v5485, %v5742
  %v5907 = vadd.f32 %v5486, %v5745
  %v5908 = vadd.f32 %v5487, %v5750
  %v5909 = vadd.f32 %v5488, %v5753
  %v5910 = vadd.f32 %v5489, %v5758
  %v5911 = vadd.f32 %v5490, %v5761
  %v5912 = vadd.f32 %v5491, %v5766
  %v5913 = vadd.f32 %v5492, %v5769
  %v5914 = vadd.f32 %v5493, %v5774
  %v5915 = vadd.f32 %v5494, %v5777
  %v5916 = vadd.f32 %v5495, %v5782
  %v5917 = vadd.f32 %v5496, %v5785
  %v5918 = vadd.f32 %v5497, %v5790
  %v5919 = vadd.f32 %v5498, %v5793
  %v5920 = vadd.f32 %v5499, %v5798
  %v5921 = vadd.f32 %v5500, %v5801
  %v5922 = vadd.f32 %v5501, %v5806
  %v5923 = vadd.f32 %v5502, %v5809
  %v5924 = vadd.f32 %v5503, %v5814
  %v5925 = vadd.f32 %v5504, %v5817
  %v5926 = vadd.f32 %v5505, %v5822
  %v5927 = vadd.f32 %v5506, %v5825
  %v5928 = vadd.f32 %v5507, %v5830
  %v5929 = vadd.f32 %v5508, %v5833
  %v5930 = vadd.f32 %v5509, %v5838
  %v5931 = vadd.f32 %v5510, %v5841
  %v5932 = vadd.f32 %v5511, %v5846
  %v5933 = vadd.f32 %v5512, %v5849
  %v5934 = vadd.f32 %v5513, %v5854
  %v5935 = vadd.f32 %v5514, %v5857
  %v5936 = vadd.f32 %v5515, %v5862
  %v5937 = vadd.f32 %v5516, %v5865
  %v5938 = vadd.f32 %v5517, %v5870
  %v5939 = vadd.f32 %v5518, %v5873
  %v5942 = vrot.slane %v1287, 5
  %v5943 = vrot.slane %v5942, 4
  %v5944 = vrot.slane %v1288, 5
  %v5945 = vsel %vm3189, %v5943, %v5944
  %v5946 = vrot.slane %v5944, 4
  %v5947 = vrot.slane %v1289, 5
  %v5948 = vsel %vm3189, %v5946, %v5947
  %v5949 = vrot.slane %v1341, 5
  %v5950 = vrot.slane %v5949, 4
  %v5951 = vrot.slane %v1342, 5
  %v5952 = vsel %vm3189, %v5950, %v5951
  %v5953 = vrot.slane %v5951, 4
  %v5954 = vrot.slane %v1343, 5
  %v5955 = vsel %vm3189, %v5953, %v5954
  %v5956 = vld [vmem:[%s1 + $0x10] sm:$0x3]
  %v5957 = vunpack.c.l.b16 %v5945
  %v5958 = vunpack.c.l.b16 %v5948
  %v5959 = vunpack.c.l.b16 %v5952
  %v5960 = vunpack.c.l.b16 %v5955
  %v5961 = vpack.c.b16 %v5958, %v5957
  %v5962 = vpack.c.b16 %v5960, %v5959
  %v5964 = vsel %vm2217, %v5961, 0
  %v5967 = vsel %vm2217, %v5962, 0
  %v5970 = vsel %vm2314, %v5956, 0
  %5972 = vmatprep.subr.bf16.mxu0 0
  %5973 = vmatpush1.bf16.msra.mxu0 0
  %5974 = vmatprep.subr.bf16.mxu0 0
  %5975 = vmatpush1.bf16.msra.mxu0 0
  %5976 = vmatprep.subr.bf16.mxu0 0
  %5977 = vmatpush1.bf16.msra.mxu0 0
  %5978 = vmatprep.subr.bf16.mxu0 0
  %5979 = vmatpush1.bf16.msra.mxu0 0
  %5980 = vmatprep.subr.bf16.mxu0 0
  %5981 = vmatpush1.bf16.msra.mxu0 0
  %5982 = vmatprep.subr.bf16.mxu0 0
  %5983 = vmatpush1.bf16.msra.mxu0 0
  %5984 = vmatprep.subr.bf16.mxu0 0
  %5985 = vmatpush1.bf16.msra.mxu0 0
  %5986 = vmatprep.subr.bf16.mxu0 0
  %5987 = vmatpush1.bf16.msra.mxu0 %v5970
  %5988 = vmatprep.subr.bf16.mxu0 0
  %5989 = vmatpush2.bf16.msra.mxu0 0
  %5990 = vmatprep.subr.bf16.mxu0 0
  %5991 = vmatpush2.bf16.msra.mxu0 0
  %5992 = vmatprep.subr.bf16.mxu0 0
  %5993 = vmatpush2.bf16.msra.mxu0 0
  %5994 = vmatprep.subr.bf16.mxu0 0
  %5995 = vmatpush2.bf16.msra.mxu0 0
  %5996 = vmatprep.subr.bf16.mxu0 0
  %5997 = vmatpush2.bf16.msra.mxu0 0
  %5998 = vmatprep.subr.bf16.mxu0 0
  %5999 = vmatpush2.bf16.msra.mxu0 0
  %6000 = vmatprep.subr.bf16.mxu0 0
  %6001 = vmatpush2.bf16.msra.mxu0 0
  %6002 = vmatprep.subr.bf16.mxu0 0
  %6003 = vmatpush2.bf16.msra.mxu0 0
  %6004 = vmatprep.mubr.bf16.mxu0 0
  %6005 = vmatmul.mubr.bf16.gmra.mxu0 %v3518
  %v6006 = vpop.f32.mrf.mxu0
  %v6007 = vadd.f32 0.0, %v6006
  %v6008 = vpop.f32.mrf.mxu0
  %v6009 = vpop.f32.mrf.mxu0
  %v6010 = vadd.f32 0.0, %v6009
  %v6011 = vpop.f32.mrf.mxu0
  %6012 = vmatprep.mubr.bf16.mxu0 0
  %6013 = vmatmul.mubr.bf16.gmra.mxu0 %v3521
  %v6014 = vpop.f32.mrf.mxu0
  %v6015 = vadd.f32 0.0, %v6014
  %v6016 = vpop.f32.mrf.mxu0
  %v6017 = vpop.f32.mrf.mxu0
  %v6018 = vadd.f32 0.0, %v6017
  %v6019 = vpop.f32.mrf.mxu0
  %6020 = vmatprep.mubr.bf16.mxu0 0
  %6021 = vmatmul.mubr.bf16.gmra.mxu0 %v3524
  %v6022 = vpop.f32.mrf.mxu0
  %v6023 = vadd.f32 0.0, %v6022
  %v6024 = vpop.f32.mrf.mxu0
  %v6025 = vpop.f32.mrf.mxu0
  %v6026 = vadd.f32 0.0, %v6025
  %v6027 = vpop.f32.mrf.mxu0
  %6028 = vmatprep.mubr.bf16.mxu0 0
  %6029 = vmatmul.mubr.bf16.gmra.mxu0 %v3527
  %v6030 = vpop.f32.mrf.mxu0
  %v6031 = vadd.f32 0.0, %v6030
  %v6032 = vpop.f32.mrf.mxu0
  %v6033 = vpop.f32.mrf.mxu0
  %v6034 = vadd.f32 0.0, %v6033
  %v6035 = vpop.f32.mrf.mxu0
  %6036 = vmatprep.mubr.bf16.mxu0 0
  %6037 = vmatmul.mubr.bf16.gmra.mxu0 %v3530
  %v6038 = vpop.f32.mrf.mxu0
  %v6039 = vadd.f32 0.0, %v6038
  %v6040 = vpop.f32.mrf.mxu0
  %v6041 = vpop.f32.mrf.mxu0
  %v6042 = vadd.f32 0.0, %v6041
  %v6043 = vpop.f32.mrf.mxu0
  %6044 = vmatprep.mubr.bf16.mxu0 0
  %6045 = vmatmul.mubr.bf16.gmra.mxu0 %v3533
  %v6046 = vpop.f32.mrf.mxu0
  %v6047 = vadd.f32 0.0, %v6046
  %v6048 = vpop.f32.mrf.mxu0
  %v6049 = vpop.f32.mrf.mxu0
  %v6050 = vadd.f32 0.0, %v6049
  %v6051 = vpop.f32.mrf.mxu0
  %6052 = vmatprep.mubr.bf16.mxu0 0
  %6053 = vmatmul.mubr.bf16.gmra.mxu0 %v3536
  %v6054 = vpop.f32.mrf.mxu0
  %v6055 = vadd.f32 0.0, %v6054
  %v6056 = vpop.f32.mrf.mxu0
  %v6057 = vpop.f32.mrf.mxu0
  %v6058 = vadd.f32 0.0, %v6057
  %v6059 = vpop.f32.mrf.mxu0
  %6060 = vmatprep.mubr.bf16.mxu0 0
  %6061 = vmatmul.mubr.bf16.gmra.mxu0 %v3539
  %v6062 = vpop.f32.mrf.mxu0
  %v6063 = vadd.f32 0.0, %v6062
  %v6064 = vpop.f32.mrf.mxu0
  %v6065 = vpop.f32.mrf.mxu0
  %v6066 = vadd.f32 0.0, %v6065
  %v6067 = vpop.f32.mrf.mxu0
  %6068 = vmatprep.mubr.bf16.mxu0 0
  %6069 = vmatmul.mubr.bf16.gmra.mxu0 %v3542
  %v6070 = vpop.f32.mrf.mxu0
  %v6071 = vadd.f32 0.0, %v6070
  %v6072 = vpop.f32.mrf.mxu0
  %v6073 = vpop.f32.mrf.mxu0
  %v6074 = vadd.f32 0.0, %v6073
  %v6075 = vpop.f32.mrf.mxu0
  %6076 = vmatprep.mubr.bf16.mxu0 0
  %6077 = vmatmul.mubr.bf16.gmra.mxu0 %v3545
  %v6078 = vpop.f32.mrf.mxu0
  %v6079 = vadd.f32 0.0, %v6078
  %v6080 = vpop.f32.mrf.mxu0
  %v6081 = vpop.f32.mrf.mxu0
  %v6082 = vadd.f32 0.0, %v6081
  %v6083 = vpop.f32.mrf.mxu0
  %6084 = vmatprep.mubr.bf16.mxu0 0
  %6085 = vmatmul.mubr.bf16.gmra.mxu0 %v3548
  %v6086 = vpop.f32.mrf.mxu0
  %v6087 = vadd.f32 0.0, %v6086
  %v6088 = vpop.f32.mrf.mxu0
  %v6089 = vpop.f32.mrf.mxu0
  %v6090 = vadd.f32 0.0, %v6089
  %v6091 = vpop.f32.mrf.mxu0
  %6092 = vmatprep.mubr.bf16.mxu0 0
  %6093 = vmatmul.mubr.bf16.gmra.mxu0 %v3551
  %v6094 = vpop.f32.mrf.mxu0
  %v6095 = vadd.f32 0.0, %v6094
  %v6096 = vpop.f32.mrf.mxu0
  %v6097 = vpop.f32.mrf.mxu0
  %v6098 = vadd.f32 0.0, %v6097
  %v6099 = vpop.f32.mrf.mxu0
  %6100 = vmatprep.mubr.bf16.mxu0 0
  %6101 = vmatmul.mubr.bf16.gmra.mxu0 %v3554
  %v6102 = vpop.f32.mrf.mxu0
  %v6103 = vadd.f32 0.0, %v6102
  %v6104 = vpop.f32.mrf.mxu0
  %v6105 = vpop.f32.mrf.mxu0
  %v6106 = vadd.f32 0.0, %v6105
  %v6107 = vpop.f32.mrf.mxu0
  %6108 = vmatprep.mubr.bf16.mxu0 0
  %6109 = vmatmul.mubr.bf16.gmra.mxu0 %v3557
  %v6110 = vpop.f32.mrf.mxu0
  %v6111 = vadd.f32 0.0, %v6110
  %v6112 = vpop.f32.mrf.mxu0
  %v6113 = vpop.f32.mrf.mxu0
  %v6114 = vadd.f32 0.0, %v6113
  %v6115 = vpop.f32.mrf.mxu0
  %6116 = vmatprep.mubr.bf16.mxu0 0
  %6117 = vmatmul.mubr.bf16.gmra.mxu0 %v4785
  %v6118 = vpop.f32.mrf.mxu0
  %v6119 = vadd.f32 0.0, %v6118
  %v6120 = vpop.f32.mrf.mxu0
  %v6121 = vpop.f32.mrf.mxu0
  %v6122 = vadd.f32 0.0, %v6121
  %v6123 = vpop.f32.mrf.mxu0
  %6124 = vmatprep.mubr.bf16.mxu0 0
  %6125 = vmatmul.mubr.bf16.gmra.mxu0 %v5964
  %v6126 = vpop.f32.mrf.mxu0
  %v6127 = vadd.f32 0.0, %v6126
  %v6128 = vpop.f32.mrf.mxu0
  %v6129 = vpop.f32.mrf.mxu0
  %v6130 = vadd.f32 0.0, %v6129
  %v6131 = vpop.f32.mrf.mxu0
  %6132 = vmatprep.mubr.bf16.mxu0 0
  %6133 = vmatmul.mubr.bf16.gmra.mxu0 %v3566
  %v6134 = vpop.f32.mrf.mxu0
  %v6135 = vadd.f32 0.0, %v6134
  %v6136 = vpop.f32.mrf.mxu0
  %v6137 = vpop.f32.mrf.mxu0
  %v6138 = vadd.f32 0.0, %v6137
  %v6139 = vpop.f32.mrf.mxu0
  %6140 = vmatprep.mubr.bf16.mxu0 0
  %6141 = vmatmul.mubr.bf16.gmra.mxu0 %v3569
  %v6142 = vpop.f32.mrf.mxu0
  %v6143 = vadd.f32 0.0, %v6142
  %v6144 = vpop.f32.mrf.mxu0
  %v6145 = vpop.f32.mrf.mxu0
  %v6146 = vadd.f32 0.0, %v6145
  %v6147 = vpop.f32.mrf.mxu0
  %6148 = vmatprep.mubr.bf16.mxu0 0
  %6149 = vmatmul.mubr.bf16.gmra.mxu0 %v3572
  %v6150 = vpop.f32.mrf.mxu0
  %v6151 = vadd.f32 0.0, %v6150
  %v6152 = vpop.f32.mrf.mxu0
  %v6153 = vpop.f32.mrf.mxu0
  %v6154 = vadd.f32 0.0, %v6153
  %v6155 = vpop.f32.mrf.mxu0
  %6156 = vmatprep.mubr.bf16.mxu0 0
  %6157 = vmatmul.mubr.bf16.gmra.mxu0 %v3575
  %v6158 = vpop.f32.mrf.mxu0
  %v6159 = vadd.f32 0.0, %v6158
  %v6160 = vpop.f32.mrf.mxu0
  %v6161 = vpop.f32.mrf.mxu0
  %v6162 = vadd.f32 0.0, %v6161
  %v6163 = vpop.f32.mrf.mxu0
  %6164 = vmatprep.mubr.bf16.mxu0 0
  %6165 = vmatmul.mubr.bf16.gmra.mxu0 %v3578
  %v6166 = vpop.f32.mrf.mxu0
  %v6167 = vadd.f32 0.0, %v6166
  %v6168 = vpop.f32.mrf.mxu0
  %v6169 = vpop.f32.mrf.mxu0
  %v6170 = vadd.f32 0.0, %v6169
  %v6171 = vpop.f32.mrf.mxu0
  %6172 = vmatprep.mubr.bf16.mxu0 0
  %6173 = vmatmul.mubr.bf16.gmra.mxu0 %v3581
  %v6174 = vpop.f32.mrf.mxu0
  %v6175 = vadd.f32 0.0, %v6174
  %v6176 = vpop.f32.mrf.mxu0
  %v6177 = vpop.f32.mrf.mxu0
  %v6178 = vadd.f32 0.0, %v6177
  %v6179 = vpop.f32.mrf.mxu0
  %6180 = vmatprep.mubr.bf16.mxu0 0
  %6181 = vmatmul.mubr.bf16.gmra.mxu0 %v3584
  %v6182 = vpop.f32.mrf.mxu0
  %v6183 = vadd.f32 0.0, %v6182
  %v6184 = vpop.f32.mrf.mxu0
  %v6185 = vpop.f32.mrf.mxu0
  %v6186 = vadd.f32 0.0, %v6185
  %v6187 = vpop.f32.mrf.mxu0
  %6188 = vmatprep.mubr.bf16.mxu0 0
  %6189 = vmatmul.mubr.bf16.gmra.mxu0 %v3587
  %v6190 = vpop.f32.mrf.mxu0
  %v6191 = vadd.f32 0.0, %v6190
  %v6192 = vpop.f32.mrf.mxu0
  %v6193 = vpop.f32.mrf.mxu0
  %v6194 = vadd.f32 0.0, %v6193
  %v6195 = vpop.f32.mrf.mxu0
  %6196 = vmatprep.mubr.bf16.mxu0 0
  %6197 = vmatmul.mubr.bf16.gmra.mxu0 %v3590
  %v6198 = vpop.f32.mrf.mxu0
  %v6199 = vadd.f32 0.0, %v6198
  %v6200 = vpop.f32.mrf.mxu0
  %v6201 = vpop.f32.mrf.mxu0
  %v6202 = vadd.f32 0.0, %v6201
  %v6203 = vpop.f32.mrf.mxu0
  %6204 = vmatprep.mubr.bf16.mxu0 0
  %6205 = vmatmul.mubr.bf16.gmra.mxu0 %v3593
  %v6206 = vpop.f32.mrf.mxu0
  %v6207 = vadd.f32 0.0, %v6206
  %v6208 = vpop.f32.mrf.mxu0
  %v6209 = vpop.f32.mrf.mxu0
  %v6210 = vadd.f32 0.0, %v6209
  %v6211 = vpop.f32.mrf.mxu0
  %6212 = vmatprep.mubr.bf16.mxu0 0
  %6213 = vmatmul.mubr.bf16.gmra.mxu0 %v3596
  %v6214 = vpop.f32.mrf.mxu0
  %v6215 = vadd.f32 0.0, %v6214
  %v6216 = vpop.f32.mrf.mxu0
  %v6217 = vpop.f32.mrf.mxu0
  %v6218 = vadd.f32 0.0, %v6217
  %v6219 = vpop.f32.mrf.mxu0
  %6220 = vmatprep.mubr.bf16.mxu0 0
  %6221 = vmatmul.mubr.bf16.gmra.mxu0 %v3599
  %v6222 = vpop.f32.mrf.mxu0
  %v6223 = vadd.f32 0.0, %v6222
  %v6224 = vpop.f32.mrf.mxu0
  %v6225 = vpop.f32.mrf.mxu0
  %v6226 = vadd.f32 0.0, %v6225
  %v6227 = vpop.f32.mrf.mxu0
  %6228 = vmatprep.mubr.bf16.mxu0 0
  %6229 = vmatmul.mubr.bf16.gmra.mxu0 %v3602
  %v6230 = vpop.f32.mrf.mxu0
  %v6231 = vadd.f32 0.0, %v6230
  %v6232 = vpop.f32.mrf.mxu0
  %v6233 = vpop.f32.mrf.mxu0
  %v6234 = vadd.f32 0.0, %v6233
  %v6235 = vpop.f32.mrf.mxu0
  %6236 = vmatprep.mubr.bf16.mxu0 0
  %6237 = vmatmul.mubr.bf16.gmra.mxu0 %v3605
  %v6238 = vpop.f32.mrf.mxu0
  %v6239 = vadd.f32 0.0, %v6238
  %v6240 = vpop.f32.mrf.mxu0
  %v6241 = vpop.f32.mrf.mxu0
  %v6242 = vadd.f32 0.0, %v6241
  %v6243 = vpop.f32.mrf.mxu0
  %6244 = vmatprep.mubr.bf16.mxu0 0
  %6245 = vmatmul.mubr.bf16.gmra.mxu0 %v4788
  %v6246 = vpop.f32.mrf.mxu0
  %v6247 = vadd.f32 0.0, %v6246
  %v6248 = vpop.f32.mrf.mxu0
  %v6249 = vpop.f32.mrf.mxu0
  %v6250 = vadd.f32 0.0, %v6249
  %v6251 = vpop.f32.mrf.mxu0
  %6252 = vmatprep.mubr.bf16.mxu0 0
  %6253 = vmatmul.mubr.bf16.gmra.mxu0 %v5967
  %v6254 = vpop.f32.mrf.mxu0
  %v6255 = vadd.f32 0.0, %v6254
  %v6256 = vpop.f32.mrf.mxu0
  %v6257 = vpop.f32.mrf.mxu0
  %v6258 = vadd.f32 0.0, %v6257
  %v6259 = vpop.f32.mrf.mxu0
  %6260 = vdwg.mxu0
  %v6261 = vadd.f32 %v5876, %v6007
  %v6262 = vadd.f32 %v5877, %v6010
  %v6263 = vadd.f32 %v5878, %v6015
  %v6264 = vadd.f32 %v5879, %v6018
  %v6265 = vadd.f32 %v5880, %v6023
  %v6266 = vadd.f32 %v5881, %v6026
  %v6267 = vadd.f32 %v5882, %v6031
  %v6268 = vadd.f32 %v5883, %v6034
  %v6269 = vadd.f32 %v5884, %v6039
  %v6270 = vadd.f32 %v5885, %v6042
  %v6271 = vadd.f32 %v5886, %v6047
  %v6272 = vadd.f32 %v5887, %v6050
  %v6273 = vadd.f32 %v5888, %v6055
  %v6274 = vadd.f32 %v5889, %v6058
  %v6275 = vadd.f32 %v5890, %v6063
  %v6276 = vadd.f32 %v5891, %v6066
  %v6277 = vadd.f32 %v5892, %v6071
  %v6278 = vadd.f32 %v5893, %v6074
  %v6279 = vadd.f32 %v5894, %v6079
  %v6280 = vadd.f32 %v5895, %v6082
  %v6281 = vadd.f32 %v5896, %v6087
  %v6282 = vadd.f32 %v5897, %v6090
  %v6283 = vadd.f32 %v5898, %v6095
  %v6284 = vadd.f32 %v5899, %v6098
  %v6285 = vadd.f32 %v5900, %v6103
  %v6286 = vadd.f32 %v5901, %v6106
  %v6287 = vadd.f32 %v5902, %v6111
  %v6288 = vadd.f32 %v5903, %v6114
  %v6289 = vadd.f32 %v5904, %v6119
  %v6290 = vadd.f32 %v5905, %v6122
  %v6291 = vadd.f32 %v5906, %v6127
  %v6292 = vadd.f32 %v5907, %v6130
  %v6293 = vadd.f32 %v5908, %v6135
  %v6294 = vadd.f32 %v5909, %v6138
  %v6295 = vadd.f32 %v5910, %v6143
  %v6296 = vadd.f32 %v5911, %v6146
  %v6297 = vadd.f32 %v5912, %v6151
  %v6298 = vadd.f32 %v5913, %v6154
  %v6299 = vadd.f32 %v5914, %v6159
  %v6300 = vadd.f32 %v5915, %v6162
  %v6301 = vadd.f32 %v5916, %v6167
  %v6302 = vadd.f32 %v5917, %v6170
  %v6303 = vadd.f32 %v5918, %v6175
  %v6304 = vadd.f32 %v5919, %v6178
  %v6305 = vadd.f32 %v5920, %v6183
  %v6306 = vadd.f32 %v5921, %v6186
  %v6307 = vadd.f32 %v5922, %v6191
  %v6308 = vadd.f32 %v5923, %v6194
  %v6309 = vadd.f32 %v5924, %v6199
  %v6310 = vadd.f32 %v5925, %v6202
  %v6311 = vadd.f32 %v5926, %v6207
  %v6312 = vadd.f32 %v5927, %v6210
  %v6313 = vadd.f32 %v5928, %v6215
  %v6314 = vadd.f32 %v5929, %v6218
  %v6315 = vadd.f32 %v5930, %v6223
  %v6316 = vadd.f32 %v5931, %v6226
  %v6317 = vadd.f32 %v5932, %v6231
  %v6318 = vadd.f32 %v5933, %v6234
  %v6319 = vadd.f32 %v5934, %v6239
  %v6320 = vadd.f32 %v5935, %v6242
  %v6321 = vadd.f32 %v5936, %v6247
  %v6322 = vadd.f32 %v5937, %v6250
  %v6323 = vadd.f32 %v5938, %v6255
  %v6324 = vadd.f32 %v5939, %v6258
  %vm6325 = vcmask 64512
  %v6326 = vsel %vm6325, %v6261, 0.0
  %v6327 = vsel %vm6325, %v6262, 0.0
  %v6328 = vadd.f32 %v6326, %v6327
  %v6329 = vsel %vm6325, %v6263, 0.0
  %v6330 = vadd.f32 %v6328, %v6329
  %v6331 = vsel %vm6325, %v6264, 0.0
  %v6332 = vadd.f32 %v6330, %v6331
  %v6333 = vsel %vm6325, %v6265, 0.0
  %v6334 = vadd.f32 %v6332, %v6333
  %v6335 = vsel %vm6325, %v6266, 0.0
  %v6336 = vadd.f32 %v6334, %v6335
  %v6337 = vsel %vm6325, %v6267, 0.0
  %v6338 = vadd.f32 %v6336, %v6337
  %v6339 = vsel %vm6325, %v6268, 0.0
  %v6340 = vadd.f32 %v6338, %v6339
  %v6341 = vsel %vm6325, %v6269, 0.0
  %v6342 = vadd.f32 %v6340, %v6341
  %v6343 = vsel %vm6325, %v6270, 0.0
  %v6344 = vadd.f32 %v6342, %v6343
  %v6345 = vsel %vm6325, %v6271, 0.0
  %v6346 = vadd.f32 %v6344, %v6345
  %v6347 = vsel %vm6325, %v6272, 0.0
  %v6348 = vadd.f32 %v6346, %v6347
  %v6349 = vsel %vm6325, %v6273, 0.0
  %v6350 = vadd.f32 %v6348, %v6349
  %v6351 = vsel %vm6325, %v6274, 0.0
  %v6352 = vadd.f32 %v6350, %v6351
  %v6353 = vsel %vm6325, %v6275, 0.0
  %v6354 = vadd.f32 %v6352, %v6353
  %v6355 = vsel %vm6325, %v6276, 0.0
  %v6356 = vadd.f32 %v6354, %v6355
  %v6357 = vsel %vm6325, %v6277, 0.0
  %v6358 = vadd.f32 %v6356, %v6357
  %v6359 = vsel %vm6325, %v6278, 0.0
  %v6360 = vadd.f32 %v6358, %v6359
  %v6361 = vsel %vm6325, %v6279, 0.0
  %v6362 = vadd.f32 %v6360, %v6361
  %v6363 = vsel %vm6325, %v6280, 0.0
  %v6364 = vadd.f32 %v6362, %v6363
  %v6365 = vsel %vm6325, %v6281, 0.0
  %v6366 = vadd.f32 %v6364, %v6365
  %v6367 = vsel %vm6325, %v6282, 0.0
  %v6368 = vadd.f32 %v6366, %v6367
  %v6369 = vsel %vm6325, %v6283, 0.0
  %v6370 = vadd.f32 %v6368, %v6369
  %v6371 = vsel %vm6325, %v6284, 0.0
  %v6372 = vadd.f32 %v6370, %v6371
  %v6373 = vsel %vm6325, %v6285, 0.0
  %v6374 = vadd.f32 %v6372, %v6373
  %v6375 = vsel %vm6325, %v6286, 0.0
  %v6376 = vadd.f32 %v6374, %v6375
  %v6377 = vsel %vm6325, %v6287, 0.0
  %v6378 = vadd.f32 %v6376, %v6377
  %v6379 = vsel %vm6325, %v6288, 0.0
  %v6380 = vadd.f32 %v6378, %v6379
  %v6381 = vsel %vm6325, %v6289, 0.0
  %v6382 = vadd.f32 %v6380, %v6381
  %v6383 = vsel %vm6325, %v6290, 0.0
  %v6384 = vadd.f32 %v6382, %v6383
  %v6385 = vsel %vm6325, %v6291, 0.0
  %v6386 = vadd.f32 %v6384, %v6385
  %v6387 = vsel %vm6325, %v6292, 0.0
  %v6388 = vadd.f32 %v6386, %v6387
  %v6389 = vsel %vm6325, %v6293, 0.0
  %v6390 = vadd.f32 %v6388, %v6389
  %v6391 = vsel %vm6325, %v6294, 0.0
  %v6392 = vadd.f32 %v6390, %v6391
  %v6393 = vsel %vm6325, %v6295, 0.0
  %v6394 = vadd.f32 %v6392, %v6393
  %v6395 = vsel %vm6325, %v6296, 0.0
  %v6396 = vadd.f32 %v6394, %v6395
  %v6397 = vsel %vm6325, %v6297, 0.0
  %v6398 = vadd.f32 %v6396, %v6397
  %v6399 = vsel %vm6325, %v6298, 0.0
  %v6400 = vadd.f32 %v6398, %v6399
  %v6401 = vsel %vm6325, %v6299, 0.0
  %v6402 = vadd.f32 %v6400, %v6401
  %v6403 = vsel %vm6325, %v6300, 0.0
  %v6404 = vadd.f32 %v6402, %v6403
  %v6405 = vsel %vm6325, %v6301, 0.0
  %v6406 = vadd.f32 %v6404, %v6405
  %v6407 = vsel %vm6325, %v6302, 0.0
  %v6408 = vadd.f32 %v6406, %v6407
  %v6409 = vsel %vm6325, %v6303, 0.0
  %v6410 = vadd.f32 %v6408, %v6409
  %v6411 = vsel %vm6325, %v6304, 0.0
  %v6412 = vadd.f32 %v6410, %v6411
  %v6413 = vsel %vm6325, %v6305, 0.0
  %v6414 = vadd.f32 %v6412, %v6413
  %v6415 = vsel %vm6325, %v6306, 0.0
  %v6416 = vadd.f32 %v6414, %v6415
  %v6417 = vsel %vm6325, %v6307, 0.0
  %v6418 = vadd.f32 %v6416, %v6417
  %v6419 = vsel %vm6325, %v6308, 0.0
  %v6420 = vadd.f32 %v6418, %v6419
  %v6421 = vsel %vm6325, %v6309, 0.0
  %v6422 = vadd.f32 %v6420, %v6421
  %v6423 = vsel %vm6325, %v6310, 0.0
  %v6424 = vadd.f32 %v6422, %v6423
  %v6425 = vsel %vm6325, %v6311, 0.0
  %v6426 = vadd.f32 %v6424, %v6425
  %v6427 = vsel %vm6325, %v6312, 0.0
  %v6428 = vadd.f32 %v6426, %v6427
  %v6429 = vsel %vm6325, %v6313, 0.0
  %v6430 = vadd.f32 %v6428, %v6429
  %v6431 = vsel %vm6325, %v6314, 0.0
  %v6432 = vadd.f32 %v6430, %v6431
  %v6433 = vsel %vm6325, %v6315, 0.0
  %v6434 = vadd.f32 %v6432, %v6433
  %v6435 = vsel %vm6325, %v6316, 0.0
  %v6436 = vadd.f32 %v6434, %v6435
  %v6437 = vsel %vm6325, %v6317, 0.0
  %v6438 = vadd.f32 %v6436, %v6437
  %v6439 = vsel %vm6325, %v6318, 0.0
  %v6440 = vadd.f32 %v6438, %v6439
  %v6441 = vsel %vm6325, %v6319, 0.0
  %v6442 = vadd.f32 %v6440, %v6441
  %v6443 = vsel %vm6325, %v6320, 0.0
  %v6444 = vadd.f32 %v6442, %v6443
  %v6445 = vsel %vm6325, %v6321, 0.0
  %v6446 = vadd.f32 %v6444, %v6445
  %v6447 = vsel %vm6325, %v6322, 0.0
  %v6448 = vadd.f32 %v6446, %v6447
  %v6449 = vsel %vm6325, %v6323, 0.0
  %v6450 = vadd.f32 %v6448, %v6449
  %v6451 = vsel %vm6325, %v6324, 0.0
  %v6452 = vadd.f32 %v6450, %v6451
  %v6453 = vrot.slane %v6452, 4
  %v6454 = vadd.f32 %v6452, %v6453
  %v6455 = vrot.slane %v6454, 2
  %v6456 = vadd.f32 %v6454, %v6455
  %v6457 = vrot.slane %v6456, 1
  %v6458 = vadd.f32 %v6456, %v6457
  %v6459 = vrcp.pop 512.0
  %v6460 = vmul.f32 %v6458, %v6459
  %v6461 = vsub.f32 %v6261, %v6460
  %v6462 = vsub.f32 %v6262, %v6460
  %v6463 = vsub.f32 %v6263, %v6460
  %v6464 = vsub.f32 %v6264, %v6460
  %v6465 = vsub.f32 %v6265, %v6460
  %v6466 = vsub.f32 %v6266, %v6460
  %v6467 = vsub.f32 %v6267, %v6460
  %v6468 = vsub.f32 %v6268, %v6460
  %v6469 = vsub.f32 %v6269, %v6460
  %v6470 = vsub.f32 %v6270, %v6460
  %v6471 = vsub.f32 %v6271, %v6460
  %v6472 = vsub.f32 %v6272, %v6460
  %v6473 = vsub.f32 %v6273, %v6460
  %v6474 = vsub.f32 %v6274, %v6460
  %v6475 = vsub.f32 %v6275, %v6460
  %v6476 = vsub.f32 %v6276, %v6460
  %v6477 = vsub.f32 %v6277, %v6460
  %v6478 = vsub.f32 %v6278, %v6460
  %v6479 = vsub.f32 %v6279, %v6460
  %v6480 = vsub.f32 %v6280, %v6460
  %v6481 = vsub.f32 %v6281, %v6460
  %v6482 = vsub.f32 %v6282, %v6460
  %v6483 = vsub.f32 %v6283, %v6460
  %v6484 = vsub.f32 %v6284, %v6460
  %v6485 = vsub.f32 %v6285, %v6460
  %v6486 = vsub.f32 %v6286, %v6460
  %v6487 = vsub.f32 %v6287, %v6460
  %v6488 = vsub.f32 %v6288, %v6460
  %v6489 = vsub.f32 %v6289, %v6460
  %v6490 = vsub.f32 %v6290, %v6460
  %v6491 = vsub.f32 %v6291, %v6460
  %v6492 = vsub.f32 %v6292, %v6460
  %v6493 = vsub.f32 %v6293, %v6460
  %v6494 = vsub.f32 %v6294, %v6460
  %v6495 = vsub.f32 %v6295, %v6460
  %v6496 = vsub.f32 %v6296, %v6460
  %v6497 = vsub.f32 %v6297, %v6460
  %v6498 = vsub.f32 %v6298, %v6460
  %v6499 = vsub.f32 %v6299, %v6460
  %v6500 = vsub.f32 %v6300, %v6460
  %v6501 = vsub.f32 %v6301, %v6460
  %v6502 = vsub.f32 %v6302, %v6460
  %v6503 = vsub.f32 %v6303, %v6460
  %v6504 = vsub.f32 %v6304, %v6460
  %v6505 = vsub.f32 %v6305, %v6460
  %v6506 = vsub.f32 %v6306, %v6460
  %v6507 = vsub.f32 %v6307, %v6460
  %v6508 = vsub.f32 %v6308, %v6460
  %v6509 = vsub.f32 %v6309, %v6460
  %v6510 = vsub.f32 %v6310, %v6460
  %v6511 = vsub.f32 %v6311, %v6460
  %v6512 = vsub.f32 %v6312, %v6460
  %v6513 = vsub.f32 %v6313, %v6460
  %v6514 = vsub.f32 %v6314, %v6460
  %v6515 = vsub.f32 %v6315, %v6460
  %v6516 = vsub.f32 %v6316, %v6460
  %v6517 = vsub.f32 %v6317, %v6460
  %v6518 = vsub.f32 %v6318, %v6460
  %v6519 = vsub.f32 %v6319, %v6460
  %v6520 = vsub.f32 %v6320, %v6460
  %v6521 = vsub.f32 %v6321, %v6460
  %v6522 = vsub.f32 %v6322, %v6460
  %v6523 = vsub.f32 %v6323, %v6460
  %v6524 = vsub.f32 %v6324, %v6460
  %v6525 = vmul.f32 %v6461, %v6461
  %v6526 = vmul.f32 %v6462, %v6462
  %v6527 = vmul.f32 %v6463, %v6463
  %v6528 = vmul.f32 %v6464, %v6464
  %v6529 = vmul.f32 %v6465, %v6465
  %v6530 = vmul.f32 %v6466, %v6466
  %v6531 = vmul.f32 %v6467, %v6467
  %v6532 = vmul.f32 %v6468, %v6468
  %v6533 = vmul.f32 %v6469, %v6469
  %v6534 = vmul.f32 %v6470, %v6470
  %v6535 = vmul.f32 %v6471, %v6471
  %v6536 = vmul.f32 %v6472, %v6472
  %v6537 = vmul.f32 %v6473, %v6473
  %v6538 = vmul.f32 %v6474, %v6474
  %v6539 = vmul.f32 %v6475, %v6475
  %v6540 = vmul.f32 %v6476, %v6476
  %v6541 = vmul.f32 %v6477, %v6477
  %v6542 = vmul.f32 %v6478, %v6478
  %v6543 = vmul.f32 %v6479, %v6479
  %v6544 = vmul.f32 %v6480, %v6480
  %v6545 = vmul.f32 %v6481, %v6481
  %v6546 = vmul.f32 %v6482, %v6482
  %v6547 = vmul.f32 %v6483, %v6483
  %v6548 = vmul.f32 %v6484, %v6484
  %v6549 = vmul.f32 %v6485, %v6485
  %v6550 = vmul.f32 %v6486, %v6486
  %v6551 = vmul.f32 %v6487, %v6487
  %v6552 = vmul.f32 %v6488, %v6488
  %v6553 = vmul.f32 %v6489, %v6489
  %v6554 = vmul.f32 %v6490, %v6490
  %v6555 = vmul.f32 %v6491, %v6491
  %v6556 = vmul.f32 %v6492, %v6492
  %v6557 = vmul.f32 %v6493, %v6493
  %v6558 = vmul.f32 %v6494, %v6494
  %v6559 = vmul.f32 %v6495, %v6495
  %v6560 = vmul.f32 %v6496, %v6496
  %v6561 = vmul.f32 %v6497, %v6497
  %v6562 = vmul.f32 %v6498, %v6498
  %v6563 = vmul.f32 %v6499, %v6499
  %v6564 = vmul.f32 %v6500, %v6500
  %v6565 = vmul.f32 %v6501, %v6501
  %v6566 = vmul.f32 %v6502, %v6502
  %v6567 = vmul.f32 %v6503, %v6503
  %v6568 = vmul.f32 %v6504, %v6504
  %v6569 = vmul.f32 %v6505, %v6505
  %v6570 = vmul.f32 %v6506, %v6506
  %v6571 = vmul.f32 %v6507, %v6507
  %v6572 = vmul.f32 %v6508, %v6508
  %v6573 = vmul.f32 %v6509, %v6509
  %v6574 = vmul.f32 %v6510, %v6510
  %v6575 = vmul.f32 %v6511, %v6511
  %v6576 = vmul.f32 %v6512, %v6512
  %v6577 = vmul.f32 %v6513, %v6513
  %v6578 = vmul.f32 %v6514, %v6514
  %v6579 = vmul.f32 %v6515, %v6515
  %v6580 = vmul.f32 %v6516, %v6516
  %v6581 = vmul.f32 %v6517, %v6517
  %v6582 = vmul.f32 %v6518, %v6518
  %v6583 = vmul.f32 %v6519, %v6519
  %v6584 = vmul.f32 %v6520, %v6520
  %v6585 = vmul.f32 %v6521, %v6521
  %v6586 = vmul.f32 %v6522, %v6522
  %v6587 = vmul.f32 %v6523, %v6523
  %v6588 = vmul.f32 %v6524, %v6524
  %v6589 = vsel %vm6325, %v6525, 0.0
  %v6590 = vsel %vm6325, %v6526, 0.0
  %v6591 = vadd.f32 %v6589, %v6590
  %v6592 = vsel %vm6325, %v6527, 0.0
  %v6593 = vadd.f32 %v6591, %v6592
  %v6594 = vsel %vm6325, %v6528, 0.0
  %v6595 = vadd.f32 %v6593, %v6594
  %v6596 = vsel %vm6325, %v6529, 0.0
  %v6597 = vadd.f32 %v6595, %v6596
  %v6598 = vsel %vm6325, %v6530, 0.0
  %v6599 = vadd.f32 %v6597, %v6598
  %v6600 = vsel %vm6325, %v6531, 0.0
  %v6601 = vadd.f32 %v6599, %v6600
  %v6602 = vsel %vm6325, %v6532, 0.0
  %v6603 = vadd.f32 %v6601, %v6602
  %v6604 = vsel %vm6325, %v6533, 0.0
  %v6605 = vadd.f32 %v6603, %v6604
  %v6606 = vsel %vm6325, %v6534, 0.0
  %v6607 = vadd.f32 %v6605, %v6606
  %v6608 = vsel %vm6325, %v6535, 0.0
  %v6609 = vadd.f32 %v6607, %v6608
  %v6610 = vsel %vm6325, %v6536, 0.0
  %v6611 = vadd.f32 %v6609, %v6610
  %v6612 = vsel %vm6325, %v6537, 0.0
  %v6613 = vadd.f32 %v6611, %v6612
  %v6614 = vsel %vm6325, %v6538, 0.0
  %v6615 = vadd.f32 %v6613, %v6614
  %v6616 = vsel %vm6325, %v6539, 0.0
  %v6617 = vadd.f32 %v6615, %v6616
  %v6618 = vsel %vm6325, %v6540, 0.0
  %v6619 = vadd.f32 %v6617, %v6618
  %v6620 = vsel %vm6325, %v6541, 0.0
  %v6621 = vadd.f32 %v6619, %v6620
  %v6622 = vsel %vm6325, %v6542, 0.0
  %v6623 = vadd.f32 %v6621, %v6622
  %v6624 = vsel %vm6325, %v6543, 0.0
  %v6625 = vadd.f32 %v6623, %v6624
  %v6626 = vsel %vm6325, %v6544, 0.0
  %v6627 = vadd.f32 %v6625, %v6626
  %v6628 = vsel %vm6325, %v6545, 0.0
  %v6629 = vadd.f32 %v6627, %v6628
  %v6630 = vsel %vm6325, %v6546, 0.0
  %v6631 = vadd.f32 %v6629, %v6630
  %v6632 = vsel %vm6325, %v6547, 0.0
  %v6633 = vadd.f32 %v6631, %v6632
  %v6634 = vsel %vm6325, %v6548, 0.0
  %v6635 = vadd.f32 %v6633, %v6634
  %v6636 = vsel %vm6325, %v6549, 0.0
  %v6637 = vadd.f32 %v6635, %v6636
  %v6638 = vsel %vm6325, %v6550, 0.0
  %v6639 = vadd.f32 %v6637, %v6638
  %v6640 = vsel %vm6325, %v6551, 0.0
  %v6641 = vadd.f32 %v6639, %v6640
  %v6642 = vsel %vm6325, %v6552, 0.0
  %v6643 = vadd.f32 %v6641, %v6642
  %v6644 = vsel %vm6325, %v6553, 0.0
  %v6645 = vadd.f32 %v6643, %v6644
  %v6646 = vsel %vm6325, %v6554, 0.0
  %v6647 = vadd.f32 %v6645, %v6646
  %v6648 = vsel %vm6325, %v6555, 0.0
  %v6649 = vadd.f32 %v6647, %v6648
  %v6650 = vsel %vm6325, %v6556, 0.0
  %v6651 = vadd.f32 %v6649, %v6650
  %v6652 = vsel %vm6325, %v6557, 0.0
  %v6653 = vadd.f32 %v6651, %v6652
  %v6654 = vsel %vm6325, %v6558, 0.0
  %v6655 = vadd.f32 %v6653, %v6654
  %v6656 = vsel %vm6325, %v6559, 0.0
  %v6657 = vadd.f32 %v6655, %v6656
  %v6658 = vsel %vm6325, %v6560, 0.0
  %v6659 = vadd.f32 %v6657, %v6658
  %v6660 = vsel %vm6325, %v6561, 0.0
  %v6661 = vadd.f32 %v6659, %v6660
  %v6662 = vsel %vm6325, %v6562, 0.0
  %v6663 = vadd.f32 %v6661, %v6662
  %v6664 = vsel %vm6325, %v6563, 0.0
  %v6665 = vadd.f32 %v6663, %v6664
  %v6666 = vsel %vm6325, %v6564, 0.0
  %v6667 = vadd.f32 %v6665, %v6666
  %v6668 = vsel %vm6325, %v6565, 0.0
  %v6669 = vadd.f32 %v6667, %v6668
  %v6670 = vsel %vm6325, %v6566, 0.0
  %v6671 = vadd.f32 %v6669, %v6670
  %v6672 = vsel %vm6325, %v6567, 0.0
  %v6673 = vadd.f32 %v6671, %v6672
  %v6674 = vsel %vm6325, %v6568, 0.0
  %v6675 = vadd.f32 %v6673, %v6674
  %v6676 = vsel %vm6325, %v6569, 0.0
  %v6677 = vadd.f32 %v6675, %v6676
  %v6678 = vsel %vm6325, %v6570, 0.0
  %v6679 = vadd.f32 %v6677, %v6678
  %v6680 = vsel %vm6325, %v6571, 0.0
  %v6681 = vadd.f32 %v6679, %v6680
  %v6682 = vsel %vm6325, %v6572, 0.0
  %v6683 = vadd.f32 %v6681, %v6682
  %v6684 = vsel %vm6325, %v6573, 0.0
  %v6685 = vadd.f32 %v6683, %v6684
  %v6686 = vsel %vm6325, %v6574, 0.0
  %v6687 = vadd.f32 %v6685, %v6686
  %v6688 = vsel %vm6325, %v6575, 0.0
  %v6689 = vadd.f32 %v6687, %v6688
  %v6690 = vsel %vm6325, %v6576, 0.0
  %v6691 = vadd.f32 %v6689, %v6690
  %v6692 = vsel %vm6325, %v6577, 0.0
  %v6693 = vadd.f32 %v6691, %v6692
  %v6694 = vsel %vm6325, %v6578, 0.0
  %v6695 = vadd.f32 %v6693, %v6694
  %v6696 = vsel %vm6325, %v6579, 0.0
  %v6697 = vadd.f32 %v6695, %v6696
  %v6698 = vsel %vm6325, %v6580, 0.0
  %v6699 = vadd.f32 %v6697, %v6698
  %v6700 = vsel %vm6325, %v6581, 0.0
  %v6701 = vadd.f32 %v6699, %v6700
  %v6702 = vsel %vm6325, %v6582, 0.0
  %v6703 = vadd.f32 %v6701, %v6702
  %v6704 = vsel %vm6325, %v6583, 0.0
  %v6705 = vadd.f32 %v6703, %v6704
  %v6706 = vsel %vm6325, %v6584, 0.0
  %v6707 = vadd.f32 %v6705, %v6706
  %v6708 = vsel %vm6325, %v6585, 0.0
  %v6709 = vadd.f32 %v6707, %v6708
  %v6710 = vsel %vm6325, %v6586, 0.0
  %v6711 = vadd.f32 %v6709, %v6710
  %v6712 = vsel %vm6325, %v6587, 0.0
  %v6713 = vadd.f32 %v6711, %v6712
  %v6714 = vsel %vm6325, %v6588, 0.0
  %v6715 = vadd.f32 %v6713, %v6714
  %v6716 = vrot.slane %v6715, 4
  %v6717 = vadd.f32 %v6715, %v6716
  %v6718 = vrot.slane %v6717, 2
  %v6719 = vadd.f32 %v6717, %v6718
  %v6720 = vrot.slane %v6719, 1
  %v6721 = vadd.f32 %v6719, %v6720
  %v6722 = vmul.f32 %v6721, %v6459
  %v6723 = vld [vmem:[%s2] sm:$0x1]
  %v6724 = vadd.f32 %v6722, 1e-05
  %v6725 = vrsqrt.pop %v6724
  %v6726 = vmul.f32 %v6723, %v6725
  %v6727 = vld [vmem:[%s3] sm:$0x1]
  %v6728 = vmul.f32 %v6460, %v6726
  %v6729 = vsub.f32 %v6727, %v6728
  %v6731 = vlaneseq
  %v6732 = vshrl.u32 %v6731, 7
  %v6733 = vsub.s32 0, %v6732
  %v6734 = vrot.slane %v6726, %v6733
  %v6736 = vmul.f32 %v6261, %v6734
  %v6737 = vmul.f32 %v6262, %v6734
  %v6738 = vmul.f32 %v6263, %v6734
  %v6739 = vmul.f32 %v6264, %v6734
  %v6740 = vmul.f32 %v6265, %v6734
  %v6741 = vmul.f32 %v6266, %v6734
  %v6742 = vmul.f32 %v6267, %v6734
  %v6743 = vmul.f32 %v6268, %v6734
  %v6744 = vmul.f32 %v6269, %v6734
  %v6745 = vmul.f32 %v6270, %v6734
  %v6746 = vmul.f32 %v6271, %v6734
  %v6747 = vmul.f32 %v6272, %v6734
  %v6748 = vmul.f32 %v6273, %v6734
  %v6749 = vmul.f32 %v6274, %v6734
  %v6750 = vmul.f32 %v6275, %v6734
  %v6751 = vmul.f32 %v6276, %v6734
  %v6752 = vmul.f32 %v6277, %v6734
  %v6753 = vmul.f32 %v6278, %v6734
  %v6754 = vmul.f32 %v6279, %v6734
  %v6755 = vmul.f32 %v6280, %v6734
  %v6756 = vmul.f32 %v6281, %v6734
  %v6757 = vmul.f32 %v6282, %v6734
  %v6758 = vmul.f32 %v6283, %v6734
  %v6759 = vmul.f32 %v6284, %v6734
  %v6760 = vmul.f32 %v6285, %v6734
  %v6761 = vmul.f32 %v6286, %v6734
  %v6762 = vmul.f32 %v6287, %v6734
  %v6763 = vmul.f32 %v6288, %v6734
  %v6764 = vmul.f32 %v6289, %v6734
  %v6765 = vmul.f32 %v6290, %v6734
  %v6766 = vmul.f32 %v6291, %v6734
  %v6767 = vmul.f32 %v6292, %v6734
  %v6768 = vmul.f32 %v6293, %v6734
  %v6769 = vmul.f32 %v6294, %v6734
  %v6770 = vmul.f32 %v6295, %v6734
  %v6771 = vmul.f32 %v6296, %v6734
  %v6772 = vmul.f32 %v6297, %v6734
  %v6773 = vmul.f32 %v6298, %v6734
  %v6774 = vmul.f32 %v6299, %v6734
  %v6775 = vmul.f32 %v6300, %v6734
  %v6776 = vmul.f32 %v6301, %v6734
  %v6777 = vmul.f32 %v6302, %v6734
  %v6778 = vmul.f32 %v6303, %v6734
  %v6779 = vmul.f32 %v6304, %v6734
  %v6780 = vmul.f32 %v6305, %v6734
  %v6781 = vmul.f32 %v6306, %v6734
  %v6782 = vmul.f32 %v6307, %v6734
  %v6783 = vmul.f32 %v6308, %v6734
  %v6784 = vmul.f32 %v6309, %v6734
  %v6785 = vmul.f32 %v6310, %v6734
  %v6786 = vmul.f32 %v6311, %v6734
  %v6787 = vmul.f32 %v6312, %v6734
  %v6788 = vmul.f32 %v6313, %v6734
  %v6789 = vmul.f32 %v6314, %v6734
  %v6790 = vmul.f32 %v6315, %v6734
  %v6791 = vmul.f32 %v6316, %v6734
  %v6792 = vmul.f32 %v6317, %v6734
  %v6793 = vmul.f32 %v6318, %v6734
  %v6794 = vmul.f32 %v6319, %v6734
  %v6795 = vmul.f32 %v6320, %v6734
  %v6796 = vmul.f32 %v6321, %v6734
  %v6797 = vmul.f32 %v6322, %v6734
  %v6798 = vmul.f32 %v6323, %v6734
  %v6799 = vmul.f32 %v6324, %v6734
  %v6801 = vlaneseq
  %v6802 = vshrl.u32 %v6801, 7
  %v6803 = vsub.s32 0, %v6802
  %v6804 = vrot.slane %v6729, %v6803
  %v6806 = vadd.f32 %v6736, %v6804
  %v6807 = vadd.f32 %v6737, %v6804
  %v6808 = vadd.f32 %v6738, %v6804
  %v6809 = vadd.f32 %v6739, %v6804
  %v6810 = vadd.f32 %v6740, %v6804
  %v6811 = vadd.f32 %v6741, %v6804
  %v6812 = vadd.f32 %v6742, %v6804
  %v6813 = vadd.f32 %v6743, %v6804
  %v6814 = vadd.f32 %v6744, %v6804
  %v6815 = vadd.f32 %v6745, %v6804
  %v6816 = vadd.f32 %v6746, %v6804
  %v6817 = vadd.f32 %v6747, %v6804
  %v6818 = vadd.f32 %v6748, %v6804
  %v6819 = vadd.f32 %v6749, %v6804
  %v6820 = vadd.f32 %v6750, %v6804
  %v6821 = vadd.f32 %v6751, %v6804
  %v6822 = vadd.f32 %v6752, %v6804
  %v6823 = vadd.f32 %v6753, %v6804
  %v6824 = vadd.f32 %v6754, %v6804
  %v6825 = vadd.f32 %v6755, %v6804
  %v6826 = vadd.f32 %v6756, %v6804
  %v6827 = vadd.f32 %v6757, %v6804
  %v6828 = vadd.f32 %v6758, %v6804
  %v6829 = vadd.f32 %v6759, %v6804
  %v6830 = vadd.f32 %v6760, %v6804
  %v6831 = vadd.f32 %v6761, %v6804
  %v6832 = vadd.f32 %v6762, %v6804
  %v6833 = vadd.f32 %v6763, %v6804
  %v6834 = vadd.f32 %v6764, %v6804
  %v6835 = vadd.f32 %v6765, %v6804
  %v6836 = vadd.f32 %v6766, %v6804
  %v6837 = vadd.f32 %v6767, %v6804
  %v6838 = vadd.f32 %v6768, %v6804
  %v6839 = vadd.f32 %v6769, %v6804
  %v6840 = vadd.f32 %v6770, %v6804
  %v6841 = vadd.f32 %v6771, %v6804
  %v6842 = vadd.f32 %v6772, %v6804
  %v6843 = vadd.f32 %v6773, %v6804
  %v6844 = vadd.f32 %v6774, %v6804
  %v6845 = vadd.f32 %v6775, %v6804
  %v6846 = vadd.f32 %v6776, %v6804
  %v6847 = vadd.f32 %v6777, %v6804
  %v6848 = vadd.f32 %v6778, %v6804
  %v6849 = vadd.f32 %v6779, %v6804
  %v6850 = vadd.f32 %v6780, %v6804
  %v6851 = vadd.f32 %v6781, %v6804
  %v6852 = vadd.f32 %v6782, %v6804
  %v6853 = vadd.f32 %v6783, %v6804
  %v6854 = vadd.f32 %v6784, %v6804
  %v6855 = vadd.f32 %v6785, %v6804
  %v6856 = vadd.f32 %v6786, %v6804
  %v6857 = vadd.f32 %v6787, %v6804
  %v6858 = vadd.f32 %v6788, %v6804
  %v6859 = vadd.f32 %v6789, %v6804
  %v6860 = vadd.f32 %v6790, %v6804
  %v6861 = vadd.f32 %v6791, %v6804
  %v6862 = vadd.f32 %v6792, %v6804
  %v6863 = vadd.f32 %v6793, %v6804
  %v6864 = vadd.f32 %v6794, %v6804
  %v6865 = vadd.f32 %v6795, %v6804
  %v6866 = vadd.f32 %v6796, %v6804
  %v6867 = vadd.f32 %v6797, %v6804
  %v6868 = vadd.f32 %v6798, %v6804
  %v6869 = vadd.f32 %v6799, %v6804
  %v6870 = vmax.f32 %v6806, 0.0
  %v6871 = vmax.f32 %v6807, 0.0
  %v6872 = vmax.f32 %v6808, 0.0
  %v6873 = vmax.f32 %v6809, 0.0
  %v6874 = vmax.f32 %v6810, 0.0
  %v6875 = vmax.f32 %v6811, 0.0
  %v6876 = vmax.f32 %v6812, 0.0
  %v6877 = vmax.f32 %v6813, 0.0
  %v6878 = vmax.f32 %v6814, 0.0
  %v6879 = vmax.f32 %v6815, 0.0
  %v6880 = vmax.f32 %v6816, 0.0
  %v6881 = vmax.f32 %v6817, 0.0
  %v6882 = vmax.f32 %v6818, 0.0
  %v6883 = vmax.f32 %v6819, 0.0
  %v6884 = vmax.f32 %v6820, 0.0
  %v6885 = vmax.f32 %v6821, 0.0
  %v6886 = vmax.f32 %v6822, 0.0
  %v6887 = vmax.f32 %v6823, 0.0
  %v6888 = vmax.f32 %v6824, 0.0
  %v6889 = vmax.f32 %v6825, 0.0
  %v6890 = vmax.f32 %v6826, 0.0
  %v6891 = vmax.f32 %v6827, 0.0
  %v6892 = vmax.f32 %v6828, 0.0
  %v6893 = vmax.f32 %v6829, 0.0
  %v6894 = vmax.f32 %v6830, 0.0
  %v6895 = vmax.f32 %v6831, 0.0
  %v6896 = vmax.f32 %v6832, 0.0
  %v6897 = vmax.f32 %v6833, 0.0
  %v6898 = vmax.f32 %v6834, 0.0
  %v6899 = vmax.f32 %v6835, 0.0
  %v6900 = vmax.f32 %v6836, 0.0
  %v6901 = vmax.f32 %v6837, 0.0
  %v6902 = vmax.f32 %v6838, 0.0
  %v6903 = vmax.f32 %v6839, 0.0
  %v6904 = vmax.f32 %v6840, 0.0
  %v6905 = vmax.f32 %v6841, 0.0
  %v6906 = vmax.f32 %v6842, 0.0
  %v6907 = vmax.f32 %v6843, 0.0
  %v6908 = vmax.f32 %v6844, 0.0
  %v6909 = vmax.f32 %v6845, 0.0
  %v6910 = vmax.f32 %v6846, 0.0
  %v6911 = vmax.f32 %v6847, 0.0
  %v6912 = vmax.f32 %v6848, 0.0
  %v6913 = vmax.f32 %v6849, 0.0
  %v6914 = vmax.f32 %v6850, 0.0
  %v6915 = vmax.f32 %v6851, 0.0
  %v6916 = vmax.f32 %v6852, 0.0
  %v6917 = vmax.f32 %v6853, 0.0
  %v6918 = vmax.f32 %v6854, 0.0
  %v6919 = vmax.f32 %v6855, 0.0
  %v6920 = vmax.f32 %v6856, 0.0
  %v6921 = vmax.f32 %v6857, 0.0
  %v6922 = vmax.f32 %v6858, 0.0
  %v6923 = vmax.f32 %v6859, 0.0
  %v6924 = vmax.f32 %v6860, 0.0
  %v6925 = vmax.f32 %v6861, 0.0
  %v6926 = vmax.f32 %v6862, 0.0
  %v6927 = vmax.f32 %v6863, 0.0
  %v6928 = vmax.f32 %v6864, 0.0
  %v6929 = vmax.f32 %v6865, 0.0
  %v6930 = vmax.f32 %v6866, 0.0
  %v6931 = vmax.f32 %v6867, 0.0
  %v6932 = vmax.f32 %v6868, 0.0
  %v6933 = vmax.f32 %v6869, 0.0
  %v6934 = vpack.c.bf16 %v6871, %v6870
  %v6935 = vpack.c.bf16 %v6873, %v6872
  %v6936 = vpack.c.bf16 %v6875, %v6874
  %v6937 = vpack.c.bf16 %v6877, %v6876
  %v6938 = vpack.c.bf16 %v6879, %v6878
  %v6939 = vpack.c.bf16 %v6881, %v6880
  %v6940 = vpack.c.bf16 %v6883, %v6882
  %v6941 = vpack.c.bf16 %v6885, %v6884
  %v6942 = vpack.c.bf16 %v6887, %v6886
  %v6943 = vpack.c.bf16 %v6889, %v6888
  %v6944 = vpack.c.bf16 %v6891, %v6890
  %v6945 = vpack.c.bf16 %v6893, %v6892
  %v6946 = vpack.c.bf16 %v6895, %v6894
  %v6947 = vpack.c.bf16 %v6897, %v6896
  %v6948 = vpack.c.bf16 %v6899, %v6898
  %v6949 = vpack.c.bf16 %v6901, %v6900
  %v6950 = vpack.c.bf16 %v6903, %v6902
  %v6951 = vpack.c.bf16 %v6905, %v6904
  %v6952 = vpack.c.bf16 %v6907, %v6906
  %v6953 = vpack.c.bf16 %v6909, %v6908
  %v6954 = vpack.c.bf16 %v6911, %v6910
  %v6955 = vpack.c.bf16 %v6913, %v6912
  %v6956 = vpack.c.bf16 %v6915, %v6914
  %v6957 = vpack.c.bf16 %v6917, %v6916
  %v6958 = vpack.c.bf16 %v6919, %v6918
  %v6959 = vpack.c.bf16 %v6921, %v6920
  %v6960 = vpack.c.bf16 %v6923, %v6922
  %v6961 = vpack.c.bf16 %v6925, %v6924
  %v6962 = vpack.c.bf16 %v6927, %v6926
  %v6963 = vpack.c.bf16 %v6929, %v6928
  %v6964 = vpack.c.bf16 %v6931, %v6930
  %v6965 = vpack.c.bf16 %v6933, %v6932
  %v6998 = vunpack.c.l.b16 %v6934
  %v6999 = vunpack.c.h.b16 %v6934
  %v7000 = vunpack.c.l.b16 %v6935
  %v7001 = vunpack.c.h.b16 %v6935
  %v7002 = vunpack.c.l.b16 %v6936
  %v7003 = vunpack.c.h.b16 %v6936
  %v7004 = vunpack.c.l.b16 %v6937
  %v7005 = vunpack.c.h.b16 %v6937
  %v7006 = vunpack.c.l.b16 %v6938
  %v7007 = vunpack.c.h.b16 %v6938
  %v7008 = vunpack.c.l.b16 %v6939
  %v7009 = vunpack.c.h.b16 %v6939
  %v7010 = vunpack.c.l.b16 %v6940
  %v7011 = vunpack.c.h.b16 %v6940
  %v7012 = vunpack.c.l.b16 %v6941
  %v7013 = vunpack.c.h.b16 %v6941
  %v7014 = vunpack.c.l.b16 %v6942
  %v7015 = vunpack.c.h.b16 %v6942
  %v7016 = vunpack.c.l.b16 %v6943
  %v7017 = vunpack.c.h.b16 %v6943
  %v7018 = vunpack.c.l.b16 %v6944
  %v7019 = vunpack.c.h.b16 %v6944
  %v7020 = vunpack.c.l.b16 %v6945
  %v7021 = vunpack.c.h.b16 %v6945
  %v7022 = vunpack.c.l.b16 %v6946
  %v7023 = vunpack.c.h.b16 %v6946
  %v7024 = vunpack.c.l.b16 %v6947
  %v7025 = vunpack.c.h.b16 %v6947
  %v7026 = vunpack.c.l.b16 %v6948
  %v7027 = vunpack.c.h.b16 %v6948
  %v7028 = vunpack.c.l.b16 %v6949
  %v7029 = vunpack.c.h.b16 %v6949
  %v7030 = vunpack.c.l.b16 %v6950
  %v7031 = vunpack.c.h.b16 %v6950
  %v7032 = vunpack.c.l.b16 %v6951
  %v7033 = vunpack.c.h.b16 %v6951
  %v7034 = vunpack.c.l.b16 %v6952
  %v7035 = vunpack.c.h.b16 %v6952
  %v7036 = vunpack.c.l.b16 %v6953
  %v7037 = vunpack.c.h.b16 %v6953
  %v7038 = vunpack.c.l.b16 %v6954
  %v7039 = vunpack.c.h.b16 %v6954
  %v7040 = vunpack.c.l.b16 %v6955
  %v7041 = vunpack.c.h.b16 %v6955
  %v7042 = vunpack.c.l.b16 %v6956
  %v7043 = vunpack.c.h.b16 %v6956
  %v7044 = vunpack.c.l.b16 %v6957
  %v7045 = vunpack.c.h.b16 %v6957
  %v7046 = vunpack.c.l.b16 %v6958
  %v7047 = vunpack.c.h.b16 %v6958
  %v7048 = vunpack.c.l.b16 %v6959
  %v7049 = vunpack.c.h.b16 %v6959
  %v7050 = vunpack.c.l.b16 %v6960
  %v7051 = vunpack.c.h.b16 %v6960
  %v7052 = vunpack.c.l.b16 %v6961
  %v7053 = vunpack.c.h.b16 %v6961
  %v7054 = vunpack.c.l.b16 %v6962
  %v7055 = vunpack.c.h.b16 %v6962
  %v7056 = vunpack.c.l.b16 %v6963
  %v7057 = vunpack.c.h.b16 %v6963
  %v7058 = vunpack.c.l.b16 %v6964
  %v7059 = vunpack.c.h.b16 %v6964
  %v7060 = vunpack.c.l.b16 %v6965
  %v7061 = vunpack.c.h.b16 %v6965
  %v7062 = vpack.c.b16 %v6998, %v6998
  %v7063 = vpack.c.b16 %v6999, %v6999
  %v7064 = vpack.c.b16 %v7000, %v7000
  %v7065 = vpack.c.b16 %v7001, %v7001
  %v7066 = vpack.c.b16 %v7002, %v7002
  %v7067 = vpack.c.b16 %v7003, %v7003
  %v7068 = vpack.c.b16 %v7004, %v7004
  %v7069 = vpack.c.b16 %v7005, %v7005
  %v7070 = vpack.c.b16 %v7006, %v7006
  %v7071 = vpack.c.b16 %v7007, %v7007
  %v7072 = vpack.c.b16 %v7008, %v7008
  %v7073 = vpack.c.b16 %v7009, %v7009
  %v7074 = vpack.c.b16 %v7010, %v7010
  %v7075 = vpack.c.b16 %v7011, %v7011
  %v7076 = vpack.c.b16 %v7012, %v7012
  %v7077 = vpack.c.b16 %v7013, %v7013
  %v7078 = vpack.c.b16 %v7014, %v7014
  %v7079 = vpack.c.b16 %v7015, %v7015
  %v7080 = vpack.c.b16 %v7016, %v7016
  %v7081 = vpack.c.b16 %v7017, %v7017
  %v7082 = vpack.c.b16 %v7018, %v7018
  %v7083 = vpack.c.b16 %v7019, %v7019
  %v7084 = vpack.c.b16 %v7020, %v7020
  %v7085 = vpack.c.b16 %v7021, %v7021
  %v7086 = vpack.c.b16 %v7022, %v7022
  %v7087 = vpack.c.b16 %v7023, %v7023
  %v7088 = vpack.c.b16 %v7024, %v7024
  %v7089 = vpack.c.b16 %v7025, %v7025
  %v7090 = vpack.c.b16 %v7026, %v7026
  %v7091 = vpack.c.b16 %v7027, %v7027
  %v7092 = vpack.c.b16 %v7028, %v7028
  %v7093 = vpack.c.b16 %v7029, %v7029
  %v7094 = vpack.c.b16 %v7030, %v7030
  %v7095 = vpack.c.b16 %v7031, %v7031
  %v7096 = vpack.c.b16 %v7032, %v7032
  %v7097 = vpack.c.b16 %v7033, %v7033
  %v7098 = vpack.c.b16 %v7034, %v7034
  %v7099 = vpack.c.b16 %v7035, %v7035
  %v7100 = vpack.c.b16 %v7036, %v7036
  %v7101 = vpack.c.b16 %v7037, %v7037
  %v7102 = vpack.c.b16 %v7038, %v7038
  %v7103 = vpack.c.b16 %v7039, %v7039
  %v7104 = vpack.c.b16 %v7040, %v7040
  %v7105 = vpack.c.b16 %v7041, %v7041
  %v7106 = vpack.c.b16 %v7042, %v7042
  %v7107 = vpack.c.b16 %v7043, %v7043
  %v7108 = vpack.c.b16 %v7044, %v7044
  %v7109 = vpack.c.b16 %v7045, %v7045
  %v7110 = vpack.c.b16 %v7046, %v7046
  %v7111 = vpack.c.b16 %v7047, %v7047
  %v7112 = vpack.c.b16 %v7048, %v7048
  %v7113 = vpack.c.b16 %v7049, %v7049
  %v7114 = vpack.c.b16 %v7050, %v7050
  %v7115 = vpack.c.b16 %v7051, %v7051
  %v7116 = vpack.c.b16 %v7052, %v7052
  %v7117 = vpack.c.b16 %v7053, %v7053
  %v7118 = vpack.c.b16 %v7054, %v7054
  %v7119 = vpack.c.b16 %v7055, %v7055
  %v7120 = vpack.c.b16 %v7056, %v7056
  %v7121 = vpack.c.b16 %v7057, %v7057
  %v7122 = vpack.c.b16 %v7058, %v7058
  %v7123 = vpack.c.b16 %v7059, %v7059
  %v7124 = vpack.c.b16 %v7060, %v7060
  %v7125 = vpack.c.b16 %v7061, %v7061
  %v7127 = vshrl.u32 %v7062, 16
  %v7129 = vrot.slane %v7127, 7
  %v7130 = vshll.u32 %v7062, 16
  %v7132 = vor.u32 %v7129, %v7130
  %v7133 = vrot.slane %v7129, 4
  %v7135 = vshrl.u32 %v7063, 16
  %v7137 = vrot.slane %v7135, 7
  %v7138 = vshll.u32 %v7063, 16
  %v7140 = vor.u32 %v7137, %v7138
  %v7141 = vsel %vm157, %v7133, %v7140
  %v7142 = vrot.slane %v7137, 4
  %v7144 = vshrl.u32 %v7064, 16
  %v7146 = vrot.slane %v7144, 7
  %v7147 = vshll.u32 %v7064, 16
  %v7149 = vor.u32 %v7146, %v7147
  %v7150 = vrot.slane %v7146, 4
  %v7152 = vshrl.u32 %v7065, 16
  %v7154 = vrot.slane %v7152, 7
  %v7155 = vshll.u32 %v7065, 16
  %v7157 = vor.u32 %v7154, %v7155
  %v7158 = vsel %vm157, %v7150, %v7157
  %v7159 = vrot.slane %v7154, 4
  %v7161 = vshrl.u32 %v7066, 16
  %v7163 = vrot.slane %v7161, 7
  %v7164 = vshll.u32 %v7066, 16
  %v7166 = vor.u32 %v7163, %v7164
  %v7167 = vrot.slane %v7163, 4
  %v7169 = vshrl.u32 %v7067, 16
  %v7171 = vrot.slane %v7169, 7
  %v7172 = vshll.u32 %v7067, 16
  %v7174 = vor.u32 %v7171, %v7172
  %v7175 = vsel %vm157, %v7167, %v7174
  %v7176 = vrot.slane %v7171, 4
  %v7178 = vshrl.u32 %v7068, 16
  %v7180 = vrot.slane %v7178, 7
  %v7181 = vshll.u32 %v7068, 16
  %v7183 = vor.u32 %v7180, %v7181
  %v7184 = vrot.slane %v7180, 4
  %v7186 = vshrl.u32 %v7069, 16
  %v7188 = vrot.slane %v7186, 7
  %v7189 = vshll.u32 %v7069, 16
  %v7191 = vor.u32 %v7188, %v7189
  %v7192 = vsel %vm157, %v7184, %v7191
  %v7193 = vrot.slane %v7188, 4
  %v7195 = vshrl.u32 %v7070, 16
  %v7197 = vrot.slane %v7195, 7
  %v7198 = vshll.u32 %v7070, 16
  %v7200 = vor.u32 %v7197, %v7198
  %v7201 = vrot.slane %v7197, 4
  %v7203 = vshrl.u32 %v7071, 16
  %v7205 = vrot.slane %v7203, 7
  %v7206 = vshll.u32 %v7071, 16
  %v7208 = vor.u32 %v7205, %v7206
  %v7209 = vsel %vm157, %v7201, %v7208
  %v7210 = vrot.slane %v7205, 4
  %v7212 = vshrl.u32 %v7072, 16
  %v7214 = vrot.slane %v7212, 7
  %v7215 = vshll.u32 %v7072, 16
  %v7217 = vor.u32 %v7214, %v7215
  %v7218 = vrot.slane %v7214, 4
  %v7220 = vshrl.u32 %v7073, 16
  %v7222 = vrot.slane %v7220, 7
  %v7223 = vshll.u32 %v7073, 16
  %v7225 = vor.u32 %v7222, %v7223
  %v7226 = vsel %vm157, %v7218, %v7225
  %v7227 = vrot.slane %v7222, 4
  %v7229 = vshrl.u32 %v7074, 16
  %v7231 = vrot.slane %v7229, 7
  %v7232 = vshll.u32 %v7074, 16
  %v7234 = vor.u32 %v7231, %v7232
  %v7235 = vrot.slane %v7231, 4
  %v7237 = vshrl.u32 %v7075, 16
  %v7239 = vrot.slane %v7237, 7
  %v7240 = vshll.u32 %v7075, 16
  %v7242 = vor.u32 %v7239, %v7240
  %v7243 = vsel %vm157, %v7235, %v7242
  %v7244 = vrot.slane %v7239, 4
  %v7246 = vshrl.u32 %v7076, 16
  %v7248 = vrot.slane %v7246, 7
  %v7249 = vshll.u32 %v7076, 16
  %v7251 = vor.u32 %v7248, %v7249
  %v7252 = vrot.slane %v7248, 4
  %v7254 = vshrl.u32 %v7077, 16
  %v7256 = vrot.slane %v7254, 7
  %v7257 = vshll.u32 %v7077, 16
  %v7259 = vor.u32 %v7256, %v7257
  %v7260 = vsel %vm157, %v7252, %v7259
  %v7261 = vrot.slane %v7256, 4
  %v7263 = vshrl.u32 %v7078, 16
  %v7265 = vrot.slane %v7263, 7
  %v7266 = vshll.u32 %v7078, 16
  %v7268 = vor.u32 %v7265, %v7266
  %v7269 = vrot.slane %v7265, 4
  %v7271 = vshrl.u32 %v7079, 16
  %v7273 = vrot.slane %v7271, 7
  %v7274 = vshll.u32 %v7079, 16
  %v7276 = vor.u32 %v7273, %v7274
  %v7277 = vsel %vm157, %v7269, %v7276
  %v7278 = vrot.slane %v7273, 4
  %v7280 = vshrl.u32 %v7080, 16
  %v7282 = vrot.slane %v7280, 7
  %v7283 = vshll.u32 %v7080, 16
  %v7285 = vor.u32 %v7282, %v7283
  %v7286 = vrot.slane %v7282, 4
  %v7288 = vshrl.u32 %v7081, 16
  %v7290 = vrot.slane %v7288, 7
  %v7291 = vshll.u32 %v7081, 16
  %v7293 = vor.u32 %v7290, %v7291
  %v7294 = vsel %vm157, %v7286, %v7293
  %v7295 = vrot.slane %v7290, 4
  %v7297 = vshrl.u32 %v7082, 16
  %v7299 = vrot.slane %v7297, 7
  %v7300 = vshll.u32 %v7082, 16
  %v7302 = vor.u32 %v7299, %v7300
  %v7303 = vrot.slane %v7299, 4
  %v7305 = vshrl.u32 %v7083, 16
  %v7307 = vrot.slane %v7305, 7
  %v7308 = vshll.u32 %v7083, 16
  %v7310 = vor.u32 %v7307, %v7308
  %v7311 = vsel %vm157, %v7303, %v7310
  %v7312 = vrot.slane %v7307, 4
  %v7314 = vshrl.u32 %v7084, 16
  %v7316 = vrot.slane %v7314, 7
  %v7317 = vshll.u32 %v7084, 16
  %v7319 = vor.u32 %v7316, %v7317
  %v7320 = vrot.slane %v7316, 4
  %v7322 = vshrl.u32 %v7085, 16
  %v7324 = vrot.slane %v7322, 7
  %v7325 = vshll.u32 %v7085, 16
  %v7327 = vor.u32 %v7324, %v7325
  %v7328 = vsel %vm157, %v7320, %v7327
  %v7329 = vrot.slane %v7324, 4
  %v7331 = vshrl.u32 %v7086, 16
  %v7333 = vrot.slane %v7331, 7
  %v7334 = vshll.u32 %v7086, 16
  %v7336 = vor.u32 %v7333, %v7334
  %v7337 = vrot.slane %v7333, 4
  %v7339 = vshrl.u32 %v7087, 16
  %v7341 = vrot.slane %v7339, 7
  %v7342 = vshll.u32 %v7087, 16
  %v7344 = vor.u32 %v7341, %v7342
  %v7345 = vsel %vm157, %v7337, %v7344
  %v7346 = vrot.slane %v7341, 4
  %v7348 = vshrl.u32 %v7088, 16
  %v7350 = vrot.slane %v7348, 7
  %v7351 = vshll.u32 %v7088, 16
  %v7353 = vor.u32 %v7350, %v7351
  %v7354 = vrot.slane %v7350, 4
  %v7356 = vshrl.u32 %v7089, 16
  %v7358 = vrot.slane %v7356, 7
  %v7359 = vshll.u32 %v7089, 16
  %v7361 = vor.u32 %v7358, %v7359
  %v7362 = vsel %vm157, %v7354, %v7361
  %v7363 = vrot.slane %v7358, 4
  %v7365 = vshrl.u32 %v7090, 16
  %v7367 = vrot.slane %v7365, 7
  %v7368 = vshll.u32 %v7090, 16
  %v7370 = vor.u32 %v7367, %v7368
  %v7371 = vrot.slane %v7367, 4
  %v7373 = vshrl.u32 %v7091, 16
  %v7375 = vrot.slane %v7373, 7
  %v7376 = vshll.u32 %v7091, 16
  %v7378 = vor.u32 %v7375, %v7376
  %v7379 = vsel %vm157, %v7371, %v7378
  %v7380 = vrot.slane %v7375, 4
  %v7382 = vshrl.u32 %v7092, 16
  %v7384 = vrot.slane %v7382, 7
  %v7385 = vshll.u32 %v7092, 16
  %v7387 = vor.u32 %v7384, %v7385
  %v7388 = vrot.slane %v7384, 4
  %v7390 = vshrl.u32 %v7093, 16
  %v7392 = vrot.slane %v7390, 7
  %v7393 = vshll.u32 %v7093, 16
  %v7395 = vor.u32 %v7392, %v7393
  %v7396 = vsel %vm157, %v7388, %v7395
  %v7397 = vrot.slane %v7392, 4
  %v7399 = vshrl.u32 %v7094, 16
  %v7401 = vrot.slane %v7399, 7
  %v7402 = vshll.u32 %v7094, 16
  %v7404 = vor.u32 %v7401, %v7402
  %v7405 = vrot.slane %v7401, 4
  %v7407 = vshrl.u32 %v7095, 16
  %v7409 = vrot.slane %v7407, 7
  %v7410 = vshll.u32 %v7095, 16
  %v7412 = vor.u32 %v7409, %v7410
  %v7413 = vsel %vm157, %v7405, %v7412
  %v7414 = vrot.slane %v7409, 4
  %v7416 = vshrl.u32 %v7096, 16
  %v7418 = vrot.slane %v7416, 7
  %v7419 = vshll.u32 %v7096, 16
  %v7421 = vor.u32 %v7418, %v7419
  %v7422 = vrot.slane %v7418, 4
  %v7424 = vshrl.u32 %v7097, 16
  %v7426 = vrot.slane %v7424, 7
  %v7427 = vshll.u32 %v7097, 16
  %v7429 = vor.u32 %v7426, %v7427
  %v7430 = vsel %vm157, %v7422, %v7429
  %v7431 = vrot.slane %v7426, 4
  %v7433 = vshrl.u32 %v7098, 16
  %v7435 = vrot.slane %v7433, 7
  %v7436 = vshll.u32 %v7098, 16
  %v7438 = vor.u32 %v7435, %v7436
  %v7439 = vrot.slane %v7435, 4
  %v7441 = vshrl.u32 %v7099, 16
  %v7443 = vrot.slane %v7441, 7
  %v7444 = vshll.u32 %v7099, 16
  %v7446 = vor.u32 %v7443, %v7444
  %v7447 = vsel %vm157, %v7439, %v7446
  %v7448 = vrot.slane %v7443, 4
  %v7450 = vshrl.u32 %v7100, 16
  %v7452 = vrot.slane %v7450, 7
  %v7453 = vshll.u32 %v7100, 16
  %v7455 = vor.u32 %v7452, %v7453
  %v7456 = vrot.slane %v7452, 4
  %v7458 = vshrl.u32 %v7101, 16
  %v7460 = vrot.slane %v7458, 7
  %v7461 = vshll.u32 %v7101, 16
  %v7463 = vor.u32 %v7460, %v7461
  %v7464 = vsel %vm157, %v7456, %v7463
  %v7465 = vrot.slane %v7460, 4
  %v7467 = vshrl.u32 %v7102, 16
  %v7469 = vrot.slane %v7467, 7
  %v7470 = vshll.u32 %v7102, 16
  %v7472 = vor.u32 %v7469, %v7470
  %v7473 = vrot.slane %v7469, 4
  %v7475 = vshrl.u32 %v7103, 16
  %v7477 = vrot.slane %v7475, 7
  %v7478 = vshll.u32 %v7103, 16
  %v7480 = vor.u32 %v7477, %v7478
  %v7481 = vsel %vm157, %v7473, %v7480
  %v7482 = vrot.slane %v7477, 4
  %v7484 = vshrl.u32 %v7104, 16
  %v7486 = vrot.slane %v7484, 7
  %v7487 = vshll.u32 %v7104, 16
  %v7489 = vor.u32 %v7486, %v7487
  %v7490 = vrot.slane %v7486, 4
  %v7492 = vshrl.u32 %v7105, 16
  %v7494 = vrot.slane %v7492, 7
  %v7495 = vshll.u32 %v7105, 16
  %v7497 = vor.u32 %v7494, %v7495
  %v7498 = vsel %vm157, %v7490, %v7497
  %v7499 = vrot.slane %v7494, 4
  %v7501 = vshrl.u32 %v7106, 16
  %v7503 = vrot.slane %v7501, 7
  %v7504 = vshll.u32 %v7106, 16
  %v7506 = vor.u32 %v7503, %v7504
  %v7507 = vrot.slane %v7503, 4
  %v7509 = vshrl.u32 %v7107, 16
  %v7511 = vrot.slane %v7509, 7
  %v7512 = vshll.u32 %v7107, 16
  %v7514 = vor.u32 %v7511, %v7512
  %v7515 = vsel %vm157, %v7507, %v7514
  %v7516 = vrot.slane %v7511, 4
  %v7518 = vshrl.u32 %v7108, 16
  %v7520 = vrot.slane %v7518, 7
  %v7521 = vshll.u32 %v7108, 16
  %v7523 = vor.u32 %v7520, %v7521
  %v7524 = vrot.slane %v7520, 4
  %v7526 = vshrl.u32 %v7109, 16
  %v7528 = vrot.slane %v7526, 7
  %v7529 = vshll.u32 %v7109, 16
  %v7531 = vor.u32 %v7528, %v7529
  %v7532 = vsel %vm157, %v7524, %v7531
  %v7533 = vrot.slane %v7528, 4
  %v7535 = vshrl.u32 %v7110, 16
  %v7537 = vrot.slane %v7535, 7
  %v7538 = vshll.u32 %v7110, 16
  %v7540 = vor.u32 %v7537, %v7538
  %v7541 = vrot.slane %v7537, 4
  %v7543 = vshrl.u32 %v7111, 16
  %v7545 = vrot.slane %v7543, 7
  %v7546 = vshll.u32 %v7111, 16
  %v7548 = vor.u32 %v7545, %v7546
  %v7549 = vsel %vm157, %v7541, %v7548
  %v7550 = vrot.slane %v7545, 4
  %v7552 = vshrl.u32 %v7112, 16
  %v7554 = vrot.slane %v7552, 7
  %v7555 = vshll.u32 %v7112, 16
  %v7557 = vor.u32 %v7554, %v7555
  %v7558 = vrot.slane %v7554, 4
  %v7560 = vshrl.u32 %v7113, 16
  %v7562 = vrot.slane %v7560, 7
  %v7563 = vshll.u32 %v7113, 16
  %v7565 = vor.u32 %v7562, %v7563
  %v7566 = vsel %vm157, %v7558, %v7565
  %v7567 = vrot.slane %v7562, 4
  %v7569 = vshrl.u32 %v7114, 16
  %v7571 = vrot.slane %v7569, 7
  %v7572 = vshll.u32 %v7114, 16
  %v7574 = vor.u32 %v7571, %v7572
  %v7575 = vrot.slane %v7571, 4
  %v7577 = vshrl.u32 %v7115, 16
  %v7579 = vrot.slane %v7577, 7
  %v7580 = vshll.u32 %v7115, 16
  %v7582 = vor.u32 %v7579, %v7580
  %v7583 = vsel %vm157, %v7575, %v7582
  %v7584 = vrot.slane %v7579, 4
  %v7586 = vshrl.u32 %v7116, 16
  %v7588 = vrot.slane %v7586, 7
  %v7589 = vshll.u32 %v7116, 16
  %v7591 = vor.u32 %v7588, %v7589
  %v7592 = vrot.slane %v7588, 4
  %v7594 = vshrl.u32 %v7117, 16
  %v7596 = vrot.slane %v7594, 7
  %v7597 = vshll.u32 %v7117, 16
  %v7599 = vor.u32 %v7596, %v7597
  %v7600 = vsel %vm157, %v7592, %v7599
  %v7601 = vrot.slane %v7596, 4
  %v7603 = vshrl.u32 %v7118, 16
  %v7605 = vrot.slane %v7603, 7
  %v7606 = vshll.u32 %v7118, 16
  %v7608 = vor.u32 %v7605, %v7606
  %v7609 = vrot.slane %v7605, 4
  %v7611 = vshrl.u32 %v7119, 16
  %v7613 = vrot.slane %v7611, 7
  %v7614 = vshll.u32 %v7119, 16
  %v7616 = vor.u32 %v7613, %v7614
  %v7617 = vsel %vm157, %v7609, %v7616
  %v7618 = vrot.slane %v7613, 4
  %v7620 = vshrl.u32 %v7120, 16
  %v7622 = vrot.slane %v7620, 7
  %v7623 = vshll.u32 %v7120, 16
  %v7625 = vor.u32 %v7622, %v7623
  %v7626 = vrot.slane %v7622, 4
  %v7628 = vshrl.u32 %v7121, 16
  %v7630 = vrot.slane %v7628, 7
  %v7631 = vshll.u32 %v7121, 16
  %v7633 = vor.u32 %v7630, %v7631
  %v7634 = vsel %vm157, %v7626, %v7633
  %v7635 = vrot.slane %v7630, 4
  %v7637 = vshrl.u32 %v7122, 16
  %v7639 = vrot.slane %v7637, 7
  %v7640 = vshll.u32 %v7122, 16
  %v7642 = vor.u32 %v7639, %v7640
  %v7643 = vrot.slane %v7639, 4
  %v7645 = vshrl.u32 %v7123, 16
  %v7647 = vrot.slane %v7645, 7
  %v7648 = vshll.u32 %v7123, 16
  %v7650 = vor.u32 %v7647, %v7648
  %v7651 = vsel %vm157, %v7643, %v7650
  %v7652 = vrot.slane %v7647, 4
  %v7654 = vshrl.u32 %v7124, 16
  %v7656 = vrot.slane %v7654, 7
  %v7657 = vshll.u32 %v7124, 16
  %v7659 = vor.u32 %v7656, %v7657
  %v7660 = vrot.slane %v7656, 4
  %v7662 = vshrl.u32 %v7125, 16
  %v7664 = vrot.slane %v7662, 7
  %v7665 = vshll.u32 %v7125, 16
  %v7667 = vor.u32 %v7664, %v7665
  %v7668 = vsel %vm157, %v7660, %v7667
  %v7669 = vrot.slane %v7664, 4
  %s7766 = scalar_lea.vmem [#allocation3], 12
  %vm7767 = vcmask 60416
  %vm7768 = vmand %vm7767, %vm800
  %v7769 = vld [vmem:[%s7766] sm:$0xf]
  %v7770 = vsel %vm7768, %v7132, %v7769
  %7771 = vst [vmem:[%s7766] sm:$0xf] %v7770
  %vm7772 = vcmask 60416
  %7773 = vst.msk [vmem:[%s7766 + $0x4] sm:$0xf] %vm7772, %v7141
  %vm7774 = vcmask 57344
  %vm7775 = vmand %vm7774, %vm155
  %v7776 = vld [vmem:[%s7766 + $0x8] sm:$0x1]
  %v7777 = vsel %vm7775, %v7142, %v7776
  %7778 = vst [vmem:[%s7766 + $0x8] sm:$0x1] %v7777
  %v7779 = vld [vmem:[%s7766 + $0xc] sm:$0xf]
  %v7780 = vsel %vm7768, %v7149, %v7779
  %7781 = vst [vmem:[%s7766 + $0xc] sm:$0xf] %v7780
  %7782 = vst.msk [vmem:[%s7766 + $0x10] sm:$0xf] %vm7772, %v7158
  %v7783 = vld [vmem:[%s7766 + $0x14] sm:$0x1]
  %v7784 = vsel %vm7775, %v7159, %v7783
  %7785 = vst [vmem:[%s7766 + $0x14] sm:$0x1] %v7784
  %v7786 = vld [vmem:[%s7766 + $0x18] sm:$0xf]
  %v7787 = vsel %vm7768, %v7166, %v7786
  %7788 = vst [vmem:[%s7766 + $0x18] sm:$0xf] %v7787
  %7789 = vst.msk [vmem:[%s7766 + $0x1c] sm:$0xf] %vm7772, %v7175
  %v7790 = vld [vmem:[%s7766 + $0x20] sm:$0x1]
  %v7791 = vsel %vm7775, %v7176, %v7790
  %7792 = vst [vmem:[%s7766 + $0x20] sm:$0x1] %v7791
  %v7793 = vld [vmem:[%s7766 + $0x24] sm:$0xf]
  %v7794 = vsel %vm7768, %v7183, %v7793
  %7795 = vst [vmem:[%s7766 + $0x24] sm:$0xf] %v7794
  %7796 = vst.msk [vmem:[%s7766 + $0x28] sm:$0xf] %vm7772, %v7192
  %v7797 = vld [vmem:[%s7766 + $0x2c] sm:$0x1]
  %v7798 = vsel %vm7775, %v7193, %v7797
  %7799 = vst [vmem:[%s7766 + $0x2c] sm:$0x1] %v7798
  %v7800 = vld [vmem:[%s7766 + $0x30] sm:$0xf]
  %v7801 = vsel %vm7768, %v7200, %v7800
  %7802 = vst [vmem:[%s7766 + $0x30] sm:$0xf] %v7801
  %7803 = vst.msk [vmem:[%s7766 + $0x34] sm:$0xf] %vm7772, %v7209
  %v7804 = vld [vmem:[%s7766 + $0x38] sm:$0x1]
  %v7805 = vsel %vm7775, %v7210, %v7804
  %7806 = vst [vmem:[%s7766 + $0x38] sm:$0x1] %v7805
  %v7807 = vld [vmem:[%s7766 + $0x3c] sm:$0xf]
  %v7808 = vsel %vm7768, %v7217, %v7807
  %7809 = vst [vmem:[%s7766 + $0x3c] sm:$0xf] %v7808
  %7810 = vst.msk [vmem:[%s7766 + $0x40] sm:$0xf] %vm7772, %v7226
  %v7811 = vld [vmem:[%s7766 + $0x44] sm:$0x1]
  %v7812 = vsel %vm7775, %v7227, %v7811
  %7813 = vst [vmem:[%s7766 + $0x44] sm:$0x1] %v7812
  %v7814 = vld [vmem:[%s7766 + $0x48] sm:$0xf]
  %v7815 = vsel %vm7768, %v7234, %v7814
  %7816 = vst [vmem:[%s7766 + $0x48] sm:$0xf] %v7815
  %7817 = vst.msk [vmem:[%s7766 + $0x4c] sm:$0xf] %vm7772, %v7243
  %v7818 = vld [vmem:[%s7766 + $0x50] sm:$0x1]
  %v7819 = vsel %vm7775, %v7244, %v7818
  %7820 = vst [vmem:[%s7766 + $0x50] sm:$0x1] %v7819
  %v7821 = vld [vmem:[%s7766 + $0x54] sm:$0xf]
  %v7822 = vsel %vm7768, %v7251, %v7821
  %7823 = vst [vmem:[%s7766 + $0x54] sm:$0xf] %v7822
  %7824 = vst.msk [vmem:[%s7766 + $0x58] sm:$0xf] %vm7772, %v7260
  %v7825 = vld [vmem:[%s7766 + $0x5c] sm:$0x1]
  %v7826 = vsel %vm7775, %v7261, %v7825
  %7827 = vst [vmem:[%s7766 + $0x5c] sm:$0x1] %v7826
  %v7828 = vld [vmem:[%s7766 + $0x60] sm:$0xf]
  %v7829 = vsel %vm7768, %v7268, %v7828
  %7830 = vst [vmem:[%s7766 + $0x60] sm:$0xf] %v7829
  %7831 = vst.msk [vmem:[%s7766 + $0x64] sm:$0xf] %vm7772, %v7277
  %v7832 = vld [vmem:[%s7766 + $0x68] sm:$0x1]
  %v7833 = vsel %vm7775, %v7278, %v7832
  %7834 = vst [vmem:[%s7766 + $0x68] sm:$0x1] %v7833
  %v7835 = vld [vmem:[%s7766 + $0x6c] sm:$0xf]
  %v7836 = vsel %vm7768, %v7285, %v7835
  %7837 = vst [vmem:[%s7766 + $0x6c] sm:$0xf] %v7836
  %7838 = vst.msk [vmem:[%s7766 + $0x70] sm:$0xf] %vm7772, %v7294
  %v7839 = vld [vmem:[%s7766 + $0x74] sm:$0x1]
  %v7840 = vsel %vm7775, %v7295, %v7839
  %7841 = vst [vmem:[%s7766 + $0x74] sm:$0x1] %v7840
  %v7842 = vld [vmem:[%s7766 + $0x78] sm:$0xf]
  %v7843 = vsel %vm7768, %v7302, %v7842
  %7844 = vst [vmem:[%s7766 + $0x78] sm:$0xf] %v7843
  %7845 = vst.msk [vmem:[%s7766 + $0x7c] sm:$0xf] %vm7772, %v7311
  %v7846 = vld [vmem:[%s7766 + $0x80] sm:$0x1]
  %v7847 = vsel %vm7775, %v7312, %v7846
  %7848 = vst [vmem:[%s7766 + $0x80] sm:$0x1] %v7847
  %v7849 = vld [vmem:[%s7766 + $0x84] sm:$0xf]
  %v7850 = vsel %vm7768, %v7319, %v7849
  %7851 = vst [vmem:[%s7766 + $0x84] sm:$0xf] %v7850
  %7852 = vst.msk [vmem:[%s7766 + $0x88] sm:$0xf] %vm7772, %v7328
  %v7853 = vld [vmem:[%s7766 + $0x8c] sm:$0x1]
  %v7854 = vsel %vm7775, %v7329, %v7853
  %7855 = vst [vmem:[%s7766 + $0x8c] sm:$0x1] %v7854
  %v7856 = vld [vmem:[%s7766 + $0x90] sm:$0xf]
  %v7857 = vsel %vm7768, %v7336, %v7856
  %7858 = vst [vmem:[%s7766 + $0x90] sm:$0xf] %v7857
  %7859 = vst.msk [vmem:[%s7766 + $0x94] sm:$0xf] %vm7772, %v7345
  %v7860 = vld [vmem:[%s7766 + $0x98] sm:$0x1]
  %v7861 = vsel %vm7775, %v7346, %v7860
  %7862 = vst [vmem:[%s7766 + $0x98] sm:$0x1] %v7861
  %v7863 = vld [vmem:[%s7766 + $0x9c] sm:$0xf]
  %v7864 = vsel %vm7768, %v7353, %v7863
  %7865 = vst [vmem:[%s7766 + $0x9c] sm:$0xf] %v7864
  %7866 = vst.msk [vmem:[%s7766 + $0xa0] sm:$0xf] %vm7772, %v7362
  %v7867 = vld [vmem:[%s7766 + $0xa4] sm:$0x1]
  %v7868 = vsel %vm7775, %v7363, %v7867
  %7869 = vst [vmem:[%s7766 + $0xa4] sm:$0x1] %v7868
  %v7870 = vld [vmem:[%s7766 + $0xa8] sm:$0xf]
  %v7871 = vsel %vm7768, %v7370, %v7870
  %7872 = vst [vmem:[%s7766 + $0xa8] sm:$0xf] %v7871
  %7873 = vst.msk [vmem:[%s7766 + $0xac] sm:$0xf] %vm7772, %v7379
  %v7874 = vld [vmem:[%s7766 + $0xb0] sm:$0x1]
  %v7875 = vsel %vm7775, %v7380, %v7874
  %7876 = vst [vmem:[%s7766 + $0xb0] sm:$0x1] %v7875
  %v7877 = vld [vmem:[%s7766 + $0xb4] sm:$0xf]
  %v7878 = vsel %vm7768, %v7387, %v7877
  %7879 = vst [vmem:[%s7766 + $0xb4] sm:$0xf] %v7878
  %7880 = vst.msk [vmem:[%s7766 + $0xb8] sm:$0xf] %vm7772, %v7396
  %v7881 = vld [vmem:[%s7766 + $0xbc] sm:$0x1]
  %v7882 = vsel %vm7775, %v7397, %v7881
  %7883 = vst [vmem:[%s7766 + $0xbc] sm:$0x1] %v7882
  %v7884 = vld [vmem:[%s7766 + $0xd8] sm:$0xf]
  %v7885 = vsel %vm7768, %v7404, %v7884
  %7886 = vst [vmem:[%s7766 + $0xd8] sm:$0xf] %v7885
  %7887 = vst.msk [vmem:[%s7766 + $0xdc] sm:$0xf] %vm7772, %v7413
  %v7888 = vld [vmem:[%s7766 + $0xe0] sm:$0x1]
  %v7889 = vsel %vm7775, %v7414, %v7888
  %7890 = vst [vmem:[%s7766 + $0xe0] sm:$0x1] %v7889
  %v7891 = vld [vmem:[%s7766 + $0xe4] sm:$0xf]
  %v7892 = vsel %vm7768, %v7421, %v7891
  %7893 = vst [vmem:[%s7766 + $0xe4] sm:$0xf] %v7892
  %7894 = vst.msk [vmem:[%s7766 + $0xe8] sm:$0xf] %vm7772, %v7430
  %v7895 = vld [vmem:[%s7766 + $0xec] sm:$0x1]
  %v7896 = vsel %vm7775, %v7431, %v7895
  %7897 = vst [vmem:[%s7766 + $0xec] sm:$0x1] %v7896
  %v7898 = vld [vmem:[%s7766 + $0xf0] sm:$0xf]
  %v7899 = vsel %vm7768, %v7438, %v7898
  %7900 = vst [vmem:[%s7766 + $0xf0] sm:$0xf] %v7899
  %7901 = vst.msk [vmem:[%s7766 + $0xf4] sm:$0xf] %vm7772, %v7447
  %v7902 = vld [vmem:[%s7766 + $0xf8] sm:$0x1]
  %v7903 = vsel %vm7775, %v7448, %v7902
  %7904 = vst [vmem:[%s7766 + $0xf8] sm:$0x1] %v7903
  %v7905 = vld [vmem:[%s7766 + $0xfc] sm:$0xf]
  %v7906 = vsel %vm7768, %v7455, %v7905
  %7907 = vst [vmem:[%s7766 + $0xfc] sm:$0xf] %v7906
  %7908 = vst.msk [vmem:[%s7766 + $0x100] sm:$0xf] %vm7772, %v7464
  %v7909 = vld [vmem:[%s7766 + $0x104] sm:$0x1]
  %v7910 = vsel %vm7775, %v7465, %v7909
  %7911 = vst [vmem:[%s7766 + $0x104] sm:$0x1] %v7910
  %v7912 = vld [vmem:[%s7766 + $0x108] sm:$0xf]
  %v7913 = vsel %vm7768, %v7472, %v7912
  %7914 = vst [vmem:[%s7766 + $0x108] sm:$0xf] %v7913
  %7915 = vst.msk [vmem:[%s7766 + $0x10c] sm:$0xf] %vm7772, %v7481
  %v7916 = vld [vmem:[%s7766 + $0x110] sm:$0x1]
  %v7917 = vsel %vm7775, %v7482, %v7916
  %7918 = vst [vmem:[%s7766 + $0x110] sm:$0x1] %v7917
  %v7919 = vld [vmem:[%s7766 + $0x114] sm:$0xf]
  %v7920 = vsel %vm7768, %v7489, %v7919
  %7921 = vst [vmem:[%s7766 + $0x114] sm:$0xf] %v7920
  %7922 = vst.msk [vmem:[%s7766 + $0x118] sm:$0xf] %vm7772, %v7498
  %v7923 = vld [vmem:[%s7766 + $0x11c] sm:$0x1]
  %v7924 = vsel %vm7775, %v7499, %v7923
  %7925 = vst [vmem:[%s7766 + $0x11c] sm:$0x1] %v7924
  %v7926 = vld [vmem:[%s7766 + $0x120] sm:$0xf]
  %v7927 = vsel %vm7768, %v7506, %v7926
  %7928 = vst [vmem:[%s7766 + $0x120] sm:$0xf] %v7927
  %7929 = vst.msk [vmem:[%s7766 + $0x124] sm:$0xf] %vm7772, %v7515
  %v7930 = vld [vmem:[%s7766 + $0x128] sm:$0x1]
  %v7931 = vsel %vm7775, %v7516, %v7930
  %7932 = vst [vmem:[%s7766 + $0x128] sm:$0x1] %v7931
  %v7933 = vld [vmem:[%s7766 + $0x12c] sm:$0xf]
  %v7934 = vsel %vm7768, %v7523, %v7933
  %7935 = vst [vmem:[%s7766 + $0x12c] sm:$0xf] %v7934
  %7936 = vst.msk [vmem:[%s7766 + $0x130] sm:$0xf] %vm7772, %v7532
  %v7937 = vld [vmem:[%s7766 + $0x134] sm:$0x1]
  %v7938 = vsel %vm7775, %v7533, %v7937
  %7939 = vst [vmem:[%s7766 + $0x134] sm:$0x1] %v7938
  %v7940 = vld [vmem:[%s7766 + $0x138] sm:$0xf]
  %v7941 = vsel %vm7768, %v7540, %v7940
  %7942 = vst [vmem:[%s7766 + $0x138] sm:$0xf] %v7941
  %7943 = vst.msk [vmem:[%s7766 + $0x13c] sm:$0xf] %vm7772, %v7549
  %v7944 = vld [vmem:[%s7766 + $0x140] sm:$0x1]
  %v7945 = vsel %vm7775, %v7550, %v7944
  %7946 = vst [vmem:[%s7766 + $0x140] sm:$0x1] %v7945
  %v7947 = vld [vmem:[%s7766 + $0x144] sm:$0xf]
  %v7948 = vsel %vm7768, %v7557, %v7947
  %7949 = vst [vmem:[%s7766 + $0x144] sm:$0xf] %v7948
  %7950 = vst.msk [vmem:[%s7766 + $0x148] sm:$0xf] %vm7772, %v7566
  %v7951 = vld [vmem:[%s7766 + $0x14c] sm:$0x1]
  %v7952 = vsel %vm7775, %v7567, %v7951
  %7953 = vst [vmem:[%s7766 + $0x14c] sm:$0x1] %v7952
  %v7954 = vld [vmem:[%s7766 + $0x150] sm:$0xf]
  %v7955 = vsel %vm7768, %v7574, %v7954
  %7956 = vst [vmem:[%s7766 + $0x150] sm:$0xf] %v7955
  %7957 = vst.msk [vmem:[%s7766 + $0x154] sm:$0xf] %vm7772, %v7583
  %v7958 = vld [vmem:[%s7766 + $0x158] sm:$0x1]
  %v7959 = vsel %vm7775, %v7584, %v7958
  %7960 = vst [vmem:[%s7766 + $0x158] sm:$0x1] %v7959
  %v7961 = vld [vmem:[%s7766 + $0x15c] sm:$0xf]
  %v7962 = vsel %vm7768, %v7591, %v7961
  %7963 = vst [vmem:[%s7766 + $0x15c] sm:$0xf] %v7962
  %7964 = vst.msk [vmem:[%s7766 + $0x160] sm:$0xf] %vm7772, %v7600
  %v7965 = vld [vmem:[%s7766 + $0x164] sm:$0x1]
  %v7966 = vsel %vm7775, %v7601, %v7965
  %7967 = vst [vmem:[%s7766 + $0x164] sm:$0x1] %v7966
  %v7968 = vld [vmem:[%s7766 + $0x168] sm:$0xf]
  %v7969 = vsel %vm7768, %v7608, %v7968
  %7970 = vst [vmem:[%s7766 + $0x168] sm:$0xf] %v7969
  %7971 = vst.msk [vmem:[%s7766 + $0x16c] sm:$0xf] %vm7772, %v7617
  %v7972 = vld [vmem:[%s7766 + $0x170] sm:$0x1]
  %v7973 = vsel %vm7775, %v7618, %v7972
  %7974 = vst [vmem:[%s7766 + $0x170] sm:$0x1] %v7973
  %v7975 = vld [vmem:[%s7766 + $0x174] sm:$0xf]
  %v7976 = vsel %vm7768, %v7625, %v7975
  %7977 = vst [vmem:[%s7766 + $0x174] sm:$0xf] %v7976
  %7978 = vst.msk [vmem:[%s7766 + $0x178] sm:$0xf] %vm7772, %v7634
  %v7979 = vld [vmem:[%s7766 + $0x17c] sm:$0x1]
  %v7980 = vsel %vm7775, %v7635, %v7979
  %7981 = vst [vmem:[%s7766 + $0x17c] sm:$0x1] %v7980
  %v7982 = vld [vmem:[%s7766 + $0x180] sm:$0xf]
  %v7983 = vsel %vm7768, %v7642, %v7982
  %7984 = vst [vmem:[%s7766 + $0x180] sm:$0xf] %v7983
  %7985 = vst.msk [vmem:[%s7766 + $0x184] sm:$0xf] %vm7772, %v7651
  %v7986 = vld [vmem:[%s7766 + $0x188] sm:$0x1]
  %v7987 = vsel %vm7775, %v7652, %v7986
  %7988 = vst [vmem:[%s7766 + $0x188] sm:$0x1] %v7987
  %v7989 = vld [vmem:[%s7766 + $0x18c] sm:$0xf]
  %v7990 = vsel %vm7768, %v7659, %v7989
  %7991 = vst [vmem:[%s7766 + $0x18c] sm:$0xf] %v7990
  %7992 = vst.msk [vmem:[%s7766 + $0x190] sm:$0xf] %vm7772, %v7668
  %v7993 = vld [vmem:[%s7766 + $0x194] sm:$0x1]
  %v7994 = vsel %vm7775, %v7669, %v7993
  %7995 = vst [vmem:[%s7766 + $0x194] sm:$0x1] %v7994
  %7996 = vst.msk [vmem:[#allocation3] sm:$0xf] %vm7772, 0
  %7997 = vst.msk [vmem:[#allocation3 + $0x4] sm:$0xf] %vm7772, 0
  %vm7998 = vcmask 57344
  %7999 = vst.msk [vmem:[#allocation3 + $0x8] sm:$0x1] %vm7998, 0
  %8000 = vst.msk [vmem:[#allocation3 + $0xd8] sm:$0xf] %vm7772, 0
  %8001 = vst.msk [vmem:[#allocation3 + $0xdc] sm:$0xf] %vm7772, 0
  %8002 = vst.msk [vmem:[#allocation3 + $0xe0] sm:$0x1] %vm7998, 0
  %s8003 = scalar_lea.vmem [#allocation3], 204
  %8004 = vst.msk [vmem:[%s8003] sm:$0xf] %vm7772, 0
  %8005 = vst.msk [vmem:[%s8003 + $0x4] sm:$0xf] %vm7772, 0
  %8006 = vst.msk [vmem:[%s8003 + $0x8] sm:$0x1] %vm7998, 0
  %8007 = vst.msk [vmem:[%s8003 + $0xd8] sm:$0xf] %vm7772, 0
  %8008 = vst.msk [vmem:[%s8003 + $0xdc] sm:$0xf] %vm7772, 0
  %8009 = vst.msk [vmem:[%s8003 + $0xe0] sm:$0x1] %vm7998, 0
  %v8010 = vld [vmem:[%s7766] sm:$0x1]
  %v8011 = vsel %vm7775, 0, %v8010
  %8012 = vst [vmem:[%s7766] sm:$0x1] %v8011
  %v8013 = vld [vmem:[%s7766 + $0xc] sm:$0x1]
  %v8014 = vsel %vm7775, 0, %v8013
  %8015 = vst [vmem:[%s7766 + $0xc] sm:$0x1] %v8014
  %v8016 = vld [vmem:[%s7766 + $0x18] sm:$0x1]
  %v8017 = vsel %vm7775, 0, %v8016
  %8018 = vst [vmem:[%s7766 + $0x18] sm:$0x1] %v8017
  %v8019 = vld [vmem:[%s7766 + $0x24] sm:$0x1]
  %v8020 = vsel %vm7775, 0, %v8019
  %8021 = vst [vmem:[%s7766 + $0x24] sm:$0x1] %v8020
  %v8022 = vld [vmem:[%s7766 + $0x30] sm:$0x1]
  %v8023 = vsel %vm7775, 0, %v8022
  %8024 = vst [vmem:[%s7766 + $0x30] sm:$0x1] %v8023
  %v8025 = vld [vmem:[%s7766 + $0x3c] sm:$0x1]
  %v8026 = vsel %vm7775, 0, %v8025
  %8027 = vst [vmem:[%s7766 + $0x3c] sm:$0x1] %v8026
  %v8028 = vld [vmem:[%s7766 + $0x48] sm:$0x1]
  %v8029 = vsel %vm7775, 0, %v8028
  %8030 = vst [vmem:[%s7766 + $0x48] sm:$0x1] %v8029
  %v8031 = vld [vmem:[%s7766 + $0x54] sm:$0x1]
  %v8032 = vsel %vm7775, 0, %v8031
  %8033 = vst [vmem:[%s7766 + $0x54] sm:$0x1] %v8032
  %v8034 = vld [vmem:[%s7766 + $0x60] sm:$0x1]
  %v8035 = vsel %vm7775, 0, %v8034
  %8036 = vst [vmem:[%s7766 + $0x60] sm:$0x1] %v8035
  %v8037 = vld [vmem:[%s7766 + $0x6c] sm:$0x1]
  %v8038 = vsel %vm7775, 0, %v8037
  %8039 = vst [vmem:[%s7766 + $0x6c] sm:$0x1] %v8038
  %v8040 = vld [vmem:[%s7766 + $0x78] sm:$0x1]
  %v8041 = vsel %vm7775, 0, %v8040
  %8042 = vst [vmem:[%s7766 + $0x78] sm:$0x1] %v8041
  %v8043 = vld [vmem:[%s7766 + $0x84] sm:$0x1]
  %v8044 = vsel %vm7775, 0, %v8043
  %8045 = vst [vmem:[%s7766 + $0x84] sm:$0x1] %v8044
  %v8046 = vld [vmem:[%s7766 + $0x90] sm:$0x1]
  %v8047 = vsel %vm7775, 0, %v8046
  %8048 = vst [vmem:[%s7766 + $0x90] sm:$0x1] %v8047
  %v8049 = vld [vmem:[%s7766 + $0x9c] sm:$0x1]
  %v8050 = vsel %vm7775, 0, %v8049
  %8051 = vst [vmem:[%s7766 + $0x9c] sm:$0x1] %v8050
  %v8052 = vld [vmem:[%s7766 + $0xa8] sm:$0x1]
  %v8053 = vsel %vm7775, 0, %v8052
  %8054 = vst [vmem:[%s7766 + $0xa8] sm:$0x1] %v8053
  %v8055 = vld [vmem:[%s7766 + $0xb4] sm:$0x1]
  %v8056 = vsel %vm7775, 0, %v8055
  %8057 = vst [vmem:[%s7766 + $0xb4] sm:$0x1] %v8056
  %v8058 = vld [vmem:[%s7766 + $0xd8] sm:$0x1]
  %v8059 = vsel %vm7775, 0, %v8058
  %8060 = vst [vmem:[%s7766 + $0xd8] sm:$0x1] %v8059
  %v8061 = vld [vmem:[%s7766 + $0xe4] sm:$0x1]
  %v8062 = vsel %vm7775, 0, %v8061
  %8063 = vst [vmem:[%s7766 + $0xe4] sm:$0x1] %v8062
  %v8064 = vld [vmem:[%s7766 + $0xf0] sm:$0x1]
  %v8065 = vsel %vm7775, 0, %v8064
  %8066 = vst [vmem:[%s7766 + $0xf0] sm:$0x1] %v8065
  %v8067 = vld [vmem:[%s7766 + $0xfc] sm:$0x1]
  %v8068 = vsel %vm7775, 0, %v8067
  %8069 = vst [vmem:[%s7766 + $0xfc] sm:$0x1] %v8068
  %v8070 = vld [vmem:[%s7766 + $0x108] sm:$0x1]
  %v8071 = vsel %vm7775, 0, %v8070
  %8072 = vst [vmem:[%s7766 + $0x108] sm:$0x1] %v8071
  %v8073 = vld [vmem:[%s7766 + $0x114] sm:$0x1]
  %v8074 = vsel %vm7775, 0, %v8073
  %8075 = vst [vmem:[%s7766 + $0x114] sm:$0x1] %v8074
  %v8076 = vld [vmem:[%s7766 + $0x120] sm:$0x1]
  %v8077 = vsel %vm7775, 0, %v8076
  %8078 = vst [vmem:[%s7766 + $0x120] sm:$0x1] %v8077
  %v8079 = vld [vmem:[%s7766 + $0x12c] sm:$0x1]
  %v8080 = vsel %vm7775, 0, %v8079
  %8081 = vst [vmem:[%s7766 + $0x12c] sm:$0x1] %v8080
  %v8082 = vld [vmem:[%s7766 + $0x138] sm:$0x1]
  %v8083 = vsel %vm7775, 0, %v8082
  %8084 = vst [vmem:[%s7766 + $0x138] sm:$0x1] %v8083
  %v8085 = vld [vmem:[%s7766 + $0x144] sm:$0x1]
  %v8086 = vsel %vm7775, 0, %v8085
  %8087 = vst [vmem:[%s7766 + $0x144] sm:$0x1] %v8086
  %v8088 = vld [vmem:[%s7766 + $0x150] sm:$0x1]
  %v8089 = vsel %vm7775, 0, %v8088
  %8090 = vst [vmem:[%s7766 + $0x150] sm:$0x1] %v8089
  %v8091 = vld [vmem:[%s7766 + $0x15c] sm:$0x1]
  %v8092 = vsel %vm7775, 0, %v8091
  %8093 = vst [vmem:[%s7766 + $0x15c] sm:$0x1] %v8092
  %v8094 = vld [vmem:[%s7766 + $0x168] sm:$0x1]
  %v8095 = vsel %vm7775, 0, %v8094
  %8096 = vst [vmem:[%s7766 + $0x168] sm:$0x1] %v8095
  %v8097 = vld [vmem:[%s7766 + $0x174] sm:$0x1]
  %v8098 = vsel %vm7775, 0, %v8097
  %8099 = vst [vmem:[%s7766 + $0x174] sm:$0x1] %v8098
  %v8100 = vld [vmem:[%s7766 + $0x180] sm:$0x1]
  %v8101 = vsel %vm7775, 0, %v8100
  %8102 = vst [vmem:[%s7766 + $0x180] sm:$0x1] %v8101
  %v8103 = vld [vmem:[%s7766 + $0x18c] sm:$0x1]
  %v8104 = vsel %vm7775, 0, %v8103
  %8105 = vst [vmem:[%s7766 + $0x18c] sm:$0x1] %v8104
  %vm8106 = vmand %vm7774, %vm800
  %v8107 = vld [vmem:[%s7766 + $0x8] sm:$0x1]
  %v8108 = vsel %vm8106, 0, %v8107
  %8109 = vst [vmem:[%s7766 + $0x8] sm:$0x1] %v8108
  %v8110 = vld [vmem:[%s7766 + $0x14] sm:$0x1]
  %v8111 = vsel %vm8106, 0, %v8110
  %8112 = vst [vmem:[%s7766 + $0x14] sm:$0x1] %v8111
  %v8113 = vld [vmem:[%s7766 + $0x20] sm:$0x1]
  %v8114 = vsel %vm8106, 0, %v8113
  %8115 = vst [vmem:[%s7766 + $0x20] sm:$0x1] %v8114
  %v8116 = vld [vmem:[%s7766 + $0x2c] sm:$0x1]
  %v8117 = vsel %vm8106, 0, %v8116
  %8118 = vst [vmem:[%s7766 + $0x2c] sm:$0x1] %v8117
  %v8119 = vld [vmem:[%s7766 + $0x38] sm:$0x1]
  %v8120 = vsel %vm8106, 0, %v8119
  %8121 = vst [vmem:[%s7766 + $0x38] sm:$0x1] %v8120
  %v8122 = vld [vmem:[%s7766 + $0x44] sm:$0x1]
  %v8123 = vsel %vm8106, 0, %v8122
  %8124 = vst [vmem:[%s7766 + $0x44] sm:$0x1] %v8123
  %v8125 = vld [vmem:[%s7766 + $0x50] sm:$0x1]
  %v8126 = vsel %vm8106, 0, %v8125
  %8127 = vst [vmem:[%s7766 + $0x50] sm:$0x1] %v8126
  %v8128 = vld [vmem:[%s7766 + $0x5c] sm:$0x1]
  %v8129 = vsel %vm8106, 0, %v8128
  %8130 = vst [vmem:[%s7766 + $0x5c] sm:$0x1] %v8129
  %v8131 = vld [vmem:[%s7766 + $0x68] sm:$0x1]
  %v8132 = vsel %vm8106, 0, %v8131
  %8133 = vst [vmem:[%s7766 + $0x68] sm:$0x1] %v8132
  %v8134 = vld [vmem:[%s7766 + $0x74] sm:$0x1]
  %v8135 = vsel %vm8106, 0, %v8134
  %8136 = vst [vmem:[%s7766 + $0x74] sm:$0x1] %v8135
  %v8137 = vld [vmem:[%s7766 + $0x80] sm:$0x1]
  %v8138 = vsel %vm8106, 0, %v8137
  %8139 = vst [vmem:[%s7766 + $0x80] sm:$0x1] %v8138
  %v8140 = vld [vmem:[%s7766 + $0x8c] sm:$0x1]
  %v8141 = vsel %vm8106, 0, %v8140
  %8142 = vst [vmem:[%s7766 + $0x8c] sm:$0x1] %v8141
  %v8143 = vld [vmem:[%s7766 + $0x98] sm:$0x1]
  %v8144 = vsel %vm8106, 0, %v8143
  %8145 = vst [vmem:[%s7766 + $0x98] sm:$0x1] %v8144
  %v8146 = vld [vmem:[%s7766 + $0xa4] sm:$0x1]
  %v8147 = vsel %vm8106, 0, %v8146
  %8148 = vst [vmem:[%s7766 + $0xa4] sm:$0x1] %v8147
  %v8149 = vld [vmem:[%s7766 + $0xb0] sm:$0x1]
  %v8150 = vsel %vm8106, 0, %v8149
  %8151 = vst [vmem:[%s7766 + $0xb0] sm:$0x1] %v8150
  %v8152 = vld [vmem:[%s7766 + $0xbc] sm:$0x1]
  %v8153 = vsel %vm8106, 0, %v8152
  %8154 = vst [vmem:[%s7766 + $0xbc] sm:$0x1] %v8153
  %v8155 = vld [vmem:[%s7766 + $0xe0] sm:$0x1]
  %v8156 = vsel %vm8106, 0, %v8155
  %8157 = vst [vmem:[%s7766 + $0xe0] sm:$0x1] %v8156
  %v8158 = vld [vmem:[%s7766 + $0xec] sm:$0x1]
  %v8159 = vsel %vm8106, 0, %v8158
  %8160 = vst [vmem:[%s7766 + $0xec] sm:$0x1] %v8159
  %v8161 = vld [vmem:[%s7766 + $0xf8] sm:$0x1]
  %v8162 = vsel %vm8106, 0, %v8161
  %8163 = vst [vmem:[%s7766 + $0xf8] sm:$0x1] %v8162
  %v8164 = vld [vmem:[%s7766 + $0x104] sm:$0x1]
  %v8165 = vsel %vm8106, 0, %v8164
  %8166 = vst [vmem:[%s7766 + $0x104] sm:$0x1] %v8165
  %v8167 = vld [vmem:[%s7766 + $0x110] sm:$0x1]
  %v8168 = vsel %vm8106, 0, %v8167
  %8169 = vst [vmem:[%s7766 + $0x110] sm:$0x1] %v8168
  %v8170 = vld [vmem:[%s7766 + $0x11c] sm:$0x1]
  %v8171 = vsel %vm8106, 0, %v8170
  %8172 = vst [vmem:[%s7766 + $0x11c] sm:$0x1] %v8171
  %v8173 = vld [vmem:[%s7766 + $0x128] sm:$0x1]
  %v8174 = vsel %vm8106, 0, %v8173
  %8175 = vst [vmem:[%s7766 + $0x128] sm:$0x1] %v8174
  %v8176 = vld [vmem:[%s7766 + $0x134] sm:$0x1]
  %v8177 = vsel %vm8106, 0, %v8176
  %8178 = vst [vmem:[%s7766 + $0x134] sm:$0x1] %v8177
  %v8179 = vld [vmem:[%s7766 + $0x140] sm:$0x1]
  %v8180 = vsel %vm8106, 0, %v8179
  %8181 = vst [vmem:[%s7766 + $0x140] sm:$0x1] %v8180
  %v8182 = vld [vmem:[%s7766 + $0x14c] sm:$0x1]
  %v8183 = vsel %vm8106, 0, %v8182
  %8184 = vst [vmem:[%s7766 + $0x14c] sm:$0x1] %v8183
  %v8185 = vld [vmem:[%s7766 + $0x158] sm:$0x1]
  %v8186 = vsel %vm8106, 0, %v8185
  %8187 = vst [vmem:[%s7766 + $0x158] sm:$0x1] %v8186
  %v8188 = vld [vmem:[%s7766 + $0x164] sm:$0x1]
  %v8189 = vsel %vm8106, 0, %v8188
  %8190 = vst [vmem:[%s7766 + $0x164] sm:$0x1] %v8189
  %v8191 = vld [vmem:[%s7766 + $0x170] sm:$0x1]
  %v8192 = vsel %vm8106, 0, %v8191
  %8193 = vst [vmem:[%s7766 + $0x170] sm:$0x1] %v8192
  %v8194 = vld [vmem:[%s7766 + $0x17c] sm:$0x1]
  %v8195 = vsel %vm8106, 0, %v8194
  %8196 = vst [vmem:[%s7766 + $0x17c] sm:$0x1] %v8195
  %v8197 = vld [vmem:[%s7766 + $0x188] sm:$0x1]
  %v8198 = vsel %vm8106, 0, %v8197
  %8199 = vst [vmem:[%s7766 + $0x188] sm:$0x1] %v8198
  %v8200 = vld [vmem:[%s7766 + $0x194] sm:$0x1]
  %v8201 = vsel %vm8106, 0, %v8200
  %8202 = vst [vmem:[%s7766 + $0x194] sm:$0x1] %v8201
  %v8203 = vld [vmem:[#allocation3] sm:$0xf]
  %v8204 = vld [vmem:[#allocation3 + $0x4] sm:$0xf]
  %v8205 = vld [vmem:[#allocation3 + $0x8] sm:$0x1]
  %v8206 = vld [vmem:[#allocation3 + $0xc] sm:$0xf]
  %v8207 = vld [vmem:[#allocation3 + $0x10] sm:$0xf]
  %v8208 = vld [vmem:[#allocation3 + $0x14] sm:$0x1]
  %v8209 = vld [vmem:[#allocation3 + $0x18] sm:$0xf]
  %v8210 = vld [vmem:[#allocation3 + $0x1c] sm:$0xf]
  %v8211 = vld [vmem:[#allocation3 + $0x20] sm:$0x1]
  %v8212 = vld [vmem:[#allocation3 + $0x24] sm:$0xf]
  %v8213 = vld [vmem:[#allocation3 + $0x28] sm:$0xf]
  %v8214 = vld [vmem:[#allocation3 + $0x2c] sm:$0x1]
  %v8215 = vld [vmem:[#allocation3 + $0x30] sm:$0xf]
  %v8216 = vld [vmem:[#allocation3 + $0x34] sm:$0xf]
  %v8217 = vld [vmem:[#allocation3 + $0x38] sm:$0x1]
  %v8218 = vld [vmem:[#allocation3 + $0x3c] sm:$0xf]
  %v8219 = vld [vmem:[#allocation3 + $0x40] sm:$0xf]
  %v8220 = vld [vmem:[#allocation3 + $0x44] sm:$0x1]
  %v8221 = vld [vmem:[#allocation3 + $0x48] sm:$0xf]
  %v8222 = vld [vmem:[#allocation3 + $0x4c] sm:$0xf]
  %v8223 = vld [vmem:[#allocation3 + $0x50] sm:$0x1]
  %v8224 = vld [vmem:[#allocation3 + $0x54] sm:$0xf]
  %v8225 = vld [vmem:[#allocation3 + $0x58] sm:$0xf]
  %v8226 = vld [vmem:[#allocation3 + $0x5c] sm:$0x1]
  %v8227 = vld [vmem:[#allocation3 + $0x60] sm:$0xf]
  %v8228 = vld [vmem:[#allocation3 + $0x64] sm:$0xf]
  %v8229 = vld [vmem:[#allocation3 + $0x68] sm:$0x1]
  %v8230 = vld [vmem:[#allocation3 + $0x6c] sm:$0xf]
  %v8231 = vld [vmem:[#allocation3 + $0x70] sm:$0xf]
  %v8232 = vld [vmem:[#allocation3 + $0x74] sm:$0x1]
  %v8233 = vld [vmem:[#allocation3 + $0x78] sm:$0xf]
  %v8234 = vld [vmem:[#allocation3 + $0x7c] sm:$0xf]
  %v8235 = vld [vmem:[#allocation3 + $0x80] sm:$0x1]
  %v8236 = vld [vmem:[#allocation3 + $0x84] sm:$0xf]
  %v8237 = vld [vmem:[#allocation3 + $0x88] sm:$0xf]
  %v8238 = vld [vmem:[#allocation3 + $0x8c] sm:$0x1]
  %v8239 = vld [vmem:[#allocation3 + $0x90] sm:$0xf]
  %v8240 = vld [vmem:[#allocation3 + $0x94] sm:$0xf]
  %v8241 = vld [vmem:[#allocation3 + $0x98] sm:$0x1]
  %v8242 = vld [vmem:[#allocation3 + $0x9c] sm:$0xf]
  %v8243 = vld [vmem:[#allocation3 + $0xa0] sm:$0xf]
  %v8244 = vld [vmem:[#allocation3 + $0xa4] sm:$0x1]
  %v8245 = vld [vmem:[#allocation3 + $0xa8] sm:$0xf]
  %v8246 = vld [vmem:[#allocation3 + $0xac] sm:$0xf]
  %v8247 = vld [vmem:[#allocation3 + $0xb0] sm:$0x1]
  %v8248 = vld [vmem:[#allocation3 + $0xb4] sm:$0xf]
  %v8249 = vld [vmem:[#allocation3 + $0xb8] sm:$0xf]
  %v8250 = vld [vmem:[#allocation3 + $0xbc] sm:$0x1]
  %v8251 = vld [vmem:[#allocation3 + $0xc0] sm:$0xf]
  %v8252 = vld [vmem:[#allocation3 + $0xc4] sm:$0xf]
  %v8253 = vld [vmem:[#allocation3 + $0xc8] sm:$0x1]
  %v8254 = vld [vmem:[#allocation3 + $0xcc] sm:$0xf]
  %v8255 = vld [vmem:[#allocation3 + $0xd0] sm:$0xf]
  %v8256 = vld [vmem:[#allocation3 + $0xd4] sm:$0x1]
  %v8257 = vld [vmem:[#allocation3 + $0xd8] sm:$0xf]
  %v8258 = vld [vmem:[#allocation3 + $0xdc] sm:$0xf]
  %v8259 = vld [vmem:[#allocation3 + $0xe0] sm:$0x1]
  %v8260 = vld [vmem:[#allocation3 + $0xe4] sm:$0xf]
  %v8261 = vld [vmem:[#allocation3 + $0xe8] sm:$0xf]
  %v8262 = vld [vmem:[#allocation3 + $0xec] sm:$0x1]
  %v8263 = vld [vmem:[#allocation3 + $0xf0] sm:$0xf]
  %v8264 = vld [vmem:[#allocation3 + $0xf4] sm:$0xf]
  %v8265 = vld [vmem:[#allocation3 + $0xf8] sm:$0x1]
  %v8266 = vld [vmem:[#allocation3 + $0xfc] sm:$0xf]
  %v8267 = vld [vmem:[#allocation3 + $0x100] sm:$0xf]
  %v8268 = vld [vmem:[#allocation3 + $0x104] sm:$0x1]
  %v8269 = vld [vmem:[#allocation3 + $0x108] sm:$0xf]
  %v8270 = vld [vmem:[#allocation3 + $0x10c] sm:$0xf]
  %v8271 = vld [vmem:[#allocation3 + $0x110] sm:$0x1]
  %v8272 = vld [vmem:[#allocation3 + $0x114] sm:$0xf]
  %v8273 = vld [vmem:[#allocation3 + $0x118] sm:$0xf]
  %v8274 = vld [vmem:[#allocation3 + $0x11c] sm:$0x1]
  %v8275 = vld [vmem:[#allocation3 + $0x120] sm:$0xf]
  %v8276 = vld [vmem:[#allocation3 + $0x124] sm:$0xf]
  %v8277 = vld [vmem:[#allocation3 + $0x128] sm:$0x1]
  %v8278 = vld [vmem:[#allocation3 + $0x12c] sm:$0xf]
  %v8279 = vld [vmem:[#allocation3 + $0x130] sm:$0xf]
  %v8280 = vld [vmem:[#allocation3 + $0x134] sm:$0x1]
  %v8281 = vld [vmem:[#allocation3 + $0x138] sm:$0xf]
  %v8282 = vld [vmem:[#allocation3 + $0x13c] sm:$0xf]
  %v8283 = vld [vmem:[#allocation3 + $0x140] sm:$0x1]
  %v8284 = vld [vmem:[#allocation3 + $0x144] sm:$0xf]
  %v8285 = vld [vmem:[#allocation3 + $0x148] sm:$0xf]
  %v8286 = vld [vmem:[#allocation3 + $0x14c] sm:$0x1]
  %v8287 = vld [vmem:[#allocation3 + $0x150] sm:$0xf]
  %v8288 = vld [vmem:[#allocation3 + $0x154] sm:$0xf]
  %v8289 = vld [vmem:[#allocation3 + $0x158] sm:$0x1]
  %v8290 = vld [vmem:[#allocation3 + $0x15c] sm:$0xf]
  %v8291 = vld [vmem:[#allocation3 + $0x160] sm:$0xf]
  %v8292 = vld [vmem:[#allocation3 + $0x164] sm:$0x1]
  %v8293 = vld [vmem:[#allocation3 + $0x168] sm:$0xf]
  %v8294 = vld [vmem:[#allocation3 + $0x16c] sm:$0xf]
  %v8295 = vld [vmem:[#allocation3 + $0x170] sm:$0x1]
  %v8296 = vld [vmem:[#allocation3 + $0x174] sm:$0xf]
  %v8297 = vld [vmem:[#allocation3 + $0x178] sm:$0xf]
  %v8298 = vld [vmem:[#allocation3 + $0x17c] sm:$0x1]
  %v8299 = vld [vmem:[#allocation3 + $0x180] sm:$0xf]
  %v8300 = vld [vmem:[#allocation3 + $0x184] sm:$0xf]
  %v8301 = vld [vmem:[#allocation3 + $0x188] sm:$0x1]
  %v8302 = vld [vmem:[#allocation3 + $0x18c] sm:$0xf]
  %v8303 = vld [vmem:[#allocation3 + $0x190] sm:$0xf]
  %v8304 = vld [vmem:[#allocation3 + $0x194] sm:$0x1]
  %v8305 = vld [vmem:[#allocation3 + $0x198] sm:$0xf]
  %v8306 = vld [vmem:[#allocation3 + $0x19c] sm:$0xf]
  %v8307 = vld [vmem:[#allocation3 + $0x1a0] sm:$0x1]
  %v8308 = vld [vmem:[#allocation3 + $0x1a4] sm:$0xf]
  %v8309 = vld [vmem:[#allocation3 + $0x1a8] sm:$0xf]
  %v8310 = vld [vmem:[#allocation3 + $0x1ac] sm:$0x1]
  %v8311 = vld [vmem:[%s4] sm:$0xf]
  %v8313 = vshrl.u32 %v8203, 16
  %v8315 = vrot.slane %v8313, 4
  %v8316 = vshll.u32 %v8203, 16
  %v8318 = vrot.slane %v8316, 5
  %v8319 = vor.u32 %v8315, %v8318
  %v8320 = vrot.slane %v8319, 4
  %v8322 = vshll.u32 %v8204, 16
  %v8324 = vrot.slane %v8322, 5
  %v8325 = vsel %vm1347, %v8320, %v8324
  %v8326 = vshrl.u32 %v8204, 16
  %v8328 = vrot.slane %v8326, 4
  %v8329 = vor.u32 %v8328, %v8324
  %v8330 = vrot.slane %v8329, 4
  %v8332 = vshll.u32 %v8205, 16
  %v8334 = vrot.slane %v8332, 5
  %v8335 = vsel %vm1347, %v8330, %v8334
  %v8337 = vshrl.u32 %v8206, 16
  %v8339 = vrot.slane %v8337, 4
  %v8340 = vshll.u32 %v8206, 16
  %v8342 = vrot.slane %v8340, 5
  %v8343 = vor.u32 %v8339, %v8342
  %v8344 = vrot.slane %v8343, 4
  %v8346 = vshll.u32 %v8207, 16
  %v8348 = vrot.slane %v8346, 5
  %v8349 = vsel %vm1347, %v8344, %v8348
  %v8350 = vshrl.u32 %v8207, 16
  %v8352 = vrot.slane %v8350, 4
  %v8353 = vor.u32 %v8352, %v8348
  %v8354 = vrot.slane %v8353, 4
  %v8356 = vshll.u32 %v8208, 16
  %v8358 = vrot.slane %v8356, 5
  %v8359 = vsel %vm1347, %v8354, %v8358
  %v8361 = vshrl.u32 %v8209, 16
  %v8363 = vrot.slane %v8361, 4
  %v8364 = vshll.u32 %v8209, 16
  %v8366 = vrot.slane %v8364, 5
  %v8367 = vor.u32 %v8363, %v8366
  %v8368 = vrot.slane %v8367, 4
  %v8370 = vshll.u32 %v8210, 16
  %v8372 = vrot.slane %v8370, 5
  %v8373 = vsel %vm1347, %v8368, %v8372
  %v8374 = vshrl.u32 %v8210, 16
  %v8376 = vrot.slane %v8374, 4
  %v8377 = vor.u32 %v8376, %v8372
  %v8378 = vrot.slane %v8377, 4
  %v8380 = vshll.u32 %v8211, 16
  %v8382 = vrot.slane %v8380, 5
  %v8383 = vsel %vm1347, %v8378, %v8382
  %v8385 = vshrl.u32 %v8212, 16
  %v8387 = vrot.slane %v8385, 4
  %v8388 = vshll.u32 %v8212, 16
  %v8390 = vrot.slane %v8388, 5
  %v8391 = vor.u32 %v8387, %v8390
  %v8392 = vrot.slane %v8391, 4
  %v8394 = vshll.u32 %v8213, 16
  %v8396 = vrot.slane %v8394, 5
  %v8397 = vsel %vm1347, %v8392, %v8396
  %v8398 = vshrl.u32 %v8213, 16
  %v8400 = vrot.slane %v8398, 4
  %v8401 = vor.u32 %v8400, %v8396
  %v8402 = vrot.slane %v8401, 4
  %v8404 = vshll.u32 %v8214, 16
  %v8406 = vrot.slane %v8404, 5
  %v8407 = vsel %vm1347, %v8402, %v8406
  %v8409 = vshrl.u32 %v8215, 16
  %v8411 = vrot.slane %v8409, 4
  %v8412 = vshll.u32 %v8215, 16
  %v8414 = vrot.slane %v8412, 5
  %v8415 = vor.u32 %v8411, %v8414
  %v8416 = vrot.slane %v8415, 4
  %v8418 = vshll.u32 %v8216, 16
  %v8420 = vrot.slane %v8418, 5
  %v8421 = vsel %vm1347, %v8416, %v8420
  %v8422 = vshrl.u32 %v8216, 16
  %v8424 = vrot.slane %v8422, 4
  %v8425 = vor.u32 %v8424, %v8420
  %v8426 = vrot.slane %v8425, 4
  %v8428 = vshll.u32 %v8217, 16
  %v8430 = vrot.slane %v8428, 5
  %v8431 = vsel %vm1347, %v8426, %v8430
  %v8433 = vshrl.u32 %v8218, 16
  %v8435 = vrot.slane %v8433, 4
  %v8436 = vshll.u32 %v8218, 16
  %v8438 = vrot.slane %v8436, 5
  %v8439 = vor.u32 %v8435, %v8438
  %v8440 = vrot.slane %v8439, 4
  %v8442 = vshll.u32 %v8219, 16
  %v8444 = vrot.slane %v8442, 5
  %v8445 = vsel %vm1347, %v8440, %v8444
  %v8446 = vshrl.u32 %v8219, 16
  %v8448 = vrot.slane %v8446, 4
  %v8449 = vor.u32 %v8448, %v8444
  %v8450 = vrot.slane %v8449, 4
  %v8452 = vshll.u32 %v8220, 16
  %v8454 = vrot.slane %v8452, 5
  %v8455 = vsel %vm1347, %v8450, %v8454
  %v8457 = vshrl.u32 %v8221, 16
  %v8459 = vrot.slane %v8457, 4
  %v8460 = vshll.u32 %v8221, 16
  %v8462 = vrot.slane %v8460, 5
  %v8463 = vor.u32 %v8459, %v8462
  %v8464 = vrot.slane %v8463, 4
  %v8466 = vshll.u32 %v8222, 16
  %v8468 = vrot.slane %v8466, 5
  %v8469 = vsel %vm1347, %v8464, %v8468
  %v8470 = vshrl.u32 %v8222, 16
  %v8472 = vrot.slane %v8470, 4
  %v8473 = vor.u32 %v8472, %v8468
  %v8474 = vrot.slane %v8473, 4
  %v8476 = vshll.u32 %v8223, 16
  %v8478 = vrot.slane %v8476, 5
  %v8479 = vsel %vm1347, %v8474, %v8478
  %v8481 = vshrl.u32 %v8224, 16
  %v8483 = vrot.slane %v8481, 4
  %v8484 = vshll.u32 %v8224, 16
  %v8486 = vrot.slane %v8484, 5
  %v8487 = vor.u32 %v8483, %v8486
  %v8488 = vrot.slane %v8487, 4
  %v8490 = vshll.u32 %v8225, 16
  %v8492 = vrot.slane %v8490, 5
  %v8493 = vsel %vm1347, %v8488, %v8492
  %v8494 = vshrl.u32 %v8225, 16
  %v8496 = vrot.slane %v8494, 4
  %v8497 = vor.u32 %v8496, %v8492
  %v8498 = vrot.slane %v8497, 4
  %v8500 = vshll.u32 %v8226, 16
  %v8502 = vrot.slane %v8500, 5
  %v8503 = vsel %vm1347, %v8498, %v8502
  %v8505 = vshrl.u32 %v8227, 16
  %v8507 = vrot.slane %v8505, 4
  %v8508 = vshll.u32 %v8227, 16
  %v8510 = vrot.slane %v8508, 5
  %v8511 = vor.u32 %v8507, %v8510
  %v8512 = vrot.slane %v8511, 4
  %v8514 = vshll.u32 %v8228, 16
  %v8516 = vrot.slane %v8514, 5
  %v8517 = vsel %vm1347, %v8512, %v8516
  %v8518 = vshrl.u32 %v8228, 16
  %v8520 = vrot.slane %v8518, 4
  %v8521 = vor.u32 %v8520, %v8516
  %v8522 = vrot.slane %v8521, 4
  %v8524 = vshll.u32 %v8229, 16
  %v8526 = vrot.slane %v8524, 5
  %v8527 = vsel %vm1347, %v8522, %v8526
  %v8529 = vshrl.u32 %v8230, 16
  %v8531 = vrot.slane %v8529, 4
  %v8532 = vshll.u32 %v8230, 16
  %v8534 = vrot.slane %v8532, 5
  %v8535 = vor.u32 %v8531, %v8534
  %v8536 = vrot.slane %v8535, 4
  %v8538 = vshll.u32 %v8231, 16
  %v8540 = vrot.slane %v8538, 5
  %v8541 = vsel %vm1347, %v8536, %v8540
  %v8542 = vshrl.u32 %v8231, 16
  %v8544 = vrot.slane %v8542, 4
  %v8545 = vor.u32 %v8544, %v8540
  %v8546 = vrot.slane %v8545, 4
  %v8548 = vshll.u32 %v8232, 16
  %v8550 = vrot.slane %v8548, 5
  %v8551 = vsel %vm1347, %v8546, %v8550
  %v8553 = vshrl.u32 %v8233, 16
  %v8555 = vrot.slane %v8553, 4
  %v8556 = vshll.u32 %v8233, 16
  %v8558 = vrot.slane %v8556, 5
  %v8559 = vor.u32 %v8555, %v8558
  %v8560 = vrot.slane %v8559, 4
  %v8562 = vshll.u32 %v8234, 16
  %v8564 = vrot.slane %v8562, 5
  %v8565 = vsel %vm1347, %v8560, %v8564
  %v8566 = vshrl.u32 %v8234, 16
  %v8568 = vrot.slane %v8566, 4
  %v8569 = vor.u32 %v8568, %v8564
  %v8570 = vrot.slane %v8569, 4
  %v8572 = vshll.u32 %v8235, 16
  %v8574 = vrot.slane %v8572, 5
  %v8575 = vsel %vm1347, %v8570, %v8574
  %v8577 = vshrl.u32 %v8236, 16
  %v8579 = vrot.slane %v8577, 4
  %v8580 = vshll.u32 %v8236, 16
  %v8582 = vrot.slane %v8580, 5
  %v8583 = vor.u32 %v8579, %v8582
  %v8584 = vrot.slane %v8583, 4
  %v8586 = vshll.u32 %v8237, 16
  %v8588 = vrot.slane %v8586, 5
  %v8589 = vsel %vm1347, %v8584, %v8588
  %v8590 = vshrl.u32 %v8237, 16
  %v8592 = vrot.slane %v8590, 4
  %v8593 = vor.u32 %v8592, %v8588
  %v8594 = vrot.slane %v8593, 4
  %v8596 = vshll.u32 %v8238, 16
  %v8598 = vrot.slane %v8596, 5
  %v8599 = vsel %vm1347, %v8594, %v8598
  %v8601 = vshrl.u32 %v8239, 16
  %v8603 = vrot.slane %v8601, 4
  %v8604 = vshll.u32 %v8239, 16
  %v8606 = vrot.slane %v8604, 5
  %v8607 = vor.u32 %v8603, %v8606
  %v8608 = vrot.slane %v8607, 4
  %v8610 = vshll.u32 %v8240, 16
  %v8612 = vrot.slane %v8610, 5
  %v8613 = vsel %vm1347, %v8608, %v8612
  %v8614 = vshrl.u32 %v8240, 16
  %v8616 = vrot.slane %v8614, 4
  %v8617 = vor.u32 %v8616, %v8612
  %v8618 = vrot.slane %v8617, 4
  %v8620 = vshll.u32 %v8241, 16
  %v8622 = vrot.slane %v8620, 5
  %v8623 = vsel %vm1347, %v8618, %v8622
  %v8625 = vshrl.u32 %v8242, 16
  %v8627 = vrot.slane %v8625, 4
  %v8628 = vshll.u32 %v8242, 16
  %v8630 = vrot.slane %v8628, 5
  %v8631 = vor.u32 %v8627, %v8630
  %v8632 = vrot.slane %v8631, 4
  %v8634 = vshll.u32 %v8243, 16
  %v8636 = vrot.slane %v8634, 5
  %v8637 = vsel %vm1347, %v8632, %v8636
  %v8638 = vshrl.u32 %v8243, 16
  %v8640 = vrot.slane %v8638, 4
  %v8641 = vor.u32 %v8640, %v8636
  %v8642 = vrot.slane %v8641, 4
  %v8644 = vshll.u32 %v8244, 16
  %v8646 = vrot.slane %v8644, 5
  %v8647 = vsel %vm1347, %v8642, %v8646
  %v8649 = vshrl.u32 %v8245, 16
  %v8651 = vrot.slane %v8649, 4
  %v8652 = vshll.u32 %v8245, 16
  %v8654 = vrot.slane %v8652, 5
  %v8655 = vor.u32 %v8651, %v8654
  %v8656 = vrot.slane %v8655, 4
  %v8658 = vshll.u32 %v8246, 16
  %v8660 = vrot.slane %v8658, 5
  %v8661 = vsel %vm1347, %v8656, %v8660
  %v8662 = vshrl.u32 %v8246, 16
  %v8664 = vrot.slane %v8662, 4
  %v8665 = vor.u32 %v8664, %v8660
  %v8666 = vrot.slane %v8665, 4
  %v8668 = vshll.u32 %v8247, 16
  %v8670 = vrot.slane %v8668, 5
  %v8671 = vsel %vm1347, %v8666, %v8670
  %v8673 = vshrl.u32 %v8248, 16
  %v8675 = vrot.slane %v8673, 4
  %v8676 = vshll.u32 %v8248, 16
  %v8678 = vrot.slane %v8676, 5
  %v8679 = vor.u32 %v8675, %v8678
  %v8680 = vrot.slane %v8679, 4
  %v8682 = vshll.u32 %v8249, 16
  %v8684 = vrot.slane %v8682, 5
  %v8685 = vsel %vm1347, %v8680, %v8684
  %v8686 = vshrl.u32 %v8249, 16
  %v8688 = vrot.slane %v8686, 4
  %v8689 = vor.u32 %v8688, %v8684
  %v8690 = vrot.slane %v8689, 4
  %v8692 = vshll.u32 %v8250, 16
  %v8694 = vrot.slane %v8692, 5
  %v8695 = vsel %vm1347, %v8690, %v8694
  %v8697 = vshrl.u32 %v8257, 16
  %v8699 = vrot.slane %v8697, 4
  %v8700 = vshll.u32 %v8257, 16
  %v8702 = vrot.slane %v8700, 5
  %v8703 = vor.u32 %v8699, %v8702
  %v8704 = vrot.slane %v8703, 4
  %v8706 = vshll.u32 %v8258, 16
  %v8708 = vrot.slane %v8706, 5
  %v8709 = vsel %vm1347, %v8704, %v8708
  %v8710 = vshrl.u32 %v8258, 16
  %v8712 = vrot.slane %v8710, 4
  %v8713 = vor.u32 %v8712, %v8708
  %v8714 = vrot.slane %v8713, 4
  %v8716 = vshll.u32 %v8259, 16
  %v8718 = vrot.slane %v8716, 5
  %v8719 = vsel %vm1347, %v8714, %v8718
  %v8721 = vshrl.u32 %v8260, 16
  %v8723 = vrot.slane %v8721, 4
  %v8724 = vshll.u32 %v8260, 16
  %v8726 = vrot.slane %v8724, 5
  %v8727 = vor.u32 %v8723, %v8726
  %v8728 = vrot.slane %v8727, 4
  %v8730 = vshll.u32 %v8261, 16
  %v8732 = vrot.slane %v8730, 5
  %v8733 = vsel %vm1347, %v8728, %v8732
  %v8734 = vshrl.u32 %v8261, 16
  %v8736 = vrot.slane %v8734, 4
  %v8737 = vor.u32 %v8736, %v8732
  %v8738 = vrot.slane %v8737, 4
  %v8740 = vshll.u32 %v8262, 16
  %v8742 = vrot.slane %v8740, 5
  %v8743 = vsel %vm1347, %v8738, %v8742
  %v8745 = vshrl.u32 %v8263, 16
  %v8747 = vrot.slane %v8745, 4
  %v8748 = vshll.u32 %v8263, 16
  %v8750 = vrot.slane %v8748, 5
  %v8751 = vor.u32 %v8747, %v8750
  %v8752 = vrot.slane %v8751, 4
  %v8754 = vshll.u32 %v8264, 16
  %v8756 = vrot.slane %v8754, 5
  %v8757 = vsel %vm1347, %v8752, %v8756
  %v8758 = vshrl.u32 %v8264, 16
  %v8760 = vrot.slane %v8758, 4
  %v8761 = vor.u32 %v8760, %v8756
  %v8762 = vrot.slane %v8761, 4
  %v8764 = vshll.u32 %v8265, 16
  %v8766 = vrot.slane %v8764, 5
  %v8767 = vsel %vm1347, %v8762, %v8766
  %v8769 = vshrl.u32 %v8266, 16
  %v8771 = vrot.slane %v8769, 4
  %v8772 = vshll.u32 %v8266, 16
  %v8774 = vrot.slane %v8772, 5
  %v8775 = vor.u32 %v8771, %v8774
  %v8776 = vrot.slane %v8775, 4
  %v8778 = vshll.u32 %v8267, 16
  %v8780 = vrot.slane %v8778, 5
  %v8781 = vsel %vm1347, %v8776, %v8780
  %v8782 = vshrl.u32 %v8267, 16
  %v8784 = vrot.slane %v8782, 4
  %v8785 = vor.u32 %v8784, %v8780
  %v8786 = vrot.slane %v8785, 4
  %v8788 = vshll.u32 %v8268, 16
  %v8790 = vrot.slane %v8788, 5
  %v8791 = vsel %vm1347, %v8786, %v8790
  %v8793 = vshrl.u32 %v8269, 16
  %v8795 = vrot.slane %v8793, 4
  %v8796 = vshll.u32 %v8269, 16
  %v8798 = vrot.slane %v8796, 5
  %v8799 = vor.u32 %v8795, %v8798
  %v8800 = vrot.slane %v8799, 4
  %v8802 = vshll.u32 %v8270, 16
  %v8804 = vrot.slane %v8802, 5
  %v8805 = vsel %vm1347, %v8800, %v8804
  %v8806 = vshrl.u32 %v8270, 16
  %v8808 = vrot.slane %v8806, 4
  %v8809 = vor.u32 %v8808, %v8804
  %v8810 = vrot.slane %v8809, 4
  %v8812 = vshll.u32 %v8271, 16
  %v8814 = vrot.slane %v8812, 5
  %v8815 = vsel %vm1347, %v8810, %v8814
  %v8817 = vshrl.u32 %v8272, 16
  %v8819 = vrot.slane %v8817, 4
  %v8820 = vshll.u32 %v8272, 16
  %v8822 = vrot.slane %v8820, 5
  %v8823 = vor.u32 %v8819, %v8822
  %v8824 = vrot.slane %v8823, 4
  %v8826 = vshll.u32 %v8273, 16
  %v8828 = vrot.slane %v8826, 5
  %v8829 = vsel %vm1347, %v8824, %v8828
  %v8830 = vshrl.u32 %v8273, 16
  %v8832 = vrot.slane %v8830, 4
  %v8833 = vor.u32 %v8832, %v8828
  %v8834 = vrot.slane %v8833, 4
  %v8836 = vshll.u32 %v8274, 16
  %v8838 = vrot.slane %v8836, 5
  %v8839 = vsel %vm1347, %v8834, %v8838
  %v8841 = vshrl.u32 %v8275, 16
  %v8843 = vrot.slane %v8841, 4
  %v8844 = vshll.u32 %v8275, 16
  %v8846 = vrot.slane %v8844, 5
  %v8847 = vor.u32 %v8843, %v8846
  %v8848 = vrot.slane %v8847, 4
  %v8850 = vshll.u32 %v8276, 16
  %v8852 = vrot.slane %v8850, 5
  %v8853 = vsel %vm1347, %v8848, %v8852
  %v8854 = vshrl.u32 %v8276, 16
  %v8856 = vrot.slane %v8854, 4
  %v8857 = vor.u32 %v8856, %v8852
  %v8858 = vrot.slane %v8857, 4
  %v8860 = vshll.u32 %v8277, 16
  %v8862 = vrot.slane %v8860, 5
  %v8863 = vsel %vm1347, %v8858, %v8862
  %v8865 = vshrl.u32 %v8278, 16
  %v8867 = vrot.slane %v8865, 4
  %v8868 = vshll.u32 %v8278, 16
  %v8870 = vrot.slane %v8868, 5
  %v8871 = vor.u32 %v8867, %v8870
  %v8872 = vrot.slane %v8871, 4
  %v8874 = vshll.u32 %v8279, 16
  %v8876 = vrot.slane %v8874, 5
  %v8877 = vsel %vm1347, %v8872, %v8876
  %v8878 = vshrl.u32 %v8279, 16
  %v8880 = vrot.slane %v8878, 4
  %v8881 = vor.u32 %v8880, %v8876
  %v8882 = vrot.slane %v8881, 4
  %v8884 = vshll.u32 %v8280, 16
  %v8886 = vrot.slane %v8884, 5
  %v8887 = vsel %vm1347, %v8882, %v8886
  %v8889 = vshrl.u32 %v8281, 16
  %v8891 = vrot.slane %v8889, 4
  %v8892 = vshll.u32 %v8281, 16
  %v8894 = vrot.slane %v8892, 5
  %v8895 = vor.u32 %v8891, %v8894
  %v8896 = vrot.slane %v8895, 4
  %v8898 = vshll.u32 %v8282, 16
  %v8900 = vrot.slane %v8898, 5
  %v8901 = vsel %vm1347, %v8896, %v8900
  %v8902 = vshrl.u32 %v8282, 16
  %v8904 = vrot.slane %v8902, 4
  %v8905 = vor.u32 %v8904, %v8900
  %v8906 = vrot.slane %v8905, 4
  %v8908 = vshll.u32 %v8283, 16
  %v8910 = vrot.slane %v8908, 5
  %v8911 = vsel %vm1347, %v8906, %v8910
  %v8913 = vshrl.u32 %v8284, 16
  %v8915 = vrot.slane %v8913, 4
  %v8916 = vshll.u32 %v8284, 16
  %v8918 = vrot.slane %v8916, 5
  %v8919 = vor.u32 %v8915, %v8918
  %v8920 = vrot.slane %v8919, 4
  %v8922 = vshll.u32 %v8285, 16
  %v8924 = vrot.slane %v8922, 5
  %v8925 = vsel %vm1347, %v8920, %v8924
  %v8926 = vshrl.u32 %v8285, 16
  %v8928 = vrot.slane %v8926, 4
  %v8929 = vor.u32 %v8928, %v8924
  %v8930 = vrot.slane %v8929, 4
  %v8932 = vshll.u32 %v8286, 16
  %v8934 = vrot.slane %v8932, 5
  %v8935 = vsel %vm1347, %v8930, %v8934
  %v8937 = vshrl.u32 %v8287, 16
  %v8939 = vrot.slane %v8937, 4
  %v8940 = vshll.u32 %v8287, 16
  %v8942 = vrot.slane %v8940, 5
  %v8943 = vor.u32 %v8939, %v8942
  %v8944 = vrot.slane %v8943, 4
  %v8946 = vshll.u32 %v8288, 16
  %v8948 = vrot.slane %v8946, 5
  %v8949 = vsel %vm1347, %v8944, %v8948
  %v8950 = vshrl.u32 %v8288, 16
  %v8952 = vrot.slane %v8950, 4
  %v8953 = vor.u32 %v8952, %v8948
  %v8954 = vrot.slane %v8953, 4
  %v8956 = vshll.u32 %v8289, 16
  %v8958 = vrot.slane %v8956, 5
  %v8959 = vsel %vm1347, %v8954, %v8958
  %v8961 = vshrl.u32 %v8290, 16
  %v8963 = vrot.slane %v8961, 4
  %v8964 = vshll.u32 %v8290, 16
  %v8966 = vrot.slane %v8964, 5
  %v8967 = vor.u32 %v8963, %v8966
  %v8968 = vrot.slane %v8967, 4
  %v8970 = vshll.u32 %v8291, 16
  %v8972 = vrot.slane %v8970, 5
  %v8973 = vsel %vm1347, %v8968, %v8972
  %v8974 = vshrl.u32 %v8291, 16
  %v8976 = vrot.slane %v8974, 4
  %v8977 = vor.u32 %v8976, %v8972
  %v8978 = vrot.slane %v8977, 4
  %v8980 = vshll.u32 %v8292, 16
  %v8982 = vrot.slane %v8980, 5
  %v8983 = vsel %vm1347, %v8978, %v8982
  %v8985 = vshrl.u32 %v8293, 16
  %v8987 = vrot.slane %v8985, 4
  %v8988 = vshll.u32 %v8293, 16
  %v8990 = vrot.slane %v8988, 5
  %v8991 = vor.u32 %v8987, %v8990
  %v8992 = vrot.slane %v8991, 4
  %v8994 = vshll.u32 %v8294, 16
  %v8996 = vrot.slane %v8994, 5
  %v8997 = vsel %vm1347, %v8992, %v8996
  %v8998 = vshrl.u32 %v8294, 16
  %v9000 = vrot.slane %v8998, 4
  %v9001 = vor.u32 %v9000, %v8996
  %v9002 = vrot.slane %v9001, 4
  %v9004 = vshll.u32 %v8295, 16
  %v9006 = vrot.slane %v9004, 5
  %v9007 = vsel %vm1347, %v9002, %v9006
  %v9009 = vshrl.u32 %v8296, 16
  %v9011 = vrot.slane %v9009, 4
  %v9012 = vshll.u32 %v8296, 16
  %v9014 = vrot.slane %v9012, 5
  %v9015 = vor.u32 %v9011, %v9014
  %v9016 = vrot.slane %v9015, 4
  %v9018 = vshll.u32 %v8297, 16
  %v9020 = vrot.slane %v9018, 5
  %v9021 = vsel %vm1347, %v9016, %v9020
  %v9022 = vshrl.u32 %v8297, 16
  %v9024 = vrot.slane %v9022, 4
  %v9025 = vor.u32 %v9024, %v9020
  %v9026 = vrot.slane %v9025, 4
  %v9028 = vshll.u32 %v8298, 16
  %v9030 = vrot.slane %v9028, 5
  %v9031 = vsel %vm1347, %v9026, %v9030
  %v9033 = vshrl.u32 %v8299, 16
  %v9035 = vrot.slane %v9033, 4
  %v9036 = vshll.u32 %v8299, 16
  %v9038 = vrot.slane %v9036, 5
  %v9039 = vor.u32 %v9035, %v9038
  %v9040 = vrot.slane %v9039, 4
  %v9042 = vshll.u32 %v8300, 16
  %v9044 = vrot.slane %v9042, 5
  %v9045 = vsel %vm1347, %v9040, %v9044
  %v9046 = vshrl.u32 %v8300, 16
  %v9048 = vrot.slane %v9046, 4
  %v9049 = vor.u32 %v9048, %v9044
  %v9050 = vrot.slane %v9049, 4
  %v9052 = vshll.u32 %v8301, 16
  %v9054 = vrot.slane %v9052, 5
  %v9055 = vsel %vm1347, %v9050, %v9054
  %v9057 = vshrl.u32 %v8302, 16
  %v9059 = vrot.slane %v9057, 4
  %v9060 = vshll.u32 %v8302, 16
  %v9062 = vrot.slane %v9060, 5
  %v9063 = vor.u32 %v9059, %v9062
  %v9064 = vrot.slane %v9063, 4
  %v9066 = vshll.u32 %v8303, 16
  %v9068 = vrot.slane %v9066, 5
  %v9069 = vsel %vm1347, %v9064, %v9068
  %v9070 = vshrl.u32 %v8303, 16
  %v9072 = vrot.slane %v9070, 4
  %v9073 = vor.u32 %v9072, %v9068
  %v9074 = vrot.slane %v9073, 4
  %v9076 = vshll.u32 %v8304, 16
  %v9078 = vrot.slane %v9076, 5
  %v9079 = vsel %vm1347, %v9074, %v9078
  %v9080 = vld [vmem:[%s4 + $0x4] sm:$0xf]
  %v9081 = vunpack.c.l.b16 %v8325
  %v9082 = vunpack.c.l.b16 %v8335
  %v9083 = vunpack.c.l.b16 %v8349
  %v9084 = vunpack.c.l.b16 %v8359
  %v9085 = vunpack.c.l.b16 %v8373
  %v9086 = vunpack.c.l.b16 %v8383
  %v9087 = vunpack.c.l.b16 %v8397
  %v9088 = vunpack.c.l.b16 %v8407
  %v9089 = vunpack.c.l.b16 %v8421
  %v9090 = vunpack.c.l.b16 %v8431
  %v9091 = vunpack.c.l.b16 %v8445
  %v9092 = vunpack.c.l.b16 %v8455
  %v9093 = vunpack.c.l.b16 %v8469
  %v9094 = vunpack.c.l.b16 %v8479
  %v9095 = vunpack.c.l.b16 %v8493
  %v9096 = vunpack.c.l.b16 %v8503
  %v9097 = vunpack.c.l.b16 %v8517
  %v9098 = vunpack.c.l.b16 %v8527
  %v9099 = vunpack.c.l.b16 %v8541
  %v9100 = vunpack.c.l.b16 %v8551
  %v9101 = vunpack.c.l.b16 %v8565
  %v9102 = vunpack.c.l.b16 %v8575
  %v9103 = vunpack.c.l.b16 %v8589
  %v9104 = vunpack.c.l.b16 %v8599
  %v9105 = vunpack.c.l.b16 %v8613
  %v9106 = vunpack.c.l.b16 %v8623
  %v9107 = vunpack.c.l.b16 %v8637
  %v9108 = vunpack.c.l.b16 %v8647
  %v9109 = vunpack.c.l.b16 %v8661
  %v9110 = vunpack.c.l.b16 %v8671
  %v9111 = vunpack.c.l.b16 %v8685
  %v9112 = vunpack.c.l.b16 %v8695
  %v9113 = vunpack.c.l.b16 %v8709
  %v9114 = vunpack.c.l.b16 %v8719
  %v9115 = vunpack.c.l.b16 %v8733
  %v9116 = vunpack.c.l.b16 %v8743
  %v9117 = vunpack.c.l.b16 %v8757
  %v9118 = vunpack.c.l.b16 %v8767
  %v9119 = vunpack.c.l.b16 %v8781
  %v9120 = vunpack.c.l.b16 %v8791
  %v9121 = vunpack.c.l.b16 %v8805
  %v9122 = vunpack.c.l.b16 %v8815
  %v9123 = vunpack.c.l.b16 %v8829
  %v9124 = vunpack.c.l.b16 %v8839
  %v9125 = vunpack.c.l.b16 %v8853
  %v9126 = vunpack.c.l.b16 %v8863
  %v9127 = vunpack.c.l.b16 %v8877
  %v9128 = vunpack.c.l.b16 %v8887
  %v9129 = vunpack.c.l.b16 %v8901
  %v9130 = vunpack.c.l.b16 %v8911
  %v9131 = vunpack.c.l.b16 %v8925
  %v9132 = vunpack.c.l.b16 %v8935
  %v9133 = vunpack.c.l.b16 %v8949
  %v9134 = vunpack.c.l.b16 %v8959
  %v9135 = vunpack.c.l.b16 %v8973
  %v9136 = vunpack.c.l.b16 %v8983
  %v9137 = vunpack.c.l.b16 %v8997
  %v9138 = vunpack.c.l.b16 %v9007
  %v9139 = vunpack.c.l.b16 %v9021
  %v9140 = vunpack.c.l.b16 %v9031
  %v9141 = vunpack.c.l.b16 %v9045
  %v9142 = vunpack.c.l.b16 %v9055
  %v9143 = vunpack.c.l.b16 %v9069
  %v9144 = vunpack.c.l.b16 %v9079
  %v9145 = vpack.c.b16 %v9082, %v9081
  %v9146 = vpack.c.b16 %v9084, %v9083
  %v9147 = vpack.c.b16 %v9086, %v9085
  %v9148 = vpack.c.b16 %v9088, %v9087
  %v9149 = vpack.c.b16 %v9090, %v9089
  %v9150 = vpack.c.b16 %v9092, %v9091
  %v9151 = vpack.c.b16 %v9094, %v9093
  %v9152 = vpack.c.b16 %v9096, %v9095
  %v9153 = vpack.c.b16 %v9098, %v9097
  %v9154 = vpack.c.b16 %v9100, %v9099
  %v9155 = vpack.c.b16 %v9102, %v9101
  %v9156 = vpack.c.b16 %v9104, %v9103
  %v9157 = vpack.c.b16 %v9106, %v9105
  %v9158 = vpack.c.b16 %v9108, %v9107
  %v9159 = vpack.c.b16 %v9110, %v9109
  %v9160 = vpack.c.b16 %v9112, %v9111
  %v9161 = vpack.c.b16 %v9114, %v9113
  %v9162 = vpack.c.b16 %v9116, %v9115
  %v9163 = vpack.c.b16 %v9118, %v9117
  %v9164 = vpack.c.b16 %v9120, %v9119
  %v9165 = vpack.c.b16 %v9122, %v9121
  %v9166 = vpack.c.b16 %v9124, %v9123
  %v9167 = vpack.c.b16 %v9126, %v9125
  %v9168 = vpack.c.b16 %v9128, %v9127
  %v9169 = vpack.c.b16 %v9130, %v9129
  %v9170 = vpack.c.b16 %v9132, %v9131
  %v9171 = vpack.c.b16 %v9134, %v9133
  %v9172 = vpack.c.b16 %v9136, %v9135
  %v9173 = vpack.c.b16 %v9138, %v9137
  %v9174 = vpack.c.b16 %v9140, %v9139
  %v9175 = vpack.c.b16 %v9142, %v9141
  %v9176 = vpack.c.b16 %v9144, %v9143
  %v9178 = vsel %vm6325, %v9145, 0
  %v9181 = vsel %vm6325, %v9146, 0
  %v9184 = vsel %vm6325, %v9147, 0
  %v9187 = vsel %vm6325, %v9148, 0
  %v9190 = vsel %vm6325, %v9149, 0
  %v9193 = vsel %vm6325, %v9150, 0
  %v9196 = vsel %vm6325, %v9151, 0
  %v9199 = vsel %vm6325, %v9152, 0
  %v9202 = vsel %vm6325, %v9153, 0
  %v9205 = vsel %vm6325, %v9154, 0
  %v9208 = vsel %vm6325, %v9155, 0
  %v9211 = vsel %vm6325, %v9156, 0
  %v9214 = vsel %vm6325, %v9157, 0
  %v9217 = vsel %vm6325, %v9158, 0
  %v9220 = vsel %vm6325, %v9159, 0
  %v9223 = vsel %vm6325, %v9160, 0
  %v9226 = vsel %vm6325, %v9161, 0
  %v9229 = vsel %vm6325, %v9162, 0
  %v9232 = vsel %vm6325, %v9163, 0
  %v9235 = vsel %vm6325, %v9164, 0
  %v9238 = vsel %vm6325, %v9165, 0
  %v9241 = vsel %vm6325, %v9166, 0
  %v9244 = vsel %vm6325, %v9167, 0
  %v9247 = vsel %vm6325, %v9168, 0
  %v9250 = vsel %vm6325, %v9169, 0
  %v9253 = vsel %vm6325, %v9170, 0
  %v9256 = vsel %vm6325, %v9171, 0
  %v9259 = vsel %vm6325, %v9172, 0
  %v9262 = vsel %vm6325, %v9173, 0
  %v9265 = vsel %vm6325, %v9174, 0
  %v9268 = vsel %vm6325, %v9175, 0
  %v9271 = vsel %vm6325, %v9176, 0
  %vm9273 = vcmask 1043456
  %v9275 = vsel %vm9273, %v9080, 0
  %9277 = vmatprep.subr.bf16.mxu0 0
  %9278 = vmatpush1.bf16.msra.mxu0 0
  %9279 = vmatprep.subr.bf16.mxu0 0
  %9280 = vmatpush1.bf16.msra.mxu0 0
  %9281 = vmatprep.subr.bf16.mxu0 0
  %9282 = vmatpush1.bf16.msra.mxu0 0
  %9283 = vmatprep.subr.bf16.mxu0 0
  %9284 = vmatpush1.bf16.msra.mxu0 0
  %9285 = vmatprep.subr.bf16.mxu0 0
  %9286 = vmatpush1.bf16.msra.mxu0 0
  %9287 = vmatprep.subr.bf16.mxu0 0
  %9288 = vmatpush1.bf16.msra.mxu0 0
  %9289 = vmatprep.subr.bf16.mxu0 0
  %9290 = vmatpush1.bf16.msra.mxu0 0
  %9291 = vmatprep.subr.bf16.mxu0 0
  %9292 = vmatpush1.bf16.msra.mxu0 %v9275
  %9293 = vmatprep.subr.bf16.mxu0 0
  %9294 = vmatpush2.bf16.msra.mxu0 0
  %9295 = vmatprep.subr.bf16.mxu0 0
  %9296 = vmatpush2.bf16.msra.mxu0 0
  %9297 = vmatprep.subr.bf16.mxu0 0
  %9298 = vmatpush2.bf16.msra.mxu0 0
  %9299 = vmatprep.subr.bf16.mxu0 0
  %9300 = vmatpush2.bf16.msra.mxu0 0
  %9301 = vmatprep.subr.bf16.mxu0 0
  %9302 = vmatpush2.bf16.msra.mxu0 0
  %9303 = vmatprep.subr.bf16.mxu0 0
  %9304 = vmatpush2.bf16.msra.mxu0 0
  %9305 = vmatprep.subr.bf16.mxu0 0
  %9306 = vmatpush2.bf16.msra.mxu0 0
  %9307 = vmatprep.subr.bf16.mxu0 0
  %9308 = vmatpush2.bf16.msra.mxu0 0
  %9309 = vmatprep.mubr.bf16.mxu0 0
  %9310 = vmatmul.mubr.bf16.gmra.mxu0 %v9178
  %v9311 = vpop.f32.mrf.mxu0
  %v9312 = vadd.f32 0.0, %v9311
  %v9313 = vpop.f32.mrf.mxu0
  %v9314 = vpop.f32.mrf.mxu0
  %v9315 = vadd.f32 0.0, %v9314
  %v9316 = vpop.f32.mrf.mxu0
  %9317 = vmatprep.mubr.bf16.mxu0 0
  %9318 = vmatmul.mubr.bf16.gmra.mxu0 %v9181
  %v9319 = vpop.f32.mrf.mxu0
  %v9320 = vadd.f32 0.0, %v9319
  %v9321 = vpop.f32.mrf.mxu0
  %v9322 = vpop.f32.mrf.mxu0
  %v9323 = vadd.f32 0.0, %v9322
  %v9324 = vpop.f32.mrf.mxu0
  %9325 = vmatprep.mubr.bf16.mxu0 0
  %9326 = vmatmul.mubr.bf16.gmra.mxu0 %v9184
  %v9327 = vpop.f32.mrf.mxu0
  %v9328 = vadd.f32 0.0, %v9327
  %v9329 = vpop.f32.mrf.mxu0
  %v9330 = vpop.f32.mrf.mxu0
  %v9331 = vadd.f32 0.0, %v9330
  %v9332 = vpop.f32.mrf.mxu0
  %9333 = vmatprep.mubr.bf16.mxu0 0
  %9334 = vmatmul.mubr.bf16.gmra.mxu0 %v9187
  %v9335 = vpop.f32.mrf.mxu0
  %v9336 = vadd.f32 0.0, %v9335
  %v9337 = vpop.f32.mrf.mxu0
  %v9338 = vpop.f32.mrf.mxu0
  %v9339 = vadd.f32 0.0, %v9338
  %v9340 = vpop.f32.mrf.mxu0
  %9341 = vmatprep.mubr.bf16.mxu0 0
  %9342 = vmatmul.mubr.bf16.gmra.mxu0 %v9190
  %v9343 = vpop.f32.mrf.mxu0
  %v9344 = vadd.f32 0.0, %v9343
  %v9345 = vpop.f32.mrf.mxu0
  %v9346 = vpop.f32.mrf.mxu0
  %v9347 = vadd.f32 0.0, %v9346
  %v9348 = vpop.f32.mrf.mxu0
  %9349 = vmatprep.mubr.bf16.mxu0 0
  %9350 = vmatmul.mubr.bf16.gmra.mxu0 %v9193
  %v9351 = vpop.f32.mrf.mxu0
  %v9352 = vadd.f32 0.0, %v9351
  %v9353 = vpop.f32.mrf.mxu0
  %v9354 = vpop.f32.mrf.mxu0
  %v9355 = vadd.f32 0.0, %v9354
  %v9356 = vpop.f32.mrf.mxu0
  %9357 = vmatprep.mubr.bf16.mxu0 0
  %9358 = vmatmul.mubr.bf16.gmra.mxu0 %v9196
  %v9359 = vpop.f32.mrf.mxu0
  %v9360 = vadd.f32 0.0, %v9359
  %v9361 = vpop.f32.mrf.mxu0
  %v9362 = vpop.f32.mrf.mxu0
  %v9363 = vadd.f32 0.0, %v9362
  %v9364 = vpop.f32.mrf.mxu0
  %9365 = vmatprep.mubr.bf16.mxu0 0
  %9366 = vmatmul.mubr.bf16.gmra.mxu0 %v9199
  %v9367 = vpop.f32.mrf.mxu0
  %v9368 = vadd.f32 0.0, %v9367
  %v9369 = vpop.f32.mrf.mxu0
  %v9370 = vpop.f32.mrf.mxu0
  %v9371 = vadd.f32 0.0, %v9370
  %v9372 = vpop.f32.mrf.mxu0
  %9373 = vmatprep.mubr.bf16.mxu0 0
  %9374 = vmatmul.mubr.bf16.gmra.mxu0 %v9202
  %v9375 = vpop.f32.mrf.mxu0
  %v9376 = vadd.f32 0.0, %v9375
  %v9377 = vpop.f32.mrf.mxu0
  %v9378 = vpop.f32.mrf.mxu0
  %v9379 = vadd.f32 0.0, %v9378
  %v9380 = vpop.f32.mrf.mxu0
  %9381 = vmatprep.mubr.bf16.mxu0 0
  %9382 = vmatmul.mubr.bf16.gmra.mxu0 %v9205
  %v9383 = vpop.f32.mrf.mxu0
  %v9384 = vadd.f32 0.0, %v9383
  %v9385 = vpop.f32.mrf.mxu0
  %v9386 = vpop.f32.mrf.mxu0
  %v9387 = vadd.f32 0.0, %v9386
  %v9388 = vpop.f32.mrf.mxu0
  %9389 = vmatprep.mubr.bf16.mxu0 0
  %9390 = vmatmul.mubr.bf16.gmra.mxu0 %v9208
  %v9391 = vpop.f32.mrf.mxu0
  %v9392 = vadd.f32 0.0, %v9391
  %v9393 = vpop.f32.mrf.mxu0
  %v9394 = vpop.f32.mrf.mxu0
  %v9395 = vadd.f32 0.0, %v9394
  %v9396 = vpop.f32.mrf.mxu0
  %9397 = vmatprep.mubr.bf16.mxu0 0
  %9398 = vmatmul.mubr.bf16.gmra.mxu0 %v9211
  %v9399 = vpop.f32.mrf.mxu0
  %v9400 = vadd.f32 0.0, %v9399
  %v9401 = vpop.f32.mrf.mxu0
  %v9402 = vpop.f32.mrf.mxu0
  %v9403 = vadd.f32 0.0, %v9402
  %v9404 = vpop.f32.mrf.mxu0
  %9405 = vmatprep.mubr.bf16.mxu0 0
  %9406 = vmatmul.mubr.bf16.gmra.mxu0 %v9214
  %v9407 = vpop.f32.mrf.mxu0
  %v9408 = vadd.f32 0.0, %v9407
  %v9409 = vpop.f32.mrf.mxu0
  %v9410 = vpop.f32.mrf.mxu0
  %v9411 = vadd.f32 0.0, %v9410
  %v9412 = vpop.f32.mrf.mxu0
  %9413 = vmatprep.mubr.bf16.mxu0 0
  %9414 = vmatmul.mubr.bf16.gmra.mxu0 %v9217
  %v9415 = vpop.f32.mrf.mxu0
  %v9416 = vadd.f32 0.0, %v9415
  %v9417 = vpop.f32.mrf.mxu0
  %v9418 = vpop.f32.mrf.mxu0
  %v9419 = vadd.f32 0.0, %v9418
  %v9420 = vpop.f32.mrf.mxu0
  %9421 = vmatprep.mubr.bf16.mxu0 0
  %9422 = vmatmul.mubr.bf16.gmra.mxu0 %v9220
  %v9423 = vpop.f32.mrf.mxu0
  %v9424 = vadd.f32 0.0, %v9423
  %v9425 = vpop.f32.mrf.mxu0
  %v9426 = vpop.f32.mrf.mxu0
  %v9427 = vadd.f32 0.0, %v9426
  %v9428 = vpop.f32.mrf.mxu0
  %9429 = vmatprep.mubr.bf16.mxu0 0
  %9430 = vmatmul.mubr.bf16.gmra.mxu0 %v9223
  %v9431 = vpop.f32.mrf.mxu0
  %v9432 = vadd.f32 0.0, %v9431
  %v9433 = vpop.f32.mrf.mxu0
  %v9434 = vpop.f32.mrf.mxu0
  %v9435 = vadd.f32 0.0, %v9434
  %v9436 = vpop.f32.mrf.mxu0
  %9437 = vmatprep.mubr.bf16.mxu0 0
  %9438 = vmatmul.mubr.bf16.gmra.mxu0 %v9226
  %v9439 = vpop.f32.mrf.mxu0
  %v9440 = vadd.f32 0.0, %v9439
  %v9441 = vpop.f32.mrf.mxu0
  %v9442 = vpop.f32.mrf.mxu0
  %v9443 = vadd.f32 0.0, %v9442
  %v9444 = vpop.f32.mrf.mxu0
  %9445 = vmatprep.mubr.bf16.mxu0 0
  %9446 = vmatmul.mubr.bf16.gmra.mxu0 %v9229
  %v9447 = vpop.f32.mrf.mxu0
  %v9448 = vadd.f32 0.0, %v9447
  %v9449 = vpop.f32.mrf.mxu0
  %v9450 = vpop.f32.mrf.mxu0
  %v9451 = vadd.f32 0.0, %v9450
  %v9452 = vpop.f32.mrf.mxu0
  %9453 = vmatprep.mubr.bf16.mxu0 0
  %9454 = vmatmul.mubr.bf16.gmra.mxu0 %v9232
  %v9455 = vpop.f32.mrf.mxu0
  %v9456 = vadd.f32 0.0, %v9455
  %v9457 = vpop.f32.mrf.mxu0
  %v9458 = vpop.f32.mrf.mxu0
  %v9459 = vadd.f32 0.0, %v9458
  %v9460 = vpop.f32.mrf.mxu0
  %9461 = vmatprep.mubr.bf16.mxu0 0
  %9462 = vmatmul.mubr.bf16.gmra.mxu0 %v9235
  %v9463 = vpop.f32.mrf.mxu0
  %v9464 = vadd.f32 0.0, %v9463
  %v9465 = vpop.f32.mrf.mxu0
  %v9466 = vpop.f32.mrf.mxu0
  %v9467 = vadd.f32 0.0, %v9466
  %v9468 = vpop.f32.mrf.mxu0
  %9469 = vmatprep.mubr.bf16.mxu0 0
  %9470 = vmatmul.mubr.bf16.gmra.mxu0 %v9238
  %v9471 = vpop.f32.mrf.mxu0
  %v9472 = vadd.f32 0.0, %v9471
  %v9473 = vpop.f32.mrf.mxu0
  %v9474 = vpop.f32.mrf.mxu0
  %v9475 = vadd.f32 0.0, %v9474
  %v9476 = vpop.f32.mrf.mxu0
  %9477 = vmatprep.mubr.bf16.mxu0 0
  %9478 = vmatmul.mubr.bf16.gmra.mxu0 %v9241
  %v9479 = vpop.f32.mrf.mxu0
  %v9480 = vadd.f32 0.0, %v9479
  %v9481 = vpop.f32.mrf.mxu0
  %v9482 = vpop.f32.mrf.mxu0
  %v9483 = vadd.f32 0.0, %v9482
  %v9484 = vpop.f32.mrf.mxu0
  %9485 = vmatprep.mubr.bf16.mxu0 0
  %9486 = vmatmul.mubr.bf16.gmra.mxu0 %v9244
  %v9487 = vpop.f32.mrf.mxu0
  %v9488 = vadd.f32 0.0, %v9487
  %v9489 = vpop.f32.mrf.mxu0
  %v9490 = vpop.f32.mrf.mxu0
  %v9491 = vadd.f32 0.0, %v9490
  %v9492 = vpop.f32.mrf.mxu0
  %9493 = vmatprep.mubr.bf16.mxu0 0
  %9494 = vmatmul.mubr.bf16.gmra.mxu0 %v9247
  %v9495 = vpop.f32.mrf.mxu0
  %v9496 = vadd.f32 0.0, %v9495
  %v9497 = vpop.f32.mrf.mxu0
  %v9498 = vpop.f32.mrf.mxu0
  %v9499 = vadd.f32 0.0, %v9498
  %v9500 = vpop.f32.mrf.mxu0
  %9501 = vmatprep.mubr.bf16.mxu0 0
  %9502 = vmatmul.mubr.bf16.gmra.mxu0 %v9250
  %v9503 = vpop.f32.mrf.mxu0
  %v9504 = vadd.f32 0.0, %v9503
  %v9505 = vpop.f32.mrf.mxu0
  %v9506 = vpop.f32.mrf.mxu0
  %v9507 = vadd.f32 0.0, %v9506
  %v9508 = vpop.f32.mrf.mxu0
  %9509 = vmatprep.mubr.bf16.mxu0 0
  %9510 = vmatmul.mubr.bf16.gmra.mxu0 %v9253
  %v9511 = vpop.f32.mrf.mxu0
  %v9512 = vadd.f32 0.0, %v9511
  %v9513 = vpop.f32.mrf.mxu0
  %v9514 = vpop.f32.mrf.mxu0
  %v9515 = vadd.f32 0.0, %v9514
  %v9516 = vpop.f32.mrf.mxu0
  %9517 = vmatprep.mubr.bf16.mxu0 0
  %9518 = vmatmul.mubr.bf16.gmra.mxu0 %v9256
  %v9519 = vpop.f32.mrf.mxu0
  %v9520 = vadd.f32 0.0, %v9519
  %v9521 = vpop.f32.mrf.mxu0
  %v9522 = vpop.f32.mrf.mxu0
  %v9523 = vadd.f32 0.0, %v9522
  %v9524 = vpop.f32.mrf.mxu0
  %9525 = vmatprep.mubr.bf16.mxu0 0
  %9526 = vmatmul.mubr.bf16.gmra.mxu0 %v9259
  %v9527 = vpop.f32.mrf.mxu0
  %v9528 = vadd.f32 0.0, %v9527
  %v9529 = vpop.f32.mrf.mxu0
  %v9530 = vpop.f32.mrf.mxu0
  %v9531 = vadd.f32 0.0, %v9530
  %v9532 = vpop.f32.mrf.mxu0
  %9533 = vmatprep.mubr.bf16.mxu0 0
  %9534 = vmatmul.mubr.bf16.gmra.mxu0 %v9262
  %v9535 = vpop.f32.mrf.mxu0
  %v9536 = vadd.f32 0.0, %v9535
  %v9537 = vpop.f32.mrf.mxu0
  %v9538 = vpop.f32.mrf.mxu0
  %v9539 = vadd.f32 0.0, %v9538
  %v9540 = vpop.f32.mrf.mxu0
  %9541 = vmatprep.mubr.bf16.mxu0 0
  %9542 = vmatmul.mubr.bf16.gmra.mxu0 %v9265
  %v9543 = vpop.f32.mrf.mxu0
  %v9544 = vadd.f32 0.0, %v9543
  %v9545 = vpop.f32.mrf.mxu0
  %v9546 = vpop.f32.mrf.mxu0
  %v9547 = vadd.f32 0.0, %v9546
  %v9548 = vpop.f32.mrf.mxu0
  %9549 = vmatprep.mubr.bf16.mxu0 0
  %9550 = vmatmul.mubr.bf16.gmra.mxu0 %v9268
  %v9551 = vpop.f32.mrf.mxu0
  %v9552 = vadd.f32 0.0, %v9551
  %v9553 = vpop.f32.mrf.mxu0
  %v9554 = vpop.f32.mrf.mxu0
  %v9555 = vadd.f32 0.0, %v9554
  %v9556 = vpop.f32.mrf.mxu0
  %9557 = vmatprep.mubr.bf16.mxu0 0
  %9558 = vmatmul.mubr.bf16.gmra.mxu0 %v9271
  %v9559 = vpop.f32.mrf.mxu0
  %v9560 = vadd.f32 0.0, %v9559
  %v9561 = vpop.f32.mrf.mxu0
  %v9562 = vpop.f32.mrf.mxu0
  %v9563 = vadd.f32 0.0, %v9562
  %v9564 = vpop.f32.mrf.mxu0
  %9565 = vdwg.mxu0
  %v9630 = vunpack.c.l.b16 %v8203
  %v9631 = vunpack.c.l.b16 %v8204
  %v9632 = vunpack.c.l.b16 %v8206
  %v9633 = vunpack.c.l.b16 %v8207
  %v9634 = vunpack.c.l.b16 %v8209
  %v9635 = vunpack.c.l.b16 %v8210
  %v9636 = vunpack.c.l.b16 %v8212
  %v9637 = vunpack.c.l.b16 %v8213
  %v9638 = vunpack.c.l.b16 %v8215
  %v9639 = vunpack.c.l.b16 %v8216
  %v9640 = vunpack.c.l.b16 %v8218
  %v9641 = vunpack.c.l.b16 %v8219
  %v9642 = vunpack.c.l.b16 %v8221
  %v9643 = vunpack.c.l.b16 %v8222
  %v9644 = vunpack.c.l.b16 %v8224
  %v9645 = vunpack.c.l.b16 %v8225
  %v9646 = vunpack.c.l.b16 %v8227
  %v9647 = vunpack.c.l.b16 %v8228
  %v9648 = vunpack.c.l.b16 %v8230
  %v9649 = vunpack.c.l.b16 %v8231
  %v9650 = vunpack.c.l.b16 %v8233
  %v9651 = vunpack.c.l.b16 %v8234
  %v9652 = vunpack.c.l.b16 %v8236
  %v9653 = vunpack.c.l.b16 %v8237
  %v9654 = vunpack.c.l.b16 %v8239
  %v9655 = vunpack.c.l.b16 %v8240
  %v9656 = vunpack.c.l.b16 %v8242
  %v9657 = vunpack.c.l.b16 %v8243
  %v9658 = vunpack.c.l.b16 %v8245
  %v9659 = vunpack.c.l.b16 %v8246
  %v9660 = vunpack.c.l.b16 %v8248
  %v9661 = vunpack.c.l.b16 %v8249
  %v9662 = vunpack.c.l.b16 %v8257
  %v9663 = vunpack.c.l.b16 %v8258
  %v9664 = vunpack.c.l.b16 %v8260
  %v9665 = vunpack.c.l.b16 %v8261
  %v9666 = vunpack.c.l.b16 %v8263
  %v9667 = vunpack.c.l.b16 %v8264
  %v9668 = vunpack.c.l.b16 %v8266
  %v9669 = vunpack.c.l.b16 %v8267
  %v9670 = vunpack.c.l.b16 %v8269
  %v9671 = vunpack.c.l.b16 %v8270
  %v9672 = vunpack.c.l.b16 %v8272
  %v9673 = vunpack.c.l.b16 %v8273
  %v9674 = vunpack.c.l.b16 %v8275
  %v9675 = vunpack.c.l.b16 %v8276
  %v9676 = vunpack.c.l.b16 %v8278
  %v9677 = vunpack.c.l.b16 %v8279
  %v9678 = vunpack.c.l.b16 %v8281
  %v9679 = vunpack.c.l.b16 %v8282
  %v9680 = vunpack.c.l.b16 %v8284
  %v9681 = vunpack.c.l.b16 %v8285
  %v9682 = vunpack.c.l.b16 %v8287
  %v9683 = vunpack.c.l.b16 %v8288
  %v9684 = vunpack.c.l.b16 %v8290
  %v9685 = vunpack.c.l.b16 %v8291
  %v9686 = vunpack.c.l.b16 %v8293
  %v9687 = vunpack.c.l.b16 %v8294
  %v9688 = vunpack.c.l.b16 %v8296
  %v9689 = vunpack.c.l.b16 %v8297
  %v9690 = vunpack.c.l.b16 %v8299
  %v9691 = vunpack.c.l.b16 %v8300
  %v9692 = vunpack.c.l.b16 %v8302
  %v9693 = vunpack.c.l.b16 %v8303
  %v9694 = vpack.c.b16 %v9631, %v9630
  %v9695 = vpack.c.b16 %v9633, %v9632
  %v9696 = vpack.c.b16 %v9635, %v9634
  %v9697 = vpack.c.b16 %v9637, %v9636
  %v9698 = vpack.c.b16 %v9639, %v9638
  %v9699 = vpack.c.b16 %v9641, %v9640
  %v9700 = vpack.c.b16 %v9643, %v9642
  %v9701 = vpack.c.b16 %v9645, %v9644
  %v9702 = vpack.c.b16 %v9647, %v9646
  %v9703 = vpack.c.b16 %v9649, %v9648
  %v9704 = vpack.c.b16 %v9651, %v9650
  %v9705 = vpack.c.b16 %v9653, %v9652
  %v9706 = vpack.c.b16 %v9655, %v9654
  %v9707 = vpack.c.b16 %v9657, %v9656
  %v9708 = vpack.c.b16 %v9659, %v9658
  %v9709 = vpack.c.b16 %v9661, %v9660
  %v9710 = vpack.c.b16 %v9663, %v9662
  %v9711 = vpack.c.b16 %v9665, %v9664
  %v9712 = vpack.c.b16 %v9667, %v9666
  %v9713 = vpack.c.b16 %v9669, %v9668
  %v9714 = vpack.c.b16 %v9671, %v9670
  %v9715 = vpack.c.b16 %v9673, %v9672
  %v9716 = vpack.c.b16 %v9675, %v9674
  %v9717 = vpack.c.b16 %v9677, %v9676
  %v9718 = vpack.c.b16 %v9679, %v9678
  %v9719 = vpack.c.b16 %v9681, %v9680
  %v9720 = vpack.c.b16 %v9683, %v9682
  %v9721 = vpack.c.b16 %v9685, %v9684
  %v9722 = vpack.c.b16 %v9687, %v9686
  %v9723 = vpack.c.b16 %v9689, %v9688
  %v9724 = vpack.c.b16 %v9691, %v9690
  %v9725 = vpack.c.b16 %v9693, %v9692
  %v9727 = vsel %vm6325, %v9694, 0
  %v9730 = vsel %vm6325, %v9695, 0
  %v9733 = vsel %vm6325, %v9696, 0
  %v9736 = vsel %vm6325, %v9697, 0
  %v9739 = vsel %vm6325, %v9698, 0
  %v9742 = vsel %vm6325, %v9699, 0
  %v9745 = vsel %vm6325, %v9700, 0
  %v9748 = vsel %vm6325, %v9701, 0
  %v9751 = vsel %vm6325, %v9702, 0
  %v9754 = vsel %vm6325, %v9703, 0
  %v9757 = vsel %vm6325, %v9704, 0
  %v9760 = vsel %vm6325, %v9705, 0
  %v9763 = vsel %vm6325, %v9706, 0
  %v9766 = vsel %vm6325, %v9707, 0
  %v9769 = vsel %vm6325, %v9708, 0
  %v9772 = vsel %vm6325, %v9709, 0
  %v9775 = vsel %vm6325, %v9710, 0
  %v9778 = vsel %vm6325, %v9711, 0
  %v9781 = vsel %vm6325, %v9712, 0
  %v9784 = vsel %vm6325, %v9713, 0
  %v9787 = vsel %vm6325, %v9714, 0
  %v9790 = vsel %vm6325, %v9715, 0
  %v9793 = vsel %vm6325, %v9716, 0
  %v9796 = vsel %vm6325, %v9717, 0
  %v9799 = vsel %vm6325, %v9718, 0
  %v9802 = vsel %vm6325, %v9719, 0
  %v9805 = vsel %vm6325, %v9720, 0
  %v9808 = vsel %vm6325, %v9721, 0
  %v9811 = vsel %vm6325, %v9722, 0
  %v9814 = vsel %vm6325, %v9723, 0
  %v9817 = vsel %vm6325, %v9724, 0
  %v9820 = vsel %vm6325, %v9725, 0
  %v9823 = vsel %vm9273, %v8311, 0
  %9825 = vmatprep.subr.bf16.mxu0 0
  %9826 = vmatpush1.bf16.msra.mxu0 0
  %9827 = vmatprep.subr.bf16.mxu0 0
  %9828 = vmatpush1.bf16.msra.mxu0 0
  %9829 = vmatprep.subr.bf16.mxu0 0
  %9830 = vmatpush1.bf16.msra.mxu0 0
  %9831 = vmatprep.subr.bf16.mxu0 0
  %9832 = vmatpush1.bf16.msra.mxu0 0
  %9833 = vmatprep.subr.bf16.mxu0 0
  %9834 = vmatpush1.bf16.msra.mxu0 0
  %9835 = vmatprep.subr.bf16.mxu0 0
  %9836 = vmatpush1.bf16.msra.mxu0 0
  %9837 = vmatprep.subr.bf16.mxu0 0
  %9838 = vmatpush1.bf16.msra.mxu0 0
  %9839 = vmatprep.subr.bf16.mxu0 0
  %9840 = vmatpush1.bf16.msra.mxu0 %v9823
  %9841 = vmatprep.subr.bf16.mxu0 0
  %9842 = vmatpush2.bf16.msra.mxu0 0
  %9843 = vmatprep.subr.bf16.mxu0 0
  %9844 = vmatpush2.bf16.msra.mxu0 0
  %9845 = vmatprep.subr.bf16.mxu0 0
  %9846 = vmatpush2.bf16.msra.mxu0 0
  %9847 = vmatprep.subr.bf16.mxu0 0
  %9848 = vmatpush2.bf16.msra.mxu0 0
  %9849 = vmatprep.subr.bf16.mxu0 0
  %9850 = vmatpush2.bf16.msra.mxu0 0
  %9851 = vmatprep.subr.bf16.mxu0 0
  %9852 = vmatpush2.bf16.msra.mxu0 0
  %9853 = vmatprep.subr.bf16.mxu0 0
  %9854 = vmatpush2.bf16.msra.mxu0 0
  %9855 = vmatprep.subr.bf16.mxu0 0
  %9856 = vmatpush2.bf16.msra.mxu0 0
  %9857 = vmatprep.mubr.bf16.mxu0 0
  %9858 = vmatmul.mubr.bf16.gmra.mxu0 %v9727
  %v9859 = vpop.f32.mrf.mxu0
  %v9860 = vadd.f32 %v9312, %v9859
  %v9861 = vpop.f32.mrf.mxu0
  %v9862 = vpop.f32.mrf.mxu0
  %v9863 = vadd.f32 %v9315, %v9862
  %v9864 = vpop.f32.mrf.mxu0
  %9865 = vmatprep.mubr.bf16.mxu0 0
  %9866 = vmatmul.mubr.bf16.gmra.mxu0 %v9730
  %v9867 = vpop.f32.mrf.mxu0
  %v9868 = vadd.f32 %v9320, %v9867
  %v9869 = vpop.f32.mrf.mxu0
  %v9870 = vpop.f32.mrf.mxu0
  %v9871 = vadd.f32 %v9323, %v9870
  %v9872 = vpop.f32.mrf.mxu0
  %9873 = vmatprep.mubr.bf16.mxu0 0
  %9874 = vmatmul.mubr.bf16.gmra.mxu0 %v9733
  %v9875 = vpop.f32.mrf.mxu0
  %v9876 = vadd.f32 %v9328, %v9875
  %v9877 = vpop.f32.mrf.mxu0
  %v9878 = vpop.f32.mrf.mxu0
  %v9879 = vadd.f32 %v9331, %v9878
  %v9880 = vpop.f32.mrf.mxu0
  %9881 = vmatprep.mubr.bf16.mxu0 0
  %9882 = vmatmul.mubr.bf16.gmra.mxu0 %v9736
  %v9883 = vpop.f32.mrf.mxu0
  %v9884 = vadd.f32 %v9336, %v9883
  %v9885 = vpop.f32.mrf.mxu0
  %v9886 = vpop.f32.mrf.mxu0
  %v9887 = vadd.f32 %v9339, %v9886
  %v9888 = vpop.f32.mrf.mxu0
  %9889 = vmatprep.mubr.bf16.mxu0 0
  %9890 = vmatmul.mubr.bf16.gmra.mxu0 %v9739
  %v9891 = vpop.f32.mrf.mxu0
  %v9892 = vadd.f32 %v9344, %v9891
  %v9893 = vpop.f32.mrf.mxu0
  %v9894 = vpop.f32.mrf.mxu0
  %v9895 = vadd.f32 %v9347, %v9894
  %v9896 = vpop.f32.mrf.mxu0
  %9897 = vmatprep.mubr.bf16.mxu0 0
  %9898 = vmatmul.mubr.bf16.gmra.mxu0 %v9742
  %v9899 = vpop.f32.mrf.mxu0
  %v9900 = vadd.f32 %v9352, %v9899
  %v9901 = vpop.f32.mrf.mxu0
  %v9902 = vpop.f32.mrf.mxu0
  %v9903 = vadd.f32 %v9355, %v9902
  %v9904 = vpop.f32.mrf.mxu0
  %9905 = vmatprep.mubr.bf16.mxu0 0
  %9906 = vmatmul.mubr.bf16.gmra.mxu0 %v9745
  %v9907 = vpop.f32.mrf.mxu0
  %v9908 = vadd.f32 %v9360, %v9907
  %v9909 = vpop.f32.mrf.mxu0
  %v9910 = vpop.f32.mrf.mxu0
  %v9911 = vadd.f32 %v9363, %v9910
  %v9912 = vpop.f32.mrf.mxu0
  %9913 = vmatprep.mubr.bf16.mxu0 0
  %9914 = vmatmul.mubr.bf16.gmra.mxu0 %v9748
  %v9915 = vpop.f32.mrf.mxu0
  %v9916 = vadd.f32 %v9368, %v9915
  %v9917 = vpop.f32.mrf.mxu0
  %v9918 = vpop.f32.mrf.mxu0
  %v9919 = vadd.f32 %v9371, %v9918
  %v9920 = vpop.f32.mrf.mxu0
  %9921 = vmatprep.mubr.bf16.mxu0 0
  %9922 = vmatmul.mubr.bf16.gmra.mxu0 %v9751
  %v9923 = vpop.f32.mrf.mxu0
  %v9924 = vadd.f32 %v9376, %v9923
  %v9925 = vpop.f32.mrf.mxu0
  %v9926 = vpop.f32.mrf.mxu0
  %v9927 = vadd.f32 %v9379, %v9926
  %v9928 = vpop.f32.mrf.mxu0
  %9929 = vmatprep.mubr.bf16.mxu0 0
  %9930 = vmatmul.mubr.bf16.gmra.mxu0 %v9754
  %v9931 = vpop.f32.mrf.mxu0
  %v9932 = vadd.f32 %v9384, %v9931
  %v9933 = vpop.f32.mrf.mxu0
  %v9934 = vpop.f32.mrf.mxu0
  %v9935 = vadd.f32 %v9387, %v9934
  %v9936 = vpop.f32.mrf.mxu0
  %9937 = vmatprep.mubr.bf16.mxu0 0
  %9938 = vmatmul.mubr.bf16.gmra.mxu0 %v9757
  %v9939 = vpop.f32.mrf.mxu0
  %v9940 = vadd.f32 %v9392, %v9939
  %v9941 = vpop.f32.mrf.mxu0
  %v9942 = vpop.f32.mrf.mxu0
  %v9943 = vadd.f32 %v9395, %v9942
  %v9944 = vpop.f32.mrf.mxu0
  %9945 = vmatprep.mubr.bf16.mxu0 0
  %9946 = vmatmul.mubr.bf16.gmra.mxu0 %v9760
  %v9947 = vpop.f32.mrf.mxu0
  %v9948 = vadd.f32 %v9400, %v9947
  %v9949 = vpop.f32.mrf.mxu0
  %v9950 = vpop.f32.mrf.mxu0
  %v9951 = vadd.f32 %v9403, %v9950
  %v9952 = vpop.f32.mrf.mxu0
  %9953 = vmatprep.mubr.bf16.mxu0 0
  %9954 = vmatmul.mubr.bf16.gmra.mxu0 %v9763
  %v9955 = vpop.f32.mrf.mxu0
  %v9956 = vadd.f32 %v9408, %v9955
  %v9957 = vpop.f32.mrf.mxu0
  %v9958 = vpop.f32.mrf.mxu0
  %v9959 = vadd.f32 %v9411, %v9958
  %v9960 = vpop.f32.mrf.mxu0
  %9961 = vmatprep.mubr.bf16.mxu0 0
  %9962 = vmatmul.mubr.bf16.gmra.mxu0 %v9766
  %v9963 = vpop.f32.mrf.mxu0
  %v9964 = vadd.f32 %v9416, %v9963
  %v9965 = vpop.f32.mrf.mxu0
  %v9966 = vpop.f32.mrf.mxu0
  %v9967 = vadd.f32 %v9419, %v9966
  %v9968 = vpop.f32.mrf.mxu0
  %9969 = vmatprep.mubr.bf16.mxu0 0
  %9970 = vmatmul.mubr.bf16.gmra.mxu0 %v9769
  %v9971 = vpop.f32.mrf.mxu0
  %v9972 = vadd.f32 %v9424, %v9971
  %v9973 = vpop.f32.mrf.mxu0
  %v9974 = vpop.f32.mrf.mxu0
  %v9975 = vadd.f32 %v9427, %v9974
  %v9976 = vpop.f32.mrf.mxu0
  %9977 = vmatprep.mubr.bf16.mxu0 0
  %9978 = vmatmul.mubr.bf16.gmra.mxu0 %v9772
  %v9979 = vpop.f32.mrf.mxu0
  %v9980 = vadd.f32 %v9432, %v9979
  %v9981 = vpop.f32.mrf.mxu0
  %v9982 = vpop.f32.mrf.mxu0
  %v9983 = vadd.f32 %v9435, %v9982
  %v9984 = vpop.f32.mrf.mxu0
  %9985 = vmatprep.mubr.bf16.mxu0 0
  %9986 = vmatmul.mubr.bf16.gmra.mxu0 %v9775
  %v9987 = vpop.f32.mrf.mxu0
  %v9988 = vadd.f32 %v9440, %v9987
  %v9989 = vpop.f32.mrf.mxu0
  %v9990 = vpop.f32.mrf.mxu0
  %v9991 = vadd.f32 %v9443, %v9990
  %v9992 = vpop.f32.mrf.mxu0
  %9993 = vmatprep.mubr.bf16.mxu0 0
  %9994 = vmatmul.mubr.bf16.gmra.mxu0 %v9778
  %v9995 = vpop.f32.mrf.mxu0
  %v9996 = vadd.f32 %v9448, %v9995
  %v9997 = vpop.f32.mrf.mxu0
  %v9998 = vpop.f32.mrf.mxu0
  %v9999 = vadd.f32 %v9451, %v9998
  %v10000 = vpop.f32.mrf.mxu0
  %10001 = vmatprep.mubr.bf16.mxu0 0
  %10002 = vmatmul.mubr.bf16.gmra.mxu0 %v9781
  %v10003 = vpop.f32.mrf.mxu0
  %v10004 = vadd.f32 %v9456, %v10003
  %v10005 = vpop.f32.mrf.mxu0
  %v10006 = vpop.f32.mrf.mxu0
  %v10007 = vadd.f32 %v9459, %v10006
  %v10008 = vpop.f32.mrf.mxu0
  %10009 = vmatprep.mubr.bf16.mxu0 0
  %10010 = vmatmul.mubr.bf16.gmra.mxu0 %v9784
  %v10011 = vpop.f32.mrf.mxu0
  %v10012 = vadd.f32 %v9464, %v10011
  %v10013 = vpop.f32.mrf.mxu0
  %v10014 = vpop.f32.mrf.mxu0
  %v10015 = vadd.f32 %v9467, %v10014
  %v10016 = vpop.f32.mrf.mxu0
  %10017 = vmatprep.mubr.bf16.mxu0 0
  %10018 = vmatmul.mubr.bf16.gmra.mxu0 %v9787
  %v10019 = vpop.f32.mrf.mxu0
  %v10020 = vadd.f32 %v9472, %v10019
  %v10021 = vpop.f32.mrf.mxu0
  %v10022 = vpop.f32.mrf.mxu0
  %v10023 = vadd.f32 %v9475, %v10022
  %v10024 = vpop.f32.mrf.mxu0
  %10025 = vmatprep.mubr.bf16.mxu0 0
  %10026 = vmatmul.mubr.bf16.gmra.mxu0 %v9790
  %v10027 = vpop.f32.mrf.mxu0
  %v10028 = vadd.f32 %v9480, %v10027
  %v10029 = vpop.f32.mrf.mxu0
  %v10030 = vpop.f32.mrf.mxu0
  %v10031 = vadd.f32 %v9483, %v10030
  %v10032 = vpop.f32.mrf.mxu0
  %10033 = vmatprep.mubr.bf16.mxu0 0
  %10034 = vmatmul.mubr.bf16.gmra.mxu0 %v9793
  %v10035 = vpop.f32.mrf.mxu0
  %v10036 = vadd.f32 %v9488, %v10035
  %v10037 = vpop.f32.mrf.mxu0
  %v10038 = vpop.f32.mrf.mxu0
  %v10039 = vadd.f32 %v9491, %v10038
  %v10040 = vpop.f32.mrf.mxu0
  %10041 = vmatprep.mubr.bf16.mxu0 0
  %10042 = vmatmul.mubr.bf16.gmra.mxu0 %v9796
  %v10043 = vpop.f32.mrf.mxu0
  %v10044 = vadd.f32 %v9496, %v10043
  %v10045 = vpop.f32.mrf.mxu0
  %v10046 = vpop.f32.mrf.mxu0
  %v10047 = vadd.f32 %v9499, %v10046
  %v10048 = vpop.f32.mrf.mxu0
  %10049 = vmatprep.mubr.bf16.mxu0 0
  %10050 = vmatmul.mubr.bf16.gmra.mxu0 %v9799
  %v10051 = vpop.f32.mrf.mxu0
  %v10052 = vadd.f32 %v9504, %v10051
  %v10053 = vpop.f32.mrf.mxu0
  %v10054 = vpop.f32.mrf.mxu0
  %v10055 = vadd.f32 %v9507, %v10054
  %v10056 = vpop.f32.mrf.mxu0
  %10057 = vmatprep.mubr.bf16.mxu0 0
  %10058 = vmatmul.mubr.bf16.gmra.mxu0 %v9802
  %v10059 = vpop.f32.mrf.mxu0
  %v10060 = vadd.f32 %v9512, %v10059
  %v10061 = vpop.f32.mrf.mxu0
  %v10062 = vpop.f32.mrf.mxu0
  %v10063 = vadd.f32 %v9515, %v10062
  %v10064 = vpop.f32.mrf.mxu0
  %10065 = vmatprep.mubr.bf16.mxu0 0
  %10066 = vmatmul.mubr.bf16.gmra.mxu0 %v9805
  %v10067 = vpop.f32.mrf.mxu0
  %v10068 = vadd.f32 %v9520, %v10067
  %v10069 = vpop.f32.mrf.mxu0
  %v10070 = vpop.f32.mrf.mxu0
  %v10071 = vadd.f32 %v9523, %v10070
  %v10072 = vpop.f32.mrf.mxu0
  %10073 = vmatprep.mubr.bf16.mxu0 0
  %10074 = vmatmul.mubr.bf16.gmra.mxu0 %v9808
  %v10075 = vpop.f32.mrf.mxu0
  %v10076 = vadd.f32 %v9528, %v10075
  %v10077 = vpop.f32.mrf.mxu0
  %v10078 = vpop.f32.mrf.mxu0
  %v10079 = vadd.f32 %v9531, %v10078
  %v10080 = vpop.f32.mrf.mxu0
  %10081 = vmatprep.mubr.bf16.mxu0 0
  %10082 = vmatmul.mubr.bf16.gmra.mxu0 %v9811
  %v10083 = vpop.f32.mrf.mxu0
  %v10084 = vadd.f32 %v9536, %v10083
  %v10085 = vpop.f32.mrf.mxu0
  %v10086 = vpop.f32.mrf.mxu0
  %v10087 = vadd.f32 %v9539, %v10086
  %v10088 = vpop.f32.mrf.mxu0
  %10089 = vmatprep.mubr.bf16.mxu0 0
  %10090 = vmatmul.mubr.bf16.gmra.mxu0 %v9814
  %v10091 = vpop.f32.mrf.mxu0
  %v10092 = vadd.f32 %v9544, %v10091
  %v10093 = vpop.f32.mrf.mxu0
  %v10094 = vpop.f32.mrf.mxu0
  %v10095 = vadd.f32 %v9547, %v10094
  %v10096 = vpop.f32.mrf.mxu0
  %10097 = vmatprep.mubr.bf16.mxu0 0
  %10098 = vmatmul.mubr.bf16.gmra.mxu0 %v9817
  %v10099 = vpop.f32.mrf.mxu0
  %v10100 = vadd.f32 %v9552, %v10099
  %v10101 = vpop.f32.mrf.mxu0
  %v10102 = vpop.f32.mrf.mxu0
  %v10103 = vadd.f32 %v9555, %v10102
  %v10104 = vpop.f32.mrf.mxu0
  %10105 = vmatprep.mubr.bf16.mxu0 0
  %10106 = vmatmul.mubr.bf16.gmra.mxu0 %v9820
  %v10107 = vpop.f32.mrf.mxu0
  %v10108 = vadd.f32 %v9560, %v10107
  %v10109 = vpop.f32.mrf.mxu0
  %v10110 = vpop.f32.mrf.mxu0
  %v10111 = vadd.f32 %v9563, %v10110
  %v10112 = vpop.f32.mrf.mxu0
  %10113 = vdwg.mxu0
  %v10146 = vrot.slane %v8203, 5
  %v10147 = vrot.slane %v10146, 4
  %v10148 = vrot.slane %v8204, 5
  %v10149 = vsel %vm3189, %v10147, %v10148
  %v10150 = vrot.slane %v10148, 4
  %v10151 = vrot.slane %v8205, 5
  %v10152 = vsel %vm3189, %v10150, %v10151
  %v10153 = vrot.slane %v8206, 5
  %v10154 = vrot.slane %v10153, 4
  %v10155 = vrot.slane %v8207, 5
  %v10156 = vsel %vm3189, %v10154, %v10155
  %v10157 = vrot.slane %v10155, 4
  %v10158 = vrot.slane %v8208, 5
  %v10159 = vsel %vm3189, %v10157, %v10158
  %v10160 = vrot.slane %v8209, 5
  %v10161 = vrot.slane %v10160, 4
  %v10162 = vrot.slane %v8210, 5
  %v10163 = vsel %vm3189, %v10161, %v10162
  %v10164 = vrot.slane %v10162, 4
  %v10165 = vrot.slane %v8211, 5
  %v10166 = vsel %vm3189, %v10164, %v10165
  %v10167 = vrot.slane %v8212, 5
  %v10168 = vrot.slane %v10167, 4
  %v10169 = vrot.slane %v8213, 5
  %v10170 = vsel %vm3189, %v10168, %v10169
  %v10171 = vrot.slane %v10169, 4
  %v10172 = vrot.slane %v8214, 5
  %v10173 = vsel %vm3189, %v10171, %v10172
  %v10174 = vrot.slane %v8215, 5
  %v10175 = vrot.slane %v10174, 4
  %v10176 = vrot.slane %v8216, 5
  %v10177 = vsel %vm3189, %v10175, %v10176
  %v10178 = vrot.slane %v10176, 4
  %v10179 = vrot.slane %v8217, 5
  %v10180 = vsel %vm3189, %v10178, %v10179
  %v10181 = vrot.slane %v8218, 5
  %v10182 = vrot.slane %v10181, 4
  %v10183 = vrot.slane %v8219, 5
  %v10184 = vsel %vm3189, %v10182, %v10183
  %v10185 = vrot.slane %v10183, 4
  %v10186 = vrot.slane %v8220, 5
  %v10187 = vsel %vm3189, %v10185, %v10186
  %v10188 = vrot.slane %v8221, 5
  %v10189 = vrot.slane %v10188, 4
  %v10190 = vrot.slane %v8222, 5
  %v10191 = vsel %vm3189, %v10189, %v10190
  %v10192 = vrot.slane %v10190, 4
  %v10193 = vrot.slane %v8223, 5
  %v10194 = vsel %vm3189, %v10192, %v10193
  %v10195 = vrot.slane %v8224, 5
  %v10196 = vrot.slane %v10195, 4
  %v10197 = vrot.slane %v8225, 5
  %v10198 = vsel %vm3189, %v10196, %v10197
  %v10199 = vrot.slane %v10197, 4
  %v10200 = vrot.slane %v8226, 5
  %v10201 = vsel %vm3189, %v10199, %v10200
  %v10202 = vrot.slane %v8227, 5
  %v10203 = vrot.slane %v10202, 4
  %v10204 = vrot.slane %v8228, 5
  %v10205 = vsel %vm3189, %v10203, %v10204
  %v10206 = vrot.slane %v10204, 4
  %v10207 = vrot.slane %v8229, 5
  %v10208 = vsel %vm3189, %v10206, %v10207
  %v10209 = vrot.slane %v8230, 5
  %v10210 = vrot.slane %v10209, 4
  %v10211 = vrot.slane %v8231, 5
  %v10212 = vsel %vm3189, %v10210, %v10211
  %v10213 = vrot.slane %v10211, 4
  %v10214 = vrot.slane %v8232, 5
  %v10215 = vsel %vm3189, %v10213, %v10214
  %v10216 = vrot.slane %v8233, 5
  %v10217 = vrot.slane %v10216, 4
  %v10218 = vrot.slane %v8234, 5
  %v10219 = vsel %vm3189, %v10217, %v10218
  %v10220 = vrot.slane %v10218, 4
  %v10221 = vrot.slane %v8235, 5
  %v10222 = vsel %vm3189, %v10220, %v10221
  %v10223 = vrot.slane %v8236, 5
  %v10224 = vrot.slane %v10223, 4
  %v10225 = vrot.slane %v8237, 5
  %v10226 = vsel %vm3189, %v10224, %v10225
  %v10227 = vrot.slane %v10225, 4
  %v10228 = vrot.slane %v8238, 5
  %v10229 = vsel %vm3189, %v10227, %v10228
  %v10230 = vrot.slane %v8239, 5
  %v10231 = vrot.slane %v10230, 4
  %v10232 = vrot.slane %v8240, 5
  %v10233 = vsel %vm3189, %v10231, %v10232
  %v10234 = vrot.slane %v10232, 4
  %v10235 = vrot.slane %v8241, 5
  %v10236 = vsel %vm3189, %v10234, %v10235
  %v10237 = vrot.slane %v8242, 5
  %v10238 = vrot.slane %v10237, 4
  %v10239 = vrot.slane %v8243, 5
  %v10240 = vsel %vm3189, %v10238, %v10239
  %v10241 = vrot.slane %v10239, 4
  %v10242 = vrot.slane %v8244, 5
  %v10243 = vsel %vm3189, %v10241, %v10242
  %v10244 = vrot.slane %v8245, 5
  %v10245 = vrot.slane %v10244, 4
  %v10246 = vrot.slane %v8246, 5
  %v10247 = vsel %vm3189, %v10245, %v10246
  %v10248 = vrot.slane %v10246, 4
  %v10249 = vrot.slane %v8247, 5
  %v10250 = vsel %vm3189, %v10248, %v10249
  %v10251 = vrot.slane %v8248, 5
  %v10252 = vrot.slane %v10251, 4
  %v10253 = vrot.slane %v8249, 5
  %v10254 = vsel %vm3189, %v10252, %v10253
  %v10255 = vrot.slane %v10253, 4
  %v10256 = vrot.slane %v8250, 5
  %v10257 = vsel %vm3189, %v10255, %v10256
  %v10258 = vrot.slane %v8257, 5
  %v10259 = vrot.slane %v10258, 4
  %v10260 = vrot.slane %v8258, 5
  %v10261 = vsel %vm3189, %v10259, %v10260
  %v10262 = vrot.slane %v10260, 4
  %v10263 = vrot.slane %v8259, 5
  %v10264 = vsel %vm3189, %v10262, %v10263
  %v10265 = vrot.slane %v8260, 5
  %v10266 = vrot.slane %v10265, 4
  %v10267 = vrot.slane %v8261, 5
  %v10268 = vsel %vm3189, %v10266, %v10267
  %v10269 = vrot.slane %v10267, 4
  %v10270 = vrot.slane %v8262, 5
  %v10271 = vsel %vm3189, %v10269, %v10270
  %v10272 = vrot.slane %v8263, 5
  %v10273 = vrot.slane %v10272, 4
  %v10274 = vrot.slane %v8264, 5
  %v10275 = vsel %vm3189, %v10273, %v10274
  %v10276 = vrot.slane %v10274, 4
  %v10277 = vrot.slane %v8265, 5
  %v10278 = vsel %vm3189, %v10276, %v10277
  %v10279 = vrot.slane %v8266, 5
  %v10280 = vrot.slane %v10279, 4
  %v10281 = vrot.slane %v8267, 5
  %v10282 = vsel %vm3189, %v10280, %v10281
  %v10283 = vrot.slane %v10281, 4
  %v10284 = vrot.slane %v8268, 5
  %v10285 = vsel %vm3189, %v10283, %v10284
  %v10286 = vrot.slane %v8269, 5
  %v10287 = vrot.slane %v10286, 4
  %v10288 = vrot.slane %v8270, 5
  %v10289 = vsel %vm3189, %v10287, %v10288
  %v10290 = vrot.slane %v10288, 4
  %v10291 = vrot.slane %v8271, 5
  %v10292 = vsel %vm3189, %v10290, %v10291
  %v10293 = vrot.slane %v8272, 5
  %v10294 = vrot.slane %v10293, 4
  %v10295 = vrot.slane %v8273, 5
  %v10296 = vsel %vm3189, %v10294, %v10295
  %v10297 = vrot.slane %v10295, 4
  %v10298 = vrot.slane %v8274, 5
  %v10299 = vsel %vm3189, %v10297, %v10298
  %v10300 = vrot.slane %v8275, 5
  %v10301 = vrot.slane %v10300, 4
  %v10302 = vrot.slane %v8276, 5
  %v10303 = vsel %vm3189, %v10301, %v10302
  %v10304 = vrot.slane %v10302, 4
  %v10305 = vrot.slane %v8277, 5
  %v10306 = vsel %vm3189, %v10304, %v10305
  %v10307 = vrot.slane %v8278, 5
  %v10308 = vrot.slane %v10307, 4
  %v10309 = vrot.slane %v8279, 5
  %v10310 = vsel %vm3189, %v10308, %v10309
  %v10311 = vrot.slane %v10309, 4
  %v10312 = vrot.slane %v8280, 5
  %v10313 = vsel %vm3189, %v10311, %v10312
  %v10314 = vrot.slane %v8281, 5
  %v10315 = vrot.slane %v10314, 4
  %v10316 = vrot.slane %v8282, 5
  %v10317 = vsel %vm3189, %v10315, %v10316
  %v10318 = vrot.slane %v10316, 4
  %v10319 = vrot.slane %v8283, 5
  %v10320 = vsel %vm3189, %v10318, %v10319
  %v10321 = vrot.slane %v8284, 5
  %v10322 = vrot.slane %v10321, 4
  %v10323 = vrot.slane %v8285, 5
  %v10324 = vsel %vm3189, %v10322, %v10323
  %v10325 = vrot.slane %v10323, 4
  %v10326 = vrot.slane %v8286, 5
  %v10327 = vsel %vm3189, %v10325, %v10326
  %v10328 = vrot.slane %v8287, 5
  %v10329 = vrot.slane %v10328, 4
  %v10330 = vrot.slane %v8288, 5
  %v10331 = vsel %vm3189, %v10329, %v10330
  %v10332 = vrot.slane %v10330, 4
  %v10333 = vrot.slane %v8289, 5
  %v10334 = vsel %vm3189, %v10332, %v10333
  %v10335 = vrot.slane %v8290, 5
  %v10336 = vrot.slane %v10335, 4
  %v10337 = vrot.slane %v8291, 5
  %v10338 = vsel %vm3189, %v10336, %v10337
  %v10339 = vrot.slane %v10337, 4
  %v10340 = vrot.slane %v8292, 5
  %v10341 = vsel %vm3189, %v10339, %v10340
  %v10342 = vrot.slane %v8293, 5
  %v10343 = vrot.slane %v10342, 4
  %v10344 = vrot.slane %v8294, 5
  %v10345 = vsel %vm3189, %v10343, %v10344
  %v10346 = vrot.slane %v10344, 4
  %v10347 = vrot.slane %v8295, 5
  %v10348 = vsel %vm3189, %v10346, %v10347
  %v10349 = vrot.slane %v8296, 5
  %v10350 = vrot.slane %v10349, 4
  %v10351 = vrot.slane %v8297, 5
  %v10352 = vsel %vm3189, %v10350, %v10351
  %v10353 = vrot.slane %v10351, 4
  %v10354 = vrot.slane %v8298, 5
  %v10355 = vsel %vm3189, %v10353, %v10354
  %v10356 = vrot.slane %v8299, 5
  %v10357 = vrot.slane %v10356, 4
  %v10358 = vrot.slane %v8300, 5
  %v10359 = vsel %vm3189, %v10357, %v10358
  %v10360 = vrot.slane %v10358, 4
  %v10361 = vrot.slane %v8301, 5
  %v10362 = vsel %vm3189, %v10360, %v10361
  %v10363 = vrot.slane %v8302, 5
  %v10364 = vrot.slane %v10363, 4
  %v10365 = vrot.slane %v8303, 5
  %v10366 = vsel %vm3189, %v10364, %v10365
  %v10367 = vrot.slane %v10365, 4
  %v10368 = vrot.slane %v8304, 5
  %v10369 = vsel %vm3189, %v10367, %v10368
  %v10370 = vld [vmem:[%s4 + $0x8] sm:$0xf]
  %v10371 = vunpack.c.l.b16 %v10149
  %v10372 = vunpack.c.l.b16 %v10152
  %v10373 = vunpack.c.l.b16 %v10156
  %v10374 = vunpack.c.l.b16 %v10159
  %v10375 = vunpack.c.l.b16 %v10163
  %v10376 = vunpack.c.l.b16 %v10166
  %v10377 = vunpack.c.l.b16 %v10170
  %v10378 = vunpack.c.l.b16 %v10173
  %v10379 = vunpack.c.l.b16 %v10177
  %v10380 = vunpack.c.l.b16 %v10180
  %v10381 = vunpack.c.l.b16 %v10184
  %v10382 = vunpack.c.l.b16 %v10187
  %v10383 = vunpack.c.l.b16 %v10191
  %v10384 = vunpack.c.l.b16 %v10194
  %v10385 = vunpack.c.l.b16 %v10198
  %v10386 = vunpack.c.l.b16 %v10201
  %v10387 = vunpack.c.l.b16 %v10205
  %v10388 = vunpack.c.l.b16 %v10208
  %v10389 = vunpack.c.l.b16 %v10212
  %v10390 = vunpack.c.l.b16 %v10215
  %v10391 = vunpack.c.l.b16 %v10219
  %v10392 = vunpack.c.l.b16 %v10222
  %v10393 = vunpack.c.l.b16 %v10226
  %v10394 = vunpack.c.l.b16 %v10229
  %v10395 = vunpack.c.l.b16 %v10233
  %v10396 = vunpack.c.l.b16 %v10236
  %v10397 = vunpack.c.l.b16 %v10240
  %v10398 = vunpack.c.l.b16 %v10243
  %v10399 = vunpack.c.l.b16 %v10247
  %v10400 = vunpack.c.l.b16 %v10250
  %v10401 = vunpack.c.l.b16 %v10254
  %v10402 = vunpack.c.l.b16 %v10257
  %v10403 = vunpack.c.l.b16 %v10261
  %v10404 = vunpack.c.l.b16 %v10264
  %v10405 = vunpack.c.l.b16 %v10268
  %v10406 = vunpack.c.l.b16 %v10271
  %v10407 = vunpack.c.l.b16 %v10275
  %v10408 = vunpack.c.l.b16 %v10278
  %v10409 = vunpack.c.l.b16 %v10282
  %v10410 = vunpack.c.l.b16 %v10285
  %v10411 = vunpack.c.l.b16 %v10289
  %v10412 = vunpack.c.l.b16 %v10292
  %v10413 = vunpack.c.l.b16 %v10296
  %v10414 = vunpack.c.l.b16 %v10299
  %v10415 = vunpack.c.l.b16 %v10303
  %v10416 = vunpack.c.l.b16 %v10306
  %v10417 = vunpack.c.l.b16 %v10310
  %v10418 = vunpack.c.l.b16 %v10313
  %v10419 = vunpack.c.l.b16 %v10317
  %v10420 = vunpack.c.l.b16 %v10320
  %v10421 = vunpack.c.l.b16 %v10324
  %v10422 = vunpack.c.l.b16 %v10327
  %v10423 = vunpack.c.l.b16 %v10331
  %v10424 = vunpack.c.l.b16 %v10334
  %v10425 = vunpack.c.l.b16 %v10338
  %v10426 = vunpack.c.l.b16 %v10341
  %v10427 = vunpack.c.l.b16 %v10345
  %v10428 = vunpack.c.l.b16 %v10348
  %v10429 = vunpack.c.l.b16 %v10352
  %v10430 = vunpack.c.l.b16 %v10355
  %v10431 = vunpack.c.l.b16 %v10359
  %v10432 = vunpack.c.l.b16 %v10362
  %v10433 = vunpack.c.l.b16 %v10366
  %v10434 = vunpack.c.l.b16 %v10369
  %v10435 = vpack.c.b16 %v10372, %v10371
  %v10436 = vpack.c.b16 %v10374, %v10373
  %v10437 = vpack.c.b16 %v10376, %v10375
  %v10438 = vpack.c.b16 %v10378, %v10377
  %v10439 = vpack.c.b16 %v10380, %v10379
  %v10440 = vpack.c.b16 %v10382, %v10381
  %v10441 = vpack.c.b16 %v10384, %v10383
  %v10442 = vpack.c.b16 %v10386, %v10385
  %v10443 = vpack.c.b16 %v10388, %v10387
  %v10444 = vpack.c.b16 %v10390, %v10389
  %v10445 = vpack.c.b16 %v10392, %v10391
  %v10446 = vpack.c.b16 %v10394, %v10393
  %v10447 = vpack.c.b16 %v10396, %v10395
  %v10448 = vpack.c.b16 %v10398, %v10397
  %v10449 = vpack.c.b16 %v10400, %v10399
  %v10450 = vpack.c.b16 %v10402, %v10401
  %v10451 = vpack.c.b16 %v10404, %v10403
  %v10452 = vpack.c.b16 %v10406, %v10405
  %v10453 = vpack.c.b16 %v10408, %v10407
  %v10454 = vpack.c.b16 %v10410, %v10409
  %v10455 = vpack.c.b16 %v10412, %v10411
  %v10456 = vpack.c.b16 %v10414, %v10413
  %v10457 = vpack.c.b16 %v10416, %v10415
  %v10458 = vpack.c.b16 %v10418, %v10417
  %v10459 = vpack.c.b16 %v10420, %v10419
  %v10460 = vpack.c.b16 %v10422, %v10421
  %v10461 = vpack.c.b16 %v10424, %v10423
  %v10462 = vpack.c.b16 %v10426, %v10425
  %v10463 = vpack.c.b16 %v10428, %v10427
  %v10464 = vpack.c.b16 %v10430, %v10429
  %v10465 = vpack.c.b16 %v10432, %v10431
  %v10466 = vpack.c.b16 %v10434, %v10433
  %v10468 = vsel %vm6325, %v10435, 0
  %v10471 = vsel %vm6325, %v10436, 0
  %v10474 = vsel %vm6325, %v10437, 0
  %v10477 = vsel %vm6325, %v10438, 0
  %v10480 = vsel %vm6325, %v10439, 0
  %v10483 = vsel %vm6325, %v10440, 0
  %v10486 = vsel %vm6325, %v10441, 0
  %v10489 = vsel %vm6325, %v10442, 0
  %v10492 = vsel %vm6325, %v10443, 0
  %v10495 = vsel %vm6325, %v10444, 0
  %v10498 = vsel %vm6325, %v10445, 0
  %v10501 = vsel %vm6325, %v10446, 0
  %v10504 = vsel %vm6325, %v10447, 0
  %v10507 = vsel %vm6325, %v10448, 0
  %v10510 = vsel %vm6325, %v10449, 0
  %v10513 = vsel %vm6325, %v10450, 0
  %v10516 = vsel %vm6325, %v10451, 0
  %v10519 = vsel %vm6325, %v10452, 0
  %v10522 = vsel %vm6325, %v10453, 0
  %v10525 = vsel %vm6325, %v10454, 0
  %v10528 = vsel %vm6325, %v10455, 0
  %v10531 = vsel %vm6325, %v10456, 0
  %v10534 = vsel %vm6325, %v10457, 0
  %v10537 = vsel %vm6325, %v10458, 0
  %v10540 = vsel %vm6325, %v10459, 0
  %v10543 = vsel %vm6325, %v10460, 0
  %v10546 = vsel %vm6325, %v10461, 0
  %v10549 = vsel %vm6325, %v10462, 0
  %v10552 = vsel %vm6325, %v10463, 0
  %v10555 = vsel %vm6325, %v10464, 0
  %v10558 = vsel %vm6325, %v10465, 0
  %v10561 = vsel %vm6325, %v10466, 0
  %v10564 = vsel %vm9273, %v10370, 0
  %10566 = vmatprep.subr.bf16.mxu0 0
  %10567 = vmatpush1.bf16.msra.mxu0 0
  %10568 = vmatprep.subr.bf16.mxu0 0
  %10569 = vmatpush1.bf16.msra.mxu0 0
  %10570 = vmatprep.subr.bf16.mxu0 0
  %10571 = vmatpush1.bf16.msra.mxu0 0
  %10572 = vmatprep.subr.bf16.mxu0 0
  %10573 = vmatpush1.bf16.msra.mxu0 0
  %10574 = vmatprep.subr.bf16.mxu0 0
  %10575 = vmatpush1.bf16.msra.mxu0 0
  %10576 = vmatprep.subr.bf16.mxu0 0
  %10577 = vmatpush1.bf16.msra.mxu0 0
  %10578 = vmatprep.subr.bf16.mxu0 0
  %10579 = vmatpush1.bf16.msra.mxu0 0
  %10580 = vmatprep.subr.bf16.mxu0 0
  %10581 = vmatpush1.bf16.msra.mxu0 %v10564
  %10582 = vmatprep.subr.bf16.mxu0 0
  %10583 = vmatpush2.bf16.msra.mxu0 0
  %10584 = vmatprep.subr.bf16.mxu0 0
  %10585 = vmatpush2.bf16.msra.mxu0 0
  %10586 = vmatprep.subr.bf16.mxu0 0
  %10587 = vmatpush2.bf16.msra.mxu0 0
  %10588 = vmatprep.subr.bf16.mxu0 0
  %10589 = vmatpush2.bf16.msra.mxu0 0
  %10590 = vmatprep.subr.bf16.mxu0 0
  %10591 = vmatpush2.bf16.msra.mxu0 0
  %10592 = vmatprep.subr.bf16.mxu0 0
  %10593 = vmatpush2.bf16.msra.mxu0 0
  %10594 = vmatprep.subr.bf16.mxu0 0
  %10595 = vmatpush2.bf16.msra.mxu0 0
  %10596 = vmatprep.subr.bf16.mxu0 0
  %10597 = vmatpush2.bf16.msra.mxu0 0
  %10598 = vmatprep.mubr.bf16.mxu0 0
  %10599 = vmatmul.mubr.bf16.gmra.mxu0 %v10468
  %v10600 = vpop.f32.mrf.mxu0
  %v10601 = vadd.f32 0.0, %v10600
  %v10602 = vpop.f32.mrf.mxu0
  %v10603 = vpop.f32.mrf.mxu0
  %v10604 = vadd.f32 0.0, %v10603
  %v10605 = vpop.f32.mrf.mxu0
  %10606 = vmatprep.mubr.bf16.mxu0 0
  %10607 = vmatmul.mubr.bf16.gmra.mxu0 %v10471
  %v10608 = vpop.f32.mrf.mxu0
  %v10609 = vadd.f32 0.0, %v10608
  %v10610 = vpop.f32.mrf.mxu0
  %v10611 = vpop.f32.mrf.mxu0
  %v10612 = vadd.f32 0.0, %v10611
  %v10613 = vpop.f32.mrf.mxu0
  %10614 = vmatprep.mubr.bf16.mxu0 0
  %10615 = vmatmul.mubr.bf16.gmra.mxu0 %v10474
  %v10616 = vpop.f32.mrf.mxu0
  %v10617 = vadd.f32 0.0, %v10616
  %v10618 = vpop.f32.mrf.mxu0
  %v10619 = vpop.f32.mrf.mxu0
  %v10620 = vadd.f32 0.0, %v10619
  %v10621 = vpop.f32.mrf.mxu0
  %10622 = vmatprep.mubr.bf16.mxu0 0
  %10623 = vmatmul.mubr.bf16.gmra.mxu0 %v10477
  %v10624 = vpop.f32.mrf.mxu0
  %v10625 = vadd.f32 0.0, %v10624
  %v10626 = vpop.f32.mrf.mxu0
  %v10627 = vpop.f32.mrf.mxu0
  %v10628 = vadd.f32 0.0, %v10627
  %v10629 = vpop.f32.mrf.mxu0
  %10630 = vmatprep.mubr.bf16.mxu0 0
  %10631 = vmatmul.mubr.bf16.gmra.mxu0 %v10480
  %v10632 = vpop.f32.mrf.mxu0
  %v10633 = vadd.f32 0.0, %v10632
  %v10634 = vpop.f32.mrf.mxu0
  %v10635 = vpop.f32.mrf.mxu0
  %v10636 = vadd.f32 0.0, %v10635
  %v10637 = vpop.f32.mrf.mxu0
  %10638 = vmatprep.mubr.bf16.mxu0 0
  %10639 = vmatmul.mubr.bf16.gmra.mxu0 %v10483
  %v10640 = vpop.f32.mrf.mxu0
  %v10641 = vadd.f32 0.0, %v10640
  %v10642 = vpop.f32.mrf.mxu0
  %v10643 = vpop.f32.mrf.mxu0
  %v10644 = vadd.f32 0.0, %v10643
  %v10645 = vpop.f32.mrf.mxu0
  %10646 = vmatprep.mubr.bf16.mxu0 0
  %10647 = vmatmul.mubr.bf16.gmra.mxu0 %v10486
  %v10648 = vpop.f32.mrf.mxu0
  %v10649 = vadd.f32 0.0, %v10648
  %v10650 = vpop.f32.mrf.mxu0
  %v10651 = vpop.f32.mrf.mxu0
  %v10652 = vadd.f32 0.0, %v10651
  %v10653 = vpop.f32.mrf.mxu0
  %10654 = vmatprep.mubr.bf16.mxu0 0
  %10655 = vmatmul.mubr.bf16.gmra.mxu0 %v10489
  %v10656 = vpop.f32.mrf.mxu0
  %v10657 = vadd.f32 0.0, %v10656
  %v10658 = vpop.f32.mrf.mxu0
  %v10659 = vpop.f32.mrf.mxu0
  %v10660 = vadd.f32 0.0, %v10659
  %v10661 = vpop.f32.mrf.mxu0
  %10662 = vmatprep.mubr.bf16.mxu0 0
  %10663 = vmatmul.mubr.bf16.gmra.mxu0 %v10492
  %v10664 = vpop.f32.mrf.mxu0
  %v10665 = vadd.f32 0.0, %v10664
  %v10666 = vpop.f32.mrf.mxu0
  %v10667 = vpop.f32.mrf.mxu0
  %v10668 = vadd.f32 0.0, %v10667
  %v10669 = vpop.f32.mrf.mxu0
  %10670 = vmatprep.mubr.bf16.mxu0 0
  %10671 = vmatmul.mubr.bf16.gmra.mxu0 %v10495
  %v10672 = vpop.f32.mrf.mxu0
  %v10673 = vadd.f32 0.0, %v10672
  %v10674 = vpop.f32.mrf.mxu0
  %v10675 = vpop.f32.mrf.mxu0
  %v10676 = vadd.f32 0.0, %v10675
  %v10677 = vpop.f32.mrf.mxu0
  %10678 = vmatprep.mubr.bf16.mxu0 0
  %10679 = vmatmul.mubr.bf16.gmra.mxu0 %v10498
  %v10680 = vpop.f32.mrf.mxu0
  %v10681 = vadd.f32 0.0, %v10680
  %v10682 = vpop.f32.mrf.mxu0
  %v10683 = vpop.f32.mrf.mxu0
  %v10684 = vadd.f32 0.0, %v10683
  %v10685 = vpop.f32.mrf.mxu0
  %10686 = vmatprep.mubr.bf16.mxu0 0
  %10687 = vmatmul.mubr.bf16.gmra.mxu0 %v10501
  %v10688 = vpop.f32.mrf.mxu0
  %v10689 = vadd.f32 0.0, %v10688
  %v10690 = vpop.f32.mrf.mxu0
  %v10691 = vpop.f32.mrf.mxu0
  %v10692 = vadd.f32 0.0, %v10691
  %v10693 = vpop.f32.mrf.mxu0
  %10694 = vmatprep.mubr.bf16.mxu0 0
  %10695 = vmatmul.mubr.bf16.gmra.mxu0 %v10504
  %v10696 = vpop.f32.mrf.mxu0
  %v10697 = vadd.f32 0.0, %v10696
  %v10698 = vpop.f32.mrf.mxu0
  %v10699 = vpop.f32.mrf.mxu0
  %v10700 = vadd.f32 0.0, %v10699
  %v10701 = vpop.f32.mrf.mxu0
  %10702 = vmatprep.mubr.bf16.mxu0 0
  %10703 = vmatmul.mubr.bf16.gmra.mxu0 %v10507
  %v10704 = vpop.f32.mrf.mxu0
  %v10705 = vadd.f32 0.0, %v10704
  %v10706 = vpop.f32.mrf.mxu0
  %v10707 = vpop.f32.mrf.mxu0
  %v10708 = vadd.f32 0.0, %v10707
  %v10709 = vpop.f32.mrf.mxu0
  %10710 = vmatprep.mubr.bf16.mxu0 0
  %10711 = vmatmul.mubr.bf16.gmra.mxu0 %v10510
  %v10712 = vpop.f32.mrf.mxu0
  %v10713 = vadd.f32 0.0, %v10712
  %v10714 = vpop.f32.mrf.mxu0
  %v10715 = vpop.f32.mrf.mxu0
  %v10716 = vadd.f32 0.0, %v10715
  %v10717 = vpop.f32.mrf.mxu0
  %10718 = vmatprep.mubr.bf16.mxu0 0
  %10719 = vmatmul.mubr.bf16.gmra.mxu0 %v10513
  %v10720 = vpop.f32.mrf.mxu0
  %v10721 = vadd.f32 0.0, %v10720
  %v10722 = vpop.f32.mrf.mxu0
  %v10723 = vpop.f32.mrf.mxu0
  %v10724 = vadd.f32 0.0, %v10723
  %v10725 = vpop.f32.mrf.mxu0
  %10726 = vmatprep.mubr.bf16.mxu0 0
  %10727 = vmatmul.mubr.bf16.gmra.mxu0 %v10516
  %v10728 = vpop.f32.mrf.mxu0
  %v10729 = vadd.f32 0.0, %v10728
  %v10730 = vpop.f32.mrf.mxu0
  %v10731 = vpop.f32.mrf.mxu0
  %v10732 = vadd.f32 0.0, %v10731
  %v10733 = vpop.f32.mrf.mxu0
  %10734 = vmatprep.mubr.bf16.mxu0 0
  %10735 = vmatmul.mubr.bf16.gmra.mxu0 %v10519
  %v10736 = vpop.f32.mrf.mxu0
  %v10737 = vadd.f32 0.0, %v10736
  %v10738 = vpop.f32.mrf.mxu0
  %v10739 = vpop.f32.mrf.mxu0
  %v10740 = vadd.f32 0.0, %v10739
  %v10741 = vpop.f32.mrf.mxu0
  %10742 = vmatprep.mubr.bf16.mxu0 0
  %10743 = vmatmul.mubr.bf16.gmra.mxu0 %v10522
  %v10744 = vpop.f32.mrf.mxu0
  %v10745 = vadd.f32 0.0, %v10744
  %v10746 = vpop.f32.mrf.mxu0
  %v10747 = vpop.f32.mrf.mxu0
  %v10748 = vadd.f32 0.0, %v10747
  %v10749 = vpop.f32.mrf.mxu0
  %10750 = vmatprep.mubr.bf16.mxu0 0
  %10751 = vmatmul.mubr.bf16.gmra.mxu0 %v10525
  %v10752 = vpop.f32.mrf.mxu0
  %v10753 = vadd.f32 0.0, %v10752
  %v10754 = vpop.f32.mrf.mxu0
  %v10755 = vpop.f32.mrf.mxu0
  %v10756 = vadd.f32 0.0, %v10755
  %v10757 = vpop.f32.mrf.mxu0
  %10758 = vmatprep.mubr.bf16.mxu0 0
  %10759 = vmatmul.mubr.bf16.gmra.mxu0 %v10528
  %v10760 = vpop.f32.mrf.mxu0
  %v10761 = vadd.f32 0.0, %v10760
  %v10762 = vpop.f32.mrf.mxu0
  %v10763 = vpop.f32.mrf.mxu0
  %v10764 = vadd.f32 0.0, %v10763
  %v10765 = vpop.f32.mrf.mxu0
  %10766 = vmatprep.mubr.bf16.mxu0 0
  %10767 = vmatmul.mubr.bf16.gmra.mxu0 %v10531
  %v10768 = vpop.f32.mrf.mxu0
  %v10769 = vadd.f32 0.0, %v10768
  %v10770 = vpop.f32.mrf.mxu0
  %v10771 = vpop.f32.mrf.mxu0
  %v10772 = vadd.f32 0.0, %v10771
  %v10773 = vpop.f32.mrf.mxu0
  %10774 = vmatprep.mubr.bf16.mxu0 0
  %10775 = vmatmul.mubr.bf16.gmra.mxu0 %v10534
  %v10776 = vpop.f32.mrf.mxu0
  %v10777 = vadd.f32 0.0, %v10776
  %v10778 = vpop.f32.mrf.mxu0
  %v10779 = vpop.f32.mrf.mxu0
  %v10780 = vadd.f32 0.0, %v10779
  %v10781 = vpop.f32.mrf.mxu0
  %10782 = vmatprep.mubr.bf16.mxu0 0
  %10783 = vmatmul.mubr.bf16.gmra.mxu0 %v10537
  %v10784 = vpop.f32.mrf.mxu0
  %v10785 = vadd.f32 0.0, %v10784
  %v10786 = vpop.f32.mrf.mxu0
  %v10787 = vpop.f32.mrf.mxu0
  %v10788 = vadd.f32 0.0, %v10787
  %v10789 = vpop.f32.mrf.mxu0
  %10790 = vmatprep.mubr.bf16.mxu0 0
  %10791 = vmatmul.mubr.bf16.gmra.mxu0 %v10540
  %v10792 = vpop.f32.mrf.mxu0
  %v10793 = vadd.f32 0.0, %v10792
  %v10794 = vpop.f32.mrf.mxu0
  %v10795 = vpop.f32.mrf.mxu0
  %v10796 = vadd.f32 0.0, %v10795
  %v10797 = vpop.f32.mrf.mxu0
  %10798 = vmatprep.mubr.bf16.mxu0 0
  %10799 = vmatmul.mubr.bf16.gmra.mxu0 %v10543
  %v10800 = vpop.f32.mrf.mxu0
  %v10801 = vadd.f32 0.0, %v10800
  %v10802 = vpop.f32.mrf.mxu0
  %v10803 = vpop.f32.mrf.mxu0
  %v10804 = vadd.f32 0.0, %v10803
  %v10805 = vpop.f32.mrf.mxu0
  %10806 = vmatprep.mubr.bf16.mxu0 0
  %10807 = vmatmul.mubr.bf16.gmra.mxu0 %v10546
  %v10808 = vpop.f32.mrf.mxu0
  %v10809 = vadd.f32 0.0, %v10808
  %v10810 = vpop.f32.mrf.mxu0
  %v10811 = vpop.f32.mrf.mxu0
  %v10812 = vadd.f32 0.0, %v10811
  %v10813 = vpop.f32.mrf.mxu0
  %10814 = vmatprep.mubr.bf16.mxu0 0
  %10815 = vmatmul.mubr.bf16.gmra.mxu0 %v10549
  %v10816 = vpop.f32.mrf.mxu0
  %v10817 = vadd.f32 0.0, %v10816
  %v10818 = vpop.f32.mrf.mxu0
  %v10819 = vpop.f32.mrf.mxu0
  %v10820 = vadd.f32 0.0, %v10819
  %v10821 = vpop.f32.mrf.mxu0
  %10822 = vmatprep.mubr.bf16.mxu0 0
  %10823 = vmatmul.mubr.bf16.gmra.mxu0 %v10552
  %v10824 = vpop.f32.mrf.mxu0
  %v10825 = vadd.f32 0.0, %v10824
  %v10826 = vpop.f32.mrf.mxu0
  %v10827 = vpop.f32.mrf.mxu0
  %v10828 = vadd.f32 0.0, %v10827
  %v10829 = vpop.f32.mrf.mxu0
  %10830 = vmatprep.mubr.bf16.mxu0 0
  %10831 = vmatmul.mubr.bf16.gmra.mxu0 %v10555
  %v10832 = vpop.f32.mrf.mxu0
  %v10833 = vadd.f32 0.0, %v10832
  %v10834 = vpop.f32.mrf.mxu0
  %v10835 = vpop.f32.mrf.mxu0
  %v10836 = vadd.f32 0.0, %v10835
  %v10837 = vpop.f32.mrf.mxu0
  %10838 = vmatprep.mubr.bf16.mxu0 0
  %10839 = vmatmul.mubr.bf16.gmra.mxu0 %v10558
  %v10840 = vpop.f32.mrf.mxu0
  %v10841 = vadd.f32 0.0, %v10840
  %v10842 = vpop.f32.mrf.mxu0
  %v10843 = vpop.f32.mrf.mxu0
  %v10844 = vadd.f32 0.0, %v10843
  %v10845 = vpop.f32.mrf.mxu0
  %10846 = vmatprep.mubr.bf16.mxu0 0
  %10847 = vmatmul.mubr.bf16.gmra.mxu0 %v10561
  %v10848 = vpop.f32.mrf.mxu0
  %v10849 = vadd.f32 0.0, %v10848
  %v10850 = vpop.f32.mrf.mxu0
  %v10851 = vpop.f32.mrf.mxu0
  %v10852 = vadd.f32 0.0, %v10851
  %v10853 = vpop.f32.mrf.mxu0
  %10854 = vdwg.mxu0
  %v10855 = vadd.f32 %v9860, %v10601
  %v10856 = vadd.f32 %v9863, %v10604
  %v10857 = vadd.f32 %v9868, %v10609
  %v10858 = vadd.f32 %v9871, %v10612
  %v10859 = vadd.f32 %v9876, %v10617
  %v10860 = vadd.f32 %v9879, %v10620
  %v10861 = vadd.f32 %v9884, %v10625
  %v10862 = vadd.f32 %v9887, %v10628
  %v10863 = vadd.f32 %v9892, %v10633
  %v10864 = vadd.f32 %v9895, %v10636
  %v10865 = vadd.f32 %v9900, %v10641
  %v10866 = vadd.f32 %v9903, %v10644
  %v10867 = vadd.f32 %v9908, %v10649
  %v10868 = vadd.f32 %v9911, %v10652
  %v10869 = vadd.f32 %v9916, %v10657
  %v10870 = vadd.f32 %v9919, %v10660
  %v10871 = vadd.f32 %v9924, %v10665
  %v10872 = vadd.f32 %v9927, %v10668
  %v10873 = vadd.f32 %v9932, %v10673
  %v10874 = vadd.f32 %v9935, %v10676
  %v10875 = vadd.f32 %v9940, %v10681
  %v10876 = vadd.f32 %v9943, %v10684
  %v10877 = vadd.f32 %v9948, %v10689
  %v10878 = vadd.f32 %v9951, %v10692
  %v10879 = vadd.f32 %v9956, %v10697
  %v10880 = vadd.f32 %v9959, %v10700
  %v10881 = vadd.f32 %v9964, %v10705
  %v10882 = vadd.f32 %v9967, %v10708
  %v10883 = vadd.f32 %v9972, %v10713
  %v10884 = vadd.f32 %v9975, %v10716
  %v10885 = vadd.f32 %v9980, %v10721
  %v10886 = vadd.f32 %v9983, %v10724
  %v10887 = vadd.f32 %v9988, %v10729
  %v10888 = vadd.f32 %v9991, %v10732
  %v10889 = vadd.f32 %v9996, %v10737
  %v10890 = vadd.f32 %v9999, %v10740
  %v10891 = vadd.f32 %v10004, %v10745
  %v10892 = vadd.f32 %v10007, %v10748
  %v10893 = vadd.f32 %v10012, %v10753
  %v10894 = vadd.f32 %v10015, %v10756
  %v10895 = vadd.f32 %v10020, %v10761
  %v10896 = vadd.f32 %v10023, %v10764
  %v10897 = vadd.f32 %v10028, %v10769
  %v10898 = vadd.f32 %v10031, %v10772
  %v10899 = vadd.f32 %v10036, %v10777
  %v10900 = vadd.f32 %v10039, %v10780
  %v10901 = vadd.f32 %v10044, %v10785
  %v10902 = vadd.f32 %v10047, %v10788
  %v10903 = vadd.f32 %v10052, %v10793
  %v10904 = vadd.f32 %v10055, %v10796
  %v10905 = vadd.f32 %v10060, %v10801
  %v10906 = vadd.f32 %v10063, %v10804
  %v10907 = vadd.f32 %v10068, %v10809
  %v10908 = vadd.f32 %v10071, %v10812
  %v10909 = vadd.f32 %v10076, %v10817
  %v10910 = vadd.f32 %v10079, %v10820
  %v10911 = vadd.f32 %v10084, %v10825
  %v10912 = vadd.f32 %v10087, %v10828
  %v10913 = vadd.f32 %v10092, %v10833
  %v10914 = vadd.f32 %v10095, %v10836
  %v10915 = vadd.f32 %v10100, %v10841
  %v10916 = vadd.f32 %v10103, %v10844
  %v10917 = vadd.f32 %v10108, %v10849
  %v10918 = vadd.f32 %v10111, %v10852
  %v10919 = vld [vmem:[%s4 + $0xc] sm:$0xf]
  %v10924 = vunpack.c.l.b16 %v8251
  %v10925 = vunpack.c.l.b16 %v8252
  %v10926 = vunpack.c.l.b16 %v8305
  %v10927 = vunpack.c.l.b16 %v8306
  %v10928 = vpack.c.b16 %v10925, %v10924
  %v10929 = vpack.c.b16 %v10927, %v10926
  %v10931 = vsel %vm6325, %v10928, 0
  %v10934 = vsel %vm6325, %v10929, 0
  %v10937 = vsel %vm9273, %v10919, 0
  %10939 = vmatprep.subr.bf16.mxu0 0
  %10940 = vmatpush1.bf16.msra.mxu0 0
  %10941 = vmatprep.subr.bf16.mxu0 0
  %10942 = vmatpush1.bf16.msra.mxu0 0
  %10943 = vmatprep.subr.bf16.mxu0 0
  %10944 = vmatpush1.bf16.msra.mxu0 0
  %10945 = vmatprep.subr.bf16.mxu0 0
  %10946 = vmatpush1.bf16.msra.mxu0 0
  %10947 = vmatprep.subr.bf16.mxu0 0
  %10948 = vmatpush1.bf16.msra.mxu0 0
  %10949 = vmatprep.subr.bf16.mxu0 0
  %10950 = vmatpush1.bf16.msra.mxu0 0
  %10951 = vmatprep.subr.bf16.mxu0 0
  %10952 = vmatpush1.bf16.msra.mxu0 0
  %10953 = vmatprep.subr.bf16.mxu0 0
  %10954 = vmatpush1.bf16.msra.mxu0 %v10937
  %10955 = vmatprep.subr.bf16.mxu0 0
  %10956 = vmatpush2.bf16.msra.mxu0 0
  %10957 = vmatprep.subr.bf16.mxu0 0
  %10958 = vmatpush2.bf16.msra.mxu0 0
  %10959 = vmatprep.subr.bf16.mxu0 0
  %10960 = vmatpush2.bf16.msra.mxu0 0
  %10961 = vmatprep.subr.bf16.mxu0 0
  %10962 = vmatpush2.bf16.msra.mxu0 0
  %10963 = vmatprep.subr.bf16.mxu0 0
  %10964 = vmatpush2.bf16.msra.mxu0 0
  %10965 = vmatprep.subr.bf16.mxu0 0
  %10966 = vmatpush2.bf16.msra.mxu0 0
  %10967 = vmatprep.subr.bf16.mxu0 0
  %10968 = vmatpush2.bf16.msra.mxu0 0
  %10969 = vmatprep.subr.bf16.mxu0 0
  %10970 = vmatpush2.bf16.msra.mxu0 0
  %10971 = vmatprep.mubr.bf16.mxu0 0
  %10972 = vmatmul.mubr.bf16.gmra.mxu0 %v9730
  %v10973 = vpop.f32.mrf.mxu0
  %v10974 = vadd.f32 0.0, %v10973
  %v10975 = vpop.f32.mrf.mxu0
  %v10976 = vpop.f32.mrf.mxu0
  %v10977 = vadd.f32 0.0, %v10976
  %v10978 = vpop.f32.mrf.mxu0
  %10979 = vmatprep.mubr.bf16.mxu0 0
  %10980 = vmatmul.mubr.bf16.gmra.mxu0 %v9733
  %v10981 = vpop.f32.mrf.mxu0
  %v10982 = vadd.f32 0.0, %v10981
  %v10983 = vpop.f32.mrf.mxu0
  %v10984 = vpop.f32.mrf.mxu0
  %v10985 = vadd.f32 0.0, %v10984
  %v10986 = vpop.f32.mrf.mxu0
  %10987 = vmatprep.mubr.bf16.mxu0 0
  %10988 = vmatmul.mubr.bf16.gmra.mxu0 %v9736
  %v10989 = vpop.f32.mrf.mxu0
  %v10990 = vadd.f32 0.0, %v10989
  %v10991 = vpop.f32.mrf.mxu0
  %v10992 = vpop.f32.mrf.mxu0
  %v10993 = vadd.f32 0.0, %v10992
  %v10994 = vpop.f32.mrf.mxu0
  %10995 = vmatprep.mubr.bf16.mxu0 0
  %10996 = vmatmul.mubr.bf16.gmra.mxu0 %v9739
  %v10997 = vpop.f32.mrf.mxu0
  %v10998 = vadd.f32 0.0, %v10997
  %v10999 = vpop.f32.mrf.mxu0
  %v11000 = vpop.f32.mrf.mxu0
  %v11001 = vadd.f32 0.0, %v11000
  %v11002 = vpop.f32.mrf.mxu0
  %11003 = vmatprep.mubr.bf16.mxu0 0
  %11004 = vmatmul.mubr.bf16.gmra.mxu0 %v9742
  %v11005 = vpop.f32.mrf.mxu0
  %v11006 = vadd.f32 0.0, %v11005
  %v11007 = vpop.f32.mrf.mxu0
  %v11008 = vpop.f32.mrf.mxu0
  %v11009 = vadd.f32 0.0, %v11008
  %v11010 = vpop.f32.mrf.mxu0
  %11011 = vmatprep.mubr.bf16.mxu0 0
  %11012 = vmatmul.mubr.bf16.gmra.mxu0 %v9745
  %v11013 = vpop.f32.mrf.mxu0
  %v11014 = vadd.f32 0.0, %v11013
  %v11015 = vpop.f32.mrf.mxu0
  %v11016 = vpop.f32.mrf.mxu0
  %v11017 = vadd.f32 0.0, %v11016
  %v11018 = vpop.f32.mrf.mxu0
  %11019 = vmatprep.mubr.bf16.mxu0 0
  %11020 = vmatmul.mubr.bf16.gmra.mxu0 %v9748
  %v11021 = vpop.f32.mrf.mxu0
  %v11022 = vadd.f32 0.0, %v11021
  %v11023 = vpop.f32.mrf.mxu0
  %v11024 = vpop.f32.mrf.mxu0
  %v11025 = vadd.f32 0.0, %v11024
  %v11026 = vpop.f32.mrf.mxu0
  %11027 = vmatprep.mubr.bf16.mxu0 0
  %11028 = vmatmul.mubr.bf16.gmra.mxu0 %v9751
  %v11029 = vpop.f32.mrf.mxu0
  %v11030 = vadd.f32 0.0, %v11029
  %v11031 = vpop.f32.mrf.mxu0
  %v11032 = vpop.f32.mrf.mxu0
  %v11033 = vadd.f32 0.0, %v11032
  %v11034 = vpop.f32.mrf.mxu0
  %11035 = vmatprep.mubr.bf16.mxu0 0
  %11036 = vmatmul.mubr.bf16.gmra.mxu0 %v9754
  %v11037 = vpop.f32.mrf.mxu0
  %v11038 = vadd.f32 0.0, %v11037
  %v11039 = vpop.f32.mrf.mxu0
  %v11040 = vpop.f32.mrf.mxu0
  %v11041 = vadd.f32 0.0, %v11040
  %v11042 = vpop.f32.mrf.mxu0
  %11043 = vmatprep.mubr.bf16.mxu0 0
  %11044 = vmatmul.mubr.bf16.gmra.mxu0 %v9757
  %v11045 = vpop.f32.mrf.mxu0
  %v11046 = vadd.f32 0.0, %v11045
  %v11047 = vpop.f32.mrf.mxu0
  %v11048 = vpop.f32.mrf.mxu0
  %v11049 = vadd.f32 0.0, %v11048
  %v11050 = vpop.f32.mrf.mxu0
  %11051 = vmatprep.mubr.bf16.mxu0 0
  %11052 = vmatmul.mubr.bf16.gmra.mxu0 %v9760
  %v11053 = vpop.f32.mrf.mxu0
  %v11054 = vadd.f32 0.0, %v11053
  %v11055 = vpop.f32.mrf.mxu0
  %v11056 = vpop.f32.mrf.mxu0
  %v11057 = vadd.f32 0.0, %v11056
  %v11058 = vpop.f32.mrf.mxu0
  %11059 = vmatprep.mubr.bf16.mxu0 0
  %11060 = vmatmul.mubr.bf16.gmra.mxu0 %v9763
  %v11061 = vpop.f32.mrf.mxu0
  %v11062 = vadd.f32 0.0, %v11061
  %v11063 = vpop.f32.mrf.mxu0
  %v11064 = vpop.f32.mrf.mxu0
  %v11065 = vadd.f32 0.0, %v11064
  %v11066 = vpop.f32.mrf.mxu0
  %11067 = vmatprep.mubr.bf16.mxu0 0
  %11068 = vmatmul.mubr.bf16.gmra.mxu0 %v9766
  %v11069 = vpop.f32.mrf.mxu0
  %v11070 = vadd.f32 0.0, %v11069
  %v11071 = vpop.f32.mrf.mxu0
  %v11072 = vpop.f32.mrf.mxu0
  %v11073 = vadd.f32 0.0, %v11072
  %v11074 = vpop.f32.mrf.mxu0
  %11075 = vmatprep.mubr.bf16.mxu0 0
  %11076 = vmatmul.mubr.bf16.gmra.mxu0 %v9769
  %v11077 = vpop.f32.mrf.mxu0
  %v11078 = vadd.f32 0.0, %v11077
  %v11079 = vpop.f32.mrf.mxu0
  %v11080 = vpop.f32.mrf.mxu0
  %v11081 = vadd.f32 0.0, %v11080
  %v11082 = vpop.f32.mrf.mxu0
  %11083 = vmatprep.mubr.bf16.mxu0 0
  %11084 = vmatmul.mubr.bf16.gmra.mxu0 %v9772
  %v11085 = vpop.f32.mrf.mxu0
  %v11086 = vadd.f32 0.0, %v11085
  %v11087 = vpop.f32.mrf.mxu0
  %v11088 = vpop.f32.mrf.mxu0
  %v11089 = vadd.f32 0.0, %v11088
  %v11090 = vpop.f32.mrf.mxu0
  %11091 = vmatprep.mubr.bf16.mxu0 0
  %11092 = vmatmul.mubr.bf16.gmra.mxu0 %v10931
  %v11093 = vpop.f32.mrf.mxu0
  %v11094 = vadd.f32 0.0, %v11093
  %v11095 = vpop.f32.mrf.mxu0
  %v11096 = vpop.f32.mrf.mxu0
  %v11097 = vadd.f32 0.0, %v11096
  %v11098 = vpop.f32.mrf.mxu0
  %11099 = vmatprep.mubr.bf16.mxu0 0
  %11100 = vmatmul.mubr.bf16.gmra.mxu0 %v9778
  %v11101 = vpop.f32.mrf.mxu0
  %v11102 = vadd.f32 0.0, %v11101
  %v11103 = vpop.f32.mrf.mxu0
  %v11104 = vpop.f32.mrf.mxu0
  %v11105 = vadd.f32 0.0, %v11104
  %v11106 = vpop.f32.mrf.mxu0
  %11107 = vmatprep.mubr.bf16.mxu0 0
  %11108 = vmatmul.mubr.bf16.gmra.mxu0 %v9781
  %v11109 = vpop.f32.mrf.mxu0
  %v11110 = vadd.f32 0.0, %v11109
  %v11111 = vpop.f32.mrf.mxu0
  %v11112 = vpop.f32.mrf.mxu0
  %v11113 = vadd.f32 0.0, %v11112
  %v11114 = vpop.f32.mrf.mxu0
  %11115 = vmatprep.mubr.bf16.mxu0 0
  %11116 = vmatmul.mubr.bf16.gmra.mxu0 %v9784
  %v11117 = vpop.f32.mrf.mxu0
  %v11118 = vadd.f32 0.0, %v11117
  %v11119 = vpop.f32.mrf.mxu0
  %v11120 = vpop.f32.mrf.mxu0
  %v11121 = vadd.f32 0.0, %v11120
  %v11122 = vpop.f32.mrf.mxu0
  %11123 = vmatprep.mubr.bf16.mxu0 0
  %11124 = vmatmul.mubr.bf16.gmra.mxu0 %v9787
  %v11125 = vpop.f32.mrf.mxu0
  %v11126 = vadd.f32 0.0, %v11125
  %v11127 = vpop.f32.mrf.mxu0
  %v11128 = vpop.f32.mrf.mxu0
  %v11129 = vadd.f32 0.0, %v11128
  %v11130 = vpop.f32.mrf.mxu0
  %11131 = vmatprep.mubr.bf16.mxu0 0
  %11132 = vmatmul.mubr.bf16.gmra.mxu0 %v9790
  %v11133 = vpop.f32.mrf.mxu0
  %v11134 = vadd.f32 0.0, %v11133
  %v11135 = vpop.f32.mrf.mxu0
  %v11136 = vpop.f32.mrf.mxu0
  %v11137 = vadd.f32 0.0, %v11136
  %v11138 = vpop.f32.mrf.mxu0
  %11139 = vmatprep.mubr.bf16.mxu0 0
  %11140 = vmatmul.mubr.bf16.gmra.mxu0 %v9793
  %v11141 = vpop.f32.mrf.mxu0
  %v11142 = vadd.f32 0.0, %v11141
  %v11143 = vpop.f32.mrf.mxu0
  %v11144 = vpop.f32.mrf.mxu0
  %v11145 = vadd.f32 0.0, %v11144
  %v11146 = vpop.f32.mrf.mxu0
  %11147 = vmatprep.mubr.bf16.mxu0 0
  %11148 = vmatmul.mubr.bf16.gmra.mxu0 %v9796
  %v11149 = vpop.f32.mrf.mxu0
  %v11150 = vadd.f32 0.0, %v11149
  %v11151 = vpop.f32.mrf.mxu0
  %v11152 = vpop.f32.mrf.mxu0
  %v11153 = vadd.f32 0.0, %v11152
  %v11154 = vpop.f32.mrf.mxu0
  %11155 = vmatprep.mubr.bf16.mxu0 0
  %11156 = vmatmul.mubr.bf16.gmra.mxu0 %v9799
  %v11157 = vpop.f32.mrf.mxu0
  %v11158 = vadd.f32 0.0, %v11157
  %v11159 = vpop.f32.mrf.mxu0
  %v11160 = vpop.f32.mrf.mxu0
  %v11161 = vadd.f32 0.0, %v11160
  %v11162 = vpop.f32.mrf.mxu0
  %11163 = vmatprep.mubr.bf16.mxu0 0
  %11164 = vmatmul.mubr.bf16.gmra.mxu0 %v9802
  %v11165 = vpop.f32.mrf.mxu0
  %v11166 = vadd.f32 0.0, %v11165
  %v11167 = vpop.f32.mrf.mxu0
  %v11168 = vpop.f32.mrf.mxu0
  %v11169 = vadd.f32 0.0, %v11168
  %v11170 = vpop.f32.mrf.mxu0
  %11171 = vmatprep.mubr.bf16.mxu0 0
  %11172 = vmatmul.mubr.bf16.gmra.mxu0 %v9805
  %v11173 = vpop.f32.mrf.mxu0
  %v11174 = vadd.f32 0.0, %v11173
  %v11175 = vpop.f32.mrf.mxu0
  %v11176 = vpop.f32.mrf.mxu0
  %v11177 = vadd.f32 0.0, %v11176
  %v11178 = vpop.f32.mrf.mxu0
  %11179 = vmatprep.mubr.bf16.mxu0 0
  %11180 = vmatmul.mubr.bf16.gmra.mxu0 %v9808
  %v11181 = vpop.f32.mrf.mxu0
  %v11182 = vadd.f32 0.0, %v11181
  %v11183 = vpop.f32.mrf.mxu0
  %v11184 = vpop.f32.mrf.mxu0
  %v11185 = vadd.f32 0.0, %v11184
  %v11186 = vpop.f32.mrf.mxu0
  %11187 = vmatprep.mubr.bf16.mxu0 0
  %11188 = vmatmul.mubr.bf16.gmra.mxu0 %v9811
  %v11189 = vpop.f32.mrf.mxu0
  %v11190 = vadd.f32 0.0, %v11189
  %v11191 = vpop.f32.mrf.mxu0
  %v11192 = vpop.f32.mrf.mxu0
  %v11193 = vadd.f32 0.0, %v11192
  %v11194 = vpop.f32.mrf.mxu0
  %11195 = vmatprep.mubr.bf16.mxu0 0
  %11196 = vmatmul.mubr.bf16.gmra.mxu0 %v9814
  %v11197 = vpop.f32.mrf.mxu0
  %v11198 = vadd.f32 0.0, %v11197
  %v11199 = vpop.f32.mrf.mxu0
  %v11200 = vpop.f32.mrf.mxu0
  %v11201 = vadd.f32 0.0, %v11200
  %v11202 = vpop.f32.mrf.mxu0
  %11203 = vmatprep.mubr.bf16.mxu0 0
  %11204 = vmatmul.mubr.bf16.gmra.mxu0 %v9817
  %v11205 = vpop.f32.mrf.mxu0
  %v11206 = vadd.f32 0.0, %v11205
  %v11207 = vpop.f32.mrf.mxu0
  %v11208 = vpop.f32.mrf.mxu0
  %v11209 = vadd.f32 0.0, %v11208
  %v11210 = vpop.f32.mrf.mxu0
  %11211 = vmatprep.mubr.bf16.mxu0 0
  %11212 = vmatmul.mubr.bf16.gmra.mxu0 %v9820
  %v11213 = vpop.f32.mrf.mxu0
  %v11214 = vadd.f32 0.0, %v11213
  %v11215 = vpop.f32.mrf.mxu0
  %v11216 = vpop.f32.mrf.mxu0
  %v11217 = vadd.f32 0.0, %v11216
  %v11218 = vpop.f32.mrf.mxu0
  %11219 = vmatprep.mubr.bf16.mxu0 0
  %11220 = vmatmul.mubr.bf16.gmra.mxu0 %v10934
  %v11221 = vpop.f32.mrf.mxu0
  %v11222 = vadd.f32 0.0, %v11221
  %v11223 = vpop.f32.mrf.mxu0
  %v11224 = vpop.f32.mrf.mxu0
  %v11225 = vadd.f32 0.0, %v11224
  %v11226 = vpop.f32.mrf.mxu0
  %11227 = vdwg.mxu0
  %v11228 = vadd.f32 %v10855, %v10974
  %v11229 = vadd.f32 %v10856, %v10977
  %v11230 = vadd.f32 %v10857, %v10982
  %v11231 = vadd.f32 %v10858, %v10985
  %v11232 = vadd.f32 %v10859, %v10990
  %v11233 = vadd.f32 %v10860, %v10993
  %v11234 = vadd.f32 %v10861, %v10998
  %v11235 = vadd.f32 %v10862, %v11001
  %v11236 = vadd.f32 %v10863, %v11006
  %v11237 = vadd.f32 %v10864, %v11009
  %v11238 = vadd.f32 %v10865, %v11014
  %v11239 = vadd.f32 %v10866, %v11017
  %v11240 = vadd.f32 %v10867, %v11022
  %v11241 = vadd.f32 %v10868, %v11025
  %v11242 = vadd.f32 %v10869, %v11030
  %v11243 = vadd.f32 %v10870, %v11033
  %v11244 = vadd.f32 %v10871, %v11038
  %v11245 = vadd.f32 %v10872, %v11041
  %v11246 = vadd.f32 %v10873, %v11046
  %v11247 = vadd.f32 %v10874, %v11049
  %v11248 = vadd.f32 %v10875, %v11054
  %v11249 = vadd.f32 %v10876, %v11057
  %v11250 = vadd.f32 %v10877, %v11062
  %v11251 = vadd.f32 %v10878, %v11065
  %v11252 = vadd.f32 %v10879, %v11070
  %v11253 = vadd.f32 %v10880, %v11073
  %v11254 = vadd.f32 %v10881, %v11078
  %v11255 = vadd.f32 %v10882, %v11081
  %v11256 = vadd.f32 %v10883, %v11086
  %v11257 = vadd.f32 %v10884, %v11089
  %v11258 = vadd.f32 %v10885, %v11094
  %v11259 = vadd.f32 %v10886, %v11097
  %v11260 = vadd.f32 %v10887, %v11102
  %v11261 = vadd.f32 %v10888, %v11105
  %v11262 = vadd.f32 %v10889, %v11110
  %v11263 = vadd.f32 %v10890, %v11113
  %v11264 = vadd.f32 %v10891, %v11118
  %v11265 = vadd.f32 %v10892, %v11121
  %v11266 = vadd.f32 %v10893, %v11126
  %v11267 = vadd.f32 %v10894, %v11129
  %v11268 = vadd.f32 %v10895, %v11134
  %v11269 = vadd.f32 %v10896, %v11137
  %v11270 = vadd.f32 %v10897, %v11142
  %v11271 = vadd.f32 %v10898, %v11145
  %v11272 = vadd.f32 %v10899, %v11150
  %v11273 = vadd.f32 %v10900, %v11153
  %v11274 = vadd.f32 %v10901, %v11158
  %v11275 = vadd.f32 %v10902, %v11161
  %v11276 = vadd.f32 %v10903, %v11166
  %v11277 = vadd.f32 %v10904, %v11169
  %v11278 = vadd.f32 %v10905, %v11174
  %v11279 = vadd.f32 %v10906, %v11177
  %v11280 = vadd.f32 %v10907, %v11182
  %v11281 = vadd.f32 %v10908, %v11185
  %v11282 = vadd.f32 %v10909, %v11190
  %v11283 = vadd.f32 %v10910, %v11193
  %v11284 = vadd.f32 %v10911, %v11198
  %v11285 = vadd.f32 %v10912, %v11201
  %v11286 = vadd.f32 %v10913, %v11206
  %v11287 = vadd.f32 %v10914, %v11209
  %v11288 = vadd.f32 %v10915, %v11214
  %v11289 = vadd.f32 %v10916, %v11217
  %v11290 = vadd.f32 %v10917, %v11222
  %v11291 = vadd.f32 %v10918, %v11225
  %v11293 = vshrl.u32 %v8251, 16
  %v11295 = vrot.slane %v11293, 4
  %v11296 = vshll.u32 %v8251, 16
  %v11298 = vrot.slane %v11296, 5
  %v11299 = vor.u32 %v11295, %v11298
  %v11300 = vrot.slane %v11299, 4
  %v11302 = vshll.u32 %v8252, 16
  %v11304 = vrot.slane %v11302, 5
  %v11305 = vsel %vm1347, %v11300, %v11304
  %v11306 = vshrl.u32 %v8252, 16
  %v11308 = vrot.slane %v11306, 4
  %v11309 = vor.u32 %v11308, %v11304
  %v11310 = vrot.slane %v11309, 4
  %v11312 = vshll.u32 %v8253, 16
  %v11314 = vrot.slane %v11312, 5
  %v11315 = vsel %vm1347, %v11310, %v11314
  %v11317 = vshrl.u32 %v8305, 16
  %v11319 = vrot.slane %v11317, 4
  %v11320 = vshll.u32 %v8305, 16
  %v11322 = vrot.slane %v11320, 5
  %v11323 = vor.u32 %v11319, %v11322
  %v11324 = vrot.slane %v11323, 4
  %v11326 = vshll.u32 %v8306, 16
  %v11328 = vrot.slane %v11326, 5
  %v11329 = vsel %vm1347, %v11324, %v11328
  %v11330 = vshrl.u32 %v8306, 16
  %v11332 = vrot.slane %v11330, 4
  %v11333 = vor.u32 %v11332, %v11328
  %v11334 = vrot.slane %v11333, 4
  %v11336 = vshll.u32 %v8307, 16
  %v11338 = vrot.slane %v11336, 5
  %v11339 = vsel %vm1347, %v11334, %v11338
  %v11340 = vld [vmem:[%s4 + $0x10] sm:$0xf]
  %v11341 = vunpack.c.l.b16 %v11305
  %v11342 = vunpack.c.l.b16 %v11315
  %v11343 = vunpack.c.l.b16 %v11329
  %v11344 = vunpack.c.l.b16 %v11339
  %v11345 = vpack.c.b16 %v11342, %v11341
  %v11346 = vpack.c.b16 %v11344, %v11343
  %v11348 = vsel %vm6325, %v11345, 0
  %v11351 = vsel %vm6325, %v11346, 0
  %v11354 = vsel %vm9273, %v11340, 0
  %11356 = vmatprep.subr.bf16.mxu0 0
  %11357 = vmatpush1.bf16.msra.mxu0 0
  %11358 = vmatprep.subr.bf16.mxu0 0
  %11359 = vmatpush1.bf16.msra.mxu0 0
  %11360 = vmatprep.subr.bf16.mxu0 0
  %11361 = vmatpush1.bf16.msra.mxu0 0
  %11362 = vmatprep.subr.bf16.mxu0 0
  %11363 = vmatpush1.bf16.msra.mxu0 0
  %11364 = vmatprep.subr.bf16.mxu0 0
  %11365 = vmatpush1.bf16.msra.mxu0 0
  %11366 = vmatprep.subr.bf16.mxu0 0
  %11367 = vmatpush1.bf16.msra.mxu0 0
  %11368 = vmatprep.subr.bf16.mxu0 0
  %11369 = vmatpush1.bf16.msra.mxu0 0
  %11370 = vmatprep.subr.bf16.mxu0 0
  %11371 = vmatpush1.bf16.msra.mxu0 %v11354
  %11372 = vmatprep.subr.bf16.mxu0 0
  %11373 = vmatpush2.bf16.msra.mxu0 0
  %11374 = vmatprep.subr.bf16.mxu0 0
  %11375 = vmatpush2.bf16.msra.mxu0 0
  %11376 = vmatprep.subr.bf16.mxu0 0
  %11377 = vmatpush2.bf16.msra.mxu0 0
  %11378 = vmatprep.subr.bf16.mxu0 0
  %11379 = vmatpush2.bf16.msra.mxu0 0
  %11380 = vmatprep.subr.bf16.mxu0 0
  %11381 = vmatpush2.bf16.msra.mxu0 0
  %11382 = vmatprep.subr.bf16.mxu0 0
  %11383 = vmatpush2.bf16.msra.mxu0 0
  %11384 = vmatprep.subr.bf16.mxu0 0
  %11385 = vmatpush2.bf16.msra.mxu0 0
  %11386 = vmatprep.subr.bf16.mxu0 0
  %11387 = vmatpush2.bf16.msra.mxu0 0
  %11388 = vmatprep.mubr.bf16.mxu0 0
  %11389 = vmatmul.mubr.bf16.gmra.mxu0 %v9181
  %v11390 = vpop.f32.mrf.mxu0
  %v11391 = vadd.f32 0.0, %v11390
  %v11392 = vpop.f32.mrf.mxu0
  %v11393 = vpop.f32.mrf.mxu0
  %v11394 = vadd.f32 0.0, %v11393
  %v11395 = vpop.f32.mrf.mxu0
  %11396 = vmatprep.mubr.bf16.mxu0 0
  %11397 = vmatmul.mubr.bf16.gmra.mxu0 %v9184
  %v11398 = vpop.f32.mrf.mxu0
  %v11399 = vadd.f32 0.0, %v11398
  %v11400 = vpop.f32.mrf.mxu0
  %v11401 = vpop.f32.mrf.mxu0
  %v11402 = vadd.f32 0.0, %v11401
  %v11403 = vpop.f32.mrf.mxu0
  %11404 = vmatprep.mubr.bf16.mxu0 0
  %11405 = vmatmul.mubr.bf16.gmra.mxu0 %v9187
  %v11406 = vpop.f32.mrf.mxu0
  %v11407 = vadd.f32 0.0, %v11406
  %v11408 = vpop.f32.mrf.mxu0
  %v11409 = vpop.f32.mrf.mxu0
  %v11410 = vadd.f32 0.0, %v11409
  %v11411 = vpop.f32.mrf.mxu0
  %11412 = vmatprep.mubr.bf16.mxu0 0
  %11413 = vmatmul.mubr.bf16.gmra.mxu0 %v9190
  %v11414 = vpop.f32.mrf.mxu0
  %v11415 = vadd.f32 0.0, %v11414
  %v11416 = vpop.f32.mrf.mxu0
  %v11417 = vpop.f32.mrf.mxu0
  %v11418 = vadd.f32 0.0, %v11417
  %v11419 = vpop.f32.mrf.mxu0
  %11420 = vmatprep.mubr.bf16.mxu0 0
  %11421 = vmatmul.mubr.bf16.gmra.mxu0 %v9193
  %v11422 = vpop.f32.mrf.mxu0
  %v11423 = vadd.f32 0.0, %v11422
  %v11424 = vpop.f32.mrf.mxu0
  %v11425 = vpop.f32.mrf.mxu0
  %v11426 = vadd.f32 0.0, %v11425
  %v11427 = vpop.f32.mrf.mxu0
  %11428 = vmatprep.mubr.bf16.mxu0 0
  %11429 = vmatmul.mubr.bf16.gmra.mxu0 %v9196
  %v11430 = vpop.f32.mrf.mxu0
  %v11431 = vadd.f32 0.0, %v11430
  %v11432 = vpop.f32.mrf.mxu0
  %v11433 = vpop.f32.mrf.mxu0
  %v11434 = vadd.f32 0.0, %v11433
  %v11435 = vpop.f32.mrf.mxu0
  %11436 = vmatprep.mubr.bf16.mxu0 0
  %11437 = vmatmul.mubr.bf16.gmra.mxu0 %v9199
  %v11438 = vpop.f32.mrf.mxu0
  %v11439 = vadd.f32 0.0, %v11438
  %v11440 = vpop.f32.mrf.mxu0
  %v11441 = vpop.f32.mrf.mxu0
  %v11442 = vadd.f32 0.0, %v11441
  %v11443 = vpop.f32.mrf.mxu0
  %11444 = vmatprep.mubr.bf16.mxu0 0
  %11445 = vmatmul.mubr.bf16.gmra.mxu0 %v9202
  %v11446 = vpop.f32.mrf.mxu0
  %v11447 = vadd.f32 0.0, %v11446
  %v11448 = vpop.f32.mrf.mxu0
  %v11449 = vpop.f32.mrf.mxu0
  %v11450 = vadd.f32 0.0, %v11449
  %v11451 = vpop.f32.mrf.mxu0
  %11452 = vmatprep.mubr.bf16.mxu0 0
  %11453 = vmatmul.mubr.bf16.gmra.mxu0 %v9205
  %v11454 = vpop.f32.mrf.mxu0
  %v11455 = vadd.f32 0.0, %v11454
  %v11456 = vpop.f32.mrf.mxu0
  %v11457 = vpop.f32.mrf.mxu0
  %v11458 = vadd.f32 0.0, %v11457
  %v11459 = vpop.f32.mrf.mxu0
  %11460 = vmatprep.mubr.bf16.mxu0 0
  %11461 = vmatmul.mubr.bf16.gmra.mxu0 %v9208
  %v11462 = vpop.f32.mrf.mxu0
  %v11463 = vadd.f32 0.0, %v11462
  %v11464 = vpop.f32.mrf.mxu0
  %v11465 = vpop.f32.mrf.mxu0
  %v11466 = vadd.f32 0.0, %v11465
  %v11467 = vpop.f32.mrf.mxu0
  %11468 = vmatprep.mubr.bf16.mxu0 0
  %11469 = vmatmul.mubr.bf16.gmra.mxu0 %v9211
  %v11470 = vpop.f32.mrf.mxu0
  %v11471 = vadd.f32 0.0, %v11470
  %v11472 = vpop.f32.mrf.mxu0
  %v11473 = vpop.f32.mrf.mxu0
  %v11474 = vadd.f32 0.0, %v11473
  %v11475 = vpop.f32.mrf.mxu0
  %11476 = vmatprep.mubr.bf16.mxu0 0
  %11477 = vmatmul.mubr.bf16.gmra.mxu0 %v9214
  %v11478 = vpop.f32.mrf.mxu0
  %v11479 = vadd.f32 0.0, %v11478
  %v11480 = vpop.f32.mrf.mxu0
  %v11481 = vpop.f32.mrf.mxu0
  %v11482 = vadd.f32 0.0, %v11481
  %v11483 = vpop.f32.mrf.mxu0
  %11484 = vmatprep.mubr.bf16.mxu0 0
  %11485 = vmatmul.mubr.bf16.gmra.mxu0 %v9217
  %v11486 = vpop.f32.mrf.mxu0
  %v11487 = vadd.f32 0.0, %v11486
  %v11488 = vpop.f32.mrf.mxu0
  %v11489 = vpop.f32.mrf.mxu0
  %v11490 = vadd.f32 0.0, %v11489
  %v11491 = vpop.f32.mrf.mxu0
  %11492 = vmatprep.mubr.bf16.mxu0 0
  %11493 = vmatmul.mubr.bf16.gmra.mxu0 %v9220
  %v11494 = vpop.f32.mrf.mxu0
  %v11495 = vadd.f32 0.0, %v11494
  %v11496 = vpop.f32.mrf.mxu0
  %v11497 = vpop.f32.mrf.mxu0
  %v11498 = vadd.f32 0.0, %v11497
  %v11499 = vpop.f32.mrf.mxu0
  %11500 = vmatprep.mubr.bf16.mxu0 0
  %11501 = vmatmul.mubr.bf16.gmra.mxu0 %v9223
  %v11502 = vpop.f32.mrf.mxu0
  %v11503 = vadd.f32 0.0, %v11502
  %v11504 = vpop.f32.mrf.mxu0
  %v11505 = vpop.f32.mrf.mxu0
  %v11506 = vadd.f32 0.0, %v11505
  %v11507 = vpop.f32.mrf.mxu0
  %11508 = vmatprep.mubr.bf16.mxu0 0
  %11509 = vmatmul.mubr.bf16.gmra.mxu0 %v11348
  %v11510 = vpop.f32.mrf.mxu0
  %v11511 = vadd.f32 0.0, %v11510
  %v11512 = vpop.f32.mrf.mxu0
  %v11513 = vpop.f32.mrf.mxu0
  %v11514 = vadd.f32 0.0, %v11513
  %v11515 = vpop.f32.mrf.mxu0
  %11516 = vmatprep.mubr.bf16.mxu0 0
  %11517 = vmatmul.mubr.bf16.gmra.mxu0 %v9229
  %v11518 = vpop.f32.mrf.mxu0
  %v11519 = vadd.f32 0.0, %v11518
  %v11520 = vpop.f32.mrf.mxu0
  %v11521 = vpop.f32.mrf.mxu0
  %v11522 = vadd.f32 0.0, %v11521
  %v11523 = vpop.f32.mrf.mxu0
  %11524 = vmatprep.mubr.bf16.mxu0 0
  %11525 = vmatmul.mubr.bf16.gmra.mxu0 %v9232
  %v11526 = vpop.f32.mrf.mxu0
  %v11527 = vadd.f32 0.0, %v11526
  %v11528 = vpop.f32.mrf.mxu0
  %v11529 = vpop.f32.mrf.mxu0
  %v11530 = vadd.f32 0.0, %v11529
  %v11531 = vpop.f32.mrf.mxu0
  %11532 = vmatprep.mubr.bf16.mxu0 0
  %11533 = vmatmul.mubr.bf16.gmra.mxu0 %v9235
  %v11534 = vpop.f32.mrf.mxu0
  %v11535 = vadd.f32 0.0, %v11534
  %v11536 = vpop.f32.mrf.mxu0
  %v11537 = vpop.f32.mrf.mxu0
  %v11538 = vadd.f32 0.0, %v11537
  %v11539 = vpop.f32.mrf.mxu0
  %11540 = vmatprep.mubr.bf16.mxu0 0
  %11541 = vmatmul.mubr.bf16.gmra.mxu0 %v9238
  %v11542 = vpop.f32.mrf.mxu0
  %v11543 = vadd.f32 0.0, %v11542
  %v11544 = vpop.f32.mrf.mxu0
  %v11545 = vpop.f32.mrf.mxu0
  %v11546 = vadd.f32 0.0, %v11545
  %v11547 = vpop.f32.mrf.mxu0
  %11548 = vmatprep.mubr.bf16.mxu0 0
  %11549 = vmatmul.mubr.bf16.gmra.mxu0 %v9241
  %v11550 = vpop.f32.mrf.mxu0
  %v11551 = vadd.f32 0.0, %v11550
  %v11552 = vpop.f32.mrf.mxu0
  %v11553 = vpop.f32.mrf.mxu0
  %v11554 = vadd.f32 0.0, %v11553
  %v11555 = vpop.f32.mrf.mxu0
  %11556 = vmatprep.mubr.bf16.mxu0 0
  %11557 = vmatmul.mubr.bf16.gmra.mxu0 %v9244
  %v11558 = vpop.f32.mrf.mxu0
  %v11559 = vadd.f32 0.0, %v11558
  %v11560 = vpop.f32.mrf.mxu0
  %v11561 = vpop.f32.mrf.mxu0
  %v11562 = vadd.f32 0.0, %v11561
  %v11563 = vpop.f32.mrf.mxu0
  %11564 = vmatprep.mubr.bf16.mxu0 0
  %11565 = vmatmul.mubr.bf16.gmra.mxu0 %v9247
  %v11566 = vpop.f32.mrf.mxu0
  %v11567 = vadd.f32 0.0, %v11566
  %v11568 = vpop.f32.mrf.mxu0
  %v11569 = vpop.f32.mrf.mxu0
  %v11570 = vadd.f32 0.0, %v11569
  %v11571 = vpop.f32.mrf.mxu0
  %11572 = vmatprep.mubr.bf16.mxu0 0
  %11573 = vmatmul.mubr.bf16.gmra.mxu0 %v9250
  %v11574 = vpop.f32.mrf.mxu0
  %v11575 = vadd.f32 0.0, %v11574
  %v11576 = vpop.f32.mrf.mxu0
  %v11577 = vpop.f32.mrf.mxu0
  %v11578 = vadd.f32 0.0, %v11577
  %v11579 = vpop.f32.mrf.mxu0
  %11580 = vmatprep.mubr.bf16.mxu0 0
  %11581 = vmatmul.mubr.bf16.gmra.mxu0 %v9253
  %v11582 = vpop.f32.mrf.mxu0
  %v11583 = vadd.f32 0.0, %v11582
  %v11584 = vpop.f32.mrf.mxu0
  %v11585 = vpop.f32.mrf.mxu0
  %v11586 = vadd.f32 0.0, %v11585
  %v11587 = vpop.f32.mrf.mxu0
  %11588 = vmatprep.mubr.bf16.mxu0 0
  %11589 = vmatmul.mubr.bf16.gmra.mxu0 %v9256
  %v11590 = vpop.f32.mrf.mxu0
  %v11591 = vadd.f32 0.0, %v11590
  %v11592 = vpop.f32.mrf.mxu0
  %v11593 = vpop.f32.mrf.mxu0
  %v11594 = vadd.f32 0.0, %v11593
  %v11595 = vpop.f32.mrf.mxu0
  %11596 = vmatprep.mubr.bf16.mxu0 0
  %11597 = vmatmul.mubr.bf16.gmra.mxu0 %v9259
  %v11598 = vpop.f32.mrf.mxu0
  %v11599 = vadd.f32 0.0, %v11598
  %v11600 = vpop.f32.mrf.mxu0
  %v11601 = vpop.f32.mrf.mxu0
  %v11602 = vadd.f32 0.0, %v11601
  %v11603 = vpop.f32.mrf.mxu0
  %11604 = vmatprep.mubr.bf16.mxu0 0
  %11605 = vmatmul.mubr.bf16.gmra.mxu0 %v9262
  %v11606 = vpop.f32.mrf.mxu0
  %v11607 = vadd.f32 0.0, %v11606
  %v11608 = vpop.f32.mrf.mxu0
  %v11609 = vpop.f32.mrf.mxu0
  %v11610 = vadd.f32 0.0, %v11609
  %v11611 = vpop.f32.mrf.mxu0
  %11612 = vmatprep.mubr.bf16.mxu0 0
  %11613 = vmatmul.mubr.bf16.gmra.mxu0 %v9265
  %v11614 = vpop.f32.mrf.mxu0
  %v11615 = vadd.f32 0.0, %v11614
  %v11616 = vpop.f32.mrf.mxu0
  %v11617 = vpop.f32.mrf.mxu0
  %v11618 = vadd.f32 0.0, %v11617
  %v11619 = vpop.f32.mrf.mxu0
  %11620 = vmatprep.mubr.bf16.mxu0 0
  %11621 = vmatmul.mubr.bf16.gmra.mxu0 %v9268
  %v11622 = vpop.f32.mrf.mxu0
  %v11623 = vadd.f32 0.0, %v11622
  %v11624 = vpop.f32.mrf.mxu0
  %v11625 = vpop.f32.mrf.mxu0
  %v11626 = vadd.f32 0.0, %v11625
  %v11627 = vpop.f32.mrf.mxu0
  %11628 = vmatprep.mubr.bf16.mxu0 0
  %11629 = vmatmul.mubr.bf16.gmra.mxu0 %v9271
  %v11630 = vpop.f32.mrf.mxu0
  %v11631 = vadd.f32 0.0, %v11630
  %v11632 = vpop.f32.mrf.mxu0
  %v11633 = vpop.f32.mrf.mxu0
  %v11634 = vadd.f32 0.0, %v11633
  %v11635 = vpop.f32.mrf.mxu0
  %11636 = vmatprep.mubr.bf16.mxu0 0
  %11637 = vmatmul.mubr.bf16.gmra.mxu0 %v11351
  %v11638 = vpop.f32.mrf.mxu0
  %v11639 = vadd.f32 0.0, %v11638
  %v11640 = vpop.f32.mrf.mxu0
  %v11641 = vpop.f32.mrf.mxu0
  %v11642 = vadd.f32 0.0, %v11641
  %v11643 = vpop.f32.mrf.mxu0
  %11644 = vdwg.mxu0
  %v11645 = vadd.f32 %v11228, %v11391
  %v11646 = vadd.f32 %v11229, %v11394
  %v11647 = vadd.f32 %v11230, %v11399
  %v11648 = vadd.f32 %v11231, %v11402
  %v11649 = vadd.f32 %v11232, %v11407
  %v11650 = vadd.f32 %v11233, %v11410
  %v11651 = vadd.f32 %v11234, %v11415
  %v11652 = vadd.f32 %v11235, %v11418
  %v11653 = vadd.f32 %v11236, %v11423
  %v11654 = vadd.f32 %v11237, %v11426
  %v11655 = vadd.f32 %v11238, %v11431
  %v11656 = vadd.f32 %v11239, %v11434
  %v11657 = vadd.f32 %v11240, %v11439
  %v11658 = vadd.f32 %v11241, %v11442
  %v11659 = vadd.f32 %v11242, %v11447
  %v11660 = vadd.f32 %v11243, %v11450
  %v11661 = vadd.f32 %v11244, %v11455
  %v11662 = vadd.f32 %v11245, %v11458
  %v11663 = vadd.f32 %v11246, %v11463
  %v11664 = vadd.f32 %v11247, %v11466
  %v11665 = vadd.f32 %v11248, %v11471
  %v11666 = vadd.f32 %v11249, %v11474
  %v11667 = vadd.f32 %v11250, %v11479
  %v11668 = vadd.f32 %v11251, %v11482
  %v11669 = vadd.f32 %v11252, %v11487
  %v11670 = vadd.f32 %v11253, %v11490
  %v11671 = vadd.f32 %v11254, %v11495
  %v11672 = vadd.f32 %v11255, %v11498
  %v11673 = vadd.f32 %v11256, %v11503
  %v11674 = vadd.f32 %v11257, %v11506
  %v11675 = vadd.f32 %v11258, %v11511
  %v11676 = vadd.f32 %v11259, %v11514
  %v11677 = vadd.f32 %v11260, %v11519
  %v11678 = vadd.f32 %v11261, %v11522
  %v11679 = vadd.f32 %v11262, %v11527
  %v11680 = vadd.f32 %v11263, %v11530
  %v11681 = vadd.f32 %v11264, %v11535
  %v11682 = vadd.f32 %v11265, %v11538
  %v11683 = vadd.f32 %v11266, %v11543
  %v11684 = vadd.f32 %v11267, %v11546
  %v11685 = vadd.f32 %v11268, %v11551
  %v11686 = vadd.f32 %v11269, %v11554
  %v11687 = vadd.f32 %v11270, %v11559
  %v11688 = vadd.f32 %v11271, %v11562
  %v11689 = vadd.f32 %v11272, %v11567
  %v11690 = vadd.f32 %v11273, %v11570
  %v11691 = vadd.f32 %v11274, %v11575
  %v11692 = vadd.f32 %v11275, %v11578
  %v11693 = vadd.f32 %v11276, %v11583
  %v11694 = vadd.f32 %v11277, %v11586
  %v11695 = vadd.f32 %v11278, %v11591
  %v11696 = vadd.f32 %v11279, %v11594
  %v11697 = vadd.f32 %v11280, %v11599
  %v11698 = vadd.f32 %v11281, %v11602
  %v11699 = vadd.f32 %v11282, %v11607
  %v11700 = vadd.f32 %v11283, %v11610
  %v11701 = vadd.f32 %v11284, %v11615
  %v11702 = vadd.f32 %v11285, %v11618
  %v11703 = vadd.f32 %v11286, %v11623
  %v11704 = vadd.f32 %v11287, %v11626
  %v11705 = vadd.f32 %v11288, %v11631
  %v11706 = vadd.f32 %v11289, %v11634
  %v11707 = vadd.f32 %v11290, %v11639
  %v11708 = vadd.f32 %v11291, %v11642
  %v11711 = vrot.slane %v8251, 5
  %v11712 = vrot.slane %v11711, 4
  %v11713 = vrot.slane %v8252, 5
  %v11714 = vsel %vm3189, %v11712, %v11713
  %v11715 = vrot.slane %v11713, 4
  %v11716 = vrot.slane %v8253, 5
  %v11717 = vsel %vm3189, %v11715, %v11716
  %v11718 = vrot.slane %v8305, 5
  %v11719 = vrot.slane %v11718, 4
  %v11720 = vrot.slane %v8306, 5
  %v11721 = vsel %vm3189, %v11719, %v11720
  %v11722 = vrot.slane %v11720, 4
  %v11723 = vrot.slane %v8307, 5
  %v11724 = vsel %vm3189, %v11722, %v11723
  %v11725 = vld [vmem:[%s4 + $0x14] sm:$0xf]
  %v11726 = vunpack.c.l.b16 %v11714
  %v11727 = vunpack.c.l.b16 %v11717
  %v11728 = vunpack.c.l.b16 %v11721
  %v11729 = vunpack.c.l.b16 %v11724
  %v11730 = vpack.c.b16 %v11727, %v11726
  %v11731 = vpack.c.b16 %v11729, %v11728
  %v11733 = vsel %vm6325, %v11730, 0
  %v11736 = vsel %vm6325, %v11731, 0
  %v11739 = vsel %vm9273, %v11725, 0
  %11741 = vmatprep.subr.bf16.mxu0 0
  %11742 = vmatpush1.bf16.msra.mxu0 0
  %11743 = vmatprep.subr.bf16.mxu0 0
  %11744 = vmatpush1.bf16.msra.mxu0 0
  %11745 = vmatprep.subr.bf16.mxu0 0
  %11746 = vmatpush1.bf16.msra.mxu0 0
  %11747 = vmatprep.subr.bf16.mxu0 0
  %11748 = vmatpush1.bf16.msra.mxu0 0
  %11749 = vmatprep.subr.bf16.mxu0 0
  %11750 = vmatpush1.bf16.msra.mxu0 0
  %11751 = vmatprep.subr.bf16.mxu0 0
  %11752 = vmatpush1.bf16.msra.mxu0 0
  %11753 = vmatprep.subr.bf16.mxu0 0
  %11754 = vmatpush1.bf16.msra.mxu0 0
  %11755 = vmatprep.subr.bf16.mxu0 0
  %11756 = vmatpush1.bf16.msra.mxu0 %v11739
  %11757 = vmatprep.subr.bf16.mxu0 0
  %11758 = vmatpush2.bf16.msra.mxu0 0
  %11759 = vmatprep.subr.bf16.mxu0 0
  %11760 = vmatpush2.bf16.msra.mxu0 0
  %11761 = vmatprep.subr.bf16.mxu0 0
  %11762 = vmatpush2.bf16.msra.mxu0 0
  %11763 = vmatprep.subr.bf16.mxu0 0
  %11764 = vmatpush2.bf16.msra.mxu0 0
  %11765 = vmatprep.subr.bf16.mxu0 0
  %11766 = vmatpush2.bf16.msra.mxu0 0
  %11767 = vmatprep.subr.bf16.mxu0 0
  %11768 = vmatpush2.bf16.msra.mxu0 0
  %11769 = vmatprep.subr.bf16.mxu0 0
  %11770 = vmatpush2.bf16.msra.mxu0 0
  %11771 = vmatprep.subr.bf16.mxu0 0
  %11772 = vmatpush2.bf16.msra.mxu0 0
  %11773 = vmatprep.mubr.bf16.mxu0 0
  %11774 = vmatmul.mubr.bf16.gmra.mxu0 %v10471
  %v11775 = vpop.f32.mrf.mxu0
  %v11776 = vadd.f32 0.0, %v11775
  %v11777 = vpop.f32.mrf.mxu0
  %v11778 = vpop.f32.mrf.mxu0
  %v11779 = vadd.f32 0.0, %v11778
  %v11780 = vpop.f32.mrf.mxu0
  %11781 = vmatprep.mubr.bf16.mxu0 0
  %11782 = vmatmul.mubr.bf16.gmra.mxu0 %v10474
  %v11783 = vpop.f32.mrf.mxu0
  %v11784 = vadd.f32 0.0, %v11783
  %v11785 = vpop.f32.mrf.mxu0
  %v11786 = vpop.f32.mrf.mxu0
  %v11787 = vadd.f32 0.0, %v11786
  %v11788 = vpop.f32.mrf.mxu0
  %11789 = vmatprep.mubr.bf16.mxu0 0
  %11790 = vmatmul.mubr.bf16.gmra.mxu0 %v10477
  %v11791 = vpop.f32.mrf.mxu0
  %v11792 = vadd.f32 0.0, %v11791
  %v11793 = vpop.f32.mrf.mxu0
  %v11794 = vpop.f32.mrf.mxu0
  %v11795 = vadd.f32 0.0, %v11794
  %v11796 = vpop.f32.mrf.mxu0
  %11797 = vmatprep.mubr.bf16.mxu0 0
  %11798 = vmatmul.mubr.bf16.gmra.mxu0 %v10480
  %v11799 = vpop.f32.mrf.mxu0
  %v11800 = vadd.f32 0.0, %v11799
  %v11801 = vpop.f32.mrf.mxu0
  %v11802 = vpop.f32.mrf.mxu0
  %v11803 = vadd.f32 0.0, %v11802
  %v11804 = vpop.f32.mrf.mxu0
  %11805 = vmatprep.mubr.bf16.mxu0 0
  %11806 = vmatmul.mubr.bf16.gmra.mxu0 %v10483
  %v11807 = vpop.f32.mrf.mxu0
  %v11808 = vadd.f32 0.0, %v11807
  %v11809 = vpop.f32.mrf.mxu0
  %v11810 = vpop.f32.mrf.mxu0
  %v11811 = vadd.f32 0.0, %v11810
  %v11812 = vpop.f32.mrf.mxu0
  %11813 = vmatprep.mubr.bf16.mxu0 0
  %11814 = vmatmul.mubr.bf16.gmra.mxu0 %v10486
  %v11815 = vpop.f32.mrf.mxu0
  %v11816 = vadd.f32 0.0, %v11815
  %v11817 = vpop.f32.mrf.mxu0
  %v11818 = vpop.f32.mrf.mxu0
  %v11819 = vadd.f32 0.0, %v11818
  %v11820 = vpop.f32.mrf.mxu0
  %11821 = vmatprep.mubr.bf16.mxu0 0
  %11822 = vmatmul.mubr.bf16.gmra.mxu0 %v10489
  %v11823 = vpop.f32.mrf.mxu0
  %v11824 = vadd.f32 0.0, %v11823
  %v11825 = vpop.f32.mrf.mxu0
  %v11826 = vpop.f32.mrf.mxu0
  %v11827 = vadd.f32 0.0, %v11826
  %v11828 = vpop.f32.mrf.mxu0
  %11829 = vmatprep.mubr.bf16.mxu0 0
  %11830 = vmatmul.mubr.bf16.gmra.mxu0 %v10492
  %v11831 = vpop.f32.mrf.mxu0
  %v11832 = vadd.f32 0.0, %v11831
  %v11833 = vpop.f32.mrf.mxu0
  %v11834 = vpop.f32.mrf.mxu0
  %v11835 = vadd.f32 0.0, %v11834
  %v11836 = vpop.f32.mrf.mxu0
  %11837 = vmatprep.mubr.bf16.mxu0 0
  %11838 = vmatmul.mubr.bf16.gmra.mxu0 %v10495
  %v11839 = vpop.f32.mrf.mxu0
  %v11840 = vadd.f32 0.0, %v11839
  %v11841 = vpop.f32.mrf.mxu0
  %v11842 = vpop.f32.mrf.mxu0
  %v11843 = vadd.f32 0.0, %v11842
  %v11844 = vpop.f32.mrf.mxu0
  %11845 = vmatprep.mubr.bf16.mxu0 0
  %11846 = vmatmul.mubr.bf16.gmra.mxu0 %v10498
  %v11847 = vpop.f32.mrf.mxu0
  %v11848 = vadd.f32 0.0, %v11847
  %v11849 = vpop.f32.mrf.mxu0
  %v11850 = vpop.f32.mrf.mxu0
  %v11851 = vadd.f32 0.0, %v11850
  %v11852 = vpop.f32.mrf.mxu0
  %11853 = vmatprep.mubr.bf16.mxu0 0
  %11854 = vmatmul.mubr.bf16.gmra.mxu0 %v10501
  %v11855 = vpop.f32.mrf.mxu0
  %v11856 = vadd.f32 0.0, %v11855
  %v11857 = vpop.f32.mrf.mxu0
  %v11858 = vpop.f32.mrf.mxu0
  %v11859 = vadd.f32 0.0, %v11858
  %v11860 = vpop.f32.mrf.mxu0
  %11861 = vmatprep.mubr.bf16.mxu0 0
  %11862 = vmatmul.mubr.bf16.gmra.mxu0 %v10504
  %v11863 = vpop.f32.mrf.mxu0
  %v11864 = vadd.f32 0.0, %v11863
  %v11865 = vpop.f32.mrf.mxu0
  %v11866 = vpop.f32.mrf.mxu0
  %v11867 = vadd.f32 0.0, %v11866
  %v11868 = vpop.f32.mrf.mxu0
  %11869 = vmatprep.mubr.bf16.mxu0 0
  %11870 = vmatmul.mubr.bf16.gmra.mxu0 %v10507
  %v11871 = vpop.f32.mrf.mxu0
  %v11872 = vadd.f32 0.0, %v11871
  %v11873 = vpop.f32.mrf.mxu0
  %v11874 = vpop.f32.mrf.mxu0
  %v11875 = vadd.f32 0.0, %v11874
  %v11876 = vpop.f32.mrf.mxu0
  %11877 = vmatprep.mubr.bf16.mxu0 0
  %11878 = vmatmul.mubr.bf16.gmra.mxu0 %v10510
  %v11879 = vpop.f32.mrf.mxu0
  %v11880 = vadd.f32 0.0, %v11879
  %v11881 = vpop.f32.mrf.mxu0
  %v11882 = vpop.f32.mrf.mxu0
  %v11883 = vadd.f32 0.0, %v11882
  %v11884 = vpop.f32.mrf.mxu0
  %11885 = vmatprep.mubr.bf16.mxu0 0
  %11886 = vmatmul.mubr.bf16.gmra.mxu0 %v10513
  %v11887 = vpop.f32.mrf.mxu0
  %v11888 = vadd.f32 0.0, %v11887
  %v11889 = vpop.f32.mrf.mxu0
  %v11890 = vpop.f32.mrf.mxu0
  %v11891 = vadd.f32 0.0, %v11890
  %v11892 = vpop.f32.mrf.mxu0
  %11893 = vmatprep.mubr.bf16.mxu0 0
  %11894 = vmatmul.mubr.bf16.gmra.mxu0 %v11733
  %v11895 = vpop.f32.mrf.mxu0
  %v11896 = vadd.f32 0.0, %v11895
  %v11897 = vpop.f32.mrf.mxu0
  %v11898 = vpop.f32.mrf.mxu0
  %v11899 = vadd.f32 0.0, %v11898
  %v11900 = vpop.f32.mrf.mxu0
  %11901 = vmatprep.mubr.bf16.mxu0 0
  %11902 = vmatmul.mubr.bf16.gmra.mxu0 %v10519
  %v11903 = vpop.f32.mrf.mxu0
  %v11904 = vadd.f32 0.0, %v11903
  %v11905 = vpop.f32.mrf.mxu0
  %v11906 = vpop.f32.mrf.mxu0
  %v11907 = vadd.f32 0.0, %v11906
  %v11908 = vpop.f32.mrf.mxu0
  %11909 = vmatprep.mubr.bf16.mxu0 0
  %11910 = vmatmul.mubr.bf16.gmra.mxu0 %v10522
  %v11911 = vpop.f32.mrf.mxu0
  %v11912 = vadd.f32 0.0, %v11911
  %v11913 = vpop.f32.mrf.mxu0
  %v11914 = vpop.f32.mrf.mxu0
  %v11915 = vadd.f32 0.0, %v11914
  %v11916 = vpop.f32.mrf.mxu0
  %11917 = vmatprep.mubr.bf16.mxu0 0
  %11918 = vmatmul.mubr.bf16.gmra.mxu0 %v10525
  %v11919 = vpop.f32.mrf.mxu0
  %v11920 = vadd.f32 0.0, %v11919
  %v11921 = vpop.f32.mrf.mxu0
  %v11922 = vpop.f32.mrf.mxu0
  %v11923 = vadd.f32 0.0, %v11922
  %v11924 = vpop.f32.mrf.mxu0
  %11925 = vmatprep.mubr.bf16.mxu0 0
  %11926 = vmatmul.mubr.bf16.gmra.mxu0 %v10528
  %v11927 = vpop.f32.mrf.mxu0
  %v11928 = vadd.f32 0.0, %v11927
  %v11929 = vpop.f32.mrf.mxu0
  %v11930 = vpop.f32.mrf.mxu0
  %v11931 = vadd.f32 0.0, %v11930
  %v11932 = vpop.f32.mrf.mxu0
  %11933 = vmatprep.mubr.bf16.mxu0 0
  %11934 = vmatmul.mubr.bf16.gmra.mxu0 %v10531
  %v11935 = vpop.f32.mrf.mxu0
  %v11936 = vadd.f32 0.0, %v11935
  %v11937 = vpop.f32.mrf.mxu0
  %v11938 = vpop.f32.mrf.mxu0
  %v11939 = vadd.f32 0.0, %v11938
  %v11940 = vpop.f32.mrf.mxu0
  %11941 = vmatprep.mubr.bf16.mxu0 0
  %11942 = vmatmul.mubr.bf16.gmra.mxu0 %v10534
  %v11943 = vpop.f32.mrf.mxu0
  %v11944 = vadd.f32 0.0, %v11943
  %v11945 = vpop.f32.mrf.mxu0
  %v11946 = vpop.f32.mrf.mxu0
  %v11947 = vadd.f32 0.0, %v11946
  %v11948 = vpop.f32.mrf.mxu0
  %11949 = vmatprep.mubr.bf16.mxu0 0
  %11950 = vmatmul.mubr.bf16.gmra.mxu0 %v10537
  %v11951 = vpop.f32.mrf.mxu0
  %v11952 = vadd.f32 0.0, %v11951
  %v11953 = vpop.f32.mrf.mxu0
  %v11954 = vpop.f32.mrf.mxu0
  %v11955 = vadd.f32 0.0, %v11954
  %v11956 = vpop.f32.mrf.mxu0
  %11957 = vmatprep.mubr.bf16.mxu0 0
  %11958 = vmatmul.mubr.bf16.gmra.mxu0 %v10540
  %v11959 = vpop.f32.mrf.mxu0
  %v11960 = vadd.f32 0.0, %v11959
  %v11961 = vpop.f32.mrf.mxu0
  %v11962 = vpop.f32.mrf.mxu0
  %v11963 = vadd.f32 0.0, %v11962
  %v11964 = vpop.f32.mrf.mxu0
  %11965 = vmatprep.mubr.bf16.mxu0 0
  %11966 = vmatmul.mubr.bf16.gmra.mxu0 %v10543
  %v11967 = vpop.f32.mrf.mxu0
  %v11968 = vadd.f32 0.0, %v11967
  %v11969 = vpop.f32.mrf.mxu0
  %v11970 = vpop.f32.mrf.mxu0
  %v11971 = vadd.f32 0.0, %v11970
  %v11972 = vpop.f32.mrf.mxu0
  %11973 = vmatprep.mubr.bf16.mxu0 0
  %11974 = vmatmul.mubr.bf16.gmra.mxu0 %v10546
  %v11975 = vpop.f32.mrf.mxu0
  %v11976 = vadd.f32 0.0, %v11975
  %v11977 = vpop.f32.mrf.mxu0
  %v11978 = vpop.f32.mrf.mxu0
  %v11979 = vadd.f32 0.0, %v11978
  %v11980 = vpop.f32.mrf.mxu0
  %11981 = vmatprep.mubr.bf16.mxu0 0
  %11982 = vmatmul.mubr.bf16.gmra.mxu0 %v10549
  %v11983 = vpop.f32.mrf.mxu0
  %v11984 = vadd.f32 0.0, %v11983
  %v11985 = vpop.f32.mrf.mxu0
  %v11986 = vpop.f32.mrf.mxu0
  %v11987 = vadd.f32 0.0, %v11986
  %v11988 = vpop.f32.mrf.mxu0
  %11989 = vmatprep.mubr.bf16.mxu0 0
  %11990 = vmatmul.mubr.bf16.gmra.mxu0 %v10552
  %v11991 = vpop.f32.mrf.mxu0
  %v11992 = vadd.f32 0.0, %v11991
  %v11993 = vpop.f32.mrf.mxu0
  %v11994 = vpop.f32.mrf.mxu0
  %v11995 = vadd.f32 0.0, %v11994
  %v11996 = vpop.f32.mrf.mxu0
  %11997 = vmatprep.mubr.bf16.mxu0 0
  %11998 = vmatmul.mubr.bf16.gmra.mxu0 %v10555
  %v11999 = vpop.f32.mrf.mxu0
  %v12000 = vadd.f32 0.0, %v11999
  %v12001 = vpop.f32.mrf.mxu0
  %v12002 = vpop.f32.mrf.mxu0
  %v12003 = vadd.f32 0.0, %v12002
  %v12004 = vpop.f32.mrf.mxu0
  %12005 = vmatprep.mubr.bf16.mxu0 0
  %12006 = vmatmul.mubr.bf16.gmra.mxu0 %v10558
  %v12007 = vpop.f32.mrf.mxu0
  %v12008 = vadd.f32 0.0, %v12007
  %v12009 = vpop.f32.mrf.mxu0
  %v12010 = vpop.f32.mrf.mxu0
  %v12011 = vadd.f32 0.0, %v12010
  %v12012 = vpop.f32.mrf.mxu0
  %12013 = vmatprep.mubr.bf16.mxu0 0
  %12014 = vmatmul.mubr.bf16.gmra.mxu0 %v10561
  %v12015 = vpop.f32.mrf.mxu0
  %v12016 = vadd.f32 0.0, %v12015
  %v12017 = vpop.f32.mrf.mxu0
  %v12018 = vpop.f32.mrf.mxu0
  %v12019 = vadd.f32 0.0, %v12018
  %v12020 = vpop.f32.mrf.mxu0
  %12021 = vmatprep.mubr.bf16.mxu0 0
  %12022 = vmatmul.mubr.bf16.gmra.mxu0 %v11736
  %v12023 = vpop.f32.mrf.mxu0
  %v12024 = vadd.f32 0.0, %v12023
  %v12025 = vpop.f32.mrf.mxu0
  %v12026 = vpop.f32.mrf.mxu0
  %v12027 = vadd.f32 0.0, %v12026
  %v12028 = vpop.f32.mrf.mxu0
  %12029 = vdwg.mxu0
  %v12030 = vadd.f32 %v11645, %v11776
  %v12031 = vadd.f32 %v11646, %v11779
  %v12032 = vadd.f32 %v11647, %v11784
  %v12033 = vadd.f32 %v11648, %v11787
  %v12034 = vadd.f32 %v11649, %v11792
  %v12035 = vadd.f32 %v11650, %v11795
  %v12036 = vadd.f32 %v11651, %v11800
  %v12037 = vadd.f32 %v11652, %v11803
  %v12038 = vadd.f32 %v11653, %v11808
  %v12039 = vadd.f32 %v11654, %v11811
  %v12040 = vadd.f32 %v11655, %v11816
  %v12041 = vadd.f32 %v11656, %v11819
  %v12042 = vadd.f32 %v11657, %v11824
  %v12043 = vadd.f32 %v11658, %v11827
  %v12044 = vadd.f32 %v11659, %v11832
  %v12045 = vadd.f32 %v11660, %v11835
  %v12046 = vadd.f32 %v11661, %v11840
  %v12047 = vadd.f32 %v11662, %v11843
  %v12048 = vadd.f32 %v11663, %v11848
  %v12049 = vadd.f32 %v11664, %v11851
  %v12050 = vadd.f32 %v11665, %v11856
  %v12051 = vadd.f32 %v11666, %v11859
  %v12052 = vadd.f32 %v11667, %v11864
  %v12053 = vadd.f32 %v11668, %v11867
  %v12054 = vadd.f32 %v11669, %v11872
  %v12055 = vadd.f32 %v11670, %v11875
  %v12056 = vadd.f32 %v11671, %v11880
  %v12057 = vadd.f32 %v11672, %v11883
  %v12058 = vadd.f32 %v11673, %v11888
  %v12059 = vadd.f32 %v11674, %v11891
  %v12060 = vadd.f32 %v11675, %v11896
  %v12061 = vadd.f32 %v11676, %v11899
  %v12062 = vadd.f32 %v11677, %v11904
  %v12063 = vadd.f32 %v11678, %v11907
  %v12064 = vadd.f32 %v11679, %v11912
  %v12065 = vadd.f32 %v11680, %v11915
  %v12066 = vadd.f32 %v11681, %v11920
  %v12067 = vadd.f32 %v11682, %v11923
  %v12068 = vadd.f32 %v11683, %v11928
  %v12069 = vadd.f32 %v11684, %v11931
  %v12070 = vadd.f32 %v11685, %v11936
  %v12071 = vadd.f32 %v11686, %v11939
  %v12072 = vadd.f32 %v11687, %v11944
  %v12073 = vadd.f32 %v11688, %v11947
  %v12074 = vadd.f32 %v11689, %v11952
  %v12075 = vadd.f32 %v11690, %v11955
  %v12076 = vadd.f32 %v11691, %v11960
  %v12077 = vadd.f32 %v11692, %v11963
  %v12078 = vadd.f32 %v11693, %v11968
  %v12079 = vadd.f32 %v11694, %v11971
  %v12080 = vadd.f32 %v11695, %v11976
  %v12081 = vadd.f32 %v11696, %v11979
  %v12082 = vadd.f32 %v11697, %v11984
  %v12083 = vadd.f32 %v11698, %v11987
  %v12084 = vadd.f32 %v11699, %v11992
  %v12085 = vadd.f32 %v11700, %v11995
  %v12086 = vadd.f32 %v11701, %v12000
  %v12087 = vadd.f32 %v11702, %v12003
  %v12088 = vadd.f32 %v11703, %v12008
  %v12089 = vadd.f32 %v11704, %v12011
  %v12090 = vadd.f32 %v11705, %v12016
  %v12091 = vadd.f32 %v11706, %v12019
  %v12092 = vadd.f32 %v11707, %v12024
  %v12093 = vadd.f32 %v11708, %v12027
  %v12094 = vld [vmem:[%s4 + $0x18] sm:$0xf]
  %v12099 = vunpack.c.l.b16 %v8254
  %v12100 = vunpack.c.l.b16 %v8255
  %v12101 = vunpack.c.l.b16 %v8308
  %v12102 = vunpack.c.l.b16 %v8309
  %v12103 = vpack.c.b16 %v12100, %v12099
  %v12104 = vpack.c.b16 %v12102, %v12101
  %v12106 = vsel %vm6325, %v12103, 0
  %v12109 = vsel %vm6325, %v12104, 0
  %v12112 = vsel %vm9273, %v12094, 0
  %12114 = vmatprep.subr.bf16.mxu0 0
  %12115 = vmatpush1.bf16.msra.mxu0 0
  %12116 = vmatprep.subr.bf16.mxu0 0
  %12117 = vmatpush1.bf16.msra.mxu0 0
  %12118 = vmatprep.subr.bf16.mxu0 0
  %12119 = vmatpush1.bf16.msra.mxu0 0
  %12120 = vmatprep.subr.bf16.mxu0 0
  %12121 = vmatpush1.bf16.msra.mxu0 0
  %12122 = vmatprep.subr.bf16.mxu0 0
  %12123 = vmatpush1.bf16.msra.mxu0 0
  %12124 = vmatprep.subr.bf16.mxu0 0
  %12125 = vmatpush1.bf16.msra.mxu0 0
  %12126 = vmatprep.subr.bf16.mxu0 0
  %12127 = vmatpush1.bf16.msra.mxu0 0
  %12128 = vmatprep.subr.bf16.mxu0 0
  %12129 = vmatpush1.bf16.msra.mxu0 %v12112
  %12130 = vmatprep.subr.bf16.mxu0 0
  %12131 = vmatpush2.bf16.msra.mxu0 0
  %12132 = vmatprep.subr.bf16.mxu0 0
  %12133 = vmatpush2.bf16.msra.mxu0 0
  %12134 = vmatprep.subr.bf16.mxu0 0
  %12135 = vmatpush2.bf16.msra.mxu0 0
  %12136 = vmatprep.subr.bf16.mxu0 0
  %12137 = vmatpush2.bf16.msra.mxu0 0
  %12138 = vmatprep.subr.bf16.mxu0 0
  %12139 = vmatpush2.bf16.msra.mxu0 0
  %12140 = vmatprep.subr.bf16.mxu0 0
  %12141 = vmatpush2.bf16.msra.mxu0 0
  %12142 = vmatprep.subr.bf16.mxu0 0
  %12143 = vmatpush2.bf16.msra.mxu0 0
  %12144 = vmatprep.subr.bf16.mxu0 0
  %12145 = vmatpush2.bf16.msra.mxu0 0
  %12146 = vmatprep.mubr.bf16.mxu0 0
  %12147 = vmatmul.mubr.bf16.gmra.mxu0 %v9733
  %v12148 = vpop.f32.mrf.mxu0
  %v12149 = vadd.f32 0.0, %v12148
  %v12150 = vpop.f32.mrf.mxu0
  %v12151 = vpop.f32.mrf.mxu0
  %v12152 = vadd.f32 0.0, %v12151
  %v12153 = vpop.f32.mrf.mxu0
  %12154 = vmatprep.mubr.bf16.mxu0 0
  %12155 = vmatmul.mubr.bf16.gmra.mxu0 %v9736
  %v12156 = vpop.f32.mrf.mxu0
  %v12157 = vadd.f32 0.0, %v12156
  %v12158 = vpop.f32.mrf.mxu0
  %v12159 = vpop.f32.mrf.mxu0
  %v12160 = vadd.f32 0.0, %v12159
  %v12161 = vpop.f32.mrf.mxu0
  %12162 = vmatprep.mubr.bf16.mxu0 0
  %12163 = vmatmul.mubr.bf16.gmra.mxu0 %v9739
  %v12164 = vpop.f32.mrf.mxu0
  %v12165 = vadd.f32 0.0, %v12164
  %v12166 = vpop.f32.mrf.mxu0
  %v12167 = vpop.f32.mrf.mxu0
  %v12168 = vadd.f32 0.0, %v12167
  %v12169 = vpop.f32.mrf.mxu0
  %12170 = vmatprep.mubr.bf16.mxu0 0
  %12171 = vmatmul.mubr.bf16.gmra.mxu0 %v9742
  %v12172 = vpop.f32.mrf.mxu0
  %v12173 = vadd.f32 0.0, %v12172
  %v12174 = vpop.f32.mrf.mxu0
  %v12175 = vpop.f32.mrf.mxu0
  %v12176 = vadd.f32 0.0, %v12175
  %v12177 = vpop.f32.mrf.mxu0
  %12178 = vmatprep.mubr.bf16.mxu0 0
  %12179 = vmatmul.mubr.bf16.gmra.mxu0 %v9745
  %v12180 = vpop.f32.mrf.mxu0
  %v12181 = vadd.f32 0.0, %v12180
  %v12182 = vpop.f32.mrf.mxu0
  %v12183 = vpop.f32.mrf.mxu0
  %v12184 = vadd.f32 0.0, %v12183
  %v12185 = vpop.f32.mrf.mxu0
  %12186 = vmatprep.mubr.bf16.mxu0 0
  %12187 = vmatmul.mubr.bf16.gmra.mxu0 %v9748
  %v12188 = vpop.f32.mrf.mxu0
  %v12189 = vadd.f32 0.0, %v12188
  %v12190 = vpop.f32.mrf.mxu0
  %v12191 = vpop.f32.mrf.mxu0
  %v12192 = vadd.f32 0.0, %v12191
  %v12193 = vpop.f32.mrf.mxu0
  %12194 = vmatprep.mubr.bf16.mxu0 0
  %12195 = vmatmul.mubr.bf16.gmra.mxu0 %v9751
  %v12196 = vpop.f32.mrf.mxu0
  %v12197 = vadd.f32 0.0, %v12196
  %v12198 = vpop.f32.mrf.mxu0
  %v12199 = vpop.f32.mrf.mxu0
  %v12200 = vadd.f32 0.0, %v12199
  %v12201 = vpop.f32.mrf.mxu0
  %12202 = vmatprep.mubr.bf16.mxu0 0
  %12203 = vmatmul.mubr.bf16.gmra.mxu0 %v9754
  %v12204 = vpop.f32.mrf.mxu0
  %v12205 = vadd.f32 0.0, %v12204
  %v12206 = vpop.f32.mrf.mxu0
  %v12207 = vpop.f32.mrf.mxu0
  %v12208 = vadd.f32 0.0, %v12207
  %v12209 = vpop.f32.mrf.mxu0
  %12210 = vmatprep.mubr.bf16.mxu0 0
  %12211 = vmatmul.mubr.bf16.gmra.mxu0 %v9757
  %v12212 = vpop.f32.mrf.mxu0
  %v12213 = vadd.f32 0.0, %v12212
  %v12214 = vpop.f32.mrf.mxu0
  %v12215 = vpop.f32.mrf.mxu0
  %v12216 = vadd.f32 0.0, %v12215
  %v12217 = vpop.f32.mrf.mxu0
  %12218 = vmatprep.mubr.bf16.mxu0 0
  %12219 = vmatmul.mubr.bf16.gmra.mxu0 %v9760
  %v12220 = vpop.f32.mrf.mxu0
  %v12221 = vadd.f32 0.0, %v12220
  %v12222 = vpop.f32.mrf.mxu0
  %v12223 = vpop.f32.mrf.mxu0
  %v12224 = vadd.f32 0.0, %v12223
  %v12225 = vpop.f32.mrf.mxu0
  %12226 = vmatprep.mubr.bf16.mxu0 0
  %12227 = vmatmul.mubr.bf16.gmra.mxu0 %v9763
  %v12228 = vpop.f32.mrf.mxu0
  %v12229 = vadd.f32 0.0, %v12228
  %v12230 = vpop.f32.mrf.mxu0
  %v12231 = vpop.f32.mrf.mxu0
  %v12232 = vadd.f32 0.0, %v12231
  %v12233 = vpop.f32.mrf.mxu0
  %12234 = vmatprep.mubr.bf16.mxu0 0
  %12235 = vmatmul.mubr.bf16.gmra.mxu0 %v9766
  %v12236 = vpop.f32.mrf.mxu0
  %v12237 = vadd.f32 0.0, %v12236
  %v12238 = vpop.f32.mrf.mxu0
  %v12239 = vpop.f32.mrf.mxu0
  %v12240 = vadd.f32 0.0, %v12239
  %v12241 = vpop.f32.mrf.mxu0
  %12242 = vmatprep.mubr.bf16.mxu0 0
  %12243 = vmatmul.mubr.bf16.gmra.mxu0 %v9769
  %v12244 = vpop.f32.mrf.mxu0
  %v12245 = vadd.f32 0.0, %v12244
  %v12246 = vpop.f32.mrf.mxu0
  %v12247 = vpop.f32.mrf.mxu0
  %v12248 = vadd.f32 0.0, %v12247
  %v12249 = vpop.f32.mrf.mxu0
  %12250 = vmatprep.mubr.bf16.mxu0 0
  %12251 = vmatmul.mubr.bf16.gmra.mxu0 %v9772
  %v12252 = vpop.f32.mrf.mxu0
  %v12253 = vadd.f32 0.0, %v12252
  %v12254 = vpop.f32.mrf.mxu0
  %v12255 = vpop.f32.mrf.mxu0
  %v12256 = vadd.f32 0.0, %v12255
  %v12257 = vpop.f32.mrf.mxu0
  %12258 = vmatprep.mubr.bf16.mxu0 0
  %12259 = vmatmul.mubr.bf16.gmra.mxu0 %v10931
  %v12260 = vpop.f32.mrf.mxu0
  %v12261 = vadd.f32 0.0, %v12260
  %v12262 = vpop.f32.mrf.mxu0
  %v12263 = vpop.f32.mrf.mxu0
  %v12264 = vadd.f32 0.0, %v12263
  %v12265 = vpop.f32.mrf.mxu0
  %12266 = vmatprep.mubr.bf16.mxu0 0
  %12267 = vmatmul.mubr.bf16.gmra.mxu0 %v12106
  %v12268 = vpop.f32.mrf.mxu0
  %v12269 = vadd.f32 0.0, %v12268
  %v12270 = vpop.f32.mrf.mxu0
  %v12271 = vpop.f32.mrf.mxu0
  %v12272 = vadd.f32 0.0, %v12271
  %v12273 = vpop.f32.mrf.mxu0
  %12274 = vmatprep.mubr.bf16.mxu0 0
  %12275 = vmatmul.mubr.bf16.gmra.mxu0 %v9781
  %v12276 = vpop.f32.mrf.mxu0
  %v12277 = vadd.f32 0.0, %v12276
  %v12278 = vpop.f32.mrf.mxu0
  %v12279 = vpop.f32.mrf.mxu0
  %v12280 = vadd.f32 0.0, %v12279
  %v12281 = vpop.f32.mrf.mxu0
  %12282 = vmatprep.mubr.bf16.mxu0 0
  %12283 = vmatmul.mubr.bf16.gmra.mxu0 %v9784
  %v12284 = vpop.f32.mrf.mxu0
  %v12285 = vadd.f32 0.0, %v12284
  %v12286 = vpop.f32.mrf.mxu0
  %v12287 = vpop.f32.mrf.mxu0
  %v12288 = vadd.f32 0.0, %v12287
  %v12289 = vpop.f32.mrf.mxu0
  %12290 = vmatprep.mubr.bf16.mxu0 0
  %12291 = vmatmul.mubr.bf16.gmra.mxu0 %v9787
  %v12292 = vpop.f32.mrf.mxu0
  %v12293 = vadd.f32 0.0, %v12292
  %v12294 = vpop.f32.mrf.mxu0
  %v12295 = vpop.f32.mrf.mxu0
  %v12296 = vadd.f32 0.0, %v12295
  %v12297 = vpop.f32.mrf.mxu0
  %12298 = vmatprep.mubr.bf16.mxu0 0
  %12299 = vmatmul.mubr.bf16.gmra.mxu0 %v9790
  %v12300 = vpop.f32.mrf.mxu0
  %v12301 = vadd.f32 0.0, %v12300
  %v12302 = vpop.f32.mrf.mxu0
  %v12303 = vpop.f32.mrf.mxu0
  %v12304 = vadd.f32 0.0, %v12303
  %v12305 = vpop.f32.mrf.mxu0
  %12306 = vmatprep.mubr.bf16.mxu0 0
  %12307 = vmatmul.mubr.bf16.gmra.mxu0 %v9793
  %v12308 = vpop.f32.mrf.mxu0
  %v12309 = vadd.f32 0.0, %v12308
  %v12310 = vpop.f32.mrf.mxu0
  %v12311 = vpop.f32.mrf.mxu0
  %v12312 = vadd.f32 0.0, %v12311
  %v12313 = vpop.f32.mrf.mxu0
  %12314 = vmatprep.mubr.bf16.mxu0 0
  %12315 = vmatmul.mubr.bf16.gmra.mxu0 %v9796
  %v12316 = vpop.f32.mrf.mxu0
  %v12317 = vadd.f32 0.0, %v12316
  %v12318 = vpop.f32.mrf.mxu0
  %v12319 = vpop.f32.mrf.mxu0
  %v12320 = vadd.f32 0.0, %v12319
  %v12321 = vpop.f32.mrf.mxu0
  %12322 = vmatprep.mubr.bf16.mxu0 0
  %12323 = vmatmul.mubr.bf16.gmra.mxu0 %v9799
  %v12324 = vpop.f32.mrf.mxu0
  %v12325 = vadd.f32 0.0, %v12324
  %v12326 = vpop.f32.mrf.mxu0
  %v12327 = vpop.f32.mrf.mxu0
  %v12328 = vadd.f32 0.0, %v12327
  %v12329 = vpop.f32.mrf.mxu0
  %12330 = vmatprep.mubr.bf16.mxu0 0
  %12331 = vmatmul.mubr.bf16.gmra.mxu0 %v9802
  %v12332 = vpop.f32.mrf.mxu0
  %v12333 = vadd.f32 0.0, %v12332
  %v12334 = vpop.f32.mrf.mxu0
  %v12335 = vpop.f32.mrf.mxu0
  %v12336 = vadd.f32 0.0, %v12335
  %v12337 = vpop.f32.mrf.mxu0
  %12338 = vmatprep.mubr.bf16.mxu0 0
  %12339 = vmatmul.mubr.bf16.gmra.mxu0 %v9805
  %v12340 = vpop.f32.mrf.mxu0
  %v12341 = vadd.f32 0.0, %v12340
  %v12342 = vpop.f32.mrf.mxu0
  %v12343 = vpop.f32.mrf.mxu0
  %v12344 = vadd.f32 0.0, %v12343
  %v12345 = vpop.f32.mrf.mxu0
  %12346 = vmatprep.mubr.bf16.mxu0 0
  %12347 = vmatmul.mubr.bf16.gmra.mxu0 %v9808
  %v12348 = vpop.f32.mrf.mxu0
  %v12349 = vadd.f32 0.0, %v12348
  %v12350 = vpop.f32.mrf.mxu0
  %v12351 = vpop.f32.mrf.mxu0
  %v12352 = vadd.f32 0.0, %v12351
  %v12353 = vpop.f32.mrf.mxu0
  %12354 = vmatprep.mubr.bf16.mxu0 0
  %12355 = vmatmul.mubr.bf16.gmra.mxu0 %v9811
  %v12356 = vpop.f32.mrf.mxu0
  %v12357 = vadd.f32 0.0, %v12356
  %v12358 = vpop.f32.mrf.mxu0
  %v12359 = vpop.f32.mrf.mxu0
  %v12360 = vadd.f32 0.0, %v12359
  %v12361 = vpop.f32.mrf.mxu0
  %12362 = vmatprep.mubr.bf16.mxu0 0
  %12363 = vmatmul.mubr.bf16.gmra.mxu0 %v9814
  %v12364 = vpop.f32.mrf.mxu0
  %v12365 = vadd.f32 0.0, %v12364
  %v12366 = vpop.f32.mrf.mxu0
  %v12367 = vpop.f32.mrf.mxu0
  %v12368 = vadd.f32 0.0, %v12367
  %v12369 = vpop.f32.mrf.mxu0
  %12370 = vmatprep.mubr.bf16.mxu0 0
  %12371 = vmatmul.mubr.bf16.gmra.mxu0 %v9817
  %v12372 = vpop.f32.mrf.mxu0
  %v12373 = vadd.f32 0.0, %v12372
  %v12374 = vpop.f32.mrf.mxu0
  %v12375 = vpop.f32.mrf.mxu0
  %v12376 = vadd.f32 0.0, %v12375
  %v12377 = vpop.f32.mrf.mxu0
  %12378 = vmatprep.mubr.bf16.mxu0 0
  %12379 = vmatmul.mubr.bf16.gmra.mxu0 %v9820
  %v12380 = vpop.f32.mrf.mxu0
  %v12381 = vadd.f32 0.0, %v12380
  %v12382 = vpop.f32.mrf.mxu0
  %v12383 = vpop.f32.mrf.mxu0
  %v12384 = vadd.f32 0.0, %v12383
  %v12385 = vpop.f32.mrf.mxu0
  %12386 = vmatprep.mubr.bf16.mxu0 0
  %12387 = vmatmul.mubr.bf16.gmra.mxu0 %v10934
  %v12388 = vpop.f32.mrf.mxu0
  %v12389 = vadd.f32 0.0, %v12388
  %v12390 = vpop.f32.mrf.mxu0
  %v12391 = vpop.f32.mrf.mxu0
  %v12392 = vadd.f32 0.0, %v12391
  %v12393 = vpop.f32.mrf.mxu0
  %12394 = vmatprep.mubr.bf16.mxu0 0
  %12395 = vmatmul.mubr.bf16.gmra.mxu0 %v12109
  %v12396 = vpop.f32.mrf.mxu0
  %v12397 = vadd.f32 0.0, %v12396
  %v12398 = vpop.f32.mrf.mxu0
  %v12399 = vpop.f32.mrf.mxu0
  %v12400 = vadd.f32 0.0, %v12399
  %v12401 = vpop.f32.mrf.mxu0
  %12402 = vdwg.mxu0
  %v12403 = vadd.f32 %v12030, %v12149
  %v12404 = vadd.f32 %v12031, %v12152
  %v12405 = vadd.f32 %v12032, %v12157
  %v12406 = vadd.f32 %v12033, %v12160
  %v12407 = vadd.f32 %v12034, %v12165
  %v12408 = vadd.f32 %v12035, %v12168
  %v12409 = vadd.f32 %v12036, %v12173
  %v12410 = vadd.f32 %v12037, %v12176
  %v12411 = vadd.f32 %v12038, %v12181
  %v12412 = vadd.f32 %v12039, %v12184
  %v12413 = vadd.f32 %v12040, %v12189
  %v12414 = vadd.f32 %v12041, %v12192
  %v12415 = vadd.f32 %v12042, %v12197
  %v12416 = vadd.f32 %v12043, %v12200
  %v12417 = vadd.f32 %v12044, %v12205
  %v12418 = vadd.f32 %v12045, %v12208
  %v12419 = vadd.f32 %v12046, %v12213
  %v12420 = vadd.f32 %v12047, %v12216
  %v12421 = vadd.f32 %v12048, %v12221
  %v12422 = vadd.f32 %v12049, %v12224
  %v12423 = vadd.f32 %v12050, %v12229
  %v12424 = vadd.f32 %v12051, %v12232
  %v12425 = vadd.f32 %v12052, %v12237
  %v12426 = vadd.f32 %v12053, %v12240
  %v12427 = vadd.f32 %v12054, %v12245
  %v12428 = vadd.f32 %v12055, %v12248
  %v12429 = vadd.f32 %v12056, %v12253
  %v12430 = vadd.f32 %v12057, %v12256
  %v12431 = vadd.f32 %v12058, %v12261
  %v12432 = vadd.f32 %v12059, %v12264
  %v12433 = vadd.f32 %v12060, %v12269
  %v12434 = vadd.f32 %v12061, %v12272
  %v12435 = vadd.f32 %v12062, %v12277
  %v12436 = vadd.f32 %v12063, %v12280
  %v12437 = vadd.f32 %v12064, %v12285
  %v12438 = vadd.f32 %v12065, %v12288
  %v12439 = vadd.f32 %v12066, %v12293
  %v12440 = vadd.f32 %v12067, %v12296
  %v12441 = vadd.f32 %v12068, %v12301
  %v12442 = vadd.f32 %v12069, %v12304
  %v12443 = vadd.f32 %v12070, %v12309
  %v12444 = vadd.f32 %v12071, %v12312
  %v12445 = vadd.f32 %v12072, %v12317
  %v12446 = vadd.f32 %v12073, %v12320
  %v12447 = vadd.f32 %v12074, %v12325
  %v12448 = vadd.f32 %v12075, %v12328
  %v12449 = vadd.f32 %v12076, %v12333
  %v12450 = vadd.f32 %v12077, %v12336
  %v12451 = vadd.f32 %v12078, %v12341
  %v12452 = vadd.f32 %v12079, %v12344
  %v12453 = vadd.f32 %v12080, %v12349
  %v12454 = vadd.f32 %v12081, %v12352
  %v12455 = vadd.f32 %v12082, %v12357
  %v12456 = vadd.f32 %v12083, %v12360
  %v12457 = vadd.f32 %v12084, %v12365
  %v12458 = vadd.f32 %v12085, %v12368
  %v12459 = vadd.f32 %v12086, %v12373
  %v12460 = vadd.f32 %v12087, %v12376
  %v12461 = vadd.f32 %v12088, %v12381
  %v12462 = vadd.f32 %v12089, %v12384
  %v12463 = vadd.f32 %v12090, %v12389
  %v12464 = vadd.f32 %v12091, %v12392
  %v12465 = vadd.f32 %v12092, %v12397
  %v12466 = vadd.f32 %v12093, %v12400
  %v12468 = vshrl.u32 %v8254, 16
  %v12470 = vrot.slane %v12468, 4
  %v12471 = vshll.u32 %v8254, 16
  %v12473 = vrot.slane %v12471, 5
  %v12474 = vor.u32 %v12470, %v12473
  %v12475 = vrot.slane %v12474, 4
  %v12477 = vshll.u32 %v8255, 16
  %v12479 = vrot.slane %v12477, 5
  %v12480 = vsel %vm1347, %v12475, %v12479
  %v12481 = vshrl.u32 %v8255, 16
  %v12483 = vrot.slane %v12481, 4
  %v12484 = vor.u32 %v12483, %v12479
  %v12485 = vrot.slane %v12484, 4
  %v12487 = vshll.u32 %v8256, 16
  %v12489 = vrot.slane %v12487, 5
  %v12490 = vsel %vm1347, %v12485, %v12489
  %v12492 = vshrl.u32 %v8308, 16
  %v12494 = vrot.slane %v12492, 4
  %v12495 = vshll.u32 %v8308, 16
  %v12497 = vrot.slane %v12495, 5
  %v12498 = vor.u32 %v12494, %v12497
  %v12499 = vrot.slane %v12498, 4
  %v12501 = vshll.u32 %v8309, 16
  %v12503 = vrot.slane %v12501, 5
  %v12504 = vsel %vm1347, %v12499, %v12503
  %v12505 = vshrl.u32 %v8309, 16
  %v12507 = vrot.slane %v12505, 4
  %v12508 = vor.u32 %v12507, %v12503
  %v12509 = vrot.slane %v12508, 4
  %v12511 = vshll.u32 %v8310, 16
  %v12513 = vrot.slane %v12511, 5
  %v12514 = vsel %vm1347, %v12509, %v12513
  %v12515 = vld [vmem:[%s4 + $0x1c] sm:$0xf]
  %v12516 = vunpack.c.l.b16 %v12480
  %v12517 = vunpack.c.l.b16 %v12490
  %v12518 = vunpack.c.l.b16 %v12504
  %v12519 = vunpack.c.l.b16 %v12514
  %v12520 = vpack.c.b16 %v12517, %v12516
  %v12521 = vpack.c.b16 %v12519, %v12518
  %v12523 = vsel %vm6325, %v12520, 0
  %v12526 = vsel %vm6325, %v12521, 0
  %v12529 = vsel %vm9273, %v12515, 0
  %12531 = vmatprep.subr.bf16.mxu0 0
  %12532 = vmatpush1.bf16.msra.mxu0 0
  %12533 = vmatprep.subr.bf16.mxu0 0
  %12534 = vmatpush1.bf16.msra.mxu0 0
  %12535 = vmatprep.subr.bf16.mxu0 0
  %12536 = vmatpush1.bf16.msra.mxu0 0
  %12537 = vmatprep.subr.bf16.mxu0 0
  %12538 = vmatpush1.bf16.msra.mxu0 0
  %12539 = vmatprep.subr.bf16.mxu0 0
  %12540 = vmatpush1.bf16.msra.mxu0 0
  %12541 = vmatprep.subr.bf16.mxu0 0
  %12542 = vmatpush1.bf16.msra.mxu0 0
  %12543 = vmatprep.subr.bf16.mxu0 0
  %12544 = vmatpush1.bf16.msra.mxu0 0
  %12545 = vmatprep.subr.bf16.mxu0 0
  %12546 = vmatpush1.bf16.msra.mxu0 %v12529
  %12547 = vmatprep.subr.bf16.mxu0 0
  %12548 = vmatpush2.bf16.msra.mxu0 0
  %12549 = vmatprep.subr.bf16.mxu0 0
  %12550 = vmatpush2.bf16.msra.mxu0 0
  %12551 = vmatprep.subr.bf16.mxu0 0
  %12552 = vmatpush2.bf16.msra.mxu0 0
  %12553 = vmatprep.subr.bf16.mxu0 0
  %12554 = vmatpush2.bf16.msra.mxu0 0
  %12555 = vmatprep.subr.bf16.mxu0 0
  %12556 = vmatpush2.bf16.msra.mxu0 0
  %12557 = vmatprep.subr.bf16.mxu0 0
  %12558 = vmatpush2.bf16.msra.mxu0 0
  %12559 = vmatprep.subr.bf16.mxu0 0
  %12560 = vmatpush2.bf16.msra.mxu0 0
  %12561 = vmatprep.subr.bf16.mxu0 0
  %12562 = vmatpush2.bf16.msra.mxu0 0
  %12563 = vmatprep.mubr.bf16.mxu0 0
  %12564 = vmatmul.mubr.bf16.gmra.mxu0 %v9184
  %v12565 = vpop.f32.mrf.mxu0
  %v12566 = vadd.f32 0.0, %v12565
  %v12567 = vpop.f32.mrf.mxu0
  %v12568 = vpop.f32.mrf.mxu0
  %v12569 = vadd.f32 0.0, %v12568
  %v12570 = vpop.f32.mrf.mxu0
  %12571 = vmatprep.mubr.bf16.mxu0 0
  %12572 = vmatmul.mubr.bf16.gmra.mxu0 %v9187
  %v12573 = vpop.f32.mrf.mxu0
  %v12574 = vadd.f32 0.0, %v12573
  %v12575 = vpop.f32.mrf.mxu0
  %v12576 = vpop.f32.mrf.mxu0
  %v12577 = vadd.f32 0.0, %v12576
  %v12578 = vpop.f32.mrf.mxu0
  %12579 = vmatprep.mubr.bf16.mxu0 0
  %12580 = vmatmul.mubr.bf16.gmra.mxu0 %v9190
  %v12581 = vpop.f32.mrf.mxu0
  %v12582 = vadd.f32 0.0, %v12581
  %v12583 = vpop.f32.mrf.mxu0
  %v12584 = vpop.f32.mrf.mxu0
  %v12585 = vadd.f32 0.0, %v12584
  %v12586 = vpop.f32.mrf.mxu0
  %12587 = vmatprep.mubr.bf16.mxu0 0
  %12588 = vmatmul.mubr.bf16.gmra.mxu0 %v9193
  %v12589 = vpop.f32.mrf.mxu0
  %v12590 = vadd.f32 0.0, %v12589
  %v12591 = vpop.f32.mrf.mxu0
  %v12592 = vpop.f32.mrf.mxu0
  %v12593 = vadd.f32 0.0, %v12592
  %v12594 = vpop.f32.mrf.mxu0
  %12595 = vmatprep.mubr.bf16.mxu0 0
  %12596 = vmatmul.mubr.bf16.gmra.mxu0 %v9196
  %v12597 = vpop.f32.mrf.mxu0
  %v12598 = vadd.f32 0.0, %v12597
  %v12599 = vpop.f32.mrf.mxu0
  %v12600 = vpop.f32.mrf.mxu0
  %v12601 = vadd.f32 0.0, %v12600
  %v12602 = vpop.f32.mrf.mxu0
  %12603 = vmatprep.mubr.bf16.mxu0 0
  %12604 = vmatmul.mubr.bf16.gmra.mxu0 %v9199
  %v12605 = vpop.f32.mrf.mxu0
  %v12606 = vadd.f32 0.0, %v12605
  %v12607 = vpop.f32.mrf.mxu0
  %v12608 = vpop.f32.mrf.mxu0
  %v12609 = vadd.f32 0.0, %v12608
  %v12610 = vpop.f32.mrf.mxu0
  %12611 = vmatprep.mubr.bf16.mxu0 0
  %12612 = vmatmul.mubr.bf16.gmra.mxu0 %v9202
  %v12613 = vpop.f32.mrf.mxu0
  %v12614 = vadd.f32 0.0, %v12613
  %v12615 = vpop.f32.mrf.mxu0
  %v12616 = vpop.f32.mrf.mxu0
  %v12617 = vadd.f32 0.0, %v12616
  %v12618 = vpop.f32.mrf.mxu0
  %12619 = vmatprep.mubr.bf16.mxu0 0
  %12620 = vmatmul.mubr.bf16.gmra.mxu0 %v9205
  %v12621 = vpop.f32.mrf.mxu0
  %v12622 = vadd.f32 0.0, %v12621
  %v12623 = vpop.f32.mrf.mxu0
  %v12624 = vpop.f32.mrf.mxu0
  %v12625 = vadd.f32 0.0, %v12624
  %v12626 = vpop.f32.mrf.mxu0
  %12627 = vmatprep.mubr.bf16.mxu0 0
  %12628 = vmatmul.mubr.bf16.gmra.mxu0 %v9208
  %v12629 = vpop.f32.mrf.mxu0
  %v12630 = vadd.f32 0.0, %v12629
  %v12631 = vpop.f32.mrf.mxu0
  %v12632 = vpop.f32.mrf.mxu0
  %v12633 = vadd.f32 0.0, %v12632
  %v12634 = vpop.f32.mrf.mxu0
  %12635 = vmatprep.mubr.bf16.mxu0 0
  %12636 = vmatmul.mubr.bf16.gmra.mxu0 %v9211
  %v12637 = vpop.f32.mrf.mxu0
  %v12638 = vadd.f32 0.0, %v12637
  %v12639 = vpop.f32.mrf.mxu0
  %v12640 = vpop.f32.mrf.mxu0
  %v12641 = vadd.f32 0.0, %v12640
  %v12642 = vpop.f32.mrf.mxu0
  %12643 = vmatprep.mubr.bf16.mxu0 0
  %12644 = vmatmul.mubr.bf16.gmra.mxu0 %v9214
  %v12645 = vpop.f32.mrf.mxu0
  %v12646 = vadd.f32 0.0, %v12645
  %v12647 = vpop.f32.mrf.mxu0
  %v12648 = vpop.f32.mrf.mxu0
  %v12649 = vadd.f32 0.0, %v12648
  %v12650 = vpop.f32.mrf.mxu0
  %12651 = vmatprep.mubr.bf16.mxu0 0
  %12652 = vmatmul.mubr.bf16.gmra.mxu0 %v9217
  %v12653 = vpop.f32.mrf.mxu0
  %v12654 = vadd.f32 0.0, %v12653
  %v12655 = vpop.f32.mrf.mxu0
  %v12656 = vpop.f32.mrf.mxu0
  %v12657 = vadd.f32 0.0, %v12656
  %v12658 = vpop.f32.mrf.mxu0
  %12659 = vmatprep.mubr.bf16.mxu0 0
  %12660 = vmatmul.mubr.bf16.gmra.mxu0 %v9220
  %v12661 = vpop.f32.mrf.mxu0
  %v12662 = vadd.f32 0.0, %v12661
  %v12663 = vpop.f32.mrf.mxu0
  %v12664 = vpop.f32.mrf.mxu0
  %v12665 = vadd.f32 0.0, %v12664
  %v12666 = vpop.f32.mrf.mxu0
  %12667 = vmatprep.mubr.bf16.mxu0 0
  %12668 = vmatmul.mubr.bf16.gmra.mxu0 %v9223
  %v12669 = vpop.f32.mrf.mxu0
  %v12670 = vadd.f32 0.0, %v12669
  %v12671 = vpop.f32.mrf.mxu0
  %v12672 = vpop.f32.mrf.mxu0
  %v12673 = vadd.f32 0.0, %v12672
  %v12674 = vpop.f32.mrf.mxu0
  %12675 = vmatprep.mubr.bf16.mxu0 0
  %12676 = vmatmul.mubr.bf16.gmra.mxu0 %v11348
  %v12677 = vpop.f32.mrf.mxu0
  %v12678 = vadd.f32 0.0, %v12677
  %v12679 = vpop.f32.mrf.mxu0
  %v12680 = vpop.f32.mrf.mxu0
  %v12681 = vadd.f32 0.0, %v12680
  %v12682 = vpop.f32.mrf.mxu0
  %12683 = vmatprep.mubr.bf16.mxu0 0
  %12684 = vmatmul.mubr.bf16.gmra.mxu0 %v12523
  %v12685 = vpop.f32.mrf.mxu0
  %v12686 = vadd.f32 0.0, %v12685
  %v12687 = vpop.f32.mrf.mxu0
  %v12688 = vpop.f32.mrf.mxu0
  %v12689 = vadd.f32 0.0, %v12688
  %v12690 = vpop.f32.mrf.mxu0
  %12691 = vmatprep.mubr.bf16.mxu0 0
  %12692 = vmatmul.mubr.bf16.gmra.mxu0 %v9232
  %v12693 = vpop.f32.mrf.mxu0
  %v12694 = vadd.f32 0.0, %v12693
  %v12695 = vpop.f32.mrf.mxu0
  %v12696 = vpop.f32.mrf.mxu0
  %v12697 = vadd.f32 0.0, %v12696
  %v12698 = vpop.f32.mrf.mxu0
  %12699 = vmatprep.mubr.bf16.mxu0 0
  %12700 = vmatmul.mubr.bf16.gmra.mxu0 %v9235
  %v12701 = vpop.f32.mrf.mxu0
  %v12702 = vadd.f32 0.0, %v12701
  %v12703 = vpop.f32.mrf.mxu0
  %v12704 = vpop.f32.mrf.mxu0
  %v12705 = vadd.f32 0.0, %v12704
  %v12706 = vpop.f32.mrf.mxu0
  %12707 = vmatprep.mubr.bf16.mxu0 0
  %12708 = vmatmul.mubr.bf16.gmra.mxu0 %v9238
  %v12709 = vpop.f32.mrf.mxu0
  %v12710 = vadd.f32 0.0, %v12709
  %v12711 = vpop.f32.mrf.mxu0
  %v12712 = vpop.f32.mrf.mxu0
  %v12713 = vadd.f32 0.0, %v12712
  %v12714 = vpop.f32.mrf.mxu0
  %12715 = vmatprep.mubr.bf16.mxu0 0
  %12716 = vmatmul.mubr.bf16.gmra.mxu0 %v9241
  %v12717 = vpop.f32.mrf.mxu0
  %v12718 = vadd.f32 0.0, %v12717
  %v12719 = vpop.f32.mrf.mxu0
  %v12720 = vpop.f32.mrf.mxu0
  %v12721 = vadd.f32 0.0, %v12720
  %v12722 = vpop.f32.mrf.mxu0
  %12723 = vmatprep.mubr.bf16.mxu0 0
  %12724 = vmatmul.mubr.bf16.gmra.mxu0 %v9244
  %v12725 = vpop.f32.mrf.mxu0
  %v12726 = vadd.f32 0.0, %v12725
  %v12727 = vpop.f32.mrf.mxu0
  %v12728 = vpop.f32.mrf.mxu0
  %v12729 = vadd.f32 0.0, %v12728
  %v12730 = vpop.f32.mrf.mxu0
  %12731 = vmatprep.mubr.bf16.mxu0 0
  %12732 = vmatmul.mubr.bf16.gmra.mxu0 %v9247
  %v12733 = vpop.f32.mrf.mxu0
  %v12734 = vadd.f32 0.0, %v12733
  %v12735 = vpop.f32.mrf.mxu0
  %v12736 = vpop.f32.mrf.mxu0
  %v12737 = vadd.f32 0.0, %v12736
  %v12738 = vpop.f32.mrf.mxu0
  %12739 = vmatprep.mubr.bf16.mxu0 0
  %12740 = vmatmul.mubr.bf16.gmra.mxu0 %v9250
  %v12741 = vpop.f32.mrf.mxu0
  %v12742 = vadd.f32 0.0, %v12741
  %v12743 = vpop.f32.mrf.mxu0
  %v12744 = vpop.f32.mrf.mxu0
  %v12745 = vadd.f32 0.0, %v12744
  %v12746 = vpop.f32.mrf.mxu0
  %12747 = vmatprep.mubr.bf16.mxu0 0
  %12748 = vmatmul.mubr.bf16.gmra.mxu0 %v9253
  %v12749 = vpop.f32.mrf.mxu0
  %v12750 = vadd.f32 0.0, %v12749
  %v12751 = vpop.f32.mrf.mxu0
  %v12752 = vpop.f32.mrf.mxu0
  %v12753 = vadd.f32 0.0, %v12752
  %v12754 = vpop.f32.mrf.mxu0
  %12755 = vmatprep.mubr.bf16.mxu0 0
  %12756 = vmatmul.mubr.bf16.gmra.mxu0 %v9256
  %v12757 = vpop.f32.mrf.mxu0
  %v12758 = vadd.f32 0.0, %v12757
  %v12759 = vpop.f32.mrf.mxu0
  %v12760 = vpop.f32.mrf.mxu0
  %v12761 = vadd.f32 0.0, %v12760
  %v12762 = vpop.f32.mrf.mxu0
  %12763 = vmatprep.mubr.bf16.mxu0 0
  %12764 = vmatmul.mubr.bf16.gmra.mxu0 %v9259
  %v12765 = vpop.f32.mrf.mxu0
  %v12766 = vadd.f32 0.0, %v12765
  %v12767 = vpop.f32.mrf.mxu0
  %v12768 = vpop.f32.mrf.mxu0
  %v12769 = vadd.f32 0.0, %v12768
  %v12770 = vpop.f32.mrf.mxu0
  %12771 = vmatprep.mubr.bf16.mxu0 0
  %12772 = vmatmul.mubr.bf16.gmra.mxu0 %v9262
  %v12773 = vpop.f32.mrf.mxu0
  %v12774 = vadd.f32 0.0, %v12773
  %v12775 = vpop.f32.mrf.mxu0
  %v12776 = vpop.f32.mrf.mxu0
  %v12777 = vadd.f32 0.0, %v12776
  %v12778 = vpop.f32.mrf.mxu0
  %12779 = vmatprep.mubr.bf16.mxu0 0
  %12780 = vmatmul.mubr.bf16.gmra.mxu0 %v9265
  %v12781 = vpop.f32.mrf.mxu0
  %v12782 = vadd.f32 0.0, %v12781
  %v12783 = vpop.f32.mrf.mxu0
  %v12784 = vpop.f32.mrf.mxu0
  %v12785 = vadd.f32 0.0, %v12784
  %v12786 = vpop.f32.mrf.mxu0
  %12787 = vmatprep.mubr.bf16.mxu0 0
  %12788 = vmatmul.mubr.bf16.gmra.mxu0 %v9268
  %v12789 = vpop.f32.mrf.mxu0
  %v12790 = vadd.f32 0.0, %v12789
  %v12791 = vpop.f32.mrf.mxu0
  %v12792 = vpop.f32.mrf.mxu0
  %v12793 = vadd.f32 0.0, %v12792
  %v12794 = vpop.f32.mrf.mxu0
  %12795 = vmatprep.mubr.bf16.mxu0 0
  %12796 = vmatmul.mubr.bf16.gmra.mxu0 %v9271
  %v12797 = vpop.f32.mrf.mxu0
  %v12798 = vadd.f32 0.0, %v12797
  %v12799 = vpop.f32.mrf.mxu0
  %v12800 = vpop.f32.mrf.mxu0
  %v12801 = vadd.f32 0.0, %v12800
  %v12802 = vpop.f32.mrf.mxu0
  %12803 = vmatprep.mubr.bf16.mxu0 0
  %12804 = vmatmul.mubr.bf16.gmra.mxu0 %v11351
  %v12805 = vpop.f32.mrf.mxu0
  %v12806 = vadd.f32 0.0, %v12805
  %v12807 = vpop.f32.mrf.mxu0
  %v12808 = vpop.f32.mrf.mxu0
  %v12809 = vadd.f32 0.0, %v12808
  %v12810 = vpop.f32.mrf.mxu0
  %12811 = vmatprep.mubr.bf16.mxu0 0
  %12812 = vmatmul.mubr.bf16.gmra.mxu0 %v12526
  %v12813 = vpop.f32.mrf.mxu0
  %v12814 = vadd.f32 0.0, %v12813
  %v12815 = vpop.f32.mrf.mxu0
  %v12816 = vpop.f32.mrf.mxu0
  %v12817 = vadd.f32 0.0, %v12816
  %v12818 = vpop.f32.mrf.mxu0
  %12819 = vdwg.mxu0
  %v12820 = vadd.f32 %v12403, %v12566
  %v12821 = vadd.f32 %v12404, %v12569
  %v12822 = vadd.f32 %v12405, %v12574
  %v12823 = vadd.f32 %v12406, %v12577
  %v12824 = vadd.f32 %v12407, %v12582
  %v12825 = vadd.f32 %v12408, %v12585
  %v12826 = vadd.f32 %v12409, %v12590
  %v12827 = vadd.f32 %v12410, %v12593
  %v12828 = vadd.f32 %v12411, %v12598
  %v12829 = vadd.f32 %v12412, %v12601
  %v12830 = vadd.f32 %v12413, %v12606
  %v12831 = vadd.f32 %v12414, %v12609
  %v12832 = vadd.f32 %v12415, %v12614
  %v12833 = vadd.f32 %v12416, %v12617
  %v12834 = vadd.f32 %v12417, %v12622
  %v12835 = vadd.f32 %v12418, %v12625
  %v12836 = vadd.f32 %v12419, %v12630
  %v12837 = vadd.f32 %v12420, %v12633
  %v12838 = vadd.f32 %v12421, %v12638
  %v12839 = vadd.f32 %v12422, %v12641
  %v12840 = vadd.f32 %v12423, %v12646
  %v12841 = vadd.f32 %v12424, %v12649
  %v12842 = vadd.f32 %v12425, %v12654
  %v12843 = vadd.f32 %v12426, %v12657
  %v12844 = vadd.f32 %v12427, %v12662
  %v12845 = vadd.f32 %v12428, %v12665
  %v12846 = vadd.f32 %v12429, %v12670
  %v12847 = vadd.f32 %v12430, %v12673
  %v12848 = vadd.f32 %v12431, %v12678
  %v12849 = vadd.f32 %v12432, %v12681
  %v12850 = vadd.f32 %v12433, %v12686
  %v12851 = vadd.f32 %v12434, %v12689
  %v12852 = vadd.f32 %v12435, %v12694
  %v12853 = vadd.f32 %v12436, %v12697
  %v12854 = vadd.f32 %v12437, %v12702
  %v12855 = vadd.f32 %v12438, %v12705
  %v12856 = vadd.f32 %v12439, %v12710
  %v12857 = vadd.f32 %v12440, %v12713
  %v12858 = vadd.f32 %v12441, %v12718
  %v12859 = vadd.f32 %v12442, %v12721
  %v12860 = vadd.f32 %v12443, %v12726
  %v12861 = vadd.f32 %v12444, %v12729
  %v12862 = vadd.f32 %v12445, %v12734
  %v12863 = vadd.f32 %v12446, %v12737
  %v12864 = vadd.f32 %v12447, %v12742
  %v12865 = vadd.f32 %v12448, %v12745
  %v12866 = vadd.f32 %v12449, %v12750
  %v12867 = vadd.f32 %v12450, %v12753
  %v12868 = vadd.f32 %v12451, %v12758
  %v12869 = vadd.f32 %v12452, %v12761
  %v12870 = vadd.f32 %v12453, %v12766
  %v12871 = vadd.f32 %v12454, %v12769
  %v12872 = vadd.f32 %v12455, %v12774
  %v12873 = vadd.f32 %v12456, %v12777
  %v12874 = vadd.f32 %v12457, %v12782
  %v12875 = vadd.f32 %v12458, %v12785
  %v12876 = vadd.f32 %v12459, %v12790
  %v12877 = vadd.f32 %v12460, %v12793
  %v12878 = vadd.f32 %v12461, %v12798
  %v12879 = vadd.f32 %v12462, %v12801
  %v12880 = vadd.f32 %v12463, %v12806
  %v12881 = vadd.f32 %v12464, %v12809
  %v12882 = vadd.f32 %v12465, %v12814
  %v12883 = vadd.f32 %v12466, %v12817
  %v12886 = vrot.slane %v8254, 5
  %v12887 = vrot.slane %v12886, 4
  %v12888 = vrot.slane %v8255, 5
  %v12889 = vsel %vm3189, %v12887, %v12888
  %v12890 = vrot.slane %v12888, 4
  %v12891 = vrot.slane %v8256, 5
  %v12892 = vsel %vm3189, %v12890, %v12891
  %v12893 = vrot.slane %v8308, 5
  %v12894 = vrot.slane %v12893, 4
  %v12895 = vrot.slane %v8309, 5
  %v12896 = vsel %vm3189, %v12894, %v12895
  %v12897 = vrot.slane %v12895, 4
  %v12898 = vrot.slane %v8310, 5
  %v12899 = vsel %vm3189, %v12897, %v12898
  %v12900 = vld [vmem:[%s4 + $0x20] sm:$0xf]
  %v12901 = vunpack.c.l.b16 %v12889
  %v12902 = vunpack.c.l.b16 %v12892
  %v12903 = vunpack.c.l.b16 %v12896
  %v12904 = vunpack.c.l.b16 %v12899
  %v12905 = vpack.c.b16 %v12902, %v12901
  %v12906 = vpack.c.b16 %v12904, %v12903
  %v12908 = vsel %vm6325, %v12905, 0
  %v12911 = vsel %vm6325, %v12906, 0
  %v12914 = vsel %vm9273, %v12900, 0
  %12916 = vmatprep.subr.bf16.mxu0 0
  %12917 = vmatpush1.bf16.msra.mxu0 0
  %12918 = vmatprep.subr.bf16.mxu0 0
  %12919 = vmatpush1.bf16.msra.mxu0 0
  %12920 = vmatprep.subr.bf16.mxu0 0
  %12921 = vmatpush1.bf16.msra.mxu0 0
  %12922 = vmatprep.subr.bf16.mxu0 0
  %12923 = vmatpush1.bf16.msra.mxu0 0
  %12924 = vmatprep.subr.bf16.mxu0 0
  %12925 = vmatpush1.bf16.msra.mxu0 0
  %12926 = vmatprep.subr.bf16.mxu0 0
  %12927 = vmatpush1.bf16.msra.mxu0 0
  %12928 = vmatprep.subr.bf16.mxu0 0
  %12929 = vmatpush1.bf16.msra.mxu0 0
  %12930 = vmatprep.subr.bf16.mxu0 0
  %12931 = vmatpush1.bf16.msra.mxu0 %v12914
  %12932 = vmatprep.subr.bf16.mxu0 0
  %12933 = vmatpush2.bf16.msra.mxu0 0
  %12934 = vmatprep.subr.bf16.mxu0 0
  %12935 = vmatpush2.bf16.msra.mxu0 0
  %12936 = vmatprep.subr.bf16.mxu0 0
  %12937 = vmatpush2.bf16.msra.mxu0 0
  %12938 = vmatprep.subr.bf16.mxu0 0
  %12939 = vmatpush2.bf16.msra.mxu0 0
  %12940 = vmatprep.subr.bf16.mxu0 0
  %12941 = vmatpush2.bf16.msra.mxu0 0
  %12942 = vmatprep.subr.bf16.mxu0 0
  %12943 = vmatpush2.bf16.msra.mxu0 0
  %12944 = vmatprep.subr.bf16.mxu0 0
  %12945 = vmatpush2.bf16.msra.mxu0 0
  %12946 = vmatprep.subr.bf16.mxu0 0
  %12947 = vmatpush2.bf16.msra.mxu0 0
  %12948 = vmatprep.mubr.bf16.mxu0 0
  %12949 = vmatmul.mubr.bf16.gmra.mxu0 %v10474
  %v12950 = vpop.f32.mrf.mxu0
  %v12951 = vadd.f32 0.0, %v12950
  %v12952 = vpop.f32.mrf.mxu0
  %v12953 = vpop.f32.mrf.mxu0
  %v12954 = vadd.f32 0.0, %v12953
  %v12955 = vpop.f32.mrf.mxu0
  %12956 = vmatprep.mubr.bf16.mxu0 0
  %12957 = vmatmul.mubr.bf16.gmra.mxu0 %v10477
  %v12958 = vpop.f32.mrf.mxu0
  %v12959 = vadd.f32 0.0, %v12958
  %v12960 = vpop.f32.mrf.mxu0
  %v12961 = vpop.f32.mrf.mxu0
  %v12962 = vadd.f32 0.0, %v12961
  %v12963 = vpop.f32.mrf.mxu0
  %12964 = vmatprep.mubr.bf16.mxu0 0
  %12965 = vmatmul.mubr.bf16.gmra.mxu0 %v10480
  %v12966 = vpop.f32.mrf.mxu0
  %v12967 = vadd.f32 0.0, %v12966
  %v12968 = vpop.f32.mrf.mxu0
  %v12969 = vpop.f32.mrf.mxu0
  %v12970 = vadd.f32 0.0, %v12969
  %v12971 = vpop.f32.mrf.mxu0
  %12972 = vmatprep.mubr.bf16.mxu0 0
  %12973 = vmatmul.mubr.bf16.gmra.mxu0 %v10483
  %v12974 = vpop.f32.mrf.mxu0
  %v12975 = vadd.f32 0.0, %v12974
  %v12976 = vpop.f32.mrf.mxu0
  %v12977 = vpop.f32.mrf.mxu0
  %v12978 = vadd.f32 0.0, %v12977
  %v12979 = vpop.f32.mrf.mxu0
  %12980 = vmatprep.mubr.bf16.mxu0 0
  %12981 = vmatmul.mubr.bf16.gmra.mxu0 %v10486
  %v12982 = vpop.f32.mrf.mxu0
  %v12983 = vadd.f32 0.0, %v12982
  %v12984 = vpop.f32.mrf.mxu0
  %v12985 = vpop.f32.mrf.mxu0
  %v12986 = vadd.f32 0.0, %v12985
  %v12987 = vpop.f32.mrf.mxu0
  %12988 = vmatprep.mubr.bf16.mxu0 0
  %12989 = vmatmul.mubr.bf16.gmra.mxu0 %v10489
  %v12990 = vpop.f32.mrf.mxu0
  %v12991 = vadd.f32 0.0, %v12990
  %v12992 = vpop.f32.mrf.mxu0
  %v12993 = vpop.f32.mrf.mxu0
  %v12994 = vadd.f32 0.0, %v12993
  %v12995 = vpop.f32.mrf.mxu0
  %12996 = vmatprep.mubr.bf16.mxu0 0
  %12997 = vmatmul.mubr.bf16.gmra.mxu0 %v10492
  %v12998 = vpop.f32.mrf.mxu0
  %v12999 = vadd.f32 0.0, %v12998
  %v13000 = vpop.f32.mrf.mxu0
  %v13001 = vpop.f32.mrf.mxu0
  %v13002 = vadd.f32 0.0, %v13001
  %v13003 = vpop.f32.mrf.mxu0
  %13004 = vmatprep.mubr.bf16.mxu0 0
  %13005 = vmatmul.mubr.bf16.gmra.mxu0 %v10495
  %v13006 = vpop.f32.mrf.mxu0
  %v13007 = vadd.f32 0.0, %v13006
  %v13008 = vpop.f32.mrf.mxu0
  %v13009 = vpop.f32.mrf.mxu0
  %v13010 = vadd.f32 0.0, %v13009
  %v13011 = vpop.f32.mrf.mxu0
  %13012 = vmatprep.mubr.bf16.mxu0 0
  %13013 = vmatmul.mubr.bf16.gmra.mxu0 %v10498
  %v13014 = vpop.f32.mrf.mxu0
  %v13015 = vadd.f32 0.0, %v13014
  %v13016 = vpop.f32.mrf.mxu0
  %v13017 = vpop.f32.mrf.mxu0
  %v13018 = vadd.f32 0.0, %v13017
  %v13019 = vpop.f32.mrf.mxu0
  %13020 = vmatprep.mubr.bf16.mxu0 0
  %13021 = vmatmul.mubr.bf16.gmra.mxu0 %v10501
  %v13022 = vpop.f32.mrf.mxu0
  %v13023 = vadd.f32 0.0, %v13022
  %v13024 = vpop.f32.mrf.mxu0
  %v13025 = vpop.f32.mrf.mxu0
  %v13026 = vadd.f32 0.0, %v13025
  %v13027 = vpop.f32.mrf.mxu0
  %13028 = vmatprep.mubr.bf16.mxu0 0
  %13029 = vmatmul.mubr.bf16.gmra.mxu0 %v10504
  %v13030 = vpop.f32.mrf.mxu0
  %v13031 = vadd.f32 0.0, %v13030
  %v13032 = vpop.f32.mrf.mxu0
  %v13033 = vpop.f32.mrf.mxu0
  %v13034 = vadd.f32 0.0, %v13033
  %v13035 = vpop.f32.mrf.mxu0
  %13036 = vmatprep.mubr.bf16.mxu0 0
  %13037 = vmatmul.mubr.bf16.gmra.mxu0 %v10507
  %v13038 = vpop.f32.mrf.mxu0
  %v13039 = vadd.f32 0.0, %v13038
  %v13040 = vpop.f32.mrf.mxu0
  %v13041 = vpop.f32.mrf.mxu0
  %v13042 = vadd.f32 0.0, %v13041
  %v13043 = vpop.f32.mrf.mxu0
  %13044 = vmatprep.mubr.bf16.mxu0 0
  %13045 = vmatmul.mubr.bf16.gmra.mxu0 %v10510
  %v13046 = vpop.f32.mrf.mxu0
  %v13047 = vadd.f32 0.0, %v13046
  %v13048 = vpop.f32.mrf.mxu0
  %v13049 = vpop.f32.mrf.mxu0
  %v13050 = vadd.f32 0.0, %v13049
  %v13051 = vpop.f32.mrf.mxu0
  %13052 = vmatprep.mubr.bf16.mxu0 0
  %13053 = vmatmul.mubr.bf16.gmra.mxu0 %v10513
  %v13054 = vpop.f32.mrf.mxu0
  %v13055 = vadd.f32 0.0, %v13054
  %v13056 = vpop.f32.mrf.mxu0
  %v13057 = vpop.f32.mrf.mxu0
  %v13058 = vadd.f32 0.0, %v13057
  %v13059 = vpop.f32.mrf.mxu0
  %13060 = vmatprep.mubr.bf16.mxu0 0
  %13061 = vmatmul.mubr.bf16.gmra.mxu0 %v11733
  %v13062 = vpop.f32.mrf.mxu0
  %v13063 = vadd.f32 0.0, %v13062
  %v13064 = vpop.f32.mrf.mxu0
  %v13065 = vpop.f32.mrf.mxu0
  %v13066 = vadd.f32 0.0, %v13065
  %v13067 = vpop.f32.mrf.mxu0
  %13068 = vmatprep.mubr.bf16.mxu0 0
  %13069 = vmatmul.mubr.bf16.gmra.mxu0 %v12908
  %v13070 = vpop.f32.mrf.mxu0
  %v13071 = vadd.f32 0.0, %v13070
  %v13072 = vpop.f32.mrf.mxu0
  %v13073 = vpop.f32.mrf.mxu0
  %v13074 = vadd.f32 0.0, %v13073
  %v13075 = vpop.f32.mrf.mxu0
  %13076 = vmatprep.mubr.bf16.mxu0 0
  %13077 = vmatmul.mubr.bf16.gmra.mxu0 %v10522
  %v13078 = vpop.f32.mrf.mxu0
  %v13079 = vadd.f32 0.0, %v13078
  %v13080 = vpop.f32.mrf.mxu0
  %v13081 = vpop.f32.mrf.mxu0
  %v13082 = vadd.f32 0.0, %v13081
  %v13083 = vpop.f32.mrf.mxu0
  %13084 = vmatprep.mubr.bf16.mxu0 0
  %13085 = vmatmul.mubr.bf16.gmra.mxu0 %v10525
  %v13086 = vpop.f32.mrf.mxu0
  %v13087 = vadd.f32 0.0, %v13086
  %v13088 = vpop.f32.mrf.mxu0
  %v13089 = vpop.f32.mrf.mxu0
  %v13090 = vadd.f32 0.0, %v13089
  %v13091 = vpop.f32.mrf.mxu0
  %13092 = vmatprep.mubr.bf16.mxu0 0
  %13093 = vmatmul.mubr.bf16.gmra.mxu0 %v10528
  %v13094 = vpop.f32.mrf.mxu0
  %v13095 = vadd.f32 0.0, %v13094
  %v13096 = vpop.f32.mrf.mxu0
  %v13097 = vpop.f32.mrf.mxu0
  %v13098 = vadd.f32 0.0, %v13097
  %v13099 = vpop.f32.mrf.mxu0
  %13100 = vmatprep.mubr.bf16.mxu0 0
  %13101 = vmatmul.mubr.bf16.gmra.mxu0 %v10531
  %v13102 = vpop.f32.mrf.mxu0
  %v13103 = vadd.f32 0.0, %v13102
  %v13104 = vpop.f32.mrf.mxu0
  %v13105 = vpop.f32.mrf.mxu0
  %v13106 = vadd.f32 0.0, %v13105
  %v13107 = vpop.f32.mrf.mxu0
  %13108 = vmatprep.mubr.bf16.mxu0 0
  %13109 = vmatmul.mubr.bf16.gmra.mxu0 %v10534
  %v13110 = vpop.f32.mrf.mxu0
  %v13111 = vadd.f32 0.0, %v13110
  %v13112 = vpop.f32.mrf.mxu0
  %v13113 = vpop.f32.mrf.mxu0
  %v13114 = vadd.f32 0.0, %v13113
  %v13115 = vpop.f32.mrf.mxu0
  %13116 = vmatprep.mubr.bf16.mxu0 0
  %13117 = vmatmul.mubr.bf16.gmra.mxu0 %v10537
  %v13118 = vpop.f32.mrf.mxu0
  %v13119 = vadd.f32 0.0, %v13118
  %v13120 = vpop.f32.mrf.mxu0
  %v13121 = vpop.f32.mrf.mxu0
  %v13122 = vadd.f32 0.0, %v13121
  %v13123 = vpop.f32.mrf.mxu0
  %13124 = vmatprep.mubr.bf16.mxu0 0
  %13125 = vmatmul.mubr.bf16.gmra.mxu0 %v10540
  %v13126 = vpop.f32.mrf.mxu0
  %v13127 = vadd.f32 0.0, %v13126
  %v13128 = vpop.f32.mrf.mxu0
  %v13129 = vpop.f32.mrf.mxu0
  %v13130 = vadd.f32 0.0, %v13129
  %v13131 = vpop.f32.mrf.mxu0
  %13132 = vmatprep.mubr.bf16.mxu0 0
  %13133 = vmatmul.mubr.bf16.gmra.mxu0 %v10543
  %v13134 = vpop.f32.mrf.mxu0
  %v13135 = vadd.f32 0.0, %v13134
  %v13136 = vpop.f32.mrf.mxu0
  %v13137 = vpop.f32.mrf.mxu0
  %v13138 = vadd.f32 0.0, %v13137
  %v13139 = vpop.f32.mrf.mxu0
  %13140 = vmatprep.mubr.bf16.mxu0 0
  %13141 = vmatmul.mubr.bf16.gmra.mxu0 %v10546
  %v13142 = vpop.f32.mrf.mxu0
  %v13143 = vadd.f32 0.0, %v13142
  %v13144 = vpop.f32.mrf.mxu0
  %v13145 = vpop.f32.mrf.mxu0
  %v13146 = vadd.f32 0.0, %v13145
  %v13147 = vpop.f32.mrf.mxu0
  %13148 = vmatprep.mubr.bf16.mxu0 0
  %13149 = vmatmul.mubr.bf16.gmra.mxu0 %v10549
  %v13150 = vpop.f32.mrf.mxu0
  %v13151 = vadd.f32 0.0, %v13150
  %v13152 = vpop.f32.mrf.mxu0
  %v13153 = vpop.f32.mrf.mxu0
  %v13154 = vadd.f32 0.0, %v13153
  %v13155 = vpop.f32.mrf.mxu0
  %13156 = vmatprep.mubr.bf16.mxu0 0
  %13157 = vmatmul.mubr.bf16.gmra.mxu0 %v10552
  %v13158 = vpop.f32.mrf.mxu0
  %v13159 = vadd.f32 0.0, %v13158
  %v13160 = vpop.f32.mrf.mxu0
  %v13161 = vpop.f32.mrf.mxu0
  %v13162 = vadd.f32 0.0, %v13161
  %v13163 = vpop.f32.mrf.mxu0
  %13164 = vmatprep.mubr.bf16.mxu0 0
  %13165 = vmatmul.mubr.bf16.gmra.mxu0 %v10555
  %v13166 = vpop.f32.mrf.mxu0
  %v13167 = vadd.f32 0.0, %v13166
  %v13168 = vpop.f32.mrf.mxu0
  %v13169 = vpop.f32.mrf.mxu0
  %v13170 = vadd.f32 0.0, %v13169
  %v13171 = vpop.f32.mrf.mxu0
  %13172 = vmatprep.mubr.bf16.mxu0 0
  %13173 = vmatmul.mubr.bf16.gmra.mxu0 %v10558
  %v13174 = vpop.f32.mrf.mxu0
  %v13175 = vadd.f32 0.0, %v13174
  %v13176 = vpop.f32.mrf.mxu0
  %v13177 = vpop.f32.mrf.mxu0
  %v13178 = vadd.f32 0.0, %v13177
  %v13179 = vpop.f32.mrf.mxu0
  %13180 = vmatprep.mubr.bf16.mxu0 0
  %13181 = vmatmul.mubr.bf16.gmra.mxu0 %v10561
  %v13182 = vpop.f32.mrf.mxu0
  %v13183 = vadd.f32 0.0, %v13182
  %v13184 = vpop.f32.mrf.mxu0
  %v13185 = vpop.f32.mrf.mxu0
  %v13186 = vadd.f32 0.0, %v13185
  %v13187 = vpop.f32.mrf.mxu0
  %13188 = vmatprep.mubr.bf16.mxu0 0
  %13189 = vmatmul.mubr.bf16.gmra.mxu0 %v11736
  %v13190 = vpop.f32.mrf.mxu0
  %v13191 = vadd.f32 0.0, %v13190
  %v13192 = vpop.f32.mrf.mxu0
  %v13193 = vpop.f32.mrf.mxu0
  %v13194 = vadd.f32 0.0, %v13193
  %v13195 = vpop.f32.mrf.mxu0
  %13196 = vmatprep.mubr.bf16.mxu0 0
  %13197 = vmatmul.mubr.bf16.gmra.mxu0 %v12911
  %v13198 = vpop.f32.mrf.mxu0
  %v13199 = vadd.f32 0.0, %v13198
  %v13200 = vpop.f32.mrf.mxu0
  %v13201 = vpop.f32.mrf.mxu0
  %v13202 = vadd.f32 0.0, %v13201
  %v13203 = vpop.f32.mrf.mxu0
  %13204 = vdwg.mxu0
  %v13205 = vadd.f32 %v12820, %v12951
  %v13206 = vadd.f32 %v12821, %v12954
  %v13207 = vadd.f32 %v12822, %v12959
  %v13208 = vadd.f32 %v12823, %v12962
  %v13209 = vadd.f32 %v12824, %v12967
  %v13210 = vadd.f32 %v12825, %v12970
  %v13211 = vadd.f32 %v12826, %v12975
  %v13212 = vadd.f32 %v12827, %v12978
  %v13213 = vadd.f32 %v12828, %v12983
  %v13214 = vadd.f32 %v12829, %v12986
  %v13215 = vadd.f32 %v12830, %v12991
  %v13216 = vadd.f32 %v12831, %v12994
  %v13217 = vadd.f32 %v12832, %v12999
  %v13218 = vadd.f32 %v12833, %v13002
  %v13219 = vadd.f32 %v12834, %v13007
  %v13220 = vadd.f32 %v12835, %v13010
  %v13221 = vadd.f32 %v12836, %v13015
  %v13222 = vadd.f32 %v12837, %v13018
  %v13223 = vadd.f32 %v12838, %v13023
  %v13224 = vadd.f32 %v12839, %v13026
  %v13225 = vadd.f32 %v12840, %v13031
  %v13226 = vadd.f32 %v12841, %v13034
  %v13227 = vadd.f32 %v12842, %v13039
  %v13228 = vadd.f32 %v12843, %v13042
  %v13229 = vadd.f32 %v12844, %v13047
  %v13230 = vadd.f32 %v12845, %v13050
  %v13231 = vadd.f32 %v12846, %v13055
  %v13232 = vadd.f32 %v12847, %v13058
  %v13233 = vadd.f32 %v12848, %v13063
  %v13234 = vadd.f32 %v12849, %v13066
  %v13235 = vadd.f32 %v12850, %v13071
  %v13236 = vadd.f32 %v12851, %v13074
  %v13237 = vadd.f32 %v12852, %v13079
  %v13238 = vadd.f32 %v12853, %v13082
  %v13239 = vadd.f32 %v12854, %v13087
  %v13240 = vadd.f32 %v12855, %v13090
  %v13241 = vadd.f32 %v12856, %v13095
  %v13242 = vadd.f32 %v12857, %v13098
  %v13243 = vadd.f32 %v12858, %v13103
  %v13244 = vadd.f32 %v12859, %v13106
  %v13245 = vadd.f32 %v12860, %v13111
  %v13246 = vadd.f32 %v12861, %v13114
  %v13247 = vadd.f32 %v12862, %v13119
  %v13248 = vadd.f32 %v12863, %v13122
  %v13249 = vadd.f32 %v12864, %v13127
  %v13250 = vadd.f32 %v12865, %v13130
  %v13251 = vadd.f32 %v12866, %v13135
  %v13252 = vadd.f32 %v12867, %v13138
  %v13253 = vadd.f32 %v12868, %v13143
  %v13254 = vadd.f32 %v12869, %v13146
  %v13255 = vadd.f32 %v12870, %v13151
  %v13256 = vadd.f32 %v12871, %v13154
  %v13257 = vadd.f32 %v12872, %v13159
  %v13258 = vadd.f32 %v12873, %v13162
  %v13259 = vadd.f32 %v12874, %v13167
  %v13260 = vadd.f32 %v12875, %v13170
  %v13261 = vadd.f32 %v12876, %v13175
  %v13262 = vadd.f32 %v12877, %v13178
  %v13263 = vadd.f32 %v12878, %v13183
  %v13264 = vadd.f32 %v12879, %v13186
  %v13265 = vadd.f32 %v12880, %v13191
  %v13266 = vadd.f32 %v12881, %v13194
  %v13267 = vadd.f32 %v12882, %v13199
  %v13268 = vadd.f32 %v12883, %v13202
  %v13269 = vsel %vm6325, %v13205, 0.0
  %v13270 = vsel %vm6325, %v13206, 0.0
  %v13271 = vadd.f32 %v13269, %v13270
  %v13272 = vsel %vm6325, %v13207, 0.0
  %v13273 = vadd.f32 %v13271, %v13272
  %v13274 = vsel %vm6325, %v13208, 0.0
  %v13275 = vadd.f32 %v13273, %v13274
  %v13276 = vsel %vm6325, %v13209, 0.0
  %v13277 = vadd.f32 %v13275, %v13276
  %v13278 = vsel %vm6325, %v13210, 0.0
  %v13279 = vadd.f32 %v13277, %v13278
  %v13280 = vsel %vm6325, %v13211, 0.0
  %v13281 = vadd.f32 %v13279, %v13280
  %v13282 = vsel %vm6325, %v13212, 0.0
  %v13283 = vadd.f32 %v13281, %v13282
  %v13284 = vsel %vm6325, %v13213, 0.0
  %v13285 = vadd.f32 %v13283, %v13284
  %v13286 = vsel %vm6325, %v13214, 0.0
  %v13287 = vadd.f32 %v13285, %v13286
  %v13288 = vsel %vm6325, %v13215, 0.0
  %v13289 = vadd.f32 %v13287, %v13288
  %v13290 = vsel %vm6325, %v13216, 0.0
  %v13291 = vadd.f32 %v13289, %v13290
  %v13292 = vsel %vm6325, %v13217, 0.0
  %v13293 = vadd.f32 %v13291, %v13292
  %v13294 = vsel %vm6325, %v13218, 0.0
  %v13295 = vadd.f32 %v13293, %v13294
  %v13296 = vsel %vm6325, %v13219, 0.0
  %v13297 = vadd.f32 %v13295, %v13296
  %v13298 = vsel %vm6325, %v13220, 0.0
  %v13299 = vadd.f32 %v13297, %v13298
  %v13300 = vsel %vm6325, %v13221, 0.0
  %v13301 = vadd.f32 %v13299, %v13300
  %v13302 = vsel %vm6325, %v13222, 0.0
  %v13303 = vadd.f32 %v13301, %v13302
  %v13304 = vsel %vm6325, %v13223, 0.0
  %v13305 = vadd.f32 %v13303, %v13304
  %v13306 = vsel %vm6325, %v13224, 0.0
  %v13307 = vadd.f32 %v13305, %v13306
  %v13308 = vsel %vm6325, %v13225, 0.0
  %v13309 = vadd.f32 %v13307, %v13308
  %v13310 = vsel %vm6325, %v13226, 0.0
  %v13311 = vadd.f32 %v13309, %v13310
  %v13312 = vsel %vm6325, %v13227, 0.0
  %v13313 = vadd.f32 %v13311, %v13312
  %v13314 = vsel %vm6325, %v13228, 0.0
  %v13315 = vadd.f32 %v13313, %v13314
  %v13316 = vsel %vm6325, %v13229, 0.0
  %v13317 = vadd.f32 %v13315, %v13316
  %v13318 = vsel %vm6325, %v13230, 0.0
  %v13319 = vadd.f32 %v13317, %v13318
  %v13320 = vsel %vm6325, %v13231, 0.0
  %v13321 = vadd.f32 %v13319, %v13320
  %v13322 = vsel %vm6325, %v13232, 0.0
  %v13323 = vadd.f32 %v13321, %v13322
  %v13324 = vsel %vm6325, %v13233, 0.0
  %v13325 = vadd.f32 %v13323, %v13324
  %v13326 = vsel %vm6325, %v13234, 0.0
  %v13327 = vadd.f32 %v13325, %v13326
  %v13328 = vsel %vm6325, %v13235, 0.0
  %v13329 = vadd.f32 %v13327, %v13328
  %v13330 = vsel %vm6325, %v13236, 0.0
  %v13331 = vadd.f32 %v13329, %v13330
  %v13332 = vsel %vm6325, %v13237, 0.0
  %v13333 = vadd.f32 %v13331, %v13332
  %v13334 = vsel %vm6325, %v13238, 0.0
  %v13335 = vadd.f32 %v13333, %v13334
  %v13336 = vsel %vm6325, %v13239, 0.0
  %v13337 = vadd.f32 %v13335, %v13336
  %v13338 = vsel %vm6325, %v13240, 0.0
  %v13339 = vadd.f32 %v13337, %v13338
  %v13340 = vsel %vm6325, %v13241, 0.0
  %v13341 = vadd.f32 %v13339, %v13340
  %v13342 = vsel %vm6325, %v13242, 0.0
  %v13343 = vadd.f32 %v13341, %v13342
  %v13344 = vsel %vm6325, %v13243, 0.0
  %v13345 = vadd.f32 %v13343, %v13344
  %v13346 = vsel %vm6325, %v13244, 0.0
  %v13347 = vadd.f32 %v13345, %v13346
  %v13348 = vsel %vm6325, %v13245, 0.0
  %v13349 = vadd.f32 %v13347, %v13348
  %v13350 = vsel %vm6325, %v13246, 0.0
  %v13351 = vadd.f32 %v13349, %v13350
  %v13352 = vsel %vm6325, %v13247, 0.0
  %v13353 = vadd.f32 %v13351, %v13352
  %v13354 = vsel %vm6325, %v13248, 0.0
  %v13355 = vadd.f32 %v13353, %v13354
  %v13356 = vsel %vm6325, %v13249, 0.0
  %v13357 = vadd.f32 %v13355, %v13356
  %v13358 = vsel %vm6325, %v13250, 0.0
  %v13359 = vadd.f32 %v13357, %v13358
  %v13360 = vsel %vm6325, %v13251, 0.0
  %v13361 = vadd.f32 %v13359, %v13360
  %v13362 = vsel %vm6325, %v13252, 0.0
  %v13363 = vadd.f32 %v13361, %v13362
  %v13364 = vsel %vm6325, %v13253, 0.0
  %v13365 = vadd.f32 %v13363, %v13364
  %v13366 = vsel %vm6325, %v13254, 0.0
  %v13367 = vadd.f32 %v13365, %v13366
  %v13368 = vsel %vm6325, %v13255, 0.0
  %v13369 = vadd.f32 %v13367, %v13368
  %v13370 = vsel %vm6325, %v13256, 0.0
  %v13371 = vadd.f32 %v13369, %v13370
  %v13372 = vsel %vm6325, %v13257, 0.0
  %v13373 = vadd.f32 %v13371, %v13372
  %v13374 = vsel %vm6325, %v13258, 0.0
  %v13375 = vadd.f32 %v13373, %v13374
  %v13376 = vsel %vm6325, %v13259, 0.0
  %v13377 = vadd.f32 %v13375, %v13376
  %v13378 = vsel %vm6325, %v13260, 0.0
  %v13379 = vadd.f32 %v13377, %v13378
  %v13380 = vsel %vm6325, %v13261, 0.0
  %v13381 = vadd.f32 %v13379, %v13380
  %v13382 = vsel %vm6325, %v13262, 0.0
  %v13383 = vadd.f32 %v13381, %v13382
  %v13384 = vsel %vm6325, %v13263, 0.0
  %v13385 = vadd.f32 %v13383, %v13384
  %v13386 = vsel %vm6325, %v13264, 0.0
  %v13387 = vadd.f32 %v13385, %v13386
  %v13388 = vsel %vm6325, %v13265, 0.0
  %v13389 = vadd.f32 %v13387, %v13388
  %v13390 = vsel %vm6325, %v13266, 0.0
  %v13391 = vadd.f32 %v13389, %v13390
  %v13392 = vsel %vm6325, %v13267, 0.0
  %v13393 = vadd.f32 %v13391, %v13392
  %v13394 = vsel %vm6325, %v13268, 0.0
  %v13395 = vadd.f32 %v13393, %v13394
  %v13396 = vrot.slane %v13395, 4
  %v13397 = vadd.f32 %v13395, %v13396
  %v13398 = vrot.slane %v13397, 2
  %v13399 = vadd.f32 %v13397, %v13398
  %v13400 = vrot.slane %v13399, 1
  %v13401 = vadd.f32 %v13399, %v13400
  %v13402 = vmul.f32 %v13401, %v6459
  %v13403 = vsub.f32 %v13205, %v13402
  %v13404 = vsub.f32 %v13206, %v13402
  %v13405 = vsub.f32 %v13207, %v13402
  %v13406 = vsub.f32 %v13208, %v13402
  %v13407 = vsub.f32 %v13209, %v13402
  %v13408 = vsub.f32 %v13210, %v13402
  %v13409 = vsub.f32 %v13211, %v13402
  %v13410 = vsub.f32 %v13212, %v13402
  %v13411 = vsub.f32 %v13213, %v13402
  %v13412 = vsub.f32 %v13214, %v13402
  %v13413 = vsub.f32 %v13215, %v13402
  %v13414 = vsub.f32 %v13216, %v13402
  %v13415 = vsub.f32 %v13217, %v13402
  %v13416 = vsub.f32 %v13218, %v13402
  %v13417 = vsub.f32 %v13219, %v13402
  %v13418 = vsub.f32 %v13220, %v13402
  %v13419 = vsub.f32 %v13221, %v13402
  %v13420 = vsub.f32 %v13222, %v13402
  %v13421 = vsub.f32 %v13223, %v13402
  %v13422 = vsub.f32 %v13224, %v13402
  %v13423 = vsub.f32 %v13225, %v13402
  %v13424 = vsub.f32 %v13226, %v13402
  %v13425 = vsub.f32 %v13227, %v13402
  %v13426 = vsub.f32 %v13228, %v13402
  %v13427 = vsub.f32 %v13229, %v13402
  %v13428 = vsub.f32 %v13230, %v13402
  %v13429 = vsub.f32 %v13231, %v13402
  %v13430 = vsub.f32 %v13232, %v13402
  %v13431 = vsub.f32 %v13233, %v13402
  %v13432 = vsub.f32 %v13234, %v13402
  %v13433 = vsub.f32 %v13235, %v13402
  %v13434 = vsub.f32 %v13236, %v13402
  %v13435 = vsub.f32 %v13237, %v13402
  %v13436 = vsub.f32 %v13238, %v13402
  %v13437 = vsub.f32 %v13239, %v13402
  %v13438 = vsub.f32 %v13240, %v13402
  %v13439 = vsub.f32 %v13241, %v13402
  %v13440 = vsub.f32 %v13242, %v13402
  %v13441 = vsub.f32 %v13243, %v13402
  %v13442 = vsub.f32 %v13244, %v13402
  %v13443 = vsub.f32 %v13245, %v13402
  %v13444 = vsub.f32 %v13246, %v13402
  %v13445 = vsub.f32 %v13247, %v13402
  %v13446 = vsub.f32 %v13248, %v13402
  %v13447 = vsub.f32 %v13249, %v13402
  %v13448 = vsub.f32 %v13250, %v13402
  %v13449 = vsub.f32 %v13251, %v13402
  %v13450 = vsub.f32 %v13252, %v13402
  %v13451 = vsub.f32 %v13253, %v13402
  %v13452 = vsub.f32 %v13254, %v13402
  %v13453 = vsub.f32 %v13255, %v13402
  %v13454 = vsub.f32 %v13256, %v13402
  %v13455 = vsub.f32 %v13257, %v13402
  %v13456 = vsub.f32 %v13258, %v13402
  %v13457 = vsub.f32 %v13259, %v13402
  %v13458 = vsub.f32 %v13260, %v13402
  %v13459 = vsub.f32 %v13261, %v13402
  %v13460 = vsub.f32 %v13262, %v13402
  %v13461 = vsub.f32 %v13263, %v13402
  %v13462 = vsub.f32 %v13264, %v13402
  %v13463 = vsub.f32 %v13265, %v13402
  %v13464 = vsub.f32 %v13266, %v13402
  %v13465 = vsub.f32 %v13267, %v13402
  %v13466 = vsub.f32 %v13268, %v13402
  %v13467 = vmul.f32 %v13403, %v13403
  %v13468 = vmul.f32 %v13404, %v13404
  %v13469 = vmul.f32 %v13405, %v13405
  %v13470 = vmul.f32 %v13406, %v13406
  %v13471 = vmul.f32 %v13407, %v13407
  %v13472 = vmul.f32 %v13408, %v13408
  %v13473 = vmul.f32 %v13409, %v13409
  %v13474 = vmul.f32 %v13410, %v13410
  %v13475 = vmul.f32 %v13411, %v13411
  %v13476 = vmul.f32 %v13412, %v13412
  %v13477 = vmul.f32 %v13413, %v13413
  %v13478 = vmul.f32 %v13414, %v13414
  %v13479 = vmul.f32 %v13415, %v13415
  %v13480 = vmul.f32 %v13416, %v13416
  %v13481 = vmul.f32 %v13417, %v13417
  %v13482 = vmul.f32 %v13418, %v13418
  %v13483 = vmul.f32 %v13419, %v13419
  %v13484 = vmul.f32 %v13420, %v13420
  %v13485 = vmul.f32 %v13421, %v13421
  %v13486 = vmul.f32 %v13422, %v13422
  %v13487 = vmul.f32 %v13423, %v13423
  %v13488 = vmul.f32 %v13424, %v13424
  %v13489 = vmul.f32 %v13425, %v13425
  %v13490 = vmul.f32 %v13426, %v13426
  %v13491 = vmul.f32 %v13427, %v13427
  %v13492 = vmul.f32 %v13428, %v13428
  %v13493 = vmul.f32 %v13429, %v13429
  %v13494 = vmul.f32 %v13430, %v13430
  %v13495 = vmul.f32 %v13431, %v13431
  %v13496 = vmul.f32 %v13432, %v13432
  %v13497 = vmul.f32 %v13433, %v13433
  %v13498 = vmul.f32 %v13434, %v13434
  %v13499 = vmul.f32 %v13435, %v13435
  %v13500 = vmul.f32 %v13436, %v13436
  %v13501 = vmul.f32 %v13437, %v13437
  %v13502 = vmul.f32 %v13438, %v13438
  %v13503 = vmul.f32 %v13439, %v13439
  %v13504 = vmul.f32 %v13440, %v13440
  %v13505 = vmul.f32 %v13441, %v13441
  %v13506 = vmul.f32 %v13442, %v13442
  %v13507 = vmul.f32 %v13443, %v13443
  %v13508 = vmul.f32 %v13444, %v13444
  %v13509 = vmul.f32 %v13445, %v13445
  %v13510 = vmul.f32 %v13446, %v13446
  %v13511 = vmul.f32 %v13447, %v13447
  %v13512 = vmul.f32 %v13448, %v13448
  %v13513 = vmul.f32 %v13449, %v13449
  %v13514 = vmul.f32 %v13450, %v13450
  %v13515 = vmul.f32 %v13451, %v13451
  %v13516 = vmul.f32 %v13452, %v13452
  %v13517 = vmul.f32 %v13453, %v13453
  %v13518 = vmul.f32 %v13454, %v13454
  %v13519 = vmul.f32 %v13455, %v13455
  %v13520 = vmul.f32 %v13456, %v13456
  %v13521 = vmul.f32 %v13457, %v13457
  %v13522 = vmul.f32 %v13458, %v13458
  %v13523 = vmul.f32 %v13459, %v13459
  %v13524 = vmul.f32 %v13460, %v13460
  %v13525 = vmul.f32 %v13461, %v13461
  %v13526 = vmul.f32 %v13462, %v13462
  %v13527 = vmul.f32 %v13463, %v13463
  %v13528 = vmul.f32 %v13464, %v13464
  %v13529 = vmul.f32 %v13465, %v13465
  %v13530 = vmul.f32 %v13466, %v13466
  %v13531 = vsel %vm6325, %v13467, 0.0
  %v13532 = vsel %vm6325, %v13468, 0.0
  %v13533 = vadd.f32 %v13531, %v13532
  %v13534 = vsel %vm6325, %v13469, 0.0
  %v13535 = vadd.f32 %v13533, %v13534
  %v13536 = vsel %vm6325, %v13470, 0.0
  %v13537 = vadd.f32 %v13535, %v13536
  %v13538 = vsel %vm6325, %v13471, 0.0
  %v13539 = vadd.f32 %v13537, %v13538
  %v13540 = vsel %vm6325, %v13472, 0.0
  %v13541 = vadd.f32 %v13539, %v13540
  %v13542 = vsel %vm6325, %v13473, 0.0
  %v13543 = vadd.f32 %v13541, %v13542
  %v13544 = vsel %vm6325, %v13474, 0.0
  %v13545 = vadd.f32 %v13543, %v13544
  %v13546 = vsel %vm6325, %v13475, 0.0
  %v13547 = vadd.f32 %v13545, %v13546
  %v13548 = vsel %vm6325, %v13476, 0.0
  %v13549 = vadd.f32 %v13547, %v13548
  %v13550 = vsel %vm6325, %v13477, 0.0
  %v13551 = vadd.f32 %v13549, %v13550
  %v13552 = vsel %vm6325, %v13478, 0.0
  %v13553 = vadd.f32 %v13551, %v13552
  %v13554 = vsel %vm6325, %v13479, 0.0
  %v13555 = vadd.f32 %v13553, %v13554
  %v13556 = vsel %vm6325, %v13480, 0.0
  %v13557 = vadd.f32 %v13555, %v13556
  %v13558 = vsel %vm6325, %v13481, 0.0
  %v13559 = vadd.f32 %v13557, %v13558
  %v13560 = vsel %vm6325, %v13482, 0.0
  %v13561 = vadd.f32 %v13559, %v13560
  %v13562 = vsel %vm6325, %v13483, 0.0
  %v13563 = vadd.f32 %v13561, %v13562
  %v13564 = vsel %vm6325, %v13484, 0.0
  %v13565 = vadd.f32 %v13563, %v13564
  %v13566 = vsel %vm6325, %v13485, 0.0
  %v13567 = vadd.f32 %v13565, %v13566
  %v13568 = vsel %vm6325, %v13486, 0.0
  %v13569 = vadd.f32 %v13567, %v13568
  %v13570 = vsel %vm6325, %v13487, 0.0
  %v13571 = vadd.f32 %v13569, %v13570
  %v13572 = vsel %vm6325, %v13488, 0.0
  %v13573 = vadd.f32 %v13571, %v13572
  %v13574 = vsel %vm6325, %v13489, 0.0
  %v13575 = vadd.f32 %v13573, %v13574
  %v13576 = vsel %vm6325, %v13490, 0.0
  %v13577 = vadd.f32 %v13575, %v13576
  %v13578 = vsel %vm6325, %v13491, 0.0
  %v13579 = vadd.f32 %v13577, %v13578
  %v13580 = vsel %vm6325, %v13492, 0.0
  %v13581 = vadd.f32 %v13579, %v13580
  %v13582 = vsel %vm6325, %v13493, 0.0
  %v13583 = vadd.f32 %v13581, %v13582
  %v13584 = vsel %vm6325, %v13494, 0.0
  %v13585 = vadd.f32 %v13583, %v13584
  %v13586 = vsel %vm6325, %v13495, 0.0
  %v13587 = vadd.f32 %v13585, %v13586
  %v13588 = vsel %vm6325, %v13496, 0.0
  %v13589 = vadd.f32 %v13587, %v13588
  %v13590 = vsel %vm6325, %v13497, 0.0
  %v13591 = vadd.f32 %v13589, %v13590
  %v13592 = vsel %vm6325, %v13498, 0.0
  %v13593 = vadd.f32 %v13591, %v13592
  %v13594 = vsel %vm6325, %v13499, 0.0
  %v13595 = vadd.f32 %v13593, %v13594
  %v13596 = vsel %vm6325, %v13500, 0.0
  %v13597 = vadd.f32 %v13595, %v13596
  %v13598 = vsel %vm6325, %v13501, 0.0
  %v13599 = vadd.f32 %v13597, %v13598
  %v13600 = vsel %vm6325, %v13502, 0.0
  %v13601 = vadd.f32 %v13599, %v13600
  %v13602 = vsel %vm6325, %v13503, 0.0
  %v13603 = vadd.f32 %v13601, %v13602
  %v13604 = vsel %vm6325, %v13504, 0.0
  %v13605 = vadd.f32 %v13603, %v13604
  %v13606 = vsel %vm6325, %v13505, 0.0
  %v13607 = vadd.f32 %v13605, %v13606
  %v13608 = vsel %vm6325, %v13506, 0.0
  %v13609 = vadd.f32 %v13607, %v13608
  %v13610 = vsel %vm6325, %v13507, 0.0
  %v13611 = vadd.f32 %v13609, %v13610
  %v13612 = vsel %vm6325, %v13508, 0.0
  %v13613 = vadd.f32 %v13611, %v13612
  %v13614 = vsel %vm6325, %v13509, 0.0
  %v13615 = vadd.f32 %v13613, %v13614
  %v13616 = vsel %vm6325, %v13510, 0.0
  %v13617 = vadd.f32 %v13615, %v13616
  %v13618 = vsel %vm6325, %v13511, 0.0
  %v13619 = vadd.f32 %v13617, %v13618
  %v13620 = vsel %vm6325, %v13512, 0.0
  %v13621 = vadd.f32 %v13619, %v13620
  %v13622 = vsel %vm6325, %v13513, 0.0
  %v13623 = vadd.f32 %v13621, %v13622
  %v13624 = vsel %vm6325, %v13514, 0.0
  %v13625 = vadd.f32 %v13623, %v13624
  %v13626 = vsel %vm6325, %v13515, 0.0
  %v13627 = vadd.f32 %v13625, %v13626
  %v13628 = vsel %vm6325, %v13516, 0.0
  %v13629 = vadd.f32 %v13627, %v13628
  %v13630 = vsel %vm6325, %v13517, 0.0
  %v13631 = vadd.f32 %v13629, %v13630
  %v13632 = vsel %vm6325, %v13518, 0.0
  %v13633 = vadd.f32 %v13631, %v13632
  %v13634 = vsel %vm6325, %v13519, 0.0
  %v13635 = vadd.f32 %v13633, %v13634
  %v13636 = vsel %vm6325, %v13520, 0.0
  %v13637 = vadd.f32 %v13635, %v13636
  %v13638 = vsel %vm6325, %v13521, 0.0
  %v13639 = vadd.f32 %v13637, %v13638
  %v13640 = vsel %vm6325, %v13522, 0.0
  %v13641 = vadd.f32 %v13639, %v13640
  %v13642 = vsel %vm6325, %v13523, 0.0
  %v13643 = vadd.f32 %v13641, %v13642
  %v13644 = vsel %vm6325, %v13524, 0.0
  %v13645 = vadd.f32 %v13643, %v13644
  %v13646 = vsel %vm6325, %v13525, 0.0
  %v13647 = vadd.f32 %v13645, %v13646
  %v13648 = vsel %vm6325, %v13526, 0.0
  %v13649 = vadd.f32 %v13647, %v13648
  %v13650 = vsel %vm6325, %v13527, 0.0
  %v13651 = vadd.f32 %v13649, %v13650
  %v13652 = vsel %vm6325, %v13528, 0.0
  %v13653 = vadd.f32 %v13651, %v13652
  %v13654 = vsel %vm6325, %v13529, 0.0
  %v13655 = vadd.f32 %v13653, %v13654
  %v13656 = vsel %vm6325, %v13530, 0.0
  %v13657 = vadd.f32 %v13655, %v13656
  %v13658 = vrot.slane %v13657, 4
  %v13659 = vadd.f32 %v13657, %v13658
  %v13660 = vrot.slane %v13659, 2
  %v13661 = vadd.f32 %v13659, %v13660
  %v13662 = vrot.slane %v13661, 1
  %v13663 = vadd.f32 %v13661, %v13662
  %v13664 = vmul.f32 %v13663, %v6459
  %v13665 = vld [vmem:[%s5] sm:$0x1]
  %v13666 = vadd.f32 %v13664, 1e-05
  %v13667 = vrsqrt.pop %v13666
  %v13668 = vmul.f32 %v13665, %v13667
  %v13669 = vld [vmem:[%s6] sm:$0x1]
  %v13670 = vmul.f32 %v13402, %v13668
  %v13671 = vsub.f32 %v13669, %v13670
  %v13673 = vlaneseq
  %v13674 = vshrl.u32 %v13673, 7
  %v13675 = vsub.s32 0, %v13674
  %v13676 = vrot.slane %v13668, %v13675
  %v13678 = vmul.f32 %v13205, %v13676
  %v13679 = vmul.f32 %v13206, %v13676
  %v13680 = vmul.f32 %v13207, %v13676
  %v13681 = vmul.f32 %v13208, %v13676
  %v13682 = vmul.f32 %v13209, %v13676
  %v13683 = vmul.f32 %v13210, %v13676
  %v13684 = vmul.f32 %v13211, %v13676
  %v13685 = vmul.f32 %v13212, %v13676
  %v13686 = vmul.f32 %v13213, %v13676
  %v13687 = vmul.f32 %v13214, %v13676
  %v13688 = vmul.f32 %v13215, %v13676
  %v13689 = vmul.f32 %v13216, %v13676
  %v13690 = vmul.f32 %v13217, %v13676
  %v13691 = vmul.f32 %v13218, %v13676
  %v13692 = vmul.f32 %v13219, %v13676
  %v13693 = vmul.f32 %v13220, %v13676
  %v13694 = vmul.f32 %v13221, %v13676
  %v13695 = vmul.f32 %v13222, %v13676
  %v13696 = vmul.f32 %v13223, %v13676
  %v13697 = vmul.f32 %v13224, %v13676
  %v13698 = vmul.f32 %v13225, %v13676
  %v13699 = vmul.f32 %v13226, %v13676
  %v13700 = vmul.f32 %v13227, %v13676
  %v13701 = vmul.f32 %v13228, %v13676
  %v13702 = vmul.f32 %v13229, %v13676
  %v13703 = vmul.f32 %v13230, %v13676
  %v13704 = vmul.f32 %v13231, %v13676
  %v13705 = vmul.f32 %v13232, %v13676
  %v13706 = vmul.f32 %v13233, %v13676
  %v13707 = vmul.f32 %v13234, %v13676
  %v13708 = vmul.f32 %v13235, %v13676
  %v13709 = vmul.f32 %v13236, %v13676
  %v13710 = vmul.f32 %v13237, %v13676
  %v13711 = vmul.f32 %v13238, %v13676
  %v13712 = vmul.f32 %v13239, %v13676
  %v13713 = vmul.f32 %v13240, %v13676
  %v13714 = vmul.f32 %v13241, %v13676
  %v13715 = vmul.f32 %v13242, %v13676
  %v13716 = vmul.f32 %v13243, %v13676
  %v13717 = vmul.f32 %v13244, %v13676
  %v13718 = vmul.f32 %v13245, %v13676
  %v13719 = vmul.f32 %v13246, %v13676
  %v13720 = vmul.f32 %v13247, %v13676
  %v13721 = vmul.f32 %v13248, %v13676
  %v13722 = vmul.f32 %v13249, %v13676
  %v13723 = vmul.f32 %v13250, %v13676
  %v13724 = vmul.f32 %v13251, %v13676
  %v13725 = vmul.f32 %v13252, %v13676
  %v13726 = vmul.f32 %v13253, %v13676
  %v13727 = vmul.f32 %v13254, %v13676
  %v13728 = vmul.f32 %v13255, %v13676
  %v13729 = vmul.f32 %v13256, %v13676
  %v13730 = vmul.f32 %v13257, %v13676
  %v13731 = vmul.f32 %v13258, %v13676
  %v13732 = vmul.f32 %v13259, %v13676
  %v13733 = vmul.f32 %v13260, %v13676
  %v13734 = vmul.f32 %v13261, %v13676
  %v13735 = vmul.f32 %v13262, %v13676
  %v13736 = vmul.f32 %v13263, %v13676
  %v13737 = vmul.f32 %v13264, %v13676
  %v13738 = vmul.f32 %v13265, %v13676
  %v13739 = vmul.f32 %v13266, %v13676
  %v13740 = vmul.f32 %v13267, %v13676
  %v13741 = vmul.f32 %v13268, %v13676
  %v13743 = vlaneseq
  %v13744 = vshrl.u32 %v13743, 7
  %v13745 = vsub.s32 0, %v13744
  %v13746 = vrot.slane %v13671, %v13745
  %v13748 = vadd.f32 %v13678, %v13746
  %v13749 = vadd.f32 %v13679, %v13746
  %v13750 = vadd.f32 %v13680, %v13746
  %v13751 = vadd.f32 %v13681, %v13746
  %v13752 = vadd.f32 %v13682, %v13746
  %v13753 = vadd.f32 %v13683, %v13746
  %v13754 = vadd.f32 %v13684, %v13746
  %v13755 = vadd.f32 %v13685, %v13746
  %v13756 = vadd.f32 %v13686, %v13746
  %v13757 = vadd.f32 %v13687, %v13746
  %v13758 = vadd.f32 %v13688, %v13746
  %v13759 = vadd.f32 %v13689, %v13746
  %v13760 = vadd.f32 %v13690, %v13746
  %v13761 = vadd.f32 %v13691, %v13746
  %v13762 = vadd.f32 %v13692, %v13746
  %v13763 = vadd.f32 %v13693, %v13746
  %v13764 = vadd.f32 %v13694, %v13746
  %v13765 = vadd.f32 %v13695, %v13746
  %v13766 = vadd.f32 %v13696, %v13746
  %v13767 = vadd.f32 %v13697, %v13746
  %v13768 = vadd.f32 %v13698, %v13746
  %v13769 = vadd.f32 %v13699, %v13746
  %v13770 = vadd.f32 %v13700, %v13746
  %v13771 = vadd.f32 %v13701, %v13746
  %v13772 = vadd.f32 %v13702, %v13746
  %v13773 = vadd.f32 %v13703, %v13746
  %v13774 = vadd.f32 %v13704, %v13746
  %v13775 = vadd.f32 %v13705, %v13746
  %v13776 = vadd.f32 %v13706, %v13746
  %v13777 = vadd.f32 %v13707, %v13746
  %v13778 = vadd.f32 %v13708, %v13746
  %v13779 = vadd.f32 %v13709, %v13746
  %v13780 = vadd.f32 %v13710, %v13746
  %v13781 = vadd.f32 %v13711, %v13746
  %v13782 = vadd.f32 %v13712, %v13746
  %v13783 = vadd.f32 %v13713, %v13746
  %v13784 = vadd.f32 %v13714, %v13746
  %v13785 = vadd.f32 %v13715, %v13746
  %v13786 = vadd.f32 %v13716, %v13746
  %v13787 = vadd.f32 %v13717, %v13746
  %v13788 = vadd.f32 %v13718, %v13746
  %v13789 = vadd.f32 %v13719, %v13746
  %v13790 = vadd.f32 %v13720, %v13746
  %v13791 = vadd.f32 %v13721, %v13746
  %v13792 = vadd.f32 %v13722, %v13746
  %v13793 = vadd.f32 %v13723, %v13746
  %v13794 = vadd.f32 %v13724, %v13746
  %v13795 = vadd.f32 %v13725, %v13746
  %v13796 = vadd.f32 %v13726, %v13746
  %v13797 = vadd.f32 %v13727, %v13746
  %v13798 = vadd.f32 %v13728, %v13746
  %v13799 = vadd.f32 %v13729, %v13746
  %v13800 = vadd.f32 %v13730, %v13746
  %v13801 = vadd.f32 %v13731, %v13746
  %v13802 = vadd.f32 %v13732, %v13746
  %v13803 = vadd.f32 %v13733, %v13746
  %v13804 = vadd.f32 %v13734, %v13746
  %v13805 = vadd.f32 %v13735, %v13746
  %v13806 = vadd.f32 %v13736, %v13746
  %v13807 = vadd.f32 %v13737, %v13746
  %v13808 = vadd.f32 %v13738, %v13746
  %v13809 = vadd.f32 %v13739, %v13746
  %v13810 = vadd.f32 %v13740, %v13746
  %v13811 = vadd.f32 %v13741, %v13746
  %13812 = vst.msk [vmem:[%s7] sm:$0xff] %vm6325, %v13748
  %13813 = vst.msk [vmem:[%s7 + $0x8] sm:$0xff] %vm6325, %v13749
  %13814 = vst.msk [vmem:[%s7 + $0x10] sm:$0xff] %vm6325, %v13750
  %13815 = vst.msk [vmem:[%s7 + $0x18] sm:$0xff] %vm6325, %v13751
  %13816 = vst.msk [vmem:[%s7 + $0x20] sm:$0xff] %vm6325, %v13752
  %13817 = vst.msk [vmem:[%s7 + $0x28] sm:$0xff] %vm6325, %v13753
  %13818 = vst.msk [vmem:[%s7 + $0x30] sm:$0xff] %vm6325, %v13754
  %13819 = vst.msk [vmem:[%s7 + $0x38] sm:$0xff] %vm6325, %v13755
  %13820 = vst.msk [vmem:[%s7 + $0x40] sm:$0xff] %vm6325, %v13756
  %13821 = vst.msk [vmem:[%s7 + $0x48] sm:$0xff] %vm6325, %v13757
  %13822 = vst.msk [vmem:[%s7 + $0x50] sm:$0xff] %vm6325, %v13758
  %13823 = vst.msk [vmem:[%s7 + $0x58] sm:$0xff] %vm6325, %v13759
  %13824 = vst.msk [vmem:[%s7 + $0x60] sm:$0xff] %vm6325, %v13760
  %13825 = vst.msk [vmem:[%s7 + $0x68] sm:$0xff] %vm6325, %v13761
  %13826 = vst.msk [vmem:[%s7 + $0x70] sm:$0xff] %vm6325, %v13762
  %13827 = vst.msk [vmem:[%s7 + $0x78] sm:$0xff] %vm6325, %v13763
  %13828 = vst.msk [vmem:[%s7 + $0x80] sm:$0xff] %vm6325, %v13764
  %13829 = vst.msk [vmem:[%s7 + $0x88] sm:$0xff] %vm6325, %v13765
  %13830 = vst.msk [vmem:[%s7 + $0x90] sm:$0xff] %vm6325, %v13766
  %13831 = vst.msk [vmem:[%s7 + $0x98] sm:$0xff] %vm6325, %v13767
  %13832 = vst.msk [vmem:[%s7 + $0xa0] sm:$0xff] %vm6325, %v13768
  %13833 = vst.msk [vmem:[%s7 + $0xa8] sm:$0xff] %vm6325, %v13769
  %13834 = vst.msk [vmem:[%s7 + $0xb0] sm:$0xff] %vm6325, %v13770
  %13835 = vst.msk [vmem:[%s7 + $0xb8] sm:$0xff] %vm6325, %v13771
  %13836 = vst.msk [vmem:[%s7 + $0xc0] sm:$0xff] %vm6325, %v13772
  %13837 = vst.msk [vmem:[%s7 + $0xc8] sm:$0xff] %vm6325, %v13773
  %13838 = vst.msk [vmem:[%s7 + $0xd0] sm:$0xff] %vm6325, %v13774
  %13839 = vst.msk [vmem:[%s7 + $0xd8] sm:$0xff] %vm6325, %v13775
  %13840 = vst.msk [vmem:[%s7 + $0xe0] sm:$0xff] %vm6325, %v13776
  %13841 = vst.msk [vmem:[%s7 + $0xe8] sm:$0xff] %vm6325, %v13777
  %13842 = vst.msk [vmem:[%s7 + $0xf0] sm:$0xff] %vm6325, %v13778
  %13843 = vst.msk [vmem:[%s7 + $0xf8] sm:$0xff] %vm6325, %v13779
  %13844 = vst.msk [vmem:[%s7 + $0x100] sm:$0xff] %vm6325, %v13780
  %13845 = vst.msk [vmem:[%s7 + $0x108] sm:$0xff] %vm6325, %v13781
  %13846 = vst.msk [vmem:[%s7 + $0x110] sm:$0xff] %vm6325, %v13782
  %13847 = vst.msk [vmem:[%s7 + $0x118] sm:$0xff] %vm6325, %v13783
  %13848 = vst.msk [vmem:[%s7 + $0x120] sm:$0xff] %vm6325, %v13784
  %13849 = vst.msk [vmem:[%s7 + $0x128] sm:$0xff] %vm6325, %v13785
  %13850 = vst.msk [vmem:[%s7 + $0x130] sm:$0xff] %vm6325, %v13786
  %13851 = vst.msk [vmem:[%s7 + $0x138] sm:$0xff] %vm6325, %v13787
  %13852 = vst.msk [vmem:[%s7 + $0x140] sm:$0xff] %vm6325, %v13788
  %13853 = vst.msk [vmem:[%s7 + $0x148] sm:$0xff] %vm6325, %v13789
  %13854 = vst.msk [vmem:[%s7 + $0x150] sm:$0xff] %vm6325, %v13790
  %13855 = vst.msk [vmem:[%s7 + $0x158] sm:$0xff] %vm6325, %v13791
  %13856 = vst.msk [vmem:[%s7 + $0x160] sm:$0xff] %vm6325, %v13792
  %13857 = vst.msk [vmem:[%s7 + $0x168] sm:$0xff] %vm6325, %v13793
  %13858 = vst.msk [vmem:[%s7 + $0x170] sm:$0xff] %vm6325, %v13794
  %13859 = vst.msk [vmem:[%s7 + $0x178] sm:$0xff] %vm6325, %v13795
  %13860 = vst.msk [vmem:[%s7 + $0x180] sm:$0xff] %vm6325, %v13796
  %13861 = vst.msk [vmem:[%s7 + $0x188] sm:$0xff] %vm6325, %v13797
  %13862 = vst.msk [vmem:[%s7 + $0x190] sm:$0xff] %vm6325, %v13798
  %13863 = vst.msk [vmem:[%s7 + $0x198] sm:$0xff] %vm6325, %v13799
  %13864 = vst.msk [vmem:[%s7 + $0x1a0] sm:$0xff] %vm6325, %v13800
  %13865 = vst.msk [vmem:[%s7 + $0x1a8] sm:$0xff] %vm6325, %v13801
  %13866 = vst.msk [vmem:[%s7 + $0x1b0] sm:$0xff] %vm6325, %v13802
  %13867 = vst.msk [vmem:[%s7 + $0x1b8] sm:$0xff] %vm6325, %v13803
  %13868 = vst.msk [vmem:[%s7 + $0x1c0] sm:$0xff] %vm6325, %v13804
  %13869 = vst.msk [vmem:[%s7 + $0x1c8] sm:$0xff] %vm6325, %v13805
  %13870 = vst.msk [vmem:[%s7 + $0x1d0] sm:$0xff] %vm6325, %v13806
  %13871 = vst.msk [vmem:[%s7 + $0x1d8] sm:$0xff] %vm6325, %v13807
  %13872 = vst.msk [vmem:[%s7 + $0x1e0] sm:$0xff] %vm6325, %v13808
  %13873 = vst.msk [vmem:[%s7 + $0x1e8] sm:$0xff] %vm6325, %v13809
  %13874 = vst.msk [vmem:[%s7 + $0x1f0] sm:$0xff] %vm6325, %v13810
  %13875 = vst.msk [vmem:[%s7 + $0x1f8] sm:$0xff] %vm6325, %v13811
  // Predicated region
  $region30: #{tpu_custom_call.1} parent=0 // pred_check
    _
  $region31: #{tpu_custom_call.1} parent=0 // pred_check_branch
    %13877 = sbr.rel (0) target = $region33
  $region32: #{tpu_custom_call.1} parent=0 // pred_region
    _
  $region33: #{tpu_custom_call.1} parent=0 // pred_fallthru
    _
  // Predicated region
  $region34: #{tpu_custom_call.1} parent=0 // pred_check
    _
  $region35: #{tpu_custom_call.1} parent=0 // pred_check_branch
    %13879 = sbr.rel (0) target = $region37
  $region36: #{tpu_custom_call.1} parent=0 // pred_region
    _
  $region37: #{tpu_custom_call.1} parent=0 // pred_fallthru
    _

</llo_original>
